<compile_context>
chip_gen: v7x
topology: tpu7x:2x2x1
jax: 0.10.0
libtpu: 0.0.40
codegen_flags: <defaults>
</compile_context>

<pallas_src>
import functools

import numpy as np

import jax
import jax.numpy as jnp
from jax import lax
from jax.experimental import pallas as pl
from jax.experimental.pallas import tpu as pltpu


# NatureCNN conv geometry: (kernel, stride, out_channels)
_CONV_CFG = ((8, 4, 32), (4, 2, 64), (3, 1, 64))


def _conv_out(size, k, s):
    return (size - k) // s + 1


# --------------------------------------------------------------------------- #
# Batch-INDEPENDENT constant 0/1 gather matrices ("im2col as matmul").
# sel[kp] @ act_b pulls, for every output position, the input row hit by
# kernel position kp.  Size is (k*k, pout, pin) regardless of the batch tile.
# --------------------------------------------------------------------------- #
@functools.lru_cache(maxsize=None)
def _conv_selection(ih, iw, k, stride):
    oh, ow = _conv_out(ih, k, stride), _conv_out(iw, k, stride)
    pin, pout = ih * iw, oh * ow
    sel = np.zeros((k * k, pout, pin), np.float32)
    for i in range(k):
        for j in range(k):
            kp = i * k + j
            for r in range(oh):
                for c in range(ow):
                    sel[kp, r * ow + c,
                        (stride * r + i) * iw + (stride * c + j)] = 1.0
    return sel


# ------------------------------ fused kernel ------------------------------- #
def _build_fused_kernel(tb, p1, p2, p3, c1, c2, c3, k2sq, k3sq):
    """conv1 + conv2 + conv3 + fc (+ ReLUs) in one kernel.  Every op is a 2-D
    matmul, lane/sublane concat, broadcast add, max or cast; all intermediate
    activations stay on-chip."""

    def _im2col(h_b, sel_ref, n_kpos):
        # (pin, cin) -> (pout, n_kpos*cin): n_kpos gather matmuls + lane concat.
        pieces = []
        for kp in range(n_kpos):
            g = jnp.dot(sel_ref[kp], h_b, preferred_element_type=jnp.float32)
            pieces.append(g.astype(jnp.bfloat16))          # exact: sel is 0/1
        return jnp.concatenate(pieces, axis=1)

    def kernel(p1_ref, w1_ref, b1_ref, s2_ref, w2_ref, b2_ref,
               s3_ref, w3_ref, b3_ref, wfc_ref, bfc_ref, out_ref):
        # conv1: ONE matmul for the whole batch tile (M = tb*p1 fills the MXU).
        h1 = jnp.dot(p1_ref[...], w1_ref[...], preferred_element_type=jnp.float32)
        h1 = jnp.maximum(h1 + b1_ref[...], 0.0).astype(jnp.bfloat16)  # (tb*p1, c1)

        flat_rows = []
        for b in range(tb):                 # tb is a small static int: unrolled
            h1_b = h1[b * p1:(b + 1) * p1, :]                       # (p1, c1)
            # conv2: batch-independent gather + ONE wide-K (k2^2*c1) matmul.
            # TODO(synk): at large spatial sizes replace this gather with
            # in-kernel parity-split slicing to remove the ~pin/cout FLOP
            # overhead of the zero-FLOP gather.
            h2_b = jnp.dot(_im2col(h1_b, s2_ref, k2sq), w2_ref[...],
                           preferred_element_type=jnp.float32)
            h2_b = jnp.maximum(h2_b + b2_ref[...], 0.0).astype(jnp.bfloat16)
            # conv3: same pattern, wide-K = k3^2*c2.
            h3_b = jnp.dot(_im2col(h2_b, s3_ref, k3sq), w3_ref[...],
                           preferred_element_type=jnp.float32)
            h3_b = jnp.maximum(h3_b + b3_ref[...], 0.0).astype(jnp.bfloat16)
            # torch's (channel, oh, ow) flatten == lane concat of the rows,
            # because wfc was pre-permuted to (pos, channel) row order.
            if p3 == 1:
                flat_rows.append(h3_b)                              # (1, c3)
            else:
                flat_rows.append(jnp.concatenate(
                    [h3_b[pos:pos + 1, :] for pos in range(p3)], axis=1))
        flat = flat_rows[0] if tb == 1 else jnp.concatenate(flat_rows, axis=0)

        # fc (+ ReLU): single lane-dense K = p3*c3 matmul; N is padded to a
        # multiple of 128 lanes so the store is a full-lane (unmasked) vst.
        o = jnp.dot(flat, wfc_ref[...], preferred_element_type=jnp.float32)
        out_ref[...] = jnp.maximum(o + bfc_ref[...], 0.0).astype(out_ref.dtype)

    return kernel


# --------------------------- parameter preparation ------------------------- #
def prepare_cnn_encoder_params(params, screen_size):
    """One-time conversion of torch-layout params to kernel-ready tensors:
    conv weights -> [(kh, kw, cin), cout] bf16, biases -> [1, cout] f32, and
    the fc weight permuted to the kernel's (pos, channel) flatten order,
    transposed to [n_flatten, features_dim] and zero-padded to 128 lanes."""
    h = screen_size
    for (k, s, _) in _CONV_CFG:
        h = _conv_out(h, k, s)
    p3 = h * h
    c3 = _CONV_CFG[-1][2]

    def conv_w(w):   # [cout, cin, kh, kw] -> [kh*kw*cin, cout]
        return jnp.transpose(w, (2, 3, 1, 0)).reshape(-1, w.shape[0]).astype(jnp.bfloat16)

    def bias(b):
        return b.reshape(1, -1).astype(jnp.float32)

    w1, b1 = params["conv1"]
    w2, b2 = params["conv2"]
    w3, b3 = params["conv3"]
    wfc, bfc = params["fc"]
    features_dim = int(wfc.shape[0])
    assert wfc.shape[1] == c3 * p3, (wfc.shape, c3, p3)
    # torch flattens (channel, oh, ow); kernel flat rows are (pos, channel).
    wfc_perm = jnp.transpose(wfc.reshape(features_dim, c3, p3), (2, 1, 0))
    wfc_perm = wfc_perm.reshape(p3 * c3, features_dim).astype(jnp.bfloat16)
    bfc_row = bias(bfc)
    # Lane-dense output: pad N to a multiple of 128 (wrapper slices it off).
    features_pad = ((features_dim + 127) // 128) * 128
    if features_pad != features_dim:
        wfc_perm = jnp.pad(wfc_perm, ((0, 0), (0, features_pad - features_dim)))
        bfc_row = jnp.pad(bfc_row, ((0, 0), (0, features_pad - features_dim)))
    return {
        "w1": conv_w(w1), "b1": bias(b1),
        "w2": conv_w(w2), "b2": bias(b2),
        "w3": conv_w(w3), "b3": bias(b3),
        "wfc": wfc_perm, "bfc": bfc_row,
        "features_dim": features_dim, "features_pad": features_pad,
    }


def _conv1_patches(x_nchw, k, stride):
    """[B, C, H, W] -> [B*OH*OW, k*k*C] patches, column order (kh, kw, cin).
    TODO(synk): move conv1 patch extraction into the kernel (pass the NHWC
    image block and do the k*k shifted stride-4 slices in VMEM) to remove the
    extra HBM round trip of the expanded patch tensor; for now it stays as
    cheap wrapper-side XLA glue, run in bf16 to halve that traffic."""
    B, C, H, W = x_nchw.shape
    oh, ow = _conv_out(H, k, stride), _conv_out(W, k, stride)
    x = jnp.transpose(x_nchw, (0, 2, 3, 1))                       # NHWC
    pieces = [x[:, i:i + stride * (oh - 1) + 1:stride,
                 j:j + stride * (ow - 1) + 1:stride, :]
              for i in range(k) for j in range(k)]
    p = jnp.stack(pieces, axis=3)                                 # [B,oh,ow,k*k,C]
    return p.reshape(B * oh * ow, k * k * C), oh, ow


def _pick_batch_tile(batch, p1):
    """Batch-tile heuristic: full batch when small; otherwise a multiple-of-8
    divisor of B (keeps blocks (8,128)-legal) chosen so conv1's matmul
    M = tb*p1 >= 512 while keeping grid >= 2 for megacore sharding."""
    if batch <= 8:
        return batch
    divs = [t for t in range(8, batch, 8) if batch % t == 0]
    if not divs:
        # TODO(synk): pad the batch to a multiple of 8 instead of running grid=1.
        return batch
    for t in divs:
        if t * p1 >= 512:
            return t
    return divs[-1]


# -------------------------------- forward ---------------------------------- #
def cnn_encoder_forward(obs, keys, prepped, batch_tile=None):
    """Fused CNNEncoder forward: one pallas_call for conv1..conv3 + fc."""
    # bf16 cast BEFORE patch extraction halves the wrapper-side HBM traffic.
    x = jnp.concatenate([obs[k] for k in keys], axis=-3).astype(jnp.bfloat16)
    B = x.shape[0]
    (k1, s1, c1), (k2, s2, c2), (k3, s3, c3) = _CONV_CFG

    patches1, oh1, ow1 = _conv1_patches(x, k1, s1)
    kdim1 = patches1.shape[1]
    oh2, ow2 = _conv_out(oh1, k2, s2), _conv_out(ow1, k2, s2)
    oh3, ow3 = _conv_out(oh2, k3, s3), _conv_out(ow2, k3, s3)
    p1, p2, p3 = oh1 * ow1, oh2 * ow2, oh3 * ow3
    features_dim = prepped["features_dim"]
    features_pad = prepped["features_pad"]
    assert prepped["wfc"].shape == (p3 * c3, features_pad)

    tb = _pick_batch_tile(B, p1) if batch_tile is None else batch_tile
    assert B % tb == 0 and (tb == B or tb % 8 == 0), (B, tb)

    sel2 = jnp.asarray(_conv_selection(oh1, ow1, k2, s2), jnp.bfloat16)
    sel3 = jnp.asarray(_conv_selection(oh2, ow2, k3, s3), jnp.bfloat16)

    kernel = _build_fused_kernel(tb, p1, p2, p3, c1, c2, c3, k2 * k2, k3 * k3)

    def call(const_kwargs):
        def const2(arr):        # grid-constant 2-D operand (resident)
            return pl.BlockSpec(arr.shape, lambda g: (0, 0), **const_kwargs)

        def const3(arr):        # grid-constant 3-D operand (resident)
            return pl.BlockSpec(arr.shape, lambda g: (0, 0, 0), **const_kwargs)

        return pl.pallas_call(
            kernel,
            out_shape=jax.ShapeDtypeStruct((B, features_pad), jnp.float32),
            grid=(B // tb,),
            in_specs=[
                pl.BlockSpec((tb * p1, kdim1), lambda g: (g, 0)),   # conv1 patches
                const2(prepped["w1"]), const2(prepped["b1"]),
                const3(sel2), const2(prepped["w2"]), const2(prepped["b2"]),
                const3(sel3), const2(prepped["w3"]), const2(prepped["b3"]),
                const2(prepped["wfc"]), const2(prepped["bfc"]),
            ],
            out_specs=pl.BlockSpec((tb, features_pad), lambda g: (g, 0)),
            compiler_params=pltpu.CompilerParams(
                dimension_semantics=("parallel",),
                vmem_limit_bytes=64 * 1024 * 1024),
        )(patches1, prepped["w1"], prepped["b1"],
          sel2, prepped["w2"], prepped["b2"],
          sel3, prepped["w3"], prepped["b3"],
          prepped["wfc"], prepped["bfc"])

    try:
        # Single-buffer the grid-constant operands (halves their VMEM cost).
        out = call({"pipeline_mode": pl.Buffered(1)})
    except Exception:   # pragma: no cover - jax without BlockSpec pipeline_mode
        out = call({})
    return out[:, :features_dim]


# ------------------------- parameter construction -------------------------- #
def _init_conv(key, cout, cin, kh, kw):
    fan_in = cin * kh * kw
    bound = 1.0 / float(np.sqrt(fan_in))
    k1, k2 = jax.random.split(key)
    w = jax.random.uniform(k1, (cout, cin, kh, kw), jnp.float32, -bound, bound)
    b = jax.random.uniform(k2, (cout,), jnp.float32, -bound, bound)
    return w, b


def _init_linear(key, fan_in, fan_out):
    bound = 1.0 / float(np.sqrt(fan_in))
    k1, k2 = jax.random.split(key)
    w = jax.random.uniform(k1, (fan_out, fan_in), jnp.float32, -bound, bound)
    b = jax.random.uniform(k2, (fan_out,), jnp.float32, -bound, bound)
    return w, b


def make_cnn_encoder_params(key, in_channels, features_dim, screen_size):
    k1, k2, k3, k4 = jax.random.split(key, 4)
    params = {}
    params["conv1"] = _init_conv(k1, 32, in_channels, 8, 8)
    params["conv2"] = _init_conv(k2, 64, 32, 4, 4)
    params["conv3"] = _init_conv(k3, 64, 64, 3, 3)
    h = screen_size
    for (k, s, _) in _CONV_CFG:
        h = _conv_out(h, k, s)
    n_flatten = 64 * h * h
    params["fc"] = _init_linear(k4, n_flatten, features_dim)
    return params


# ---------------------------- pure-JAX reference ---------------------------- #
def _conv_ref(x, w, b, stride):
    out = lax.conv_general_dilated(
        x, w, window_strides=(stride, stride), padding="VALID",
        dimension_numbers=("NCHW", "OIHW", "NCHW"))
    return jnp.maximum(out + b[None, :, None, None], 0.0)


def cnn_encoder_reference(obs, keys, params):
    x = jnp.concatenate([obs[k] for k in keys], axis=-3).astype(jnp.float32)
    x = _conv_ref(x, *params["conv1"], stride=4)
    x = _conv_ref(x, *params["conv2"], stride=2)
    x = _conv_ref(x, *params["conv3"], stride=1)
    x = x.reshape(x.shape[0], -1)
    w_fc, b_fc = params["fc"]
    return jnp.maximum(x @ w_fc.T + b_fc, 0.0)


# ----------------------------------- main ----------------------------------- #
if __name__ == "__main__":
    B = 2
    keys_list = ["rgb", "depth"]
    per_key_channels = 2
    in_channels = per_key_channels * len(keys_list)   # 4
    screen_size = 36                                  # 36 -> 8 -> 3 -> 1
    features_dim = 32

    root = jax.random.PRNGKey(0)
    k_obs1, k_obs2, k_params = jax.random.split(root, 3)
    obs = {
        "rgb": jax.random.normal(
            k_obs1, (B, per_key_channels, screen_size, screen_size), jnp.float32),
        "depth": jax.random.normal(
            k_obs2, (B, per_key_channels, screen_size, screen_size), jnp.float32),
    }
    params = make_cnn_encoder_params(k_params, in_channels, features_dim, screen_size)
    prepped = prepare_cnn_encoder_params(params, screen_size)   # one-time prep

    out = jax.block_until_ready(cnn_encoder_forward(obs, keys_list, prepped))
    assert out.shape == (B, features_dim), out.shape

    ref = jax.block_until_ready(cnn_encoder_reference(obs, keys_list, params))
    max_err = float(jnp.max(jnp.abs(out - ref)))
    assert jnp.allclose(out, ref, rtol=5e-2, atol=2e-2), max_err

    print("KERNEL_OK")
</pallas_src>

<mosaic_0001>
module attributes {stable_mosaic.version = 11 : i64} {
  func.func @kernel(%arg0: i32, %arg1: memref<128x256xbf16, #tpu.memory_space<vmem>>, %arg2: memref<256x32xbf16, #tpu.memory_space<vmem>>, %arg3: memref<1x32xf32, #tpu.memory_space<vmem>>, %arg4: memref<16x9x64xbf16, #tpu.memory_space<vmem>>, %arg5: memref<512x64xbf16, #tpu.memory_space<vmem>>, %arg6: memref<1x64xf32, #tpu.memory_space<vmem>>, %arg7: memref<9x1x9xbf16, #tpu.memory_space<vmem>>, %arg8: memref<576x64xbf16, #tpu.memory_space<vmem>>, %arg9: memref<1x64xf32, #tpu.memory_space<vmem>>, %arg10: memref<64x128xbf16, #tpu.memory_space<vmem>>, %arg11: memref<1x128xf32, #tpu.memory_space<vmem>>, %arg12: memref<2x128xf32, #tpu.memory_space<vmem>>) attributes {dimension_semantics = [#tpu.dimension_semantics<parallel>], iteration_bounds = array<i64: 1>, scalar_prefetch = 0 : i64, scratch_operands = 0 : i64, tpu.core_type = #tpu.core_type<tc>, window_params = [{transform_indices = @transform_0, window_bounds = array<i64: 128, 256>}, {pipeline_mode = #tpu.pipeline_mode<synchronous>, transform_indices = @transform_1, window_bounds = array<i64: 256, 32>}, {pipeline_mode = #tpu.pipeline_mode<synchronous>, transform_indices = @transform_2, window_bounds = array<i64: 1, 32>}, {pipeline_mode = #tpu.pipeline_mode<synchronous>, transform_indices = @transform_3, window_bounds = array<i64: 16, 9, 64>}, {pipeline_mode = #tpu.pipeline_mode<synchronous>, transform_indices = @transform_4, window_bounds = array<i64: 512, 64>}, {pipeline_mode = #tpu.pipeline_mode<synchronous>, transform_indices = @transform_5, window_bounds = array<i64: 1, 64>}, {pipeline_mode = #tpu.pipeline_mode<synchronous>, transform_indices = @transform_6, window_bounds = array<i64: 9, 1, 9>}, {pipeline_mode = #tpu.pipeline_mode<synchronous>, transform_indices = @transform_7, window_bounds = array<i64: 576, 64>}, {pipeline_mode = #tpu.pipeline_mode<synchronous>, transform_indices = @transform_8, window_bounds = array<i64: 1, 64>}, {pipeline_mode = #tpu.pipeline_mode<synchronous>, transform_indices = @transform_9, window_bounds = array<i64: 64, 128>}, {pipeline_mode = #tpu.pipeline_mode<synchronous>, transform_indices = @transform_10, window_bounds = array<i64: 1, 128>}, {transform_indices = @transform_11, window_bounds = array<i64: 2, 128>}]} {
    %c0 = arith.constant 0 : index
    %c0_0 = arith.constant 0 : index
    %0 = vector.load %arg1[%c0, %c0_0] : memref<128x256xbf16, #tpu.memory_space<vmem>>, vector<128x256xbf16>
    %c0_1 = arith.constant 0 : index
    %c0_2 = arith.constant 0 : index
    %1 = vector.load %arg2[%c0_1, %c0_2] : memref<256x32xbf16, #tpu.memory_space<vmem>>, vector<256x32xbf16>
    %cst = arith.constant dense<0.000000e+00> : vector<128x32xf32>
    %2 = tpu.matmul %0, %1, %cst {dimension_numbers = #tpu.dot_dimension_numbers<[1], [0], [0], [1], [0, 0, 1, 1], [], []>} : vector<128x256xbf16>, vector<256x32xbf16>, vector<128x32xf32> -> vector<128x32xf32>
    %c0_3 = arith.constant 0 : index
    %c0_4 = arith.constant 0 : index
    %3 = vector.load %arg3[%c0_3, %c0_4] : memref<1x32xf32, #tpu.memory_space<vmem>>, vector<1x32xf32>
    %4 = vector.broadcast %3 : vector<1x32xf32> to vector<128x32xf32>
    %5 = arith.addf %2, %4 : vector<128x32xf32>
    %cst_5 = arith.constant 0.000000e+00 : f32
    %6 = vector.broadcast %cst_5 : f32 to vector<128x32xf32>
    %7 = arith.maximumf %5, %6 : vector<128x32xf32>
    %8 = arith.truncf %7 : vector<128x32xf32> to vector<128x32xbf16>
    %9 = vector.extract_strided_slice %8 {offsets = [0, 0], sizes = [64, 32], strides = [1, 1]} : vector<128x32xbf16> to vector<64x32xbf16>
    %c0_6 = arith.constant 0 : index
    %c0_7 = arith.constant 0 : index
    %c0_8 = arith.constant 0 : index
    %10 = vector.load %arg4[%c0_6, %c0_7, %c0_8] : memref<16x9x64xbf16, #tpu.memory_space<vmem>>, vector<1x9x64xbf16>
    %11 = vector.shape_cast %10 : vector<1x9x64xbf16> to vector<9x64xbf16>
    %cst_9 = arith.constant dense<0.000000e+00> : vector<9x32xf32>
    %12 = tpu.matmul %11, %9, %cst_9 {dimension_numbers = #tpu.dot_dimension_numbers<[1], [0], [0], [1], [0, 0, 1, 1], [], []>} : vector<9x64xbf16>, vector<64x32xbf16>, vector<9x32xf32> -> vector<9x32xf32>
    %13 = arith.truncf %12 : vector<9x32xf32> to vector<9x32xbf16>
    %c1 = arith.constant 1 : index
    %c0_10 = arith.constant 0 : index
    %c0_11 = arith.constant 0 : index
    %14 = vector.load %arg4[%c1, %c0_10, %c0_11] : memref<16x9x64xbf16, #tpu.memory_space<vmem>>, vector<1x9x64xbf16>
    %15 = vector.shape_cast %14 : vector<1x9x64xbf16> to vector<9x64xbf16>
    %cst_12 = arith.constant dense<0.000000e+00> : vector<9x32xf32>
    %16 = tpu.matmul %15, %9, %cst_12 {dimension_numbers = #tpu.dot_dimension_numbers<[1], [0], [0], [1], [0, 0, 1, 1], [], []>} : vector<9x64xbf16>, vector<64x32xbf16>, vector<9x32xf32> -> vector<9x32xf32>
    %17 = arith.truncf %16 : vector<9x32xf32> to vector<9x32xbf16>
    %c2 = arith.constant 2 : index
    %c0_13 = arith.constant 0 : index
    %c0_14 = arith.constant 0 : index
    %18 = vector.load %arg4[%c2, %c0_13, %c0_14] : memref<16x9x64xbf16, #tpu.memory_space<vmem>>, vector<1x9x64xbf16>
    %19 = vector.shape_cast %18 : vector<1x9x64xbf16> to vector<9x64xbf16>
    %cst_15 = arith.constant dense<0.000000e+00> : vector<9x32xf32>
    %20 = tpu.matmul %19, %9, %cst_15 {dimension_numbers = #tpu.dot_dimension_numbers<[1], [0], [0], [1], [0, 0, 1, 1], [], []>} : vector<9x64xbf16>, vector<64x32xbf16>, vector<9x32xf32> -> vector<9x32xf32>
    %21 = arith.truncf %20 : vector<9x32xf32> to vector<9x32xbf16>
    %c3 = arith.constant 3 : index
    %c0_16 = arith.constant 0 : index
    %c0_17 = arith.constant 0 : index
    %22 = vector.load %arg4[%c3, %c0_16, %c0_17] : memref<16x9x64xbf16, #tpu.memory_space<vmem>>, vector<1x9x64xbf16>
    %23 = vector.shape_cast %22 : vector<1x9x64xbf16> to vector<9x64xbf16>
    %cst_18 = arith.constant dense<0.000000e+00> : vector<9x32xf32>
    %24 = tpu.matmul %23, %9, %cst_18 {dimension_numbers = #tpu.dot_dimension_numbers<[1], [0], [0], [1], [0, 0, 1, 1], [], []>} : vector<9x64xbf16>, vector<64x32xbf16>, vector<9x32xf32> -> vector<9x32xf32>
    %25 = arith.truncf %24 : vector<9x32xf32> to vector<9x32xbf16>
    %c4 = arith.constant 4 : index
    %c0_19 = arith.constant 0 : index
    %c0_20 = arith.constant 0 : index
    %26 = vector.load %arg4[%c4, %c0_19, %c0_20] : memref<16x9x64xbf16, #tpu.memory_space<vmem>>, vector<1x9x64xbf16>
    %27 = vector.shape_cast %26 : vector<1x9x64xbf16> to vector<9x64xbf16>
    %cst_21 = arith.constant dense<0.000000e+00> : vector<9x32xf32>
    %28 = tpu.matmul %27, %9, %cst_21 {dimension_numbers = #tpu.dot_dimension_numbers<[1], [0], [0], [1], [0, 0, 1, 1], [], []>} : vector<9x64xbf16>, vector<64x32xbf16>, vector<9x32xf32> -> vector<9x32xf32>
    %29 = arith.truncf %28 : vector<9x32xf32> to vector<9x32xbf16>
    %c5 = arith.constant 5 : index
    %c0_22 = arith.constant 0 : index
    %c0_23 = arith.constant 0 : index
    %30 = vector.load %arg4[%c5, %c0_22, %c0_23] : memref<16x9x64xbf16, #tpu.memory_space<vmem>>, vector<1x9x64xbf16>
    %31 = vector.shape_cast %30 : vector<1x9x64xbf16> to vector<9x64xbf16>
    %cst_24 = arith.constant dense<0.000000e+00> : vector<9x32xf32>
    %32 = tpu.matmul %31, %9, %cst_24 {dimension_numbers = #tpu.dot_dimension_numbers<[1], [0], [0], [1], [0, 0, 1, 1], [], []>} : vector<9x64xbf16>, vector<64x32xbf16>, vector<9x32xf32> -> vector<9x32xf32>
    %33 = arith.truncf %32 : vector<9x32xf32> to vector<9x32xbf16>
    %c6 = arith.constant 6 : index
    %c0_25 = arith.constant 0 : index
    %c0_26 = arith.constant 0 : index
    %34 = vector.load %arg4[%c6, %c0_25, %c0_26] : memref<16x9x64xbf16, #tpu.memory_space<vmem>>, vector<1x9x64xbf16>
    %35 = vector.shape_cast %34 : vector<1x9x64xbf16> to vector<9x64xbf16>
    %cst_27 = arith.constant dense<0.000000e+00> : vector<9x32xf32>
    %36 = tpu.matmul %35, %9, %cst_27 {dimension_numbers = #tpu.dot_dimension_numbers<[1], [0], [0], [1], [0, 0, 1, 1], [], []>} : vector<9x64xbf16>, vector<64x32xbf16>, vector<9x32xf32> -> vector<9x32xf32>
    %37 = arith.truncf %36 : vector<9x32xf32> to vector<9x32xbf16>
    %c7 = arith.constant 7 : index
    %c0_28 = arith.constant 0 : index
    %c0_29 = arith.constant 0 : index
    %38 = vector.load %arg4[%c7, %c0_28, %c0_29] : memref<16x9x64xbf16, #tpu.memory_space<vmem>>, vector<1x9x64xbf16>
    %39 = vector.shape_cast %38 : vector<1x9x64xbf16> to vector<9x64xbf16>
    %cst_30 = arith.constant dense<0.000000e+00> : vector<9x32xf32>
    %40 = tpu.matmul %39, %9, %cst_30 {dimension_numbers = #tpu.dot_dimension_numbers<[1], [0], [0], [1], [0, 0, 1, 1], [], []>} : vector<9x64xbf16>, vector<64x32xbf16>, vector<9x32xf32> -> vector<9x32xf32>
    %41 = arith.truncf %40 : vector<9x32xf32> to vector<9x32xbf16>
    %c8 = arith.constant 8 : index
    %c0_31 = arith.constant 0 : index
    %c0_32 = arith.constant 0 : index
    %42 = vector.load %arg4[%c8, %c0_31, %c0_32] : memref<16x9x64xbf16, #tpu.memory_space<vmem>>, vector<1x9x64xbf16>
    %43 = vector.shape_cast %42 : vector<1x9x64xbf16> to vector<9x64xbf16>
    %cst_33 = arith.constant dense<0.000000e+00> : vector<9x32xf32>
    %44 = tpu.matmul %43, %9, %cst_33 {dimension_numbers = #tpu.dot_dimension_numbers<[1], [0], [0], [1], [0, 0, 1, 1], [], []>} : vector<9x64xbf16>, vector<64x32xbf16>, vector<9x32xf32> -> vector<9x32xf32>
    %45 = arith.truncf %44 : vector<9x32xf32> to vector<9x32xbf16>
    %c9 = arith.constant 9 : index
    %c0_34 = arith.constant 0 : index
    %c0_35 = arith.constant 0 : index
    %46 = vector.load %arg4[%c9, %c0_34, %c0_35] : memref<16x9x64xbf16, #tpu.memory_space<vmem>>, vector<1x9x64xbf16>
    %47 = vector.shape_cast %46 : vector<1x9x64xbf16> to vector<9x64xbf16>
    %cst_36 = arith.constant dense<0.000000e+00> : vector<9x32xf32>
    %48 = tpu.matmul %47, %9, %cst_36 {dimension_numbers = #tpu.dot_dimension_numbers<[1], [0], [0], [1], [0, 0, 1, 1], [], []>} : vector<9x64xbf16>, vector<64x32xbf16>, vector<9x32xf32> -> vector<9x32xf32>
    %49 = arith.truncf %48 : vector<9x32xf32> to vector<9x32xbf16>
    %c10 = arith.constant 10 : index
    %c0_37 = arith.constant 0 : index
    %c0_38 = arith.constant 0 : index
    %50 = vector.load %arg4[%c10, %c0_37, %c0_38] : memref<16x9x64xbf16, #tpu.memory_space<vmem>>, vector<1x9x64xbf16>
    %51 = vector.shape_cast %50 : vector<1x9x64xbf16> to vector<9x64xbf16>
    %cst_39 = arith.constant dense<0.000000e+00> : vector<9x32xf32>
    %52 = tpu.matmul %51, %9, %cst_39 {dimension_numbers = #tpu.dot_dimension_numbers<[1], [0], [0], [1], [0, 0, 1, 1], [], []>} : vector<9x64xbf16>, vector<64x32xbf16>, vector<9x32xf32> -> vector<9x32xf32>
    %53 = arith.truncf %52 : vector<9x32xf32> to vector<9x32xbf16>
    %c11 = arith.constant 11 : index
    %c0_40 = arith.constant 0 : index
    %c0_41 = arith.constant 0 : index
    %54 = vector.load %arg4[%c11, %c0_40, %c0_41] : memref<16x9x64xbf16, #tpu.memory_space<vmem>>, vector<1x9x64xbf16>
    %55 = vector.shape_cast %54 : vector<1x9x64xbf16> to vector<9x64xbf16>
    %cst_42 = arith.constant dense<0.000000e+00> : vector<9x32xf32>
    %56 = tpu.matmul %55, %9, %cst_42 {dimension_numbers = #tpu.dot_dimension_numbers<[1], [0], [0], [1], [0, 0, 1, 1], [], []>} : vector<9x64xbf16>, vector<64x32xbf16>, vector<9x32xf32> -> vector<9x32xf32>
    %57 = arith.truncf %56 : vector<9x32xf32> to vector<9x32xbf16>
    %c12 = arith.constant 12 : index
    %c0_43 = arith.constant 0 : index
    %c0_44 = arith.constant 0 : index
    %58 = vector.load %arg4[%c12, %c0_43, %c0_44] : memref<16x9x64xbf16, #tpu.memory_space<vmem>>, vector<1x9x64xbf16>
    %59 = vector.shape_cast %58 : vector<1x9x64xbf16> to vector<9x64xbf16>
    %cst_45 = arith.constant dense<0.000000e+00> : vector<9x32xf32>
    %60 = tpu.matmul %59, %9, %cst_45 {dimension_numbers = #tpu.dot_dimension_numbers<[1], [0], [0], [1], [0, 0, 1, 1], [], []>} : vector<9x64xbf16>, vector<64x32xbf16>, vector<9x32xf32> -> vector<9x32xf32>
    %61 = arith.truncf %60 : vector<9x32xf32> to vector<9x32xbf16>
    %c13 = arith.constant 13 : index
    %c0_46 = arith.constant 0 : index
    %c0_47 = arith.constant 0 : index
    %62 = vector.load %arg4[%c13, %c0_46, %c0_47] : memref<16x9x64xbf16, #tpu.memory_space<vmem>>, vector<1x9x64xbf16>
    %63 = vector.shape_cast %62 : vector<1x9x64xbf16> to vector<9x64xbf16>
    %cst_48 = arith.constant dense<0.000000e+00> : vector<9x32xf32>
    %64 = tpu.matmul %63, %9, %cst_48 {dimension_numbers = #tpu.dot_dimension_numbers<[1], [0], [0], [1], [0, 0, 1, 1], [], []>} : vector<9x64xbf16>, vector<64x32xbf16>, vector<9x32xf32> -> vector<9x32xf32>
    %65 = arith.truncf %64 : vector<9x32xf32> to vector<9x32xbf16>
    %c14 = arith.constant 14 : index
    %c0_49 = arith.constant 0 : index
    %c0_50 = arith.constant 0 : index
    %66 = vector.load %arg4[%c14, %c0_49, %c0_50] : memref<16x9x64xbf16, #tpu.memory_space<vmem>>, vector<1x9x64xbf16>
    %67 = vector.shape_cast %66 : vector<1x9x64xbf16> to vector<9x64xbf16>
    %cst_51 = arith.constant dense<0.000000e+00> : vector<9x32xf32>
    %68 = tpu.matmul %67, %9, %cst_51 {dimension_numbers = #tpu.dot_dimension_numbers<[1], [0], [0], [1], [0, 0, 1, 1], [], []>} : vector<9x64xbf16>, vector<64x32xbf16>, vector<9x32xf32> -> vector<9x32xf32>
    %69 = arith.truncf %68 : vector<9x32xf32> to vector<9x32xbf16>
    %c15 = arith.constant 15 : index
    %c0_52 = arith.constant 0 : index
    %c0_53 = arith.constant 0 : index
    %70 = vector.load %arg4[%c15, %c0_52, %c0_53] : memref<16x9x64xbf16, #tpu.memory_space<vmem>>, vector<1x9x64xbf16>
    %71 = vector.shape_cast %70 : vector<1x9x64xbf16> to vector<9x64xbf16>
    %cst_54 = arith.constant dense<0.000000e+00> : vector<9x32xf32>
    %72 = tpu.matmul %71, %9, %cst_54 {dimension_numbers = #tpu.dot_dimension_numbers<[1], [0], [0], [1], [0, 0, 1, 1], [], []>} : vector<9x64xbf16>, vector<64x32xbf16>, vector<9x32xf32> -> vector<9x32xf32>
    %73 = arith.truncf %72 : vector<9x32xf32> to vector<9x32xbf16>
    %74 = tpu.concatenate %13, %17, %21, %25, %29, %33, %37, %41, %45, %49, %53, %57, %61, %65, %69, %73 in 1 : vector<9x32xbf16>, vector<9x32xbf16>, vector<9x32xbf16>, vector<9x32xbf16>, vector<9x32xbf16>, vector<9x32xbf16>, vector<9x32xbf16>, vector<9x32xbf16>, vector<9x32xbf16>, vector<9x32xbf16>, vector<9x32xbf16>, vector<9x32xbf16>, vector<9x32xbf16>, vector<9x32xbf16>, vector<9x32xbf16>, vector<9x32xbf16> -> vector<9x512xbf16>
    %c0_55 = arith.constant 0 : index
    %c0_56 = arith.constant 0 : index
    %75 = vector.load %arg5[%c0_55, %c0_56] : memref<512x64xbf16, #tpu.memory_space<vmem>>, vector<512x64xbf16>
    %cst_57 = arith.constant dense<0.000000e+00> : vector<9x64xf32>
    %76 = tpu.matmul %74, %75, %cst_57 {dimension_numbers = #tpu.dot_dimension_numbers<[1], [0], [0], [1], [0, 0, 1, 1], [], []>} : vector<9x512xbf16>, vector<512x64xbf16>, vector<9x64xf32> -> vector<9x64xf32>
    %c0_58 = arith.constant 0 : index
    %c0_59 = arith.constant 0 : index
    %77 = vector.load %arg6[%c0_58, %c0_59] : memref<1x64xf32, #tpu.memory_space<vmem>>, vector<1x64xf32>
    %78 = vector.broadcast %77 : vector<1x64xf32> to vector<9x64xf32>
    %79 = arith.addf %76, %78 : vector<9x64xf32>
    %cst_60 = arith.constant 0.000000e+00 : f32
    %80 = vector.broadcast %cst_60 : f32 to vector<9x64xf32>
    %81 = arith.maximumf %79, %80 : vector<9x64xf32>
    %82 = arith.truncf %81 : vector<9x64xf32> to vector<9x64xbf16>
    %c0_61 = arith.constant 0 : index
    %c0_62 = arith.constant 0 : index
    %c0_63 = arith.constant 0 : index
    %83 = vector.load %arg7[%c0_61, %c0_62, %c0_63] : memref<9x1x9xbf16, #tpu.memory_space<vmem>>, vector<1x1x9xbf16>
    %84 = vector.shape_cast %83 : vector<1x1x9xbf16> to vector<1x9xbf16>
    %cst_64 = arith.constant dense<0.000000e+00> : vector<1x64xf32>
    %85 = tpu.matmul %84, %82, %cst_64 {dimension_numbers = #tpu.dot_dimension_numbers<[1], [0], [0], [1], [0, 0, 1, 1], [], []>} : vector<1x9xbf16>, vector<9x64xbf16>, vector<1x64xf32> -> vector<1x64xf32>
    %86 = arith.truncf %85 : vector<1x64xf32> to vector<1x64xbf16>
    %c1_65 = arith.constant 1 : index
    %c0_66 = arith.constant 0 : index
    %c0_67 = arith.constant 0 : index
    %87 = vector.load %arg7[%c1_65, %c0_66, %c0_67] : memref<9x1x9xbf16, #tpu.memory_space<vmem>>, vector<1x1x9xbf16>
    %88 = vector.shape_cast %87 : vector<1x1x9xbf16> to vector<1x9xbf16>
    %cst_68 = arith.constant dense<0.000000e+00> : vector<1x64xf32>
    %89 = tpu.matmul %88, %82, %cst_68 {dimension_numbers = #tpu.dot_dimension_numbers<[1], [0], [0], [1], [0, 0, 1, 1], [], []>} : vector<1x9xbf16>, vector<9x64xbf16>, vector<1x64xf32> -> vector<1x64xf32>
    %90 = arith.truncf %89 : vector<1x64xf32> to vector<1x64xbf16>
    %c2_69 = arith.constant 2 : index
    %c0_70 = arith.constant 0 : index
    %c0_71 = arith.constant 0 : index
    %91 = vector.load %arg7[%c2_69, %c0_70, %c0_71] : memref<9x1x9xbf16, #tpu.memory_space<vmem>>, vector<1x1x9xbf16>
    %92 = vector.shape_cast %91 : vector<1x1x9xbf16> to vector<1x9xbf16>
    %cst_72 = arith.constant dense<0.000000e+00> : vector<1x64xf32>
    %93 = tpu.matmul %92, %82, %cst_72 {dimension_numbers = #tpu.dot_dimension_numbers<[1], [0], [0], [1], [0, 0, 1, 1], [], []>} : vector<1x9xbf16>, vector<9x64xbf16>, vector<1x64xf32> -> vector<1x64xf32>
    %94 = arith.truncf %93 : vector<1x64xf32> to vector<1x64xbf16>
    %c3_73 = arith.constant 3 : index
    %c0_74 = arith.constant 0 : index
    %c0_75 = arith.constant 0 : index
    %95 = vector.load %arg7[%c3_73, %c0_74, %c0_75] : memref<9x1x9xbf16, #tpu.memory_space<vmem>>, vector<1x1x9xbf16>
    %96 = vector.shape_cast %95 : vector<1x1x9xbf16> to vector<1x9xbf16>
    %cst_76 = arith.constant dense<0.000000e+00> : vector<1x64xf32>
    %97 = tpu.matmul %96, %82, %cst_76 {dimension_numbers = #tpu.dot_dimension_numbers<[1], [0], [0], [1], [0, 0, 1, 1], [], []>} : vector<1x9xbf16>, vector<9x64xbf16>, vector<1x64xf32> -> vector<1x64xf32>
    %98 = arith.truncf %97 : vector<1x64xf32> to vector<1x64xbf16>
    %c4_77 = arith.constant 4 : index
    %c0_78 = arith.constant 0 : index
    %c0_79 = arith.constant 0 : index
    %99 = vector.load %arg7[%c4_77, %c0_78, %c0_79] : memref<9x1x9xbf16, #tpu.memory_space<vmem>>, vector<1x1x9xbf16>
    %100 = vector.shape_cast %99 : vector<1x1x9xbf16> to vector<1x9xbf16>
    %cst_80 = arith.constant dense<0.000000e+00> : vector<1x64xf32>
    %101 = tpu.matmul %100, %82, %cst_80 {dimension_numbers = #tpu.dot_dimension_numbers<[1], [0], [0], [1], [0, 0, 1, 1], [], []>} : vector<1x9xbf16>, vector<9x64xbf16>, vector<1x64xf32> -> vector<1x64xf32>
    %102 = arith.truncf %101 : vector<1x64xf32> to vector<1x64xbf16>
    %c5_81 = arith.constant 5 : index
    %c0_82 = arith.constant 0 : index
    %c0_83 = arith.constant 0 : index
    %103 = vector.load %arg7[%c5_81, %c0_82, %c0_83] : memref<9x1x9xbf16, #tpu.memory_space<vmem>>, vector<1x1x9xbf16>
    %104 = vector.shape_cast %103 : vector<1x1x9xbf16> to vector<1x9xbf16>
    %cst_84 = arith.constant dense<0.000000e+00> : vector<1x64xf32>
    %105 = tpu.matmul %104, %82, %cst_84 {dimension_numbers = #tpu.dot_dimension_numbers<[1], [0], [0], [1], [0, 0, 1, 1], [], []>} : vector<1x9xbf16>, vector<9x64xbf16>, vector<1x64xf32> -> vector<1x64xf32>
    %106 = arith.truncf %105 : vector<1x64xf32> to vector<1x64xbf16>
    %c6_85 = arith.constant 6 : index
    %c0_86 = arith.constant 0 : index
    %c0_87 = arith.constant 0 : index
    %107 = vector.load %arg7[%c6_85, %c0_86, %c0_87] : memref<9x1x9xbf16, #tpu.memory_space<vmem>>, vector<1x1x9xbf16>
    %108 = vector.shape_cast %107 : vector<1x1x9xbf16> to vector<1x9xbf16>
    %cst_88 = arith.constant dense<0.000000e+00> : vector<1x64xf32>
    %109 = tpu.matmul %108, %82, %cst_88 {dimension_numbers = #tpu.dot_dimension_numbers<[1], [0], [0], [1], [0, 0, 1, 1], [], []>} : vector<1x9xbf16>, vector<9x64xbf16>, vector<1x64xf32> -> vector<1x64xf32>
    %110 = arith.truncf %109 : vector<1x64xf32> to vector<1x64xbf16>
    %c7_89 = arith.constant 7 : index
    %c0_90 = arith.constant 0 : index
    %c0_91 = arith.constant 0 : index
    %111 = vector.load %arg7[%c7_89, %c0_90, %c0_91] : memref<9x1x9xbf16, #tpu.memory_space<vmem>>, vector<1x1x9xbf16>
    %112 = vector.shape_cast %111 : vector<1x1x9xbf16> to vector<1x9xbf16>
    %cst_92 = arith.constant dense<0.000000e+00> : vector<1x64xf32>
    %113 = tpu.matmul %112, %82, %cst_92 {dimension_numbers = #tpu.dot_dimension_numbers<[1], [0], [0], [1], [0, 0, 1, 1], [], []>} : vector<1x9xbf16>, vector<9x64xbf16>, vector<1x64xf32> -> vector<1x64xf32>
    %114 = arith.truncf %113 : vector<1x64xf32> to vector<1x64xbf16>
    %c8_93 = arith.constant 8 : index
    %c0_94 = arith.constant 0 : index
    %c0_95 = arith.constant 0 : index
    %115 = vector.load %arg7[%c8_93, %c0_94, %c0_95] : memref<9x1x9xbf16, #tpu.memory_space<vmem>>, vector<1x1x9xbf16>
    %116 = vector.shape_cast %115 : vector<1x1x9xbf16> to vector<1x9xbf16>
    %cst_96 = arith.constant dense<0.000000e+00> : vector<1x64xf32>
    %117 = tpu.matmul %116, %82, %cst_96 {dimension_numbers = #tpu.dot_dimension_numbers<[1], [0], [0], [1], [0, 0, 1, 1], [], []>} : vector<1x9xbf16>, vector<9x64xbf16>, vector<1x64xf32> -> vector<1x64xf32>
    %118 = arith.truncf %117 : vector<1x64xf32> to vector<1x64xbf16>
    %119 = tpu.concatenate %86, %90, %94, %98, %102, %106, %110, %114, %118 in 1 : vector<1x64xbf16>, vector<1x64xbf16>, vector<1x64xbf16>, vector<1x64xbf16>, vector<1x64xbf16>, vector<1x64xbf16>, vector<1x64xbf16>, vector<1x64xbf16>, vector<1x64xbf16> -> vector<1x576xbf16>
    %c0_97 = arith.constant 0 : index
    %c0_98 = arith.constant 0 : index
    %120 = vector.load %arg8[%c0_97, %c0_98] : memref<576x64xbf16, #tpu.memory_space<vmem>>, vector<576x64xbf16>
    %cst_99 = arith.constant dense<0.000000e+00> : vector<1x64xf32>
    %121 = tpu.matmul %119, %120, %cst_99 {dimension_numbers = #tpu.dot_dimension_numbers<[1], [0], [0], [1], [0, 0, 1, 1], [], []>} : vector<1x576xbf16>, vector<576x64xbf16>, vector<1x64xf32> -> vector<1x64xf32>
    %c0_100 = arith.constant 0 : index
    %c0_101 = arith.constant 0 : index
    %122 = vector.load %arg9[%c0_100, %c0_101] : memref<1x64xf32, #tpu.memory_space<vmem>>, vector<1x64xf32>
    %123 = arith.addf %121, %122 : vector<1x64xf32>
    %cst_102 = arith.constant 0.000000e+00 : f32
    %124 = vector.broadcast %cst_102 : f32 to vector<1x64xf32>
    %125 = arith.maximumf %123, %124 : vector<1x64xf32>
    %126 = arith.truncf %125 : vector<1x64xf32> to vector<1x64xbf16>
    %127 = vector.extract_strided_slice %8 {offsets = [64, 0], sizes = [64, 32], strides = [1, 1]} : vector<128x32xbf16> to vector<64x32xbf16>
    %c0_103 = arith.constant 0 : index
    %c0_104 = arith.constant 0 : index
    %c0_105 = arith.constant 0 : index
    %128 = vector.load %arg4[%c0_103, %c0_104, %c0_105] : memref<16x9x64xbf16, #tpu.memory_space<vmem>>, vector<1x9x64xbf16>
    %129 = vector.shape_cast %128 : vector<1x9x64xbf16> to vector<9x64xbf16>
    %cst_106 = arith.constant dense<0.000000e+00> : vector<9x32xf32>
    %130 = tpu.matmul %129, %127, %cst_106 {dimension_numbers = #tpu.dot_dimension_numbers<[1], [0], [0], [1], [0, 0, 1, 1], [], []>} : vector<9x64xbf16>, vector<64x32xbf16>, vector<9x32xf32> -> vector<9x32xf32>
    %131 = arith.truncf %130 : vector<9x32xf32> to vector<9x32xbf16>
    %c1_107 = arith.constant 1 : index
    %c0_108 = arith.constant 0 : index
    %c0_109 = arith.constant 0 : index
    %132 = vector.load %arg4[%c1_107, %c0_108, %c0_109] : memref<16x9x64xbf16, #tpu.memory_space<vmem>>, vector<1x9x64xbf16>
    %133 = vector.shape_cast %132 : vector<1x9x64xbf16> to vector<9x64xbf16>
    %cst_110 = arith.constant dense<0.000000e+00> : vector<9x32xf32>
    %134 = tpu.matmul %133, %127, %cst_110 {dimension_numbers = #tpu.dot_dimension_numbers<[1], [0], [0], [1], [0, 0, 1, 1], [], []>} : vector<9x64xbf16>, vector<64x32xbf16>, vector<9x32xf32> -> vector<9x32xf32>
    %135 = arith.truncf %134 : vector<9x32xf32> to vector<9x32xbf16>
    %c2_111 = arith.constant 2 : index
    %c0_112 = arith.constant 0 : index
    %c0_113 = arith.constant 0 : index
    %136 = vector.load %arg4[%c2_111, %c0_112, %c0_113] : memref<16x9x64xbf16, #tpu.memory_space<vmem>>, vector<1x9x64xbf16>
    %137 = vector.shape_cast %136 : vector<1x9x64xbf16> to vector<9x64xbf16>
    %cst_114 = arith.constant dense<0.000000e+00> : vector<9x32xf32>
    %138 = tpu.matmul %137, %127, %cst_114 {dimension_numbers = #tpu.dot_dimension_numbers<[1], [0], [0], [1], [0, 0, 1, 1], [], []>} : vector<9x64xbf16>, vector<64x32xbf16>, vector<9x32xf32> -> vector<9x32xf32>
    %139 = arith.truncf %138 : vector<9x32xf32> to vector<9x32xbf16>
    %c3_115 = arith.constant 3 : index
    %c0_116 = arith.constant 0 : index
    %c0_117 = arith.constant 0 : index
    %140 = vector.load %arg4[%c3_115, %c0_116, %c0_117] : memref<16x9x64xbf16, #tpu.memory_space<vmem>>, vector<1x9x64xbf16>
    %141 = vector.shape_cast %140 : vector<1x9x64xbf16> to vector<9x64xbf16>
    %cst_118 = arith.constant dense<0.000000e+00> : vector<9x32xf32>
    %142 = tpu.matmul %141, %127, %cst_118 {dimension_numbers = #tpu.dot_dimension_numbers<[1], [0], [0], [1], [0, 0, 1, 1], [], []>} : vector<9x64xbf16>, vector<64x32xbf16>, vector<9x32xf32> -> vector<9x32xf32>
    %143 = arith.truncf %142 : vector<9x32xf32> to vector<9x32xbf16>
    %c4_119 = arith.constant 4 : index
    %c0_120 = arith.constant 0 : index
    %c0_121 = arith.constant 0 : index
    %144 = vector.load %arg4[%c4_119, %c0_120, %c0_121] : memref<16x9x64xbf16, #tpu.memory_space<vmem>>, vector<1x9x64xbf16>
    %145 = vector.shape_cast %144 : vector<1x9x64xbf16> to vector<9x64xbf16>
    %cst_122 = arith.constant dense<0.000000e+00> : vector<9x32xf32>
    %146 = tpu.matmul %145, %127, %cst_122 {dimension_numbers = #tpu.dot_dimension_numbers<[1], [0], [0], [1], [0, 0, 1, 1], [], []>} : vector<9x64xbf16>, vector<64x32xbf16>, vector<9x32xf32> -> vector<9x32xf32>
    %147 = arith.truncf %146 : vector<9x32xf32> to vector<9x32xbf16>
    %c5_123 = arith.constant 5 : index
    %c0_124 = arith.constant 0 : index
    %c0_125 = arith.constant 0 : index
    %148 = vector.load %arg4[%c5_123, %c0_124, %c0_125] : memref<16x9x64xbf16, #tpu.memory_space<vmem>>, vector<1x9x64xbf16>
    %149 = vector.shape_cast %148 : vector<1x9x64xbf16> to vector<9x64xbf16>
    %cst_126 = arith.constant dense<0.000000e+00> : vector<9x32xf32>
    %150 = tpu.matmul %149, %127, %cst_126 {dimension_numbers = #tpu.dot_dimension_numbers<[1], [0], [0], [1], [0, 0, 1, 1], [], []>} : vector<9x64xbf16>, vector<64x32xbf16>, vector<9x32xf32> -> vector<9x32xf32>
    %151 = arith.truncf %150 : vector<9x32xf32> to vector<9x32xbf16>
    %c6_127 = arith.constant 6 : index
    %c0_128 = arith.constant 0 : index
    %c0_129 = arith.constant 0 : index
    %152 = vector.load %arg4[%c6_127, %c0_128, %c0_129] : memref<16x9x64xbf16, #tpu.memory_space<vmem>>, vector<1x9x64xbf16>
    %153 = vector.shape_cast %152 : vector<1x9x64xbf16> to vector<9x64xbf16>
    %cst_130 = arith.constant dense<0.000000e+00> : vector<9x32xf32>
    %154 = tpu.matmul %153, %127, %cst_130 {dimension_numbers = #tpu.dot_dimension_numbers<[1], [0], [0], [1], [0, 0, 1, 1], [], []>} : vector<9x64xbf16>, vector<64x32xbf16>, vector<9x32xf32> -> vector<9x32xf32>
    %155 = arith.truncf %154 : vector<9x32xf32> to vector<9x32xbf16>
    %c7_131 = arith.constant 7 : index
    %c0_132 = arith.constant 0 : index
    %c0_133 = arith.constant 0 : index
    %156 = vector.load %arg4[%c7_131, %c0_132, %c0_133] : memref<16x9x64xbf16, #tpu.memory_space<vmem>>, vector<1x9x64xbf16>
    %157 = vector.shape_cast %156 : vector<1x9x64xbf16> to vector<9x64xbf16>
    %cst_134 = arith.constant dense<0.000000e+00> : vector<9x32xf32>
    %158 = tpu.matmul %157, %127, %cst_134 {dimension_numbers = #tpu.dot_dimension_numbers<[1], [0], [0], [1], [0, 0, 1, 1], [], []>} : vector<9x64xbf16>, vector<64x32xbf16>, vector<9x32xf32> -> vector<9x32xf32>
    %159 = arith.truncf %158 : vector<9x32xf32> to vector<9x32xbf16>
    %c8_135 = arith.constant 8 : index
    %c0_136 = arith.constant 0 : index
    %c0_137 = arith.constant 0 : index
    %160 = vector.load %arg4[%c8_135, %c0_136, %c0_137] : memref<16x9x64xbf16, #tpu.memory_space<vmem>>, vector<1x9x64xbf16>
    %161 = vector.shape_cast %160 : vector<1x9x64xbf16> to vector<9x64xbf16>
    %cst_138 = arith.constant dense<0.000000e+00> : vector<9x32xf32>
    %162 = tpu.matmul %161, %127, %cst_138 {dimension_numbers = #tpu.dot_dimension_numbers<[1], [0], [0], [1], [0, 0, 1, 1], [], []>} : vector<9x64xbf16>, vector<64x32xbf16>, vector<9x32xf32> -> vector<9x32xf32>
    %163 = arith.truncf %162 : vector<9x32xf32> to vector<9x32xbf16>
    %c9_139 = arith.constant 9 : index
    %c0_140 = arith.constant 0 : index
    %c0_141 = arith.constant 0 : index
    %164 = vector.load %arg4[%c9_139, %c0_140, %c0_141] : memref<16x9x64xbf16, #tpu.memory_space<vmem>>, vector<1x9x64xbf16>
    %165 = vector.shape_cast %164 : vector<1x9x64xbf16> to vector<9x64xbf16>
    %cst_142 = arith.constant dense<0.000000e+00> : vector<9x32xf32>
    %166 = tpu.matmul %165, %127, %cst_142 {dimension_numbers = #tpu.dot_dimension_numbers<[1], [0], [0], [1], [0, 0, 1, 1], [], []>} : vector<9x64xbf16>, vector<64x32xbf16>, vector<9x32xf32> -> vector<9x32xf32>
    %167 = arith.truncf %166 : vector<9x32xf32> to vector<9x32xbf16>
    %c10_143 = arith.constant 10 : index
    %c0_144 = arith.constant 0 : index
    %c0_145 = arith.constant 0 : index
    %168 = vector.load %arg4[%c10_143, %c0_144, %c0_145] : memref<16x9x64xbf16, #tpu.memory_space<vmem>>, vector<1x9x64xbf16>
    %169 = vector.shape_cast %168 : vector<1x9x64xbf16> to vector<9x64xbf16>
    %cst_146 = arith.constant dense<0.000000e+00> : vector<9x32xf32>
    %170 = tpu.matmul %169, %127, %cst_146 {dimension_numbers = #tpu.dot_dimension_numbers<[1], [0], [0], [1], [0, 0, 1, 1], [], []>} : vector<9x64xbf16>, vector<64x32xbf16>, vector<9x32xf32> -> vector<9x32xf32>
    %171 = arith.truncf %170 : vector<9x32xf32> to vector<9x32xbf16>
    %c11_147 = arith.constant 11 : index
    %c0_148 = arith.constant 0 : index
    %c0_149 = arith.constant 0 : index
    %172 = vector.load %arg4[%c11_147, %c0_148, %c0_149] : memref<16x9x64xbf16, #tpu.memory_space<vmem>>, vector<1x9x64xbf16>
    %173 = vector.shape_cast %172 : vector<1x9x64xbf16> to vector<9x64xbf16>
    %cst_150 = arith.constant dense<0.000000e+00> : vector<9x32xf32>
    %174 = tpu.matmul %173, %127, %cst_150 {dimension_numbers = #tpu.dot_dimension_numbers<[1], [0], [0], [1], [0, 0, 1, 1], [], []>} : vector<9x64xbf16>, vector<64x32xbf16>, vector<9x32xf32> -> vector<9x32xf32>
    %175 = arith.truncf %174 : vector<9x32xf32> to vector<9x32xbf16>
    %c12_151 = arith.constant 12 : index
    %c0_152 = arith.constant 0 : index
    %c0_153 = arith.constant 0 : index
    %176 = vector.load %arg4[%c12_151, %c0_152, %c0_153] : memref<16x9x64xbf16, #tpu.memory_space<vmem>>, vector<1x9x64xbf16>
    %177 = vector.shape_cast %176 : vector<1x9x64xbf16> to vector<9x64xbf16>
    %cst_154 = arith.constant dense<0.000000e+00> : vector<9x32xf32>
    %178 = tpu.matmul %177, %127, %cst_154 {dimension_numbers = #tpu.dot_dimension_numbers<[1], [0], [0], [1], [0, 0, 1, 1], [], []>} : vector<9x64xbf16>, vector<64x32xbf16>, vector<9x32xf32> -> vector<9x32xf32>
    %179 = arith.truncf %178 : vector<9x32xf32> to vector<9x32xbf16>
    %c13_155 = arith.constant 13 : index
    %c0_156 = arith.constant 0 : index
    %c0_157 = arith.constant 0 : index
    %180 = vector.load %arg4[%c13_155, %c0_156, %c0_157] : memref<16x9x64xbf16, #tpu.memory_space<vmem>>, vector<1x9x64xbf16>
    %181 = vector.shape_cast %180 : vector<1x9x64xbf16> to vector<9x64xbf16>
    %cst_158 = arith.constant dense<0.000000e+00> : vector<9x32xf32>
    %182 = tpu.matmul %181, %127, %cst_158 {dimension_numbers = #tpu.dot_dimension_numbers<[1], [0], [0], [1], [0, 0, 1, 1], [], []>} : vector<9x64xbf16>, vector<64x32xbf16>, vector<9x32xf32> -> vector<9x32xf32>
    %183 = arith.truncf %182 : vector<9x32xf32> to vector<9x32xbf16>
    %c14_159 = arith.constant 14 : index
    %c0_160 = arith.constant 0 : index
    %c0_161 = arith.constant 0 : index
    %184 = vector.load %arg4[%c14_159, %c0_160, %c0_161] : memref<16x9x64xbf16, #tpu.memory_space<vmem>>, vector<1x9x64xbf16>
    %185 = vector.shape_cast %184 : vector<1x9x64xbf16> to vector<9x64xbf16>
    %cst_162 = arith.constant dense<0.000000e+00> : vector<9x32xf32>
    %186 = tpu.matmul %185, %127, %cst_162 {dimension_numbers = #tpu.dot_dimension_numbers<[1], [0], [0], [1], [0, 0, 1, 1], [], []>} : vector<9x64xbf16>, vector<64x32xbf16>, vector<9x32xf32> -> vector<9x32xf32>
    %187 = arith.truncf %186 : vector<9x32xf32> to vector<9x32xbf16>
    %c15_163 = arith.constant 15 : index
    %c0_164 = arith.constant 0 : index
    %c0_165 = arith.constant 0 : index
    %188 = vector.load %arg4[%c15_163, %c0_164, %c0_165] : memref<16x9x64xbf16, #tpu.memory_space<vmem>>, vector<1x9x64xbf16>
    %189 = vector.shape_cast %188 : vector<1x9x64xbf16> to vector<9x64xbf16>
    %cst_166 = arith.constant dense<0.000000e+00> : vector<9x32xf32>
    %190 = tpu.matmul %189, %127, %cst_166 {dimension_numbers = #tpu.dot_dimension_numbers<[1], [0], [0], [1], [0, 0, 1, 1], [], []>} : vector<9x64xbf16>, vector<64x32xbf16>, vector<9x32xf32> -> vector<9x32xf32>
    %191 = arith.truncf %190 : vector<9x32xf32> to vector<9x32xbf16>
    %192 = tpu.concatenate %131, %135, %139, %143, %147, %151, %155, %159, %163, %167, %171, %175, %179, %183, %187, %191 in 1 : vector<9x32xbf16>, vector<9x32xbf16>, vector<9x32xbf16>, vector<9x32xbf16>, vector<9x32xbf16>, vector<9x32xbf16>, vector<9x32xbf16>, vector<9x32xbf16>, vector<9x32xbf16>, vector<9x32xbf16>, vector<9x32xbf16>, vector<9x32xbf16>, vector<9x32xbf16>, vector<9x32xbf16>, vector<9x32xbf16>, vector<9x32xbf16> -> vector<9x512xbf16>
    %c0_167 = arith.constant 0 : index
    %c0_168 = arith.constant 0 : index
    %193 = vector.load %arg5[%c0_167, %c0_168] : memref<512x64xbf16, #tpu.memory_space<vmem>>, vector<512x64xbf16>
    %cst_169 = arith.constant dense<0.000000e+00> : vector<9x64xf32>
    %194 = tpu.matmul %192, %193, %cst_169 {dimension_numbers = #tpu.dot_dimension_numbers<[1], [0], [0], [1], [0, 0, 1, 1], [], []>} : vector<9x512xbf16>, vector<512x64xbf16>, vector<9x64xf32> -> vector<9x64xf32>
    %c0_170 = arith.constant 0 : index
    %c0_171 = arith.constant 0 : index
    %195 = vector.load %arg6[%c0_170, %c0_171] : memref<1x64xf32, #tpu.memory_space<vmem>>, vector<1x64xf32>
    %196 = vector.broadcast %195 : vector<1x64xf32> to vector<9x64xf32>
    %197 = arith.addf %194, %196 : vector<9x64xf32>
    %cst_172 = arith.constant 0.000000e+00 : f32
    %198 = vector.broadcast %cst_172 : f32 to vector<9x64xf32>
    %199 = arith.maximumf %197, %198 : vector<9x64xf32>
    %200 = arith.truncf %199 : vector<9x64xf32> to vector<9x64xbf16>
    %c0_173 = arith.constant 0 : index
    %c0_174 = arith.constant 0 : index
    %c0_175 = arith.constant 0 : index
    %201 = vector.load %arg7[%c0_173, %c0_174, %c0_175] : memref<9x1x9xbf16, #tpu.memory_space<vmem>>, vector<1x1x9xbf16>
    %202 = vector.shape_cast %201 : vector<1x1x9xbf16> to vector<1x9xbf16>
    %cst_176 = arith.constant dense<0.000000e+00> : vector<1x64xf32>
    %203 = tpu.matmul %202, %200, %cst_176 {dimension_numbers = #tpu.dot_dimension_numbers<[1], [0], [0], [1], [0, 0, 1, 1], [], []>} : vector<1x9xbf16>, vector<9x64xbf16>, vector<1x64xf32> -> vector<1x64xf32>
    %204 = arith.truncf %203 : vector<1x64xf32> to vector<1x64xbf16>
    %c1_177 = arith.constant 1 : index
    %c0_178 = arith.constant 0 : index
    %c0_179 = arith.constant 0 : index
    %205 = vector.load %arg7[%c1_177, %c0_178, %c0_179] : memref<9x1x9xbf16, #tpu.memory_space<vmem>>, vector<1x1x9xbf16>
    %206 = vector.shape_cast %205 : vector<1x1x9xbf16> to vector<1x9xbf16>
    %cst_180 = arith.constant dense<0.000000e+00> : vector<1x64xf32>
    %207 = tpu.matmul %206, %200, %cst_180 {dimension_numbers = #tpu.dot_dimension_numbers<[1], [0], [0], [1], [0, 0, 1, 1], [], []>} : vector<1x9xbf16>, vector<9x64xbf16>, vector<1x64xf32> -> vector<1x64xf32>
    %208 = arith.truncf %207 : vector<1x64xf32> to vector<1x64xbf16>
    %c2_181 = arith.constant 2 : index
    %c0_182 = arith.constant 0 : index
    %c0_183 = arith.constant 0 : index
    %209 = vector.load %arg7[%c2_181, %c0_182, %c0_183] : memref<9x1x9xbf16, #tpu.memory_space<vmem>>, vector<1x1x9xbf16>
    %210 = vector.shape_cast %209 : vector<1x1x9xbf16> to vector<1x9xbf16>
    %cst_184 = arith.constant dense<0.000000e+00> : vector<1x64xf32>
    %211 = tpu.matmul %210, %200, %cst_184 {dimension_numbers = #tpu.dot_dimension_numbers<[1], [0], [0], [1], [0, 0, 1, 1], [], []>} : vector<1x9xbf16>, vector<9x64xbf16>, vector<1x64xf32> -> vector<1x64xf32>
    %212 = arith.truncf %211 : vector<1x64xf32> to vector<1x64xbf16>
    %c3_185 = arith.constant 3 : index
    %c0_186 = arith.constant 0 : index
    %c0_187 = arith.constant 0 : index
    %213 = vector.load %arg7[%c3_185, %c0_186, %c0_187] : memref<9x1x9xbf16, #tpu.memory_space<vmem>>, vector<1x1x9xbf16>
    %214 = vector.shape_cast %213 : vector<1x1x9xbf16> to vector<1x9xbf16>
    %cst_188 = arith.constant dense<0.000000e+00> : vector<1x64xf32>
    %215 = tpu.matmul %214, %200, %cst_188 {dimension_numbers = #tpu.dot_dimension_numbers<[1], [0], [0], [1], [0, 0, 1, 1], [], []>} : vector<1x9xbf16>, vector<9x64xbf16>, vector<1x64xf32> -> vector<1x64xf32>
    %216 = arith.truncf %215 : vector<1x64xf32> to vector<1x64xbf16>
    %c4_189 = arith.constant 4 : index
    %c0_190 = arith.constant 0 : index
    %c0_191 = arith.constant 0 : index
    %217 = vector.load %arg7[%c4_189, %c0_190, %c0_191] : memref<9x1x9xbf16, #tpu.memory_space<vmem>>, vector<1x1x9xbf16>
    %218 = vector.shape_cast %217 : vector<1x1x9xbf16> to vector<1x9xbf16>
    %cst_192 = arith.constant dense<0.000000e+00> : vector<1x64xf32>
    %219 = tpu.matmul %218, %200, %cst_192 {dimension_numbers = #tpu.dot_dimension_numbers<[1], [0], [0], [1], [0, 0, 1, 1], [], []>} : vector<1x9xbf16>, vector<9x64xbf16>, vector<1x64xf32> -> vector<1x64xf32>
    %220 = arith.truncf %219 : vector<1x64xf32> to vector<1x64xbf16>
    %c5_193 = arith.constant 5 : index
    %c0_194 = arith.constant 0 : index
    %c0_195 = arith.constant 0 : index
    %221 = vector.load %arg7[%c5_193, %c0_194, %c0_195] : memref<9x1x9xbf16, #tpu.memory_space<vmem>>, vector<1x1x9xbf16>
    %222 = vector.shape_cast %221 : vector<1x1x9xbf16> to vector<1x9xbf16>
    %cst_196 = arith.constant dense<0.000000e+00> : vector<1x64xf32>
    %223 = tpu.matmul %222, %200, %cst_196 {dimension_numbers = #tpu.dot_dimension_numbers<[1], [0], [0], [1], [0, 0, 1, 1], [], []>} : vector<1x9xbf16>, vector<9x64xbf16>, vector<1x64xf32> -> vector<1x64xf32>
    %224 = arith.truncf %223 : vector<1x64xf32> to vector<1x64xbf16>
    %c6_197 = arith.constant 6 : index
    %c0_198 = arith.constant 0 : index
    %c0_199 = arith.constant 0 : index
    %225 = vector.load %arg7[%c6_197, %c0_198, %c0_199] : memref<9x1x9xbf16, #tpu.memory_space<vmem>>, vector<1x1x9xbf16>
    %226 = vector.shape_cast %225 : vector<1x1x9xbf16> to vector<1x9xbf16>
    %cst_200 = arith.constant dense<0.000000e+00> : vector<1x64xf32>
    %227 = tpu.matmul %226, %200, %cst_200 {dimension_numbers = #tpu.dot_dimension_numbers<[1], [0], [0], [1], [0, 0, 1, 1], [], []>} : vector<1x9xbf16>, vector<9x64xbf16>, vector<1x64xf32> -> vector<1x64xf32>
    %228 = arith.truncf %227 : vector<1x64xf32> to vector<1x64xbf16>
    %c7_201 = arith.constant 7 : index
    %c0_202 = arith.constant 0 : index
    %c0_203 = arith.constant 0 : index
    %229 = vector.load %arg7[%c7_201, %c0_202, %c0_203] : memref<9x1x9xbf16, #tpu.memory_space<vmem>>, vector<1x1x9xbf16>
    %230 = vector.shape_cast %229 : vector<1x1x9xbf16> to vector<1x9xbf16>
    %cst_204 = arith.constant dense<0.000000e+00> : vector<1x64xf32>
    %231 = tpu.matmul %230, %200, %cst_204 {dimension_numbers = #tpu.dot_dimension_numbers<[1], [0], [0], [1], [0, 0, 1, 1], [], []>} : vector<1x9xbf16>, vector<9x64xbf16>, vector<1x64xf32> -> vector<1x64xf32>
    %232 = arith.truncf %231 : vector<1x64xf32> to vector<1x64xbf16>
    %c8_205 = arith.constant 8 : index
    %c0_206 = arith.constant 0 : index
    %c0_207 = arith.constant 0 : index
    %233 = vector.load %arg7[%c8_205, %c0_206, %c0_207] : memref<9x1x9xbf16, #tpu.memory_space<vmem>>, vector<1x1x9xbf16>
    %234 = vector.shape_cast %233 : vector<1x1x9xbf16> to vector<1x9xbf16>
    %cst_208 = arith.constant dense<0.000000e+00> : vector<1x64xf32>
    %235 = tpu.matmul %234, %200, %cst_208 {dimension_numbers = #tpu.dot_dimension_numbers<[1], [0], [0], [1], [0, 0, 1, 1], [], []>} : vector<1x9xbf16>, vector<9x64xbf16>, vector<1x64xf32> -> vector<1x64xf32>
    %236 = arith.truncf %235 : vector<1x64xf32> to vector<1x64xbf16>
    %237 = tpu.concatenate %204, %208, %212, %216, %220, %224, %228, %232, %236 in 1 : vector<1x64xbf16>, vector<1x64xbf16>, vector<1x64xbf16>, vector<1x64xbf16>, vector<1x64xbf16>, vector<1x64xbf16>, vector<1x64xbf16>, vector<1x64xbf16>, vector<1x64xbf16> -> vector<1x576xbf16>
    %c0_209 = arith.constant 0 : index
    %c0_210 = arith.constant 0 : index
    %238 = vector.load %arg8[%c0_209, %c0_210] : memref<576x64xbf16, #tpu.memory_space<vmem>>, vector<576x64xbf16>
    %cst_211 = arith.constant dense<0.000000e+00> : vector<1x64xf32>
    %239 = tpu.matmul %237, %238, %cst_211 {dimension_numbers = #tpu.dot_dimension_numbers<[1], [0], [0], [1], [0, 0, 1, 1], [], []>} : vector<1x576xbf16>, vector<576x64xbf16>, vector<1x64xf32> -> vector<1x64xf32>
    %c0_212 = arith.constant 0 : index
    %c0_213 = arith.constant 0 : index
    %240 = vector.load %arg9[%c0_212, %c0_213] : memref<1x64xf32, #tpu.memory_space<vmem>>, vector<1x64xf32>
    %241 = arith.addf %239, %240 : vector<1x64xf32>
    %cst_214 = arith.constant 0.000000e+00 : f32
    %242 = vector.broadcast %cst_214 : f32 to vector<1x64xf32>
    %243 = arith.maximumf %241, %242 : vector<1x64xf32>
    %244 = arith.truncf %243 : vector<1x64xf32> to vector<1x64xbf16>
    %245 = tpu.concatenate %126, %244 in 0 : vector<1x64xbf16>, vector<1x64xbf16> -> vector<2x64xbf16>
    %c0_215 = arith.constant 0 : index
    %c0_216 = arith.constant 0 : index
    %246 = vector.load %arg10[%c0_215, %c0_216] : memref<64x128xbf16, #tpu.memory_space<vmem>>, vector<64x128xbf16>
    %cst_217 = arith.constant dense<0.000000e+00> : vector<2x128xf32>
    %247 = tpu.matmul %245, %246, %cst_217 {dimension_numbers = #tpu.dot_dimension_numbers<[1], [0], [0], [1], [0, 0, 1, 1], [], []>} : vector<2x64xbf16>, vector<64x128xbf16>, vector<2x128xf32> -> vector<2x128xf32>
    %c0_218 = arith.constant 0 : index
    %c0_219 = arith.constant 0 : index
    %248 = vector.load %arg11[%c0_218, %c0_219] : memref<1x128xf32, #tpu.memory_space<vmem>>, vector<1x128xf32>
    %249 = vector.broadcast %248 : vector<1x128xf32> to vector<2x128xf32>
    %250 = arith.addf %247, %249 : vector<2x128xf32>
    %cst_220 = arith.constant 0.000000e+00 : f32
    %251 = vector.broadcast %cst_220 : f32 to vector<2x128xf32>
    %252 = arith.maximumf %250, %251 : vector<2x128xf32>
    %c0_221 = arith.constant 0 : index
    %c0_222 = arith.constant 0 : index
    %253 = vector.load %arg12[%c0_221, %c0_222] : memref<2x128xf32, #tpu.memory_space<vmem>>, vector<2x128xf32>
    tpu.vector_store %arg12[%c0_221, %c0_222], %252 {strides = array<i32>} : memref<2x128xf32, #tpu.memory_space<vmem>>, vector<2x128xf32>,
    return
  }
  func.func @transform_0(%arg0: i32) -> (i32, i32) {
    %c0_i32 = arith.constant 0 : i32
    %c0_i32_0 = arith.constant 0 : i32
    return %arg0, %c0_i32 : i32, i32
  }
  func.func @transform_1(%arg0: i32) -> (i32, i32) {
    %c0_i32 = arith.constant 0 : i32
    %c0_i32_0 = arith.constant 0 : i32
    %c0_i32_1 = arith.constant 0 : i32
    return %c0_i32, %c0_i32_0 : i32, i32
  }
  func.func @transform_2(%arg0: i32) -> (i32, i32) {
    %c0_i32 = arith.constant 0 : i32
    %c0_i32_0 = arith.constant 0 : i32
    %c0_i32_1 = arith.constant 0 : i32
    return %c0_i32, %c0_i32_0 : i32, i32
  }
  func.func @transform_3(%arg0: i32) -> (i32, i32, i32) {
    %c0_i32 = arith.constant 0 : i32
    %c0_i32_0 = arith.constant 0 : i32
    %c0_i32_1 = arith.constant 0 : i32
    %c0_i32_2 = arith.constant 0 : i32
    return %c0_i32, %c0_i32_0, %c0_i32_1 : i32, i32, i32
  }
  func.func @transform_4(%arg0: i32) -> (i32, i32) {
    %c0_i32 = arith.constant 0 : i32
    %c0_i32_0 = arith.constant 0 : i32
    %c0_i32_1 = arith.constant 0 : i32
    return %c0_i32, %c0_i32_0 : i32, i32
  }
  func.func @transform_5(%arg0: i32) -> (i32, i32) {
    %c0_i32 = arith.constant 0 : i32
    %c0_i32_0 = arith.constant 0 : i32
    %c0_i32_1 = arith.constant 0 : i32
    return %c0_i32, %c0_i32_0 : i32, i32
  }
  func.func @transform_6(%arg0: i32) -> (i32, i32, i32) {
    %c0_i32 = arith.constant 0 : i32
    %c0_i32_0 = arith.constant 0 : i32
    %c0_i32_1 = arith.constant 0 : i32
    %c0_i32_2 = arith.constant 0 : i32
    return %c0_i32, %c0_i32_0, %c0_i32_1 : i32, i32, i32
  }
  func.func @transform_7(%arg0: i32) -> (i32, i32) {
    %c0_i32 = arith.constant 0 : i32
    %c0_i32_0 = arith.constant 0 : i32
    %c0_i32_1 = arith.constant 0 : i32
    return %c0_i32, %c0_i32_0 : i32, i32
  }
  func.func @transform_8(%arg0: i32) -> (i32, i32) {
    %c0_i32 = arith.constant 0 : i32
    %c0_i32_0 = arith.constant 0 : i32
    %c0_i32_1 = arith.constant 0 : i32
    return %c0_i32, %c0_i32_0 : i32, i32
  }
  func.func @transform_9(%arg0: i32) -> (i32, i32) {
    %c0_i32 = arith.constant 0 : i32
    %c0_i32_0 = arith.constant 0 : i32
    %c0_i32_1 = arith.constant 0 : i32
    return %c0_i32, %c0_i32_0 : i32, i32
  }
  func.func @transform_10(%arg0: i32) -> (i32, i32) {
    %c0_i32 = arith.constant 0 : i32
    %c0_i32_0 = arith.constant 0 : i32
    %c0_i32_1 = arith.constant 0 : i32
    return %c0_i32, %c0_i32_0 : i32, i32
  }
  func.func @transform_11(%arg0: i32) -> (i32, i32) {
    %c0_i32 = arith.constant 0 : i32
    %c0_i32_0 = arith.constant 0 : i32
    return %arg0, %c0_i32 : i32, i32
  }
}

module attributes {stable_mosaic.version = 11 : i64} {
  func.func @kernel(%arg0: i32, %arg1: memref<128x256xbf16, #tpu.memory_space<vmem>>, %arg2: memref<256x32xbf16, #tpu.memory_space<vmem>>, %arg3: memref<1x32xf32, #tpu.memory_space<vmem>>, %arg4: memref<16x9x64xbf16, #tpu.memory_space<vmem>>, %arg5: memref<512x64xbf16, #tpu.memory_space<vmem>>, %arg6: memref<1x64xf32, #tpu.memory_space<vmem>>, %arg7: memref<9x1x9xbf16, #tpu.memory_space<vmem>>, %arg8: memref<576x64xbf16, #tpu.memory_space<vmem>>, %arg9: memref<1x64xf32, #tpu.memory_space<vmem>>, %arg10: memref<64x128xbf16, #tpu.memory_space<vmem>>, %arg11: memref<1x128xf32, #tpu.memory_space<vmem>>, %arg12: memref<2x128xf32, #tpu.memory_space<vmem>>) attributes {dimension_semantics = [#tpu.dimension_semantics<parallel>], iteration_bounds = array<i64: 1>, scalar_prefetch = 0 : i64, scratch_operands = 0 : i64, tpu.core_type = #tpu.core_type<tc>, window_params = [{transform_indices = @transform_0, window_bounds = array<i64: 128, 256>}, {pipeline_mode = #tpu.pipeline_mode<synchronous>, transform_indices = @transform_1, window_bounds = array<i64: 256, 32>}, {pipeline_mode = #tpu.pipeline_mode<synchronous>, transform_indices = @transform_2, window_bounds = array<i64: 1, 32>}, {pipeline_mode = #tpu.pipeline_mode<synchronous>, transform_indices = @transform_3, window_bounds = array<i64: 16, 9, 64>}, {pipeline_mode = #tpu.pipeline_mode<synchronous>, transform_indices = @transform_4, window_bounds = array<i64: 512, 64>}, {pipeline_mode = #tpu.pipeline_mode<synchronous>, transform_indices = @transform_5, window_bounds = array<i64: 1, 64>}, {pipeline_mode = #tpu.pipeline_mode<synchronous>, transform_indices = @transform_6, window_bounds = array<i64: 9, 1, 9>}, {pipeline_mode = #tpu.pipeline_mode<synchronous>, transform_indices = @transform_7, window_bounds = array<i64: 576, 64>}, {pipeline_mode = #tpu.pipeline_mode<synchronous>, transform_indices = @transform_8, window_bounds = array<i64: 1, 64>}, {pipeline_mode = #tpu.pipeline_mode<synchronous>, transform_indices = @transform_9, window_bounds = array<i64: 64, 128>}, {pipeline_mode = #tpu.pipeline_mode<synchronous>, transform_indices = @transform_10, window_bounds = array<i64: 1, 128>}, {transform_indices = @transform_11, window_bounds = array<i64: 2, 128>}]} {
    %c0 = arith.constant 0 : index
    %c0_0 = arith.constant 0 : index
    %0 = vector.load %arg1[%c0, %c0_0] : memref<128x256xbf16, #tpu.memory_space<vmem>>, vector<128x256xbf16>
    %c0_1 = arith.constant 0 : index
    %c0_2 = arith.constant 0 : index
    %1 = vector.load %arg2[%c0_1, %c0_2] : memref<256x32xbf16, #tpu.memory_space<vmem>>, vector<256x32xbf16>
    %cst = arith.constant dense<0.000000e+00> : vector<128x32xf32>
    %2 = tpu.matmul %0, %1, %cst {dimension_numbers = #tpu.dot_dimension_numbers<[1], [0], [0], [1], [0, 0, 1, 1], [], []>} : vector<128x256xbf16>, vector<256x32xbf16>, vector<128x32xf32> -> vector<128x32xf32>
    %c0_3 = arith.constant 0 : index
    %c0_4 = arith.constant 0 : index
    %3 = vector.load %arg3[%c0_3, %c0_4] : memref<1x32xf32, #tpu.memory_space<vmem>>, vector<1x32xf32>
    %4 = vector.broadcast %3 : vector<1x32xf32> to vector<128x32xf32>
    %5 = arith.addf %2, %4 : vector<128x32xf32>
    %cst_5 = arith.constant 0.000000e+00 : f32
    %6 = vector.broadcast %cst_5 : f32 to vector<128x32xf32>
    %7 = arith.maximumf %5, %6 : vector<128x32xf32>
    %8 = arith.truncf %7 : vector<128x32xf32> to vector<128x32xbf16>
    %9 = vector.extract_strided_slice %8 {offsets = [0, 0], sizes = [64, 32], strides = [1, 1]} : vector<128x32xbf16> to vector<64x32xbf16>
    %c0_6 = arith.constant 0 : index
    %c0_7 = arith.constant 0 : index
    %c0_8 = arith.constant 0 : index
    %10 = vector.load %arg4[%c0_6, %c0_7, %c0_8] : memref<16x9x64xbf16, #tpu.memory_space<vmem>>, vector<1x9x64xbf16>
    %11 = vector.shape_cast %10 : vector<1x9x64xbf16> to vector<9x64xbf16>
    %cst_9 = arith.constant dense<0.000000e+00> : vector<9x32xf32>
    %12 = tpu.matmul %11, %9, %cst_9 {dimension_numbers = #tpu.dot_dimension_numbers<[1], [0], [0], [1], [0, 0, 1, 1], [], []>} : vector<9x64xbf16>, vector<64x32xbf16>, vector<9x32xf32> -> vector<9x32xf32>
    %13 = arith.truncf %12 : vector<9x32xf32> to vector<9x32xbf16>
    %c1 = arith.constant 1 : index
    %c0_10 = arith.constant 0 : index
    %c0_11 = arith.constant 0 : index
    %14 = vector.load %arg4[%c1, %c0_10, %c0_11] : memref<16x9x64xbf16, #tpu.memory_space<vmem>>, vector<1x9x64xbf16>
    %15 = vector.shape_cast %14 : vector<1x9x64xbf16> to vector<9x64xbf16>
    %cst_12 = arith.constant dense<0.000000e+00> : vector<9x32xf32>
    %16 = tpu.matmul %15, %9, %cst_12 {dimension_numbers = #tpu.dot_dimension_numbers<[1], [0], [0], [1], [0, 0, 1, 1], [], []>} : vector<9x64xbf16>, vector<64x32xbf16>, vector<9x32xf32> -> vector<9x32xf32>
    %17 = arith.truncf %16 : vector<9x32xf32> to vector<9x32xbf16>
    %c2 = arith.constant 2 : index
    %c0_13 = arith.constant 0 : index
    %c0_14 = arith.constant 0 : index
    %18 = vector.load %arg4[%c2, %c0_13, %c0_14] : memref<16x9x64xbf16, #tpu.memory_space<vmem>>, vector<1x9x64xbf16>
    %19 = vector.shape_cast %18 : vector<1x9x64xbf16> to vector<9x64xbf16>
    %cst_15 = arith.constant dense<0.000000e+00> : vector<9x32xf32>
    %20 = tpu.matmul %19, %9, %cst_15 {dimension_numbers = #tpu.dot_dimension_numbers<[1], [0], [0], [1], [0, 0, 1, 1], [], []>} : vector<9x64xbf16>, vector<64x32xbf16>, vector<9x32xf32> -> vector<9x32xf32>
    %21 = arith.truncf %20 : vector<9x32xf32> to vector<9x32xbf16>
    %c3 = arith.constant 3 : index
    %c0_16 = arith.constant 0 : index
    %c0_17 = arith.constant 0 : index
    %22 = vector.load %arg4[%c3, %c0_16, %c0_17] : memref<16x9x64xbf16, #tpu.memory_space<vmem>>, vector<1x9x64xbf16>
    %23 = vector.shape_cast %22 : vector<1x9x64xbf16> to vector<9x64xbf16>
    %cst_18 = arith.constant dense<0.000000e+00> : vector<9x32xf32>
    %24 = tpu.matmul %23, %9, %cst_18 {dimension_numbers = #tpu.dot_dimension_numbers<[1], [0], [0], [1], [0, 0, 1, 1], [], []>} : vector<9x64xbf16>, vector<64x32xbf16>, vector<9x32xf32> -> vector<9x32xf32>
    %25 = arith.truncf %24 : vector<9x32xf32> to vector<9x32xbf16>
    %c4 = arith.constant 4 : index
    %c0_19 = arith.constant 0 : index
    %c0_20 = arith.constant 0 : index
    %26 = vector.load %arg4[%c4, %c0_19, %c0_20] : memref<16x9x64xbf16, #tpu.memory_space<vmem>>, vector<1x9x64xbf16>
    %27 = vector.shape_cast %26 : vector<1x9x64xbf16> to vector<9x64xbf16>
    %cst_21 = arith.constant dense<0.000000e+00> : vector<9x32xf32>
    %28 = tpu.matmul %27, %9, %cst_21 {dimension_numbers = #tpu.dot_dimension_numbers<[1], [0], [0], [1], [0, 0, 1, 1], [], []>} : vector<9x64xbf16>, vector<64x32xbf16>, vector<9x32xf32> -> vector<9x32xf32>
    %29 = arith.truncf %28 : vector<9x32xf32> to vector<9x32xbf16>
    %c5 = arith.constant 5 : index
    %c0_22 = arith.constant 0 : index
    %c0_23 = arith.constant 0 : index
    %30 = vector.load %arg4[%c5, %c0_22, %c0_23] : memref<16x9x64xbf16, #tpu.memory_space<vmem>>, vector<1x9x64xbf16>
    %31 = vector.shape_cast %30 : vector<1x9x64xbf16> to vector<9x64xbf16>
    %cst_24 = arith.constant dense<0.000000e+00> : vector<9x32xf32>
    %32 = tpu.matmul %31, %9, %cst_24 {dimension_numbers = #tpu.dot_dimension_numbers<[1], [0], [0], [1], [0, 0, 1, 1], [], []>} : vector<9x64xbf16>, vector<64x32xbf16>, vector<9x32xf32> -> vector<9x32xf32>
    %33 = arith.truncf %32 : vector<9x32xf32> to vector<9x32xbf16>
    %c6 = arith.constant 6 : index
    %c0_25 = arith.constant 0 : index
    %c0_26 = arith.constant 0 : index
    %34 = vector.load %arg4[%c6, %c0_25, %c0_26] : memref<16x9x64xbf16, #tpu.memory_space<vmem>>, vector<1x9x64xbf16>
    %35 = vector.shape_cast %34 : vector<1x9x64xbf16> to vector<9x64xbf16>
    %cst_27 = arith.constant dense<0.000000e+00> : vector<9x32xf32>
    %36 = tpu.matmul %35, %9, %cst_27 {dimension_numbers = #tpu.dot_dimension_numbers<[1], [0], [0], [1], [0, 0, 1, 1], [], []>} : vector<9x64xbf16>, vector<64x32xbf16>, vector<9x32xf32> -> vector<9x32xf32>
    %37 = arith.truncf %36 : vector<9x32xf32> to vector<9x32xbf16>
    %c7 = arith.constant 7 : index
    %c0_28 = arith.constant 0 : index
    %c0_29 = arith.constant 0 : index
    %38 = vector.load %arg4[%c7, %c0_28, %c0_29] : memref<16x9x64xbf16, #tpu.memory_space<vmem>>, vector<1x9x64xbf16>
    %39 = vector.shape_cast %38 : vector<1x9x64xbf16> to vector<9x64xbf16>
    %cst_30 = arith.constant dense<0.000000e+00> : vector<9x32xf32>
    %40 = tpu.matmul %39, %9, %cst_30 {dimension_numbers = #tpu.dot_dimension_numbers<[1], [0], [0], [1], [0, 0, 1, 1], [], []>} : vector<9x64xbf16>, vector<64x32xbf16>, vector<9x32xf32> -> vector<9x32xf32>
    %41 = arith.truncf %40 : vector<9x32xf32> to vector<9x32xbf16>
    %c8 = arith.constant 8 : index
    %c0_31 = arith.constant 0 : index
    %c0_32 = arith.constant 0 : index
    %42 = vector.load %arg4[%c8, %c0_31, %c0_32] : memref<16x9x64xbf16, #tpu.memory_space<vmem>>, vector<1x9x64xbf16>
    %43 = vector.shape_cast %42 : vector<1x9x64xbf16> to vector<9x64xbf16>
    %cst_33 = arith.constant dense<0.000000e+00> : vector<9x32xf32>
    %44 = tpu.matmul %43, %9, %cst_33 {dimension_numbers = #tpu.dot_dimension_numbers<[1], [0], [0], [1], [0, 0, 1, 1], [], []>} : vector<9x64xbf16>, vector<64x32xbf16>, vector<9x32xf32> -> vector<9x32xf32>
    %45 = arith.truncf %44 : vector<9x32xf32> to vector<9x32xbf16>
    %c9 = arith.constant 9 : index
    %c0_34 = arith.constant 0 : index
    %c0_35 = arith.constant 0 : index
    %46 = vector.load %arg4[%c9, %c0_34, %c0_35] : memref<16x9x64xbf16, #tpu.memory_space<vmem>>, vector<1x9x64xbf16>
    %47 = vector.shape_cast %46 : vector<1x9x64xbf16> to vector<9x64xbf16>
    %cst_36 = arith.constant dense<0.000000e+00> : vector<9x32xf32>
    %48 = tpu.matmul %47, %9, %cst_36 {dimension_numbers = #tpu.dot_dimension_numbers<[1], [0], [0], [1], [0, 0, 1, 1], [], []>} : vector<9x64xbf16>, vector<64x32xbf16>, vector<9x32xf32> -> vector<9x32xf32>
    %49 = arith.truncf %48 : vector<9x32xf32> to vector<9x32xbf16>
    %c10 = arith.constant 10 : index
    %c0_37 = arith.constant 0 : index
    %c0_38 = arith.constant 0 : index
    %50 = vector.load %arg4[%c10, %c0_37, %c0_38] : memref<16x9x64xbf16, #tpu.memory_space<vmem>>, vector<1x9x64xbf16>
    %51 = vector.shape_cast %50 : vector<1x9x64xbf16> to vector<9x64xbf16>
    %cst_39 = arith.constant dense<0.000000e+00> : vector<9x32xf32>
    %52 = tpu.matmul %51, %9, %cst_39 {dimension_numbers = #tpu.dot_dimension_numbers<[1], [0], [0], [1], [0, 0, 1, 1], [], []>} : vector<9x64xbf16>, vector<64x32xbf16>, vector<9x32xf32> -> vector<9x32xf32>
    %53 = arith.truncf %52 : vector<9x32xf32> to vector<9x32xbf16>
    %c11 = arith.constant 11 : index
    %c0_40 = arith.constant 0 : index
    %c0_41 = arith.constant 0 : index
    %54 = vector.load %arg4[%c11, %c0_40, %c0_41] : memref<16x9x64xbf16, #tpu.memory_space<vmem>>, vector<1x9x64xbf16>
    %55 = vector.shape_cast %54 : vector<1x9x64xbf16> to vector<9x64xbf16>
    %cst_42 = arith.constant dense<0.000000e+00> : vector<9x32xf32>
    %56 = tpu.matmul %55, %9, %cst_42 {dimension_numbers = #tpu.dot_dimension_numbers<[1], [0], [0], [1], [0, 0, 1, 1], [], []>} : vector<9x64xbf16>, vector<64x32xbf16>, vector<9x32xf32> -> vector<9x32xf32>
    %57 = arith.truncf %56 : vector<9x32xf32> to vector<9x32xbf16>
    %c12 = arith.constant 12 : index
    %c0_43 = arith.constant 0 : index
    %c0_44 = arith.constant 0 : index
    %58 = vector.load %arg4[%c12, %c0_43, %c0_44] : memref<16x9x64xbf16, #tpu.memory_space<vmem>>, vector<1x9x64xbf16>
    %59 = vector.shape_cast %58 : vector<1x9x64xbf16> to vector<9x64xbf16>
    %cst_45 = arith.constant dense<0.000000e+00> : vector<9x32xf32>
    %60 = tpu.matmul %59, %9, %cst_45 {dimension_numbers = #tpu.dot_dimension_numbers<[1], [0], [0], [1], [0, 0, 1, 1], [], []>} : vector<9x64xbf16>, vector<64x32xbf16>, vector<9x32xf32> -> vector<9x32xf32>
    %61 = arith.truncf %60 : vector<9x32xf32> to vector<9x32xbf16>
    %c13 = arith.constant 13 : index
    %c0_46 = arith.constant 0 : index
    %c0_47 = arith.constant 0 : index
    %62 = vector.load %arg4[%c13, %c0_46, %c0_47] : memref<16x9x64xbf16, #tpu.memory_space<vmem>>, vector<1x9x64xbf16>
    %63 = vector.shape_cast %62 : vector<1x9x64xbf16> to vector<9x64xbf16>
    %cst_48 = arith.constant dense<0.000000e+00> : vector<9x32xf32>
    %64 = tpu.matmul %63, %9, %cst_48 {dimension_numbers = #tpu.dot_dimension_numbers<[1], [0], [0], [1], [0, 0, 1, 1], [], []>} : vector<9x64xbf16>, vector<64x32xbf16>, vector<9x32xf32> -> vector<9x32xf32>
    %65 = arith.truncf %64 : vector<9x32xf32> to vector<9x32xbf16>
    %c14 = arith.constant 14 : index
    %c0_49 = arith.constant 0 : index
    %c0_50 = arith.constant 0 : index
    %66 = vector.load %arg4[%c14, %c0_49, %c0_50] : memref<16x9x64xbf16, #tpu.memory_space<vmem>>, vector<1x9x64xbf16>
    %67 = vector.shape_cast %66 : vector<1x9x64xbf16> to vector<9x64xbf16>
    %cst_51 = arith.constant dense<0.000000e+00> : vector<9x32xf32>
    %68 = tpu.matmul %67, %9, %cst_51 {dimension_numbers = #tpu.dot_dimension_numbers<[1], [0], [0], [1], [0, 0, 1, 1], [], []>} : vector<9x64xbf16>, vector<64x32xbf16>, vector<9x32xf32> -> vector<9x32xf32>
    %69 = arith.truncf %68 : vector<9x32xf32> to vector<9x32xbf16>
    %c15 = arith.constant 15 : index
    %c0_52 = arith.constant 0 : index
    %c0_53 = arith.constant 0 : index
    %70 = vector.load %arg4[%c15, %c0_52, %c0_53] : memref<16x9x64xbf16, #tpu.memory_space<vmem>>, vector<1x9x64xbf16>
    %71 = vector.shape_cast %70 : vector<1x9x64xbf16> to vector<9x64xbf16>
    %cst_54 = arith.constant dense<0.000000e+00> : vector<9x32xf32>
    %72 = tpu.matmul %71, %9, %cst_54 {dimension_numbers = #tpu.dot_dimension_numbers<[1], [0], [0], [1], [0, 0, 1, 1], [], []>} : vector<9x64xbf16>, vector<64x32xbf16>, vector<9x32xf32> -> vector<9x32xf32>
    %73 = arith.truncf %72 : vector<9x32xf32> to vector<9x32xbf16>
    %74 = tpu.concatenate %13, %17, %21, %25, %29, %33, %37, %41, %45, %49, %53, %57, %61, %65, %69, %73 in 1 : vector<9x32xbf16>, vector<9x32xbf16>, vector<9x32xbf16>, vector<9x32xbf16>, vector<9x32xbf16>, vector<9x32xbf16>, vector<9x32xbf16>, vector<9x32xbf16>, vector<9x32xbf16>, vector<9x32xbf16>, vector<9x32xbf16>, vector<9x32xbf16>, vector<9x32xbf16>, vector<9x32xbf16>, vector<9x32xbf16>, vector<9x32xbf16> -> vector<9x512xbf16>
    %c0_55 = arith.constant 0 : index
    %c0_56 = arith.constant 0 : index
    %75 = vector.load %arg5[%c0_55, %c0_56] : memref<512x64xbf16, #tpu.memory_space<vmem>>, vector<512x64xbf16>
    %cst_57 = arith.constant dense<0.000000e+00> : vector<9x64xf32>
    %76 = tpu.matmul %74, %75, %cst_57 {dimension_numbers = #tpu.dot_dimension_numbers<[1], [0], [0], [1], [0, 0, 1, 1], [], []>} : vector<9x512xbf16>, vector<512x64xbf16>, vector<9x64xf32> -> vector<9x64xf32>
    %c0_58 = arith.constant 0 : index
    %c0_59 = arith.constant 0 : index
    %77 = vector.load %arg6[%c0_58, %c0_59] : memref<1x64xf32, #tpu.memory_space<vmem>>, vector<1x64xf32>
    %78 = vector.broadcast %77 : vector<1x64xf32> to vector<9x64xf32>
    %79 = arith.addf %76, %78 : vector<9x64xf32>
    %cst_60 = arith.constant 0.000000e+00 : f32
    %80 = vector.broadcast %cst_60 : f32 to vector<9x64xf32>
    %81 = arith.maximumf %79, %80 : vector<9x64xf32>
    %82 = arith.truncf %81 : vector<9x64xf32> to vector<9x64xbf16>
    %c0_61 = arith.constant 0 : index
    %c0_62 = arith.constant 0 : index
    %c0_63 = arith.constant 0 : index
    %83 = vector.load %arg7[%c0_61, %c0_62, %c0_63] : memref<9x1x9xbf16, #tpu.memory_space<vmem>>, vector<1x1x9xbf16>
    %84 = vector.shape_cast %83 : vector<1x1x9xbf16> to vector<1x9xbf16>
    %cst_64 = arith.constant dense<0.000000e+00> : vector<1x64xf32>
    %85 = tpu.matmul %84, %82, %cst_64 {dimension_numbers = #tpu.dot_dimension_numbers<[1], [0], [0], [1], [0, 0, 1, 1], [], []>} : vector<1x9xbf16>, vector<9x64xbf16>, vector<1x64xf32> -> vector<1x64xf32>
    %86 = arith.truncf %85 : vector<1x64xf32> to vector<1x64xbf16>
    %c1_65 = arith.constant 1 : index
    %c0_66 = arith.constant 0 : index
    %c0_67 = arith.constant 0 : index
    %87 = vector.load %arg7[%c1_65, %c0_66, %c0_67] : memref<9x1x9xbf16, #tpu.memory_space<vmem>>, vector<1x1x9xbf16>
    %88 = vector.shape_cast %87 : vector<1x1x9xbf16> to vector<1x9xbf16>
    %cst_68 = arith.constant dense<0.000000e+00> : vector<1x64xf32>
    %89 = tpu.matmul %88, %82, %cst_68 {dimension_numbers = #tpu.dot_dimension_numbers<[1], [0], [0], [1], [0, 0, 1, 1], [], []>} : vector<1x9xbf16>, vector<9x64xbf16>, vector<1x64xf32> -> vector<1x64xf32>
    %90 = arith.truncf %89 : vector<1x64xf32> to vector<1x64xbf16>
    %c2_69 = arith.constant 2 : index
    %c0_70 = arith.constant 0 : index
    %c0_71 = arith.constant 0 : index
    %91 = vector.load %arg7[%c2_69, %c0_70, %c0_71] : memref<9x1x9xbf16, #tpu.memory_space<vmem>>, vector<1x1x9xbf16>
    %92 = vector.shape_cast %91 : vector<1x1x9xbf16> to vector<1x9xbf16>
    %cst_72 = arith.constant dense<0.000000e+00> : vector<1x64xf32>
    %93 = tpu.matmul %92, %82, %cst_72 {dimension_numbers = #tpu.dot_dimension_numbers<[1], [0], [0], [1], [0, 0, 1, 1], [], []>} : vector<1x9xbf16>, vector<9x64xbf16>, vector<1x64xf32> -> vector<1x64xf32>
    %94 = arith.truncf %93 : vector<1x64xf32> to vector<1x64xbf16>
    %c3_73 = arith.constant 3 : index
    %c0_74 = arith.constant 0 : index
    %c0_75 = arith.constant 0 : index
    %95 = vector.load %arg7[%c3_73, %c0_74, %c0_75] : memref<9x1x9xbf16, #tpu.memory_space<vmem>>, vector<1x1x9xbf16>
    %96 = vector.shape_cast %95 : vector<1x1x9xbf16> to vector<1x9xbf16>
    %cst_76 = arith.constant dense<0.000000e+00> : vector<1x64xf32>
    %97 = tpu.matmul %96, %82, %cst_76 {dimension_numbers = #tpu.dot_dimension_numbers<[1], [0], [0], [1], [0, 0, 1, 1], [], []>} : vector<1x9xbf16>, vector<9x64xbf16>, vector<1x64xf32> -> vector<1x64xf32>
    %98 = arith.truncf %97 : vector<1x64xf32> to vector<1x64xbf16>
    %c4_77 = arith.constant 4 : index
    %c0_78 = arith.constant 0 : index
    %c0_79 = arith.constant 0 : index
    %99 = vector.load %arg7[%c4_77, %c0_78, %c0_79] : memref<9x1x9xbf16, #tpu.memory_space<vmem>>, vector<1x1x9xbf16>
    %100 = vector.shape_cast %99 : vector<1x1x9xbf16> to vector<1x9xbf16>
    %cst_80 = arith.constant dense<0.000000e+00> : vector<1x64xf32>
    %101 = tpu.matmul %100, %82, %cst_80 {dimension_numbers = #tpu.dot_dimension_numbers<[1], [0], [0], [1], [0, 0, 1, 1], [], []>} : vector<1x9xbf16>, vector<9x64xbf16>, vector<1x64xf32> -> vector<1x64xf32>
    %102 = arith.truncf %101 : vector<1x64xf32> to vector<1x64xbf16>
    %c5_81 = arith.constant 5 : index
    %c0_82 = arith.constant 0 : index
    %c0_83 = arith.constant 0 : index
    %103 = vector.load %arg7[%c5_81, %c0_82, %c0_83] : memref<9x1x9xbf16, #tpu.memory_space<vmem>>, vector<1x1x9xbf16>
    %104 = vector.shape_cast %103 : vector<1x1x9xbf16> to vector<1x9xbf16>
    %cst_84 = arith.constant dense<0.000000e+00> : vector<1x64xf32>
    %105 = tpu.matmul %104, %82, %cst_84 {dimension_numbers = #tpu.dot_dimension_numbers<[1], [0], [0], [1], [0, 0, 1, 1], [], []>} : vector<1x9xbf16>, vector<9x64xbf16>, vector<1x64xf32> -> vector<1x64xf32>
    %106 = arith.truncf %105 : vector<1x64xf32> to vector<1x64xbf16>
    %c6_85 = arith.constant 6 : index
    %c0_86 = arith.constant 0 : index
    %c0_87 = arith.constant 0 : index
    %107 = vector.load %arg7[%c6_85, %c0_86, %c0_87] : memref<9x1x9xbf16, #tpu.memory_space<vmem>>, vector<1x1x9xbf16>
    %108 = vector.shape_cast %107 : vector<1x1x9xbf16> to vector<1x9xbf16>
    %cst_88 = arith.constant dense<0.000000e+00> : vector<1x64xf32>
    %109 = tpu.matmul %108, %82, %cst_88 {dimension_numbers = #tpu.dot_dimension_numbers<[1], [0], [0], [1], [0, 0, 1, 1], [], []>} : vector<1x9xbf16>, vector<9x64xbf16>, vector<1x64xf32> -> vector<1x64xf32>
    %110 = arith.truncf %109 : vector<1x64xf32> to vector<1x64xbf16>
    %c7_89 = arith.constant 7 : index
    %c0_90 = arith.constant 0 : index
    %c0_91 = arith.constant 0 : index
    %111 = vector.load %arg7[%c7_89, %c0_90, %c0_91] : memref<9x1x9xbf16, #tpu.memory_space<vmem>>, vector<1x1x9xbf16>
    %112 = vector.shape_cast %111 : vector<1x1x9xbf16> to vector<1x9xbf16>
    %cst_92 = arith.constant dense<0.000000e+00> : vector<1x64xf32>
    %113 = tpu.matmul %112, %82, %cst_92 {dimension_numbers = #tpu.dot_dimension_numbers<[1], [0], [0], [1], [0, 0, 1, 1], [], []>} : vector<1x9xbf16>, vector<9x64xbf16>, vector<1x64xf32> -> vector<1x64xf32>
    %114 = arith.truncf %113 : vector<1x64xf32> to vector<1x64xbf16>
    %c8_93 = arith.constant 8 : index
    %c0_94 = arith.constant 0 : index
    %c0_95 = arith.constant 0 : index
    %115 = vector.load %arg7[%c8_93, %c0_94, %c0_95] : memref<9x1x9xbf16, #tpu.memory_space<vmem>>, vector<1x1x9xbf16>
    %116 = vector.shape_cast %115 : vector<1x1x9xbf16> to vector<1x9xbf16>
    %cst_96 = arith.constant dense<0.000000e+00> : vector<1x64xf32>
    %117 = tpu.matmul %116, %82, %cst_96 {dimension_numbers = #tpu.dot_dimension_numbers<[1], [0], [0], [1], [0, 0, 1, 1], [], []>} : vector<1x9xbf16>, vector<9x64xbf16>, vector<1x64xf32> -> vector<1x64xf32>
    %118 = arith.truncf %117 : vector<1x64xf32> to vector<1x64xbf16>
    %119 = tpu.concatenate %86, %90, %94, %98, %102, %106, %110, %114, %118 in 1 : vector<1x64xbf16>, vector<1x64xbf16>, vector<1x64xbf16>, vector<1x64xbf16>, vector<1x64xbf16>, vector<1x64xbf16>, vector<1x64xbf16>, vector<1x64xbf16>, vector<1x64xbf16> -> vector<1x576xbf16>
    %c0_97 = arith.constant 0 : index
    %c0_98 = arith.constant 0 : index
    %120 = vector.load %arg8[%c0_97, %c0_98] : memref<576x64xbf16, #tpu.memory_space<vmem>>, vector<576x64xbf16>
    %cst_99 = arith.constant dense<0.000000e+00> : vector<1x64xf32>
    %121 = tpu.matmul %119, %120, %cst_99 {dimension_numbers = #tpu.dot_dimension_numbers<[1], [0], [0], [1], [0, 0, 1, 1], [], []>} : vector<1x576xbf16>, vector<576x64xbf16>, vector<1x64xf32> -> vector<1x64xf32>
    %c0_100 = arith.constant 0 : index
    %c0_101 = arith.constant 0 : index
    %122 = vector.load %arg9[%c0_100, %c0_101] : memref<1x64xf32, #tpu.memory_space<vmem>>, vector<1x64xf32>
    %123 = arith.addf %121, %122 : vector<1x64xf32>
    %cst_102 = arith.constant 0.000000e+00 : f32
    %124 = vector.broadcast %cst_102 : f32 to vector<1x64xf32>
    %125 = arith.maximumf %123, %124 : vector<1x64xf32>
    %126 = arith.truncf %125 : vector<1x64xf32> to vector<1x64xbf16>
    %127 = vector.extract_strided_slice %8 {offsets = [64, 0], sizes = [64, 32], strides = [1, 1]} : vector<128x32xbf16> to vector<64x32xbf16>
    %c0_103 = arith.constant 0 : index
    %c0_104 = arith.constant 0 : index
    %c0_105 = arith.constant 0 : index
    %128 = vector.load %arg4[%c0_103, %c0_104, %c0_105] : memref<16x9x64xbf16, #tpu.memory_space<vmem>>, vector<1x9x64xbf16>
    %129 = vector.shape_cast %128 : vector<1x9x64xbf16> to vector<9x64xbf16>
    %cst_106 = arith.constant dense<0.000000e+00> : vector<9x32xf32>
    %130 = tpu.matmul %129, %127, %cst_106 {dimension_numbers = #tpu.dot_dimension_numbers<[1], [0], [0], [1], [0, 0, 1, 1], [], []>} : vector<9x64xbf16>, vector<64x32xbf16>, vector<9x32xf32> -> vector<9x32xf32>
    %131 = arith.truncf %130 : vector<9x32xf32> to vector<9x32xbf16>
    %c1_107 = arith.constant 1 : index
    %c0_108 = arith.constant 0 : index
    %c0_109 = arith.constant 0 : index
    %132 = vector.load %arg4[%c1_107, %c0_108, %c0_109] : memref<16x9x64xbf16, #tpu.memory_space<vmem>>, vector<1x9x64xbf16>
    %133 = vector.shape_cast %132 : vector<1x9x64xbf16> to vector<9x64xbf16>
    %cst_110 = arith.constant dense<0.000000e+00> : vector<9x32xf32>
    %134 = tpu.matmul %133, %127, %cst_110 {dimension_numbers = #tpu.dot_dimension_numbers<[1], [0], [0], [1], [0, 0, 1, 1], [], []>} : vector<9x64xbf16>, vector<64x32xbf16>, vector<9x32xf32> -> vector<9x32xf32>
    %135 = arith.truncf %134 : vector<9x32xf32> to vector<9x32xbf16>
    %c2_111 = arith.constant 2 : index
    %c0_112 = arith.constant 0 : index
    %c0_113 = arith.constant 0 : index
    %136 = vector.load %arg4[%c2_111, %c0_112, %c0_113] : memref<16x9x64xbf16, #tpu.memory_space<vmem>>, vector<1x9x64xbf16>
    %137 = vector.shape_cast %136 : vector<1x9x64xbf16> to vector<9x64xbf16>
    %cst_114 = arith.constant dense<0.000000e+00> : vector<9x32xf32>
    %138 = tpu.matmul %137, %127, %cst_114 {dimension_numbers = #tpu.dot_dimension_numbers<[1], [0], [0], [1], [0, 0, 1, 1], [], []>} : vector<9x64xbf16>, vector<64x32xbf16>, vector<9x32xf32> -> vector<9x32xf32>
    %139 = arith.truncf %138 : vector<9x32xf32> to vector<9x32xbf16>
    %c3_115 = arith.constant 3 : index
    %c0_116 = arith.constant 0 : index
    %c0_117 = arith.constant 0 : index
    %140 = vector.load %arg4[%c3_115, %c0_116, %c0_117] : memref<16x9x64xbf16, #tpu.memory_space<vmem>>, vector<1x9x64xbf16>
    %141 = vector.shape_cast %140 : vector<1x9x64xbf16> to vector<9x64xbf16>
    %cst_118 = arith.constant dense<0.000000e+00> : vector<9x32xf32>
    %142 = tpu.matmul %141, %127, %cst_118 {dimension_numbers = #tpu.dot_dimension_numbers<[1], [0], [0], [1], [0, 0, 1, 1], [], []>} : vector<9x64xbf16>, vector<64x32xbf16>, vector<9x32xf32> -> vector<9x32xf32>
    %143 = arith.truncf %142 : vector<9x32xf32> to vector<9x32xbf16>
    %c4_119 = arith.constant 4 : index
    %c0_120 = arith.constant 0 : index
    %c0_121 = arith.constant 0 : index
    %144 = vector.load %arg4[%c4_119, %c0_120, %c0_121] : memref<16x9x64xbf16, #tpu.memory_space<vmem>>, vector<1x9x64xbf16>
    %145 = vector.shape_cast %144 : vector<1x9x64xbf16> to vector<9x64xbf16>
    %cst_122 = arith.constant dense<0.000000e+00> : vector<9x32xf32>
    %146 = tpu.matmul %145, %127, %cst_122 {dimension_numbers = #tpu.dot_dimension_numbers<[1], [0], [0], [1], [0, 0, 1, 1], [], []>} : vector<9x64xbf16>, vector<64x32xbf16>, vector<9x32xf32> -> vector<9x32xf32>
    %147 = arith.truncf %146 : vector<9x32xf32> to vector<9x32xbf16>
    %c5_123 = arith.constant 5 : index
    %c0_124 = arith.constant 0 : index
    %c0_125 = arith.constant 0 : index
    %148 = vector.load %arg4[%c5_123, %c0_124, %c0_125] : memref<16x9x64xbf16, #tpu.memory_space<vmem>>, vector<1x9x64xbf16>
    %149 = vector.shape_cast %148 : vector<1x9x64xbf16> to vector<9x64xbf16>
    %cst_126 = arith.constant dense<0.000000e+00> : vector<9x32xf32>
    %150 = tpu.matmul %149, %127, %cst_126 {dimension_numbers = #tpu.dot_dimension_numbers<[1], [0], [0], [1], [0, 0, 1, 1], [], []>} : vector<9x64xbf16>, vector<64x32xbf16>, vector<9x32xf32> -> vector<9x32xf32>
    %151 = arith.truncf %150 : vector<9x32xf32> to vector<9x32xbf16>
    %c6_127 = arith.constant 6 : index
    %c0_128 = arith.constant 0 : index
    %c0_129 = arith.constant 0 : index
    %152 = vector.load %arg4[%c6_127, %c0_128, %c0_129] : memref<16x9x64xbf16, #tpu.memory_space<vmem>>, vector<1x9x64xbf16>
    %153 = vector.shape_cast %152 : vector<1x9x64xbf16> to vector<9x64xbf16>
    %cst_130 = arith.constant dense<0.000000e+00> : vector<9x32xf32>
    %154 = tpu.matmul %153, %127, %cst_130 {dimension_numbers = #tpu.dot_dimension_numbers<[1], [0], [0], [1], [0, 0, 1, 1], [], []>} : vector<9x64xbf16>, vector<64x32xbf16>, vector<9x32xf32> -> vector<9x32xf32>
    %155 = arith.truncf %154 : vector<9x32xf32> to vector<9x32xbf16>
    %c7_131 = arith.constant 7 : index
    %c0_132 = arith.constant 0 : index
    %c0_133 = arith.constant 0 : index
    %156 = vector.load %arg4[%c7_131, %c0_132, %c0_133] : memref<16x9x64xbf16, #tpu.memory_space<vmem>>, vector<1x9x64xbf16>
    %157 = vector.shape_cast %156 : vector<1x9x64xbf16> to vector<9x64xbf16>
    %cst_134 = arith.constant dense<0.000000e+00> : vector<9x32xf32>
    %158 = tpu.matmul %157, %127, %cst_134 {dimension_numbers = #tpu.dot_dimension_numbers<[1], [0], [0], [1], [0, 0, 1, 1], [], []>} : vector<9x64xbf16>, vector<64x32xbf16>, vector<9x32xf32> -> vector<9x32xf32>
    %159 = arith.truncf %158 : vector<9x32xf32> to vector<9x32xbf16>
    %c8_135 = arith.constant 8 : index
    %c0_136 = arith.constant 0 : index
    %c0_137 = arith.constant 0 : index
    %160 = vector.load %arg4[%c8_135, %c0_136, %c0_137] : memref<16x9x64xbf16, #tpu.memory_space<vmem>>, vector<1x9x64xbf16>
    %161 = vector.shape_cast %160 : vector<1x9x64xbf16> to vector<9x64xbf16>
    %cst_138 = arith.constant dense<0.000000e+00> : vector<9x32xf32>
    %162 = tpu.matmul %161, %127, %cst_138 {dimension_numbers = #tpu.dot_dimension_numbers<[1], [0], [0], [1], [0, 0, 1, 1], [], []>} : vector<9x64xbf16>, vector<64x32xbf16>, vector<9x32xf32> -> vector<9x32xf32>
    %163 = arith.truncf %162 : vector<9x32xf32> to vector<9x32xbf16>
    %c9_139 = arith.constant 9 : index
    %c0_140 = arith.constant 0 : index
    %c0_141 = arith.constant 0 : index
    %164 = vector.load %arg4[%c9_139, %c0_140, %c0_141] : memref<16x9x64xbf16, #tpu.memory_space<vmem>>, vector<1x9x64xbf16>
    %165 = vector.shape_cast %164 : vector<1x9x64xbf16> to vector<9x64xbf16>
    %cst_142 = arith.constant dense<0.000000e+00> : vector<9x32xf32>
    %166 = tpu.matmul %165, %127, %cst_142 {dimension_numbers = #tpu.dot_dimension_numbers<[1], [0], [0], [1], [0, 0, 1, 1], [], []>} : vector<9x64xbf16>, vector<64x32xbf16>, vector<9x32xf32> -> vector<9x32xf32>
    %167 = arith.truncf %166 : vector<9x32xf32> to vector<9x32xbf16>
    %c10_143 = arith.constant 10 : index
    %c0_144 = arith.constant 0 : index
    %c0_145 = arith.constant 0 : index
    %168 = vector.load %arg4[%c10_143, %c0_144, %c0_145] : memref<16x9x64xbf16, #tpu.memory_space<vmem>>, vector<1x9x64xbf16>
    %169 = vector.shape_cast %168 : vector<1x9x64xbf16> to vector<9x64xbf16>
    %cst_146 = arith.constant dense<0.000000e+00> : vector<9x32xf32>
    %170 = tpu.matmul %169, %127, %cst_146 {dimension_numbers = #tpu.dot_dimension_numbers<[1], [0], [0], [1], [0, 0, 1, 1], [], []>} : vector<9x64xbf16>, vector<64x32xbf16>, vector<9x32xf32> -> vector<9x32xf32>
    %171 = arith.truncf %170 : vector<9x32xf32> to vector<9x32xbf16>
    %c11_147 = arith.constant 11 : index
    %c0_148 = arith.constant 0 : index
    %c0_149 = arith.constant 0 : index
    %172 = vector.load %arg4[%c11_147, %c0_148, %c0_149] : memref<16x9x64xbf16, #tpu.memory_space<vmem>>, vector<1x9x64xbf16>
    %173 = vector.shape_cast %172 : vector<1x9x64xbf16> to vector<9x64xbf16>
    %cst_150 = arith.constant dense<0.000000e+00> : vector<9x32xf32>
    %174 = tpu.matmul %173, %127, %cst_150 {dimension_numbers = #tpu.dot_dimension_numbers<[1], [0], [0], [1], [0, 0, 1, 1], [], []>} : vector<9x64xbf16>, vector<64x32xbf16>, vector<9x32xf32> -> vector<9x32xf32>
    %175 = arith.truncf %174 : vector<9x32xf32> to vector<9x32xbf16>
    %c12_151 = arith.constant 12 : index
    %c0_152 = arith.constant 0 : index
    %c0_153 = arith.constant 0 : index
    %176 = vector.load %arg4[%c12_151, %c0_152, %c0_153] : memref<16x9x64xbf16, #tpu.memory_space<vmem>>, vector<1x9x64xbf16>
    %177 = vector.shape_cast %176 : vector<1x9x64xbf16> to vector<9x64xbf16>
    %cst_154 = arith.constant dense<0.000000e+00> : vector<9x32xf32>
    %178 = tpu.matmul %177, %127, %cst_154 {dimension_numbers = #tpu.dot_dimension_numbers<[1], [0], [0], [1], [0, 0, 1, 1], [], []>} : vector<9x64xbf16>, vector<64x32xbf16>, vector<9x32xf32> -> vector<9x32xf32>
    %179 = arith.truncf %178 : vector<9x32xf32> to vector<9x32xbf16>
    %c13_155 = arith.constant 13 : index
    %c0_156 = arith.constant 0 : index
    %c0_157 = arith.constant 0 : index
    %180 = vector.load %arg4[%c13_155, %c0_156, %c0_157] : memref<16x9x64xbf16, #tpu.memory_space<vmem>>, vector<1x9x64xbf16>
    %181 = vector.shape_cast %180 : vector<1x9x64xbf16> to vector<9x64xbf16>
    %cst_158 = arith.constant dense<0.000000e+00> : vector<9x32xf32>
    %182 = tpu.matmul %181, %127, %cst_158 {dimension_numbers = #tpu.dot_dimension_numbers<[1], [0], [0], [1], [0, 0, 1, 1], [], []>} : vector<9x64xbf16>, vector<64x32xbf16>, vector<9x32xf32> -> vector<9x32xf32>
    %183 = arith.truncf %182 : vector<9x32xf32> to vector<9x32xbf16>
    %c14_159 = arith.constant 14 : index
    %c0_160 = arith.constant 0 : index
    %c0_161 = arith.constant 0 : index
    %184 = vector.load %arg4[%c14_159, %c0_160, %c0_161] : memref<16x9x64xbf16, #tpu.memory_space<vmem>>, vector<1x9x64xbf16>
    %185 = vector.shape_cast %184 : vector<1x9x64xbf16> to vector<9x64xbf16>
    %cst_162 = arith.constant dense<0.000000e+00> : vector<9x32xf32>
    %186 = tpu.matmul %185, %127, %cst_162 {dimension_numbers = #tpu.dot_dimension_numbers<[1], [0], [0], [1], [0, 0, 1, 1], [], []>} : vector<9x64xbf16>, vector<64x32xbf16>, vector<9x32xf32> -> vector<9x32xf32>
    %187 = arith.truncf %186 : vector<9x32xf32> to vector<9x32xbf16>
    %c15_163 = arith.constant 15 : index
    %c0_164 = arith.constant 0 : index
    %c0_165 = arith.constant 0 : index
    %188 = vector.load %arg4[%c15_163, %c0_164, %c0_165] : memref<16x9x64xbf16, #tpu.memory_space<vmem>>, vector<1x9x64xbf16>
    %189 = vector.shape_cast %188 : vector<1x9x64xbf16> to vector<9x64xbf16>
    %cst_166 = arith.constant dense<0.000000e+00> : vector<9x32xf32>
    %190 = tpu.matmul %189, %127, %cst_166 {dimension_numbers = #tpu.dot_dimension_numbers<[1], [0], [0], [1], [0, 0, 1, 1], [], []>} : vector<9x64xbf16>, vector<64x32xbf16>, vector<9x32xf32> -> vector<9x32xf32>
    %191 = arith.truncf %190 : vector<9x32xf32> to vector<9x32xbf16>
    %192 = tpu.concatenate %131, %135, %139, %143, %147, %151, %155, %159, %163, %167, %171, %175, %179, %183, %187, %191 in 1 : vector<9x32xbf16>, vector<9x32xbf16>, vector<9x32xbf16>, vector<9x32xbf16>, vector<9x32xbf16>, vector<9x32xbf16>, vector<9x32xbf16>, vector<9x32xbf16>, vector<9x32xbf16>, vector<9x32xbf16>, vector<9x32xbf16>, vector<9x32xbf16>, vector<9x32xbf16>, vector<9x32xbf16>, vector<9x32xbf16>, vector<9x32xbf16> -> vector<9x512xbf16>
    %c0_167 = arith.constant 0 : index
    %c0_168 = arith.constant 0 : index
    %193 = vector.load %arg5[%c0_167, %c0_168] : memref<512x64xbf16, #tpu.memory_space<vmem>>, vector<512x64xbf16>
    %cst_169 = arith.constant dense<0.000000e+00> : vector<9x64xf32>
    %194 = tpu.matmul %192, %193, %cst_169 {dimension_numbers = #tpu.dot_dimension_numbers<[1], [0], [0], [1], [0, 0, 1, 1], [], []>} : vector<9x512xbf16>, vector<512x64xbf16>, vector<9x64xf32> -> vector<9x64xf32>
    %c0_170 = arith.constant 0 : index
    %c0_171 = arith.constant 0 : index
    %195 = vector.load %arg6[%c0_170, %c0_171] : memref<1x64xf32, #tpu.memory_space<vmem>>, vector<1x64xf32>
    %196 = vector.broadcast %195 : vector<1x64xf32> to vector<9x64xf32>
    %197 = arith.addf %194, %196 : vector<9x64xf32>
    %cst_172 = arith.constant 0.000000e+00 : f32
    %198 = vector.broadcast %cst_172 : f32 to vector<9x64xf32>
    %199 = arith.maximumf %197, %198 : vector<9x64xf32>
    %200 = arith.truncf %199 : vector<9x64xf32> to vector<9x64xbf16>
    %c0_173 = arith.constant 0 : index
    %c0_174 = arith.constant 0 : index
    %c0_175 = arith.constant 0 : index
    %201 = vector.load %arg7[%c0_173, %c0_174, %c0_175] : memref<9x1x9xbf16, #tpu.memory_space<vmem>>, vector<1x1x9xbf16>
    %202 = vector.shape_cast %201 : vector<1x1x9xbf16> to vector<1x9xbf16>
    %cst_176 = arith.constant dense<0.000000e+00> : vector<1x64xf32>
    %203 = tpu.matmul %202, %200, %cst_176 {dimension_numbers = #tpu.dot_dimension_numbers<[1], [0], [0], [1], [0, 0, 1, 1], [], []>} : vector<1x9xbf16>, vector<9x64xbf16>, vector<1x64xf32> -> vector<1x64xf32>
    %204 = arith.truncf %203 : vector<1x64xf32> to vector<1x64xbf16>
    %c1_177 = arith.constant 1 : index
    %c0_178 = arith.constant 0 : index
    %c0_179 = arith.constant 0 : index
    %205 = vector.load %arg7[%c1_177, %c0_178, %c0_179] : memref<9x1x9xbf16, #tpu.memory_space<vmem>>, vector<1x1x9xbf16>
    %206 = vector.shape_cast %205 : vector<1x1x9xbf16> to vector<1x9xbf16>
    %cst_180 = arith.constant dense<0.000000e+00> : vector<1x64xf32>
    %207 = tpu.matmul %206, %200, %cst_180 {dimension_numbers = #tpu.dot_dimension_numbers<[1], [0], [0], [1], [0, 0, 1, 1], [], []>} : vector<1x9xbf16>, vector<9x64xbf16>, vector<1x64xf32> -> vector<1x64xf32>
    %208 = arith.truncf %207 : vector<1x64xf32> to vector<1x64xbf16>
    %c2_181 = arith.constant 2 : index
    %c0_182 = arith.constant 0 : index
    %c0_183 = arith.constant 0 : index
    %209 = vector.load %arg7[%c2_181, %c0_182, %c0_183] : memref<9x1x9xbf16, #tpu.memory_space<vmem>>, vector<1x1x9xbf16>
    %210 = vector.shape_cast %209 : vector<1x1x9xbf16> to vector<1x9xbf16>
    %cst_184 = arith.constant dense<0.000000e+00> : vector<1x64xf32>
    %211 = tpu.matmul %210, %200, %cst_184 {dimension_numbers = #tpu.dot_dimension_numbers<[1], [0], [0], [1], [0, 0, 1, 1], [], []>} : vector<1x9xbf16>, vector<9x64xbf16>, vector<1x64xf32> -> vector<1x64xf32>
    %212 = arith.truncf %211 : vector<1x64xf32> to vector<1x64xbf16>
    %c3_185 = arith.constant 3 : index
    %c0_186 = arith.constant 0 : index
    %c0_187 = arith.constant 0 : index
    %213 = vector.load %arg7[%c3_185, %c0_186, %c0_187] : memref<9x1x9xbf16, #tpu.memory_space<vmem>>, vector<1x1x9xbf16>
    %214 = vector.shape_cast %213 : vector<1x1x9xbf16> to vector<1x9xbf16>
    %cst_188 = arith.constant dense<0.000000e+00> : vector<1x64xf32>
    %215 = tpu.matmul %214, %200, %cst_188 {dimension_numbers = #tpu.dot_dimension_numbers<[1], [0], [0], [1], [0, 0, 1, 1], [], []>} : vector<1x9xbf16>, vector<9x64xbf16>, vector<1x64xf32> -> vector<1x64xf32>
    %216 = arith.truncf %215 : vector<1x64xf32> to vector<1x64xbf16>
    %c4_189 = arith.constant 4 : index
    %c0_190 = arith.constant 0 : index
    %c0_191 = arith.constant 0 : index
    %217 = vector.load %arg7[%c4_189, %c0_190, %c0_191] : memref<9x1x9xbf16, #tpu.memory_space<vmem>>, vector<1x1x9xbf16>
    %218 = vector.shape_cast %217 : vector<1x1x9xbf16> to vector<1x9xbf16>
    %cst_192 = arith.constant dense<0.000000e+00> : vector<1x64xf32>
    %219 = tpu.matmul %218, %200, %cst_192 {dimension_numbers = #tpu.dot_dimension_numbers<[1], [0], [0], [1], [0, 0, 1, 1], [], []>} : vector<1x9xbf16>, vector<9x64xbf16>, vector<1x64xf32> -> vector<1x64xf32>
    %220 = arith.truncf %219 : vector<1x64xf32> to vector<1x64xbf16>
    %c5_193 = arith.constant 5 : index
    %c0_194 = arith.constant 0 : index
    %c0_195 = arith.constant 0 : index
    %221 = vector.load %arg7[%c5_193, %c0_194, %c0_195] : memref<9x1x9xbf16, #tpu.memory_space<vmem>>, vector<1x1x9xbf16>
    %222 = vector.shape_cast %221 : vector<1x1x9xbf16> to vector<1x9xbf16>
    %cst_196 = arith.constant dense<0.000000e+00> : vector<1x64xf32>
    %223 = tpu.matmul %222, %200, %cst_196 {dimension_numbers = #tpu.dot_dimension_numbers<[1], [0], [0], [1], [0, 0, 1, 1], [], []>} : vector<1x9xbf16>, vector<9x64xbf16>, vector<1x64xf32> -> vector<1x64xf32>
    %224 = arith.truncf %223 : vector<1x64xf32> to vector<1x64xbf16>
    %c6_197 = arith.constant 6 : index
    %c0_198 = arith.constant 0 : index
    %c0_199 = arith.constant 0 : index
    %225 = vector.load %arg7[%c6_197, %c0_198, %c0_199] : memref<9x1x9xbf16, #tpu.memory_space<vmem>>, vector<1x1x9xbf16>
    %226 = vector.shape_cast %225 : vector<1x1x9xbf16> to vector<1x9xbf16>
    %cst_200 = arith.constant dense<0.000000e+00> : vector<1x64xf32>
    %227 = tpu.matmul %226, %200, %cst_200 {dimension_numbers = #tpu.dot_dimension_numbers<[1], [0], [0], [1], [0, 0, 1, 1], [], []>} : vector<1x9xbf16>, vector<9x64xbf16>, vector<1x64xf32> -> vector<1x64xf32>
    %228 = arith.truncf %227 : vector<1x64xf32> to vector<1x64xbf16>
    %c7_201 = arith.constant 7 : index
    %c0_202 = arith.constant 0 : index
    %c0_203 = arith.constant 0 : index
    %229 = vector.load %arg7[%c7_201, %c0_202, %c0_203] : memref<9x1x9xbf16, #tpu.memory_space<vmem>>, vector<1x1x9xbf16>
    %230 = vector.shape_cast %229 : vector<1x1x9xbf16> to vector<1x9xbf16>
    %cst_204 = arith.constant dense<0.000000e+00> : vector<1x64xf32>
    %231 = tpu.matmul %230, %200, %cst_204 {dimension_numbers = #tpu.dot_dimension_numbers<[1], [0], [0], [1], [0, 0, 1, 1], [], []>} : vector<1x9xbf16>, vector<9x64xbf16>, vector<1x64xf32> -> vector<1x64xf32>
    %232 = arith.truncf %231 : vector<1x64xf32> to vector<1x64xbf16>
    %c8_205 = arith.constant 8 : index
    %c0_206 = arith.constant 0 : index
    %c0_207 = arith.constant 0 : index
    %233 = vector.load %arg7[%c8_205, %c0_206, %c0_207] : memref<9x1x9xbf16, #tpu.memory_space<vmem>>, vector<1x1x9xbf16>
    %234 = vector.shape_cast %233 : vector<1x1x9xbf16> to vector<1x9xbf16>
    %cst_208 = arith.constant dense<0.000000e+00> : vector<1x64xf32>
    %235 = tpu.matmul %234, %200, %cst_208 {dimension_numbers = #tpu.dot_dimension_numbers<[1], [0], [0], [1], [0, 0, 1, 1], [], []>} : vector<1x9xbf16>, vector<9x64xbf16>, vector<1x64xf32> -> vector<1x64xf32>
    %236 = arith.truncf %235 : vector<1x64xf32> to vector<1x64xbf16>
    %237 = tpu.concatenate %204, %208, %212, %216, %220, %224, %228, %232, %236 in 1 : vector<1x64xbf16>, vector<1x64xbf16>, vector<1x64xbf16>, vector<1x64xbf16>, vector<1x64xbf16>, vector<1x64xbf16>, vector<1x64xbf16>, vector<1x64xbf16>, vector<1x64xbf16> -> vector<1x576xbf16>
    %c0_209 = arith.constant 0 : index
    %c0_210 = arith.constant 0 : index
    %238 = vector.load %arg8[%c0_209, %c0_210] : memref<576x64xbf16, #tpu.memory_space<vmem>>, vector<576x64xbf16>
    %cst_211 = arith.constant dense<0.000000e+00> : vector<1x64xf32>
    %239 = tpu.matmul %237, %238, %cst_211 {dimension_numbers = #tpu.dot_dimension_numbers<[1], [0], [0], [1], [0, 0, 1, 1], [], []>} : vector<1x576xbf16>, vector<576x64xbf16>, vector<1x64xf32> -> vector<1x64xf32>
    %c0_212 = arith.constant 0 : index
    %c0_213 = arith.constant 0 : index
    %240 = vector.load %arg9[%c0_212, %c0_213] : memref<1x64xf32, #tpu.memory_space<vmem>>, vector<1x64xf32>
    %241 = arith.addf %239, %240 : vector<1x64xf32>
    %cst_214 = arith.constant 0.000000e+00 : f32
    %242 = vector.broadcast %cst_214 : f32 to vector<1x64xf32>
    %243 = arith.maximumf %241, %242 : vector<1x64xf32>
    %244 = arith.truncf %243 : vector<1x64xf32> to vector<1x64xbf16>
    %245 = tpu.concatenate %126, %244 in 0 : vector<1x64xbf16>, vector<1x64xbf16> -> vector<2x64xbf16>
    %c0_215 = arith.constant 0 : index
    %c0_216 = arith.constant 0 : index
    %246 = vector.load %arg10[%c0_215, %c0_216] : memref<64x128xbf16, #tpu.memory_space<vmem>>, vector<64x128xbf16>
    %cst_217 = arith.constant dense<0.000000e+00> : vector<2x128xf32>
    %247 = tpu.matmul %245, %246, %cst_217 {dimension_numbers = #tpu.dot_dimension_numbers<[1], [0], [0], [1], [0, 0, 1, 1], [], []>} : vector<2x64xbf16>, vector<64x128xbf16>, vector<2x128xf32> -> vector<2x128xf32>
    %c0_218 = arith.constant 0 : index
    %c0_219 = arith.constant 0 : index
    %248 = vector.load %arg11[%c0_218, %c0_219] : memref<1x128xf32, #tpu.memory_space<vmem>>, vector<1x128xf32>
    %249 = vector.broadcast %248 : vector<1x128xf32> to vector<2x128xf32>
    %250 = arith.addf %247, %249 : vector<2x128xf32>
    %cst_220 = arith.constant 0.000000e+00 : f32
    %251 = vector.broadcast %cst_220 : f32 to vector<2x128xf32>
    %252 = arith.maximumf %250, %251 : vector<2x128xf32>
    %c0_221 = arith.constant 0 : index
    %c0_222 = arith.constant 0 : index
    %253 = vector.load %arg12[%c0_221, %c0_222] : memref<2x128xf32, #tpu.memory_space<vmem>>, vector<2x128xf32>
    tpu.vector_store %arg12[%c0_221, %c0_222], %252 {strides = array<i32>} : memref<2x128xf32, #tpu.memory_space<vmem>>, vector<2x128xf32>,
    return
  }
  func.func @transform_0(%arg0: i32) -> (i32, i32) {
    %c0_i32 = arith.constant 0 : i32
    %c0_i32_0 = arith.constant 0 : i32
    return %arg0, %c0_i32 : i32, i32
  }
  func.func @transform_1(%arg0: i32) -> (i32, i32) {
    %c0_i32 = arith.constant 0 : i32
    %c0_i32_0 = arith.constant 0 : i32
    %c0_i32_1 = arith.constant 0 : i32
    return %c0_i32, %c0_i32_0 : i32, i32
  }
  func.func @transform_2(%arg0: i32) -> (i32, i32) {
    %c0_i32 = arith.constant 0 : i32
    %c0_i32_0 = arith.constant 0 : i32
    %c0_i32_1 = arith.constant 0 : i32
    return %c0_i32, %c0_i32_0 : i32, i32
  }
  func.func @transform_3(%arg0: i32) -> (i32, i32, i32) {
    %c0_i32 = arith.constant 0 : i32
    %c0_i32_0 = arith.constant 0 : i32
    %c0_i32_1 = arith.constant 0 : i32
    %c0_i32_2 = arith.constant 0 : i32
    return %c0_i32, %c0_i32_0, %c0_i32_1 : i32, i32, i32
  }
  func.func @transform_4(%arg0: i32) -> (i32, i32) {
    %c0_i32 = arith.constant 0 : i32
    %c0_i32_0 = arith.constant 0 : i32
    %c0_i32_1 = arith.constant 0 : i32
    return %c0_i32, %c0_i32_0 : i32, i32
  }
  func.func @transform_5(%arg0: i32) -> (i32, i32) {
    %c0_i32 = arith.constant 0 : i32
    %c0_i32_0 = arith.constant 0 : i32
    %c0_i32_1 = arith.constant 0 : i32
    return %c0_i32, %c0_i32_0 : i32, i32
  }
  func.func @transform_6(%arg0: i32) -> (i32, i32, i32) {
    %c0_i32 = arith.constant 0 : i32
    %c0_i32_0 = arith.constant 0 : i32
    %c0_i32_1 = arith.constant 0 : i32
    %c0_i32_2 = arith.constant 0 : i32
    return %c0_i32, %c0_i32_0, %c0_i32_1 : i32, i32, i32
  }
  func.func @transform_7(%arg0: i32) -> (i32, i32) {
    %c0_i32 = arith.constant 0 : i32
    %c0_i32_0 = arith.constant 0 : i32
    %c0_i32_1 = arith.constant 0 : i32
    return %c0_i32, %c0_i32_0 : i32, i32
  }
  func.func @transform_8(%arg0: i32) -> (i32, i32) {
    %c0_i32 = arith.constant 0 : i32
    %c0_i32_0 = arith.constant 0 : i32
    %c0_i32_1 = arith.constant 0 : i32
    return %c0_i32, %c0_i32_0 : i32, i32
  }
  func.func @transform_9(%arg0: i32) -> (i32, i32) {
    %c0_i32 = arith.constant 0 : i32
    %c0_i32_0 = arith.constant 0 : i32
    %c0_i32_1 = arith.constant 0 : i32
    return %c0_i32, %c0_i32_0 : i32, i32
  }
  func.func @transform_10(%arg0: i32) -> (i32, i32) {
    %c0_i32 = arith.constant 0 : i32
    %c0_i32_0 = arith.constant 0 : i32
    %c0_i32_1 = arith.constant 0 : i32
    return %c0_i32, %c0_i32_0 : i32, i32
  }
  func.func @transform_11(%arg0: i32) -> (i32, i32) {
    %c0_i32 = arith.constant 0 : i32
    %c0_i32_0 = arith.constant 0 : i32
    return %arg0, %c0_i32 : i32, i32
  }
}

</mosaic_0001>

<llo_original>
// kernel: tpu_custom_call.1
$region0: #{tpu_custom_call.1}
  #allocation0 [shape = 'u32[]', space=smem, size = 0x4, offset = 0x4, fixed_abs, tag = 'smem constant byte address 0x4 - core index']
  #allocation1 [shape = 'u32[144,128]{1,0:T(1,128)}', space=vmem, size = 0x12000, scoped, tag = 'internal scratch']
  %s0 = inlined_call_operand.hbm [shape: bf16[128,256], index: 0, kind: input, shape index: {}]
  %s1 = inlined_call_operand.hbm [shape: bf16[256,32], index: 1, kind: input, shape index: {}]
  %s2 = inlined_call_operand.hbm [shape: f32[1,32], index: 2, kind: input, shape index: {}]
  %s3 = inlined_call_operand.hbm [shape: bf16[16,9,64], index: 3, kind: input, shape index: {}]
  %s4 = inlined_call_operand.hbm [shape: bf16[512,64], index: 4, kind: input, shape index: {}]
  %s5 = inlined_call_operand.hbm [shape: f32[1,64], index: 5, kind: input, shape index: {}]
  %s6 = inlined_call_operand.hbm [shape: bf16[9,1,9], index: 6, kind: input, shape index: {}]
  %s7 = inlined_call_operand.hbm [shape: bf16[576,64], index: 7, kind: input, shape index: {}]
  %s8 = inlined_call_operand.hbm [shape: f32[1,64], index: 8, kind: input, shape index: {}]
  %s9 = inlined_call_operand.hbm [shape: bf16[64,128], index: 9, kind: input, shape index: {}]
  %s10 = inlined_call_operand.hbm [shape: f32[1,128], index: 10, kind: input, shape index: {}]
  %s11 = inlined_call_operand.hbm [shape: f32[2,128], index: 11, kind: output, shape index: {}]
  %s12 = sld [smem:[#allocation0]]
  $region98: #{tpu_custom_call.1} parent=0
    _
  %s14 = ssub.s32 1, %s12
  %s15 = scalar_select 0, %s14, %s12
  $region1: #{tpu_custom_call.1} parent=0
    #allocation2 [shape = 'u8[65536]{0}', space=vmem, size = 0x10000, scoped, tag = 'input window, operand 0, single buffered']
    #allocation3 [shape = 's32[1]{0}', space=sflag, size = 0x4, scoped, tag = 'scoped memory for tpu_custom_call.1']
    #allocation4 [shape = 's32[1]{0}', space=sflag, size = 0x4, scoped, tag = 'scoped memory for tpu_custom_call.1']
    #allocation5 [shape = 'u8[65536]{0}', space=vmem, size = 0x10000, scoped, tag = 'input window, operand 1, single buffered']
    #allocation6 [shape = 's32[1]{0}', space=sflag, size = 0x4, scoped, tag = 'scoped memory for tpu_custom_call.1']
    #allocation7 [shape = 'u8[512]{0}', space=vmem, size = 0x400, scoped, tag = 'input window, operand 2, single buffered']
    #allocation8 [shape = 'u8[65536]{0}', space=vmem, size = 0x10000, scoped, tag = 'input window, operand 3, single buffered']
    #allocation9 [shape = 's32[1]{0}', space=sflag, size = 0x4, scoped, tag = 'scoped memory for tpu_custom_call.1']
    #allocation10 [shape = 'u8[131072]{0}', space=vmem, size = 0x20000, scoped, tag = 'input window, operand 4, single buffered']
    #allocation11 [shape = 'u8[512]{0}', space=vmem, size = 0x400, scoped, tag = 'input window, operand 5, single buffered']
    #allocation12 [shape = 's32[1]{0}', space=sflag, size = 0x4, scoped, tag = 'scoped memory for tpu_custom_call.1']
    #allocation13 [shape = 'u8[4608]{0}', space=vmem, size = 0x1400, scoped, tag = 'input window, operand 6, single buffered']
    #allocation14 [shape = 'u8[147456]{0}', space=vmem, size = 0x24000, scoped, tag = 'input window, operand 7, single buffered']
    #allocation15 [shape = 's32[1]{0}', space=sflag, size = 0x4, scoped, tag = 'scoped memory for tpu_custom_call.1']
    #allocation16 [shape = 'u8[512]{0}', space=vmem, size = 0x400, scoped, tag = 'input window, operand 8, single buffered']
    #allocation17 [shape = 'u8[16384]{0}', space=vmem, size = 0x4000, scoped, tag = 'input window, operand 9, single buffered']
    #allocation18 [shape = 's32[1]{0}', space=sflag, size = 0x4, scoped, tag = 'scoped memory for tpu_custom_call.1']
    #allocation19 [shape = 'u8[512]{0}', space=vmem, size = 0x400, scoped, tag = 'input window, operand 10, single buffered']
    #allocation20 [shape = 'u8[1024]{0}', space=vmem, size = 0x400, scoped, tag = 'output window, operand 0, single buffered']
    %16 = vsyncpa [#allocation3], 0
    %17 = vsyncpa [#allocation6], 0
    %18 = vsyncpa [#allocation9], 0
    %19 = vsyncpa [#allocation12], 0
    %20 = vsyncpa [#allocation15], 0
    %21 = vsyncpa [#allocation18], 0
    %22 = vsyncpa [#allocation4], 0
    // Predicated region
    $region2: #{tpu_custom_call.1} parent=1 // pred_check
      _
    $region3: #{tpu_custom_call.1} parent=1 // pred_check_branch
      %24 = sbr.rel (0) target = $region5
    $region4: #{tpu_custom_call.1} parent=1 // pred_region
      %s26 = ssub.s32 2048, 2048
      %27 = vsyncadd [#allocation3], %s26
      %s28 = sshll.u32 [#allocation2], 4
      %s29 = int_to_ptr.vmem [resolvable:$true] %s28
      %34 = dma.hbm_to_vmem [thread:$0]  %s0, 2048, %s29, [#allocation3], 128, 128, 8
    $region5: #{tpu_custom_call.1} parent=1 // pred_fallthru
      _
    // Predicated region
    $region6: #{tpu_custom_call.1} parent=1 // pred_check
      _
    $region7: #{tpu_custom_call.1} parent=1 // pred_check_branch
      %36 = sbr.rel (0) target = $region9
    $region8: #{tpu_custom_call.1} parent=1 // pred_region
      %s38 = ssub.s32 2048, 2048
      %39 = vsyncadd [#allocation6], %s38
      %s40 = sshll.u32 [#allocation5], 4
      %s41 = int_to_ptr.vmem [resolvable:$true] %s40
      %46 = dma.hbm_to_vmem [thread:$0]  %s1, 2048, %s41, [#allocation6], 64, 64, 4
    $region9: #{tpu_custom_call.1} parent=1 // pred_fallthru
      _
    // Predicated region
    $region10: #{tpu_custom_call.1} parent=1 // pred_check
      _
    $region11: #{tpu_custom_call.1} parent=1 // pred_check_branch
      %48 = sbr.rel (0) target = $region13
    $region12: #{tpu_custom_call.1} parent=1 // pred_region
      %s50 = ssub.s32 16, 16
      %51 = vsyncadd [#allocation6], %s50
      %s53 = sshll.u32 [#allocation7], 4
      %s54 = int_to_ptr.vmem [resolvable:$true] %s53
      %56 = dma.hbm_to_vmem [thread:$0]  %s2, 16, %s54, [#allocation6]
    $region13: #{tpu_custom_call.1} parent=1 // pred_fallthru
      _
    // Predicated region
    $region14: #{tpu_custom_call.1} parent=1 // pred_check
      _
    $region15: #{tpu_custom_call.1} parent=1 // pred_check_branch
      %58 = sbr.rel (0) target = $region17
    $region16: #{tpu_custom_call.1} parent=1 // pred_region
      %s60 = ssub.s32 2048, 2048
      %61 = vsyncadd [#allocation9], %s60
      %s62 = sshll.u32 [#allocation8], 4
      %s63 = int_to_ptr.vmem [resolvable:$true] %s62
      %68 = dma.hbm_to_vmem [thread:$0]  %s3, 2048, %s63, [#allocation9], 64, 64, 4
    $region17: #{tpu_custom_call.1} parent=1 // pred_fallthru
      _
    // Predicated region
    $region18: #{tpu_custom_call.1} parent=1 // pred_check
      _
    $region19: #{tpu_custom_call.1} parent=1 // pred_check_branch
      %70 = sbr.rel (0) target = $region21
    $region20: #{tpu_custom_call.1} parent=1 // pred_region
      %s72 = ssub.s32 4096, 4096
      %73 = vsyncadd [#allocation9], %s72
      %s74 = sshll.u32 [#allocation10], 4
      %s75 = int_to_ptr.vmem [resolvable:$true] %s74
      %80 = dma.hbm_to_vmem [thread:$0]  %s4, 4096, %s75, [#allocation9], 64, 64, 4
    $region21: #{tpu_custom_call.1} parent=1 // pred_fallthru
      _
    // Predicated region
    $region22: #{tpu_custom_call.1} parent=1 // pred_check
      _
    $region23: #{tpu_custom_call.1} parent=1 // pred_check_branch
      %82 = sbr.rel (0) target = $region25
    $region24: #{tpu_custom_call.1} parent=1 // pred_region
      %s84 = ssub.s32 16, 16
      %85 = vsyncadd [#allocation12], %s84
      %s87 = sshll.u32 [#allocation11], 4
      %s88 = int_to_ptr.vmem [resolvable:$true] %s87
      %90 = dma.hbm_to_vmem [thread:$0]  %s5, 16, %s88, [#allocation12]
    $region25: #{tpu_custom_call.1} parent=1 // pred_fallthru
      _
    // Predicated region
    $region26: #{tpu_custom_call.1} parent=1 // pred_check
      _
    $region27: #{tpu_custom_call.1} parent=1 // pred_check_branch
      %92 = sbr.rel (0) target = $region29
    $region28: #{tpu_custom_call.1} parent=1 // pred_region
      %s94 = ssub.s32 144, 144
      %95 = vsyncadd [#allocation12], %s94
      %s96 = sshll.u32 [#allocation13], 4
      %s97 = int_to_ptr.vmem [resolvable:$true] %s96
      %102 = dma.hbm_to_vmem [thread:$0]  %s6, 144, %s97, [#allocation12], 16, 16, 1
    $region29: #{tpu_custom_call.1} parent=1 // pred_fallthru
      _
    // Predicated region
    $region30: #{tpu_custom_call.1} parent=1 // pred_check
      _
    $region31: #{tpu_custom_call.1} parent=1 // pred_check_branch
      %104 = sbr.rel (0) target = $region33
    $region32: #{tpu_custom_call.1} parent=1 // pred_region
      %s106 = ssub.s32 4608, 4608
      %107 = vsyncadd [#allocation15], %s106
      %s108 = sshll.u32 [#allocation14], 4
      %s109 = int_to_ptr.vmem [resolvable:$true] %s108
      %114 = dma.hbm_to_vmem [thread:$0]  %s7, 4608, %s109, [#allocation15], 64, 64, 4
    $region33: #{tpu_custom_call.1} parent=1 // pred_fallthru
      _
    // Predicated region
    $region34: #{tpu_custom_call.1} parent=1 // pred_check
      _
    $region35: #{tpu_custom_call.1} parent=1 // pred_check_branch
      %116 = sbr.rel (0) target = $region37
    $region36: #{tpu_custom_call.1} parent=1 // pred_region
      %s118 = ssub.s32 16, 16
      %119 = vsyncadd [#allocation15], %s118
      %s121 = sshll.u32 [#allocation16], 4
      %s122 = int_to_ptr.vmem [resolvable:$true] %s121
      %124 = dma.hbm_to_vmem [thread:$0]  %s8, 16, %s122, [#allocation15]
    $region37: #{tpu_custom_call.1} parent=1 // pred_fallthru
      _
    // Predicated region
    $region38: #{tpu_custom_call.1} parent=1 // pred_check
      _
    $region39: #{tpu_custom_call.1} parent=1 // pred_check_branch
      %126 = sbr.rel (0) target = $region41
    $region40: #{tpu_custom_call.1} parent=1 // pred_region
      %s128 = ssub.s32 512, 512
      %129 = vsyncadd [#allocation18], %s128
      %s130 = sshll.u32 [#allocation17], 4
      %s131 = int_to_ptr.vmem [resolvable:$true] %s130
      %136 = dma.hbm_to_vmem [thread:$0]  %s9, 512, %s131, [#allocation18], 64, 64, 4
    $region41: #{tpu_custom_call.1} parent=1 // pred_fallthru
      _
    // Predicated region
    $region42: #{tpu_custom_call.1} parent=1 // pred_check
      _
    $region43: #{tpu_custom_call.1} parent=1 // pred_check_branch
      %138 = sbr.rel (0) target = $region45
    $region44: #{tpu_custom_call.1} parent=1 // pred_region
      %s140 = ssub.s32 16, 16
      %141 = vsyncadd [#allocation18], %s140
      %s143 = sshll.u32 [#allocation19], 4
      %s144 = int_to_ptr.vmem [resolvable:$true] %s143
      %146 = dma.hbm_to_vmem [thread:$0]  %s10, 16, %s144, [#allocation18]
    $region45: #{tpu_custom_call.1} parent=1 // pred_fallthru
      _
    // Predicated region
    $region46: #{tpu_custom_call.1} parent=1 // pred_check
      _
    $region47: #{tpu_custom_call.1} parent=1 // pred_check_branch
      %148 = sbr.rel (0) target = $region49
    $region48: #{tpu_custom_call.1} parent=1 // pred_region
      %149 = dma.done [#allocation3], 2048
    $region49: #{tpu_custom_call.1} parent=1 // pred_fallthru
      _
    // Predicated region
    $region50: #{tpu_custom_call.1} parent=1 // pred_check
      _
    $region51: #{tpu_custom_call.1} parent=1 // pred_check_branch
      %151 = sbr.rel (0) target = $region53
    $region52: #{tpu_custom_call.1} parent=1 // pred_region
      %152 = dma.done [#allocation6], 2048
    $region53: #{tpu_custom_call.1} parent=1 // pred_fallthru
      _
    // Predicated region
    $region54: #{tpu_custom_call.1} parent=1 // pred_check
      _
    $region55: #{tpu_custom_call.1} parent=1 // pred_check_branch
      %154 = sbr.rel (0) target = $region57
    $region56: #{tpu_custom_call.1} parent=1 // pred_region
      %155 = dma.done [#allocation6], 16
    $region57: #{tpu_custom_call.1} parent=1 // pred_fallthru
      _
    // Predicated region
    $region58: #{tpu_custom_call.1} parent=1 // pred_check
      _
    $region59: #{tpu_custom_call.1} parent=1 // pred_check_branch
      %157 = sbr.rel (0) target = $region61
    $region60: #{tpu_custom_call.1} parent=1 // pred_region
      %158 = dma.done [#allocation9], 2048
    $region61: #{tpu_custom_call.1} parent=1 // pred_fallthru
      _
    // Predicated region
    $region62: #{tpu_custom_call.1} parent=1 // pred_check
      _
    $region63: #{tpu_custom_call.1} parent=1 // pred_check_branch
      %160 = sbr.rel (0) target = $region65
    $region64: #{tpu_custom_call.1} parent=1 // pred_region
      %161 = dma.done [#allocation9], 4096
    $region65: #{tpu_custom_call.1} parent=1 // pred_fallthru
      _
    // Predicated region
    $region66: #{tpu_custom_call.1} parent=1 // pred_check
      _
    $region67: #{tpu_custom_call.1} parent=1 // pred_check_branch
      %163 = sbr.rel (0) target = $region69
    $region68: #{tpu_custom_call.1} parent=1 // pred_region
      %164 = dma.done [#allocation12], 16
    $region69: #{tpu_custom_call.1} parent=1 // pred_fallthru
      _
    // Predicated region
    $region70: #{tpu_custom_call.1} parent=1 // pred_check
      _
    $region71: #{tpu_custom_call.1} parent=1 // pred_check_branch
      %166 = sbr.rel (0) target = $region73
    $region72: #{tpu_custom_call.1} parent=1 // pred_region
      %167 = dma.done [#allocation12], 144
    $region73: #{tpu_custom_call.1} parent=1 // pred_fallthru
      _
    // Predicated region
    $region74: #{tpu_custom_call.1} parent=1 // pred_check
      _
    $region75: #{tpu_custom_call.1} parent=1 // pred_check_branch
      %169 = sbr.rel (0) target = $region77
    $region76: #{tpu_custom_call.1} parent=1 // pred_region
      %170 = dma.done [#allocation15], 4608
    $region77: #{tpu_custom_call.1} parent=1 // pred_fallthru
      _
    // Predicated region
    $region78: #{tpu_custom_call.1} parent=1 // pred_check
      _
    $region79: #{tpu_custom_call.1} parent=1 // pred_check_branch
      %172 = sbr.rel (0) target = $region81
    $region80: #{tpu_custom_call.1} parent=1 // pred_region
      %173 = dma.done [#allocation15], 16
    $region81: #{tpu_custom_call.1} parent=1 // pred_fallthru
      _
    // Predicated region
    $region82: #{tpu_custom_call.1} parent=1 // pred_check
      _
    $region83: #{tpu_custom_call.1} parent=1 // pred_check_branch
      %175 = sbr.rel (0) target = $region85
    $region84: #{tpu_custom_call.1} parent=1 // pred_region
      %176 = dma.done [#allocation18], 512
    $region85: #{tpu_custom_call.1} parent=1 // pred_fallthru
      _
    // Predicated region
    $region86: #{tpu_custom_call.1} parent=1 // pred_check
      _
    $region87: #{tpu_custom_call.1} parent=1 // pred_check_branch
      %178 = sbr.rel (0) target = $region89
    $region88: #{tpu_custom_call.1} parent=1 // pred_region
      %179 = dma.done [#allocation18], 16
    $region89: #{tpu_custom_call.1} parent=1 // pred_fallthru
      _
    %v181 = vld [vmem:[#allocation2] sm:$0xff]
    %v182 = vld [vmem:[#allocation2 + $0x8] sm:$0xff]
    %v183 = vld [vmem:[#allocation2 + $0x10] sm:$0xff]
    %v184 = vld [vmem:[#allocation2 + $0x18] sm:$0xff]
    %v185 = vld [vmem:[#allocation2 + $0x20] sm:$0xff]
    %v186 = vld [vmem:[#allocation2 + $0x28] sm:$0xff]
    %v187 = vld [vmem:[#allocation2 + $0x30] sm:$0xff]
    %v188 = vld [vmem:[#allocation2 + $0x38] sm:$0xff]
    %v189 = vld [vmem:[#allocation2 + $0x40] sm:$0xff]
    %v190 = vld [vmem:[#allocation2 + $0x48] sm:$0xff]
    %v191 = vld [vmem:[#allocation2 + $0x50] sm:$0xff]
    %v192 = vld [vmem:[#allocation2 + $0x58] sm:$0xff]
    %v193 = vld [vmem:[#allocation2 + $0x60] sm:$0xff]
    %v194 = vld [vmem:[#allocation2 + $0x68] sm:$0xff]
    %v195 = vld [vmem:[#allocation2 + $0x70] sm:$0xff]
    %v196 = vld [vmem:[#allocation2 + $0x78] sm:$0xff]
    %v197 = vld [vmem:[#allocation5] sm:$0xf]
    %v198 = vld [vmem:[#allocation5 + $0x4] sm:$0xf]
    %v199 = vld [vmem:[#allocation5 + $0x8] sm:$0xf]
    %v200 = vld [vmem:[#allocation5 + $0xc] sm:$0xf]
    %v201 = vld [vmem:[#allocation5 + $0x10] sm:$0xf]
    %v202 = vld [vmem:[#allocation5 + $0x14] sm:$0xf]
    %v203 = vld [vmem:[#allocation5 + $0x18] sm:$0xf]
    %v204 = vld [vmem:[#allocation5 + $0x1c] sm:$0xf]
    %v205 = vld [vmem:[#allocation5 + $0x20] sm:$0xf]
    %v206 = vld [vmem:[#allocation5 + $0x24] sm:$0xf]
    %v207 = vld [vmem:[#allocation5 + $0x28] sm:$0xf]
    %v208 = vld [vmem:[#allocation5 + $0x2c] sm:$0xf]
    %v209 = vld [vmem:[#allocation5 + $0x30] sm:$0xf]
    %v210 = vld [vmem:[#allocation5 + $0x34] sm:$0xf]
    %v211 = vld [vmem:[#allocation5 + $0x38] sm:$0xf]
    %v212 = vld [vmem:[#allocation5 + $0x3c] sm:$0xf]
    %v213 = vld [vmem:[#allocation5 + $0x40] sm:$0xf]
    %v214 = vld [vmem:[#allocation5 + $0x44] sm:$0xf]
    %v215 = vld [vmem:[#allocation5 + $0x48] sm:$0xf]
    %v216 = vld [vmem:[#allocation5 + $0x4c] sm:$0xf]
    %v217 = vld [vmem:[#allocation5 + $0x50] sm:$0xf]
    %v218 = vld [vmem:[#allocation5 + $0x54] sm:$0xf]
    %v219 = vld [vmem:[#allocation5 + $0x58] sm:$0xf]
    %v220 = vld [vmem:[#allocation5 + $0x5c] sm:$0xf]
    %v221 = vld [vmem:[#allocation5 + $0x60] sm:$0xf]
    %v222 = vld [vmem:[#allocation5 + $0x64] sm:$0xf]
    %v223 = vld [vmem:[#allocation5 + $0x68] sm:$0xf]
    %v224 = vld [vmem:[#allocation5 + $0x6c] sm:$0xf]
    %v225 = vld [vmem:[#allocation5 + $0x70] sm:$0xf]
    %v226 = vld [vmem:[#allocation5 + $0x74] sm:$0xf]
    %v227 = vld [vmem:[#allocation5 + $0x78] sm:$0xf]
    %v228 = vld [vmem:[#allocation5 + $0x7c] sm:$0xf]
    %v229 = vld [vmem:[#allocation7] sm:$0x1]
    %v231 = vlaneseq
    %v232 = vshrl.u32 %v231, 7
    %v233 = vsub.s32 0, %v232
    %v234 = vrot.slane %v229, %v233
    %v252 = vunpack.c.l.b16 %v181
    %v253 = vunpack.c.h.b16 %v181
    %v254 = vunpack.c.l.b16 %v182
    %v255 = vunpack.c.h.b16 %v182
    %v256 = vunpack.c.l.b16 %v183
    %v257 = vunpack.c.h.b16 %v183
    %v258 = vunpack.c.l.b16 %v184
    %v259 = vunpack.c.h.b16 %v184
    %v260 = vunpack.c.l.b16 %v185
    %v261 = vunpack.c.h.b16 %v185
    %v262 = vunpack.c.l.b16 %v186
    %v263 = vunpack.c.h.b16 %v186
    %v264 = vunpack.c.l.b16 %v187
    %v265 = vunpack.c.h.b16 %v187
    %v266 = vunpack.c.l.b16 %v188
    %v267 = vunpack.c.h.b16 %v188
    %v268 = vunpack.c.l.b16 %v189
    %v269 = vunpack.c.h.b16 %v189
    %v270 = vunpack.c.l.b16 %v190
    %v271 = vunpack.c.h.b16 %v190
    %v272 = vunpack.c.l.b16 %v191
    %v273 = vunpack.c.h.b16 %v191
    %v274 = vunpack.c.l.b16 %v192
    %v275 = vunpack.c.h.b16 %v192
    %v276 = vunpack.c.l.b16 %v193
    %v277 = vunpack.c.h.b16 %v193
    %v278 = vunpack.c.l.b16 %v194
    %v279 = vunpack.c.h.b16 %v194
    %v280 = vunpack.c.l.b16 %v195
    %v281 = vunpack.c.h.b16 %v195
    %v282 = vunpack.c.l.b16 %v196
    %v283 = vunpack.c.h.b16 %v196
    %v284 = vpack.c.b16 %v254, %v252
    %v285 = vpack.c.b16 %v255, %v253
    %v286 = vpack.c.b16 %v258, %v256
    %v287 = vpack.c.b16 %v259, %v257
    %v288 = vpack.c.b16 %v262, %v260
    %v289 = vpack.c.b16 %v263, %v261
    %v290 = vpack.c.b16 %v266, %v264
    %v291 = vpack.c.b16 %v267, %v265
    %v292 = vpack.c.b16 %v270, %v268
    %v293 = vpack.c.b16 %v271, %v269
    %v294 = vpack.c.b16 %v274, %v272
    %v295 = vpack.c.b16 %v275, %v273
    %v296 = vpack.c.b16 %v278, %v276
    %v297 = vpack.c.b16 %v279, %v277
    %v298 = vpack.c.b16 %v282, %v280
    %v299 = vpack.c.b16 %v283, %v281
    %v348 = vunpack.c.l.b16 %v197
    %v349 = vunpack.c.l.b16 %v198
    %v350 = vunpack.c.l.b16 %v199
    %v351 = vunpack.c.l.b16 %v200
    %v352 = vunpack.c.l.b16 %v201
    %v353 = vunpack.c.l.b16 %v202
    %v354 = vunpack.c.l.b16 %v203
    %v355 = vunpack.c.l.b16 %v204
    %v356 = vunpack.c.l.b16 %v205
    %v357 = vunpack.c.l.b16 %v206
    %v358 = vunpack.c.l.b16 %v207
    %v359 = vunpack.c.l.b16 %v208
    %v360 = vunpack.c.l.b16 %v209
    %v361 = vunpack.c.l.b16 %v210
    %v362 = vunpack.c.l.b16 %v211
    %v363 = vunpack.c.l.b16 %v212
    %v364 = vunpack.c.l.b16 %v213
    %v365 = vunpack.c.l.b16 %v214
    %v366 = vunpack.c.l.b16 %v215
    %v367 = vunpack.c.l.b16 %v216
    %v368 = vunpack.c.l.b16 %v217
    %v369 = vunpack.c.l.b16 %v218
    %v370 = vunpack.c.l.b16 %v219
    %v371 = vunpack.c.l.b16 %v220
    %v372 = vunpack.c.l.b16 %v221
    %v373 = vunpack.c.l.b16 %v222
    %v374 = vunpack.c.l.b16 %v223
    %v375 = vunpack.c.l.b16 %v224
    %v376 = vunpack.c.l.b16 %v225
    %v377 = vunpack.c.l.b16 %v226
    %v378 = vunpack.c.l.b16 %v227
    %v379 = vunpack.c.l.b16 %v228
    %v380 = vpack.c.b16 %v349, %v348
    %v381 = vpack.c.b16 %v351, %v350
    %v382 = vpack.c.b16 %v353, %v352
    %v383 = vpack.c.b16 %v355, %v354
    %v384 = vpack.c.b16 %v357, %v356
    %v385 = vpack.c.b16 %v359, %v358
    %v386 = vpack.c.b16 %v361, %v360
    %v387 = vpack.c.b16 %v363, %v362
    %v388 = vpack.c.b16 %v365, %v364
    %v389 = vpack.c.b16 %v367, %v366
    %v390 = vpack.c.b16 %v369, %v368
    %v391 = vpack.c.b16 %v371, %v370
    %v392 = vpack.c.b16 %v373, %v372
    %v393 = vpack.c.b16 %v375, %v374
    %v394 = vpack.c.b16 %v377, %v376
    %v395 = vpack.c.b16 %v379, %v378
    %412 = vmatprep.subr.bf16.mxu0 0
    %413 = vmatpush1.bf16.msra.mxu0 %v380
    %414 = vmatprep.subr.bf16.mxu0 0
    %415 = vmatpush1.bf16.msra.mxu0 %v381
    %416 = vmatprep.subr.bf16.mxu0 0
    %417 = vmatpush1.bf16.msra.mxu0 %v382
    %418 = vmatprep.subr.bf16.mxu0 0
    %419 = vmatpush1.bf16.msra.mxu0 %v383
    %420 = vmatprep.subr.bf16.mxu0 0
    %421 = vmatpush1.bf16.msra.mxu0 %v384
    %422 = vmatprep.subr.bf16.mxu0 0
    %423 = vmatpush1.bf16.msra.mxu0 %v385
    %424 = vmatprep.subr.bf16.mxu0 0
    %425 = vmatpush1.bf16.msra.mxu0 %v386
    %426 = vmatprep.subr.bf16.mxu0 0
    %427 = vmatpush1.bf16.msra.mxu0 %v387
    %428 = vmatprep.subr.bf16.mxu0 0
    %429 = vmatpush1.bf16.msra.mxu0 %v388
    %430 = vmatprep.subr.bf16.mxu0 0
    %431 = vmatpush1.bf16.msra.mxu0 %v389
    %432 = vmatprep.subr.bf16.mxu0 0
    %433 = vmatpush1.bf16.msra.mxu0 %v390
    %434 = vmatprep.subr.bf16.mxu0 0
    %435 = vmatpush1.bf16.msra.mxu0 %v391
    %436 = vmatprep.subr.bf16.mxu0 0
    %437 = vmatpush1.bf16.msra.mxu0 %v392
    %438 = vmatprep.subr.bf16.mxu0 0
    %439 = vmatpush1.bf16.msra.mxu0 %v393
    %440 = vmatprep.subr.bf16.mxu0 0
    %441 = vmatpush1.bf16.msra.mxu0 %v394
    %442 = vmatprep.subr.bf16.mxu0 0
    %443 = vmatpush1.bf16.msra.mxu0 %v395
    %444 = vmatprep.mubr.bf16.mxu0 %v285
    %445 = vmatmul.mubr.bf16.gmra.mrb[0].mxu0 %v284
    %v446 = vpop.f32.mrb[0].mxu0
    %v447 = vadd.f32 %v234, %v446
    %v448 = vpop.f32.mrb[0].mxu0
    %v449 = vpop.f32.mrb[0].mxu0
    %v450 = vadd.f32 %v234, %v449
    %v451 = vpop.f32.mrb[0].mxu0
    %452 = vmatprep.mubr.bf16.mxu0 %v287
    %453 = vmatmul.mubr.bf16.gmra.mrb[0].mxu0 %v286
    %v454 = vpop.f32.mrb[0].mxu0
    %v455 = vadd.f32 %v234, %v454
    %v456 = vpop.f32.mrb[0].mxu0
    %v457 = vpop.f32.mrb[0].mxu0
    %v458 = vadd.f32 %v234, %v457
    %v459 = vpop.f32.mrb[0].mxu0
    %460 = vmatprep.mubr.bf16.mxu0 %v289
    %461 = vmatmul.mubr.bf16.gmra.mrb[0].mxu0 %v288
    %v462 = vpop.f32.mrb[0].mxu0
    %v463 = vadd.f32 %v234, %v462
    %v464 = vpop.f32.mrb[0].mxu0
    %v465 = vpop.f32.mrb[0].mxu0
    %v466 = vadd.f32 %v234, %v465
    %v467 = vpop.f32.mrb[0].mxu0
    %468 = vmatprep.mubr.bf16.mxu0 %v291
    %469 = vmatmul.mubr.bf16.gmra.mrb[0].mxu0 %v290
    %v470 = vpop.f32.mrb[0].mxu0
    %v471 = vadd.f32 %v234, %v470
    %v472 = vpop.f32.mrb[0].mxu0
    %v473 = vpop.f32.mrb[0].mxu0
    %v474 = vadd.f32 %v234, %v473
    %v475 = vpop.f32.mrb[0].mxu0
    %476 = vmatprep.mubr.bf16.mxu0 %v293
    %477 = vmatmul.mubr.bf16.gmra.mrb[0].mxu0 %v292
    %v478 = vpop.f32.mrb[0].mxu0
    %v479 = vadd.f32 %v234, %v478
    %v480 = vpop.f32.mrb[0].mxu0
    %v481 = vpop.f32.mrb[0].mxu0
    %v482 = vadd.f32 %v234, %v481
    %v483 = vpop.f32.mrb[0].mxu0
    %484 = vmatprep.mubr.bf16.mxu0 %v295
    %485 = vmatmul.mubr.bf16.gmra.mrb[0].mxu0 %v294
    %v486 = vpop.f32.mrb[0].mxu0
    %v487 = vadd.f32 %v234, %v486
    %v488 = vpop.f32.mrb[0].mxu0
    %v489 = vpop.f32.mrb[0].mxu0
    %v490 = vadd.f32 %v234, %v489
    %v491 = vpop.f32.mrb[0].mxu0
    %492 = vmatprep.mubr.bf16.mxu0 %v297
    %493 = vmatmul.mubr.bf16.gmra.mrb[0].mxu0 %v296
    %v494 = vpop.f32.mrb[0].mxu0
    %v495 = vadd.f32 %v234, %v494
    %v496 = vpop.f32.mrb[0].mxu0
    %v497 = vpop.f32.mrb[0].mxu0
    %v498 = vadd.f32 %v234, %v497
    %v499 = vpop.f32.mrb[0].mxu0
    %500 = vmatprep.mubr.bf16.mxu0 %v299
    %501 = vmatmul.mubr.bf16.gmra.mrb[0].mxu0 %v298
    %v502 = vpop.f32.mrb[0].mxu0
    %v503 = vadd.f32 %v234, %v502
    %v504 = vpop.f32.mrb[0].mxu0
    %v505 = vpop.f32.mrb[0].mxu0
    %v506 = vadd.f32 %v234, %v505
    %v507 = vpop.f32.mrb[0].mxu0
    %508 = vdwg.mxu0
    %v509 = vmax.f32 %v447, 0.0
    %v510 = vmax.f32 %v450, 0.0
    %v511 = vmax.f32 %v455, 0.0
    %v512 = vmax.f32 %v458, 0.0
    %v513 = vmax.f32 %v463, 0.0
    %v514 = vmax.f32 %v466, 0.0
    %v515 = vmax.f32 %v471, 0.0
    %v516 = vmax.f32 %v474, 0.0
    %v517 = vmax.f32 %v479, 0.0
    %v518 = vmax.f32 %v482, 0.0
    %v519 = vmax.f32 %v487, 0.0
    %v520 = vmax.f32 %v490, 0.0
    %v521 = vmax.f32 %v495, 0.0
    %v522 = vmax.f32 %v498, 0.0
    %v523 = vmax.f32 %v503, 0.0
    %v524 = vmax.f32 %v506, 0.0
    %v525 = vpack.c.bf16 %v510, %v509
    %v526 = vpack.c.bf16 %v512, %v511
    %v527 = vpack.c.bf16 %v514, %v513
    %v528 = vpack.c.bf16 %v516, %v515
    %v529 = vpack.c.bf16 %v518, %v517
    %v530 = vpack.c.bf16 %v520, %v519
    %v531 = vpack.c.bf16 %v522, %v521
    %v532 = vpack.c.bf16 %v524, %v523
    %v533 = vld [vmem:[#allocation8] sm:$0xf]
    %v534 = vld [vmem:[#allocation8 + $0x4] sm:$0x1]
    %v537 = vunpack.c.l.b16 %v533
    %v538 = vunpack.c.l.b16 %v534
    %v539 = vpack.c.b16 %v538, %v537
    %vm540 = vcmask 523264
    %v542 = vsel %vm540, %v539, 0
    %544 = vmatprep.subr.bf16.mxu0 0
    %545 = vmatpush1.bf16.msra.mxu0 %v525
    %546 = vmatprep.subr.bf16.mxu0 0
    %547 = vmatpush1.bf16.msra.mxu0 %v526
    %548 = vmatprep.subr.bf16.mxu0 0
    %549 = vmatpush1.bf16.msra.mxu0 %v527
    %550 = vmatprep.subr.bf16.mxu0 0
    %551 = vmatpush1.bf16.msra.mxu0 %v528
    %552 = vmatprep.subr.bf16.mxu0 0
    %553 = vmatpush1.bf16.msra.mxu0 0
    %554 = vmatprep.subr.bf16.mxu0 0
    %555 = vmatpush1.bf16.msra.mxu0 0
    %556 = vmatprep.subr.bf16.mxu0 0
    %557 = vmatpush1.bf16.msra.mxu0 0
    %558 = vmatprep.subr.bf16.mxu0 0
    %559 = vmatpush1.bf16.msra.mxu0 0
    %560 = vmatprep.subr.bf16.mxu0 0
    %561 = vmatpush1.bf16.msra.mxu0 0
    %562 = vmatprep.subr.bf16.mxu0 0
    %563 = vmatpush1.bf16.msra.mxu0 0
    %564 = vmatprep.subr.bf16.mxu0 0
    %565 = vmatpush1.bf16.msra.mxu0 0
    %566 = vmatprep.subr.bf16.mxu0 0
    %567 = vmatpush1.bf16.msra.mxu0 0
    %568 = vmatprep.subr.bf16.mxu0 0
    %569 = vmatpush1.bf16.msra.mxu0 0
    %570 = vmatprep.subr.bf16.mxu0 0
    %571 = vmatpush1.bf16.msra.mxu0 0
    %572 = vmatprep.subr.bf16.mxu0 0
    %573 = vmatpush1.bf16.msra.mxu0 0
    %574 = vmatprep.subr.bf16.mxu0 0
    %575 = vmatpush1.bf16.msra.mxu0 0
    %576 = vmatprep.mubr.bf16.mxu0 0
    %577 = vmatmul.mubr.bf16.gmra.mrb[0].mxu0 %v542
    %v578 = vpop.f32.mrb[0].mxu0
    %v579 = vadd.f32 0.0, %v578
    %v580 = vpop.f32.mrb[0].mxu0
    %v581 = vpop.f32.mrb[0].mxu0
    %v582 = vadd.f32 0.0, %v581
    %v583 = vpop.f32.mrb[0].mxu0
    %584 = vdwg.mxu0
    %v585 = vpack.c.bf16 %v582, %v579
    %s586 = scalar_lea.vmem [#allocation8], 8
    %v587 = vld [vmem:[%s586] sm:$0xf]
    %v588 = vld [vmem:[%s586 + $0x4] sm:$0x1]
    %v591 = vunpack.c.l.b16 %v587
    %v592 = vunpack.c.l.b16 %v588
    %v593 = vpack.c.b16 %v592, %v591
    %v595 = vsel %vm540, %v593, 0
    %597 = vmatprep.subr.bf16.mxu0 0
    %598 = vmatpush1.bf16.msra.mxu0 %v525
    %599 = vmatprep.subr.bf16.mxu0 0
    %600 = vmatpush1.bf16.msra.mxu0 %v526
    %601 = vmatprep.subr.bf16.mxu0 0
    %602 = vmatpush1.bf16.msra.mxu0 %v527
    %603 = vmatprep.subr.bf16.mxu0 0
    %604 = vmatpush1.bf16.msra.mxu0 %v528
    %605 = vmatprep.subr.bf16.mxu0 0
    %606 = vmatpush1.bf16.msra.mxu0 0
    %607 = vmatprep.subr.bf16.mxu0 0
    %608 = vmatpush1.bf16.msra.mxu0 0
    %609 = vmatprep.subr.bf16.mxu0 0
    %610 = vmatpush1.bf16.msra.mxu0 0
    %611 = vmatprep.subr.bf16.mxu0 0
    %612 = vmatpush1.bf16.msra.mxu0 0
    %613 = vmatprep.subr.bf16.mxu0 0
    %614 = vmatpush1.bf16.msra.mxu0 0
    %615 = vmatprep.subr.bf16.mxu0 0
    %616 = vmatpush1.bf16.msra.mxu0 0
    %617 = vmatprep.subr.bf16.mxu0 0
    %618 = vmatpush1.bf16.msra.mxu0 0
    %619 = vmatprep.subr.bf16.mxu0 0
    %620 = vmatpush1.bf16.msra.mxu0 0
    %621 = vmatprep.subr.bf16.mxu0 0
    %622 = vmatpush1.bf16.msra.mxu0 0
    %623 = vmatprep.subr.bf16.mxu0 0
    %624 = vmatpush1.bf16.msra.mxu0 0
    %625 = vmatprep.subr.bf16.mxu0 0
    %626 = vmatpush1.bf16.msra.mxu0 0
    %627 = vmatprep.subr.bf16.mxu0 0
    %628 = vmatpush1.bf16.msra.mxu0 0
    %629 = vmatprep.mubr.bf16.mxu0 0
    %630 = vmatmul.mubr.bf16.gmra.mrb[0].mxu0 %v595
    %v631 = vpop.f32.mrb[0].mxu0
    %v632 = vadd.f32 0.0, %v631
    %v633 = vpop.f32.mrb[0].mxu0
    %v634 = vpop.f32.mrb[0].mxu0
    %v635 = vadd.f32 0.0, %v634
    %v636 = vpop.f32.mrb[0].mxu0
    %637 = vdwg.mxu0
    %v638 = vpack.c.bf16 %v635, %v632
    %s639 = scalar_lea.vmem [#allocation8], 16
    %v640 = vld [vmem:[%s639] sm:$0xf]
    %v641 = vld [vmem:[%s639 + $0x4] sm:$0x1]
    %v644 = vunpack.c.l.b16 %v640
    %v645 = vunpack.c.l.b16 %v641
    %v646 = vpack.c.b16 %v645, %v644
    %v648 = vsel %vm540, %v646, 0
    %650 = vmatprep.subr.bf16.mxu0 0
    %651 = vmatpush1.bf16.msra.mxu0 %v525
    %652 = vmatprep.subr.bf16.mxu0 0
    %653 = vmatpush1.bf16.msra.mxu0 %v526
    %654 = vmatprep.subr.bf16.mxu0 0
    %655 = vmatpush1.bf16.msra.mxu0 %v527
    %656 = vmatprep.subr.bf16.mxu0 0
    %657 = vmatpush1.bf16.msra.mxu0 %v528
    %658 = vmatprep.subr.bf16.mxu0 0
    %659 = vmatpush1.bf16.msra.mxu0 0
    %660 = vmatprep.subr.bf16.mxu0 0
    %661 = vmatpush1.bf16.msra.mxu0 0
    %662 = vmatprep.subr.bf16.mxu0 0
    %663 = vmatpush1.bf16.msra.mxu0 0
    %664 = vmatprep.subr.bf16.mxu0 0
    %665 = vmatpush1.bf16.msra.mxu0 0
    %666 = vmatprep.subr.bf16.mxu0 0
    %667 = vmatpush1.bf16.msra.mxu0 0
    %668 = vmatprep.subr.bf16.mxu0 0
    %669 = vmatpush1.bf16.msra.mxu0 0
    %670 = vmatprep.subr.bf16.mxu0 0
    %671 = vmatpush1.bf16.msra.mxu0 0
    %672 = vmatprep.subr.bf16.mxu0 0
    %673 = vmatpush1.bf16.msra.mxu0 0
    %674 = vmatprep.subr.bf16.mxu0 0
    %675 = vmatpush1.bf16.msra.mxu0 0
    %676 = vmatprep.subr.bf16.mxu0 0
    %677 = vmatpush1.bf16.msra.mxu0 0
    %678 = vmatprep.subr.bf16.mxu0 0
    %679 = vmatpush1.bf16.msra.mxu0 0
    %680 = vmatprep.subr.bf16.mxu0 0
    %681 = vmatpush1.bf16.msra.mxu0 0
    %682 = vmatprep.mubr.bf16.mxu0 0
    %683 = vmatmul.mubr.bf16.gmra.mrb[0].mxu0 %v648
    %v684 = vpop.f32.mrb[0].mxu0
    %v685 = vadd.f32 0.0, %v684
    %v686 = vpop.f32.mrb[0].mxu0
    %v687 = vpop.f32.mrb[0].mxu0
    %v688 = vadd.f32 0.0, %v687
    %v689 = vpop.f32.mrb[0].mxu0
    %690 = vdwg.mxu0
    %v691 = vpack.c.bf16 %v688, %v685
    %s692 = scalar_lea.vmem [#allocation8], 24
    %v693 = vld [vmem:[%s692] sm:$0xf]
    %v694 = vld [vmem:[%s692 + $0x4] sm:$0x1]
    %v697 = vunpack.c.l.b16 %v693
    %v698 = vunpack.c.l.b16 %v694
    %v699 = vpack.c.b16 %v698, %v697
    %v701 = vsel %vm540, %v699, 0
    %703 = vmatprep.subr.bf16.mxu0 0
    %704 = vmatpush1.bf16.msra.mxu0 %v525
    %705 = vmatprep.subr.bf16.mxu0 0
    %706 = vmatpush1.bf16.msra.mxu0 %v526
    %707 = vmatprep.subr.bf16.mxu0 0
    %708 = vmatpush1.bf16.msra.mxu0 %v527
    %709 = vmatprep.subr.bf16.mxu0 0
    %710 = vmatpush1.bf16.msra.mxu0 %v528
    %711 = vmatprep.subr.bf16.mxu0 0
    %712 = vmatpush1.bf16.msra.mxu0 0
    %713 = vmatprep.subr.bf16.mxu0 0
    %714 = vmatpush1.bf16.msra.mxu0 0
    %715 = vmatprep.subr.bf16.mxu0 0
    %716 = vmatpush1.bf16.msra.mxu0 0
    %717 = vmatprep.subr.bf16.mxu0 0
    %718 = vmatpush1.bf16.msra.mxu0 0
    %719 = vmatprep.subr.bf16.mxu0 0
    %720 = vmatpush1.bf16.msra.mxu0 0
    %721 = vmatprep.subr.bf16.mxu0 0
    %722 = vmatpush1.bf16.msra.mxu0 0
    %723 = vmatprep.subr.bf16.mxu0 0
    %724 = vmatpush1.bf16.msra.mxu0 0
    %725 = vmatprep.subr.bf16.mxu0 0
    %726 = vmatpush1.bf16.msra.mxu0 0
    %727 = vmatprep.subr.bf16.mxu0 0
    %728 = vmatpush1.bf16.msra.mxu0 0
    %729 = vmatprep.subr.bf16.mxu0 0
    %730 = vmatpush1.bf16.msra.mxu0 0
    %731 = vmatprep.subr.bf16.mxu0 0
    %732 = vmatpush1.bf16.msra.mxu0 0
    %733 = vmatprep.subr.bf16.mxu0 0
    %734 = vmatpush1.bf16.msra.mxu0 0
    %735 = vmatprep.mubr.bf16.mxu0 0
    %736 = vmatmul.mubr.bf16.gmra.mrb[0].mxu0 %v701
    %v737 = vpop.f32.mrb[0].mxu0
    %v738 = vadd.f32 0.0, %v737
    %v739 = vpop.f32.mrb[0].mxu0
    %v740 = vpop.f32.mrb[0].mxu0
    %v741 = vadd.f32 0.0, %v740
    %v742 = vpop.f32.mrb[0].mxu0
    %743 = vdwg.mxu0
    %v744 = vpack.c.bf16 %v741, %v738
    %s745 = scalar_lea.vmem [#allocation8], 32
    %v746 = vld [vmem:[%s745] sm:$0xf]
    %v747 = vld [vmem:[%s745 + $0x4] sm:$0x1]
    %v750 = vunpack.c.l.b16 %v746
    %v751 = vunpack.c.l.b16 %v747
    %v752 = vpack.c.b16 %v751, %v750
    %v754 = vsel %vm540, %v752, 0
    %756 = vmatprep.subr.bf16.mxu0 0
    %757 = vmatpush1.bf16.msra.mxu0 %v525
    %758 = vmatprep.subr.bf16.mxu0 0
    %759 = vmatpush1.bf16.msra.mxu0 %v526
    %760 = vmatprep.subr.bf16.mxu0 0
    %761 = vmatpush1.bf16.msra.mxu0 %v527
    %762 = vmatprep.subr.bf16.mxu0 0
    %763 = vmatpush1.bf16.msra.mxu0 %v528
    %764 = vmatprep.subr.bf16.mxu0 0
    %765 = vmatpush1.bf16.msra.mxu0 0
    %766 = vmatprep.subr.bf16.mxu0 0
    %767 = vmatpush1.bf16.msra.mxu0 0
    %768 = vmatprep.subr.bf16.mxu0 0
    %769 = vmatpush1.bf16.msra.mxu0 0
    %770 = vmatprep.subr.bf16.mxu0 0
    %771 = vmatpush1.bf16.msra.mxu0 0
    %772 = vmatprep.subr.bf16.mxu0 0
    %773 = vmatpush1.bf16.msra.mxu0 0
    %774 = vmatprep.subr.bf16.mxu0 0
    %775 = vmatpush1.bf16.msra.mxu0 0
    %776 = vmatprep.subr.bf16.mxu0 0
    %777 = vmatpush1.bf16.msra.mxu0 0
    %778 = vmatprep.subr.bf16.mxu0 0
    %779 = vmatpush1.bf16.msra.mxu0 0
    %780 = vmatprep.subr.bf16.mxu0 0
    %781 = vmatpush1.bf16.msra.mxu0 0
    %782 = vmatprep.subr.bf16.mxu0 0
    %783 = vmatpush1.bf16.msra.mxu0 0
    %784 = vmatprep.subr.bf16.mxu0 0
    %785 = vmatpush1.bf16.msra.mxu0 0
    %786 = vmatprep.subr.bf16.mxu0 0
    %787 = vmatpush1.bf16.msra.mxu0 0
    %788 = vmatprep.mubr.bf16.mxu0 0
    %789 = vmatmul.mubr.bf16.gmra.mrb[0].mxu0 %v754
    %v790 = vpop.f32.mrb[0].mxu0
    %v791 = vadd.f32 0.0, %v790
    %v792 = vpop.f32.mrb[0].mxu0
    %v793 = vpop.f32.mrb[0].mxu0
    %v794 = vadd.f32 0.0, %v793
    %v795 = vpop.f32.mrb[0].mxu0
    %796 = vdwg.mxu0
    %v797 = vpack.c.bf16 %v794, %v791
    %s798 = scalar_lea.vmem [#allocation8], 40
    %v799 = vld [vmem:[%s798] sm:$0xf]
    %v800 = vld [vmem:[%s798 + $0x4] sm:$0x1]
    %v803 = vunpack.c.l.b16 %v799
    %v804 = vunpack.c.l.b16 %v800
    %v805 = vpack.c.b16 %v804, %v803
    %v807 = vsel %vm540, %v805, 0
    %809 = vmatprep.subr.bf16.mxu0 0
    %810 = vmatpush1.bf16.msra.mxu0 %v525
    %811 = vmatprep.subr.bf16.mxu0 0
    %812 = vmatpush1.bf16.msra.mxu0 %v526
    %813 = vmatprep.subr.bf16.mxu0 0
    %814 = vmatpush1.bf16.msra.mxu0 %v527
    %815 = vmatprep.subr.bf16.mxu0 0
    %816 = vmatpush1.bf16.msra.mxu0 %v528
    %817 = vmatprep.subr.bf16.mxu0 0
    %818 = vmatpush1.bf16.msra.mxu0 0
    %819 = vmatprep.subr.bf16.mxu0 0
    %820 = vmatpush1.bf16.msra.mxu0 0
    %821 = vmatprep.subr.bf16.mxu0 0
    %822 = vmatpush1.bf16.msra.mxu0 0
    %823 = vmatprep.subr.bf16.mxu0 0
    %824 = vmatpush1.bf16.msra.mxu0 0
    %825 = vmatprep.subr.bf16.mxu0 0
    %826 = vmatpush1.bf16.msra.mxu0 0
    %827 = vmatprep.subr.bf16.mxu0 0
    %828 = vmatpush1.bf16.msra.mxu0 0
    %829 = vmatprep.subr.bf16.mxu0 0
    %830 = vmatpush1.bf16.msra.mxu0 0
    %831 = vmatprep.subr.bf16.mxu0 0
    %832 = vmatpush1.bf16.msra.mxu0 0
    %833 = vmatprep.subr.bf16.mxu0 0
    %834 = vmatpush1.bf16.msra.mxu0 0
    %835 = vmatprep.subr.bf16.mxu0 0
    %836 = vmatpush1.bf16.msra.mxu0 0
    %837 = vmatprep.subr.bf16.mxu0 0
    %838 = vmatpush1.bf16.msra.mxu0 0
    %839 = vmatprep.subr.bf16.mxu0 0
    %840 = vmatpush1.bf16.msra.mxu0 0
    %841 = vmatprep.mubr.bf16.mxu0 0
    %842 = vmatmul.mubr.bf16.gmra.mrb[0].mxu0 %v807
    %v843 = vpop.f32.mrb[0].mxu0
    %v844 = vadd.f32 0.0, %v843
    %v845 = vpop.f32.mrb[0].mxu0
    %v846 = vpop.f32.mrb[0].mxu0
    %v847 = vadd.f32 0.0, %v846
    %v848 = vpop.f32.mrb[0].mxu0
    %849 = vdwg.mxu0
    %v850 = vpack.c.bf16 %v847, %v844
    %s851 = scalar_lea.vmem [#allocation8], 48
    %v852 = vld [vmem:[%s851] sm:$0xf]
    %v853 = vld [vmem:[%s851 + $0x4] sm:$0x1]
    %v856 = vunpack.c.l.b16 %v852
    %v857 = vunpack.c.l.b16 %v853
    %v858 = vpack.c.b16 %v857, %v856
    %v860 = vsel %vm540, %v858, 0
    %862 = vmatprep.subr.bf16.mxu0 0
    %863 = vmatpush1.bf16.msra.mxu0 %v525
    %864 = vmatprep.subr.bf16.mxu0 0
    %865 = vmatpush1.bf16.msra.mxu0 %v526
    %866 = vmatprep.subr.bf16.mxu0 0
    %867 = vmatpush1.bf16.msra.mxu0 %v527
    %868 = vmatprep.subr.bf16.mxu0 0
    %869 = vmatpush1.bf16.msra.mxu0 %v528
    %870 = vmatprep.subr.bf16.mxu0 0
    %871 = vmatpush1.bf16.msra.mxu0 0
    %872 = vmatprep.subr.bf16.mxu0 0
    %873 = vmatpush1.bf16.msra.mxu0 0
    %874 = vmatprep.subr.bf16.mxu0 0
    %875 = vmatpush1.bf16.msra.mxu0 0
    %876 = vmatprep.subr.bf16.mxu0 0
    %877 = vmatpush1.bf16.msra.mxu0 0
    %878 = vmatprep.subr.bf16.mxu0 0
    %879 = vmatpush1.bf16.msra.mxu0 0
    %880 = vmatprep.subr.bf16.mxu0 0
    %881 = vmatpush1.bf16.msra.mxu0 0
    %882 = vmatprep.subr.bf16.mxu0 0
    %883 = vmatpush1.bf16.msra.mxu0 0
    %884 = vmatprep.subr.bf16.mxu0 0
    %885 = vmatpush1.bf16.msra.mxu0 0
    %886 = vmatprep.subr.bf16.mxu0 0
    %887 = vmatpush1.bf16.msra.mxu0 0
    %888 = vmatprep.subr.bf16.mxu0 0
    %889 = vmatpush1.bf16.msra.mxu0 0
    %890 = vmatprep.subr.bf16.mxu0 0
    %891 = vmatpush1.bf16.msra.mxu0 0
    %892 = vmatprep.subr.bf16.mxu0 0
    %893 = vmatpush1.bf16.msra.mxu0 0
    %894 = vmatprep.mubr.bf16.mxu0 0
    %895 = vmatmul.mubr.bf16.gmra.mrb[0].mxu0 %v860
    %v896 = vpop.f32.mrb[0].mxu0
    %v897 = vadd.f32 0.0, %v896
    %v898 = vpop.f32.mrb[0].mxu0
    %v899 = vpop.f32.mrb[0].mxu0
    %v900 = vadd.f32 0.0, %v899
    %v901 = vpop.f32.mrb[0].mxu0
    %902 = vdwg.mxu0
    %v903 = vpack.c.bf16 %v900, %v897
    %s904 = scalar_lea.vmem [#allocation8], 56
    %v905 = vld [vmem:[%s904] sm:$0xf]
    %v906 = vld [vmem:[%s904 + $0x4] sm:$0x1]
    %v909 = vunpack.c.l.b16 %v905
    %v910 = vunpack.c.l.b16 %v906
    %v911 = vpack.c.b16 %v910, %v909
    %v913 = vsel %vm540, %v911, 0
    %915 = vmatprep.subr.bf16.mxu0 0
    %916 = vmatpush1.bf16.msra.mxu0 %v525
    %917 = vmatprep.subr.bf16.mxu0 0
    %918 = vmatpush1.bf16.msra.mxu0 %v526
    %919 = vmatprep.subr.bf16.mxu0 0
    %920 = vmatpush1.bf16.msra.mxu0 %v527
    %921 = vmatprep.subr.bf16.mxu0 0
    %922 = vmatpush1.bf16.msra.mxu0 %v528
    %923 = vmatprep.subr.bf16.mxu0 0
    %924 = vmatpush1.bf16.msra.mxu0 0
    %925 = vmatprep.subr.bf16.mxu0 0
    %926 = vmatpush1.bf16.msra.mxu0 0
    %927 = vmatprep.subr.bf16.mxu0 0
    %928 = vmatpush1.bf16.msra.mxu0 0
    %929 = vmatprep.subr.bf16.mxu0 0
    %930 = vmatpush1.bf16.msra.mxu0 0
    %931 = vmatprep.subr.bf16.mxu0 0
    %932 = vmatpush1.bf16.msra.mxu0 0
    %933 = vmatprep.subr.bf16.mxu0 0
    %934 = vmatpush1.bf16.msra.mxu0 0
    %935 = vmatprep.subr.bf16.mxu0 0
    %936 = vmatpush1.bf16.msra.mxu0 0
    %937 = vmatprep.subr.bf16.mxu0 0
    %938 = vmatpush1.bf16.msra.mxu0 0
    %939 = vmatprep.subr.bf16.mxu0 0
    %940 = vmatpush1.bf16.msra.mxu0 0
    %941 = vmatprep.subr.bf16.mxu0 0
    %942 = vmatpush1.bf16.msra.mxu0 0
    %943 = vmatprep.subr.bf16.mxu0 0
    %944 = vmatpush1.bf16.msra.mxu0 0
    %945 = vmatprep.subr.bf16.mxu0 0
    %946 = vmatpush1.bf16.msra.mxu0 0
    %947 = vmatprep.mubr.bf16.mxu0 0
    %948 = vmatmul.mubr.bf16.gmra.mrb[0].mxu0 %v913
    %v949 = vpop.f32.mrb[0].mxu0
    %v950 = vadd.f32 0.0, %v949
    %v951 = vpop.f32.mrb[0].mxu0
    %v952 = vpop.f32.mrb[0].mxu0
    %v953 = vadd.f32 0.0, %v952
    %v954 = vpop.f32.mrb[0].mxu0
    %955 = vdwg.mxu0
    %v956 = vpack.c.bf16 %v953, %v950
    %s957 = scalar_lea.vmem [#allocation8], 64
    %v958 = vld [vmem:[%s957] sm:$0xf]
    %v959 = vld [vmem:[%s957 + $0x4] sm:$0x1]
    %v962 = vunpack.c.l.b16 %v958
    %v963 = vunpack.c.l.b16 %v959
    %v964 = vpack.c.b16 %v963, %v962
    %v966 = vsel %vm540, %v964, 0
    %968 = vmatprep.subr.bf16.mxu0 0
    %969 = vmatpush1.bf16.msra.mxu0 %v525
    %970 = vmatprep.subr.bf16.mxu0 0
    %971 = vmatpush1.bf16.msra.mxu0 %v526
    %972 = vmatprep.subr.bf16.mxu0 0
    %973 = vmatpush1.bf16.msra.mxu0 %v527
    %974 = vmatprep.subr.bf16.mxu0 0
    %975 = vmatpush1.bf16.msra.mxu0 %v528
    %976 = vmatprep.subr.bf16.mxu0 0
    %977 = vmatpush1.bf16.msra.mxu0 0
    %978 = vmatprep.subr.bf16.mxu0 0
    %979 = vmatpush1.bf16.msra.mxu0 0
    %980 = vmatprep.subr.bf16.mxu0 0
    %981 = vmatpush1.bf16.msra.mxu0 0
    %982 = vmatprep.subr.bf16.mxu0 0
    %983 = vmatpush1.bf16.msra.mxu0 0
    %984 = vmatprep.subr.bf16.mxu0 0
    %985 = vmatpush1.bf16.msra.mxu0 0
    %986 = vmatprep.subr.bf16.mxu0 0
    %987 = vmatpush1.bf16.msra.mxu0 0
    %988 = vmatprep.subr.bf16.mxu0 0
    %989 = vmatpush1.bf16.msra.mxu0 0
    %990 = vmatprep.subr.bf16.mxu0 0
    %991 = vmatpush1.bf16.msra.mxu0 0
    %992 = vmatprep.subr.bf16.mxu0 0
    %993 = vmatpush1.bf16.msra.mxu0 0
    %994 = vmatprep.subr.bf16.mxu0 0
    %995 = vmatpush1.bf16.msra.mxu0 0
    %996 = vmatprep.subr.bf16.mxu0 0
    %997 = vmatpush1.bf16.msra.mxu0 0
    %998 = vmatprep.subr.bf16.mxu0 0
    %999 = vmatpush1.bf16.msra.mxu0 0
    %1000 = vmatprep.mubr.bf16.mxu0 0
    %1001 = vmatmul.mubr.bf16.gmra.mrb[0].mxu0 %v966
    %v1002 = vpop.f32.mrb[0].mxu0
    %v1003 = vadd.f32 0.0, %v1002
    %v1004 = vpop.f32.mrb[0].mxu0
    %v1005 = vpop.f32.mrb[0].mxu0
    %v1006 = vadd.f32 0.0, %v1005
    %v1007 = vpop.f32.mrb[0].mxu0
    %1008 = vdwg.mxu0
    %v1009 = vpack.c.bf16 %v1006, %v1003
    %s1010 = scalar_lea.vmem [#allocation8], 72
    %v1011 = vld [vmem:[%s1010] sm:$0xf]
    %v1012 = vld [vmem:[%s1010 + $0x4] sm:$0x1]
    %v1015 = vunpack.c.l.b16 %v1011
    %v1016 = vunpack.c.l.b16 %v1012
    %v1017 = vpack.c.b16 %v1016, %v1015
    %v1019 = vsel %vm540, %v1017, 0
    %1021 = vmatprep.subr.bf16.mxu0 0
    %1022 = vmatpush1.bf16.msra.mxu0 %v525
    %1023 = vmatprep.subr.bf16.mxu0 0
    %1024 = vmatpush1.bf16.msra.mxu0 %v526
    %1025 = vmatprep.subr.bf16.mxu0 0
    %1026 = vmatpush1.bf16.msra.mxu0 %v527
    %1027 = vmatprep.subr.bf16.mxu0 0
    %1028 = vmatpush1.bf16.msra.mxu0 %v528
    %1029 = vmatprep.subr.bf16.mxu0 0
    %1030 = vmatpush1.bf16.msra.mxu0 0
    %1031 = vmatprep.subr.bf16.mxu0 0
    %1032 = vmatpush1.bf16.msra.mxu0 0
    %1033 = vmatprep.subr.bf16.mxu0 0
    %1034 = vmatpush1.bf16.msra.mxu0 0
    %1035 = vmatprep.subr.bf16.mxu0 0
    %1036 = vmatpush1.bf16.msra.mxu0 0
    %1037 = vmatprep.subr.bf16.mxu0 0
    %1038 = vmatpush1.bf16.msra.mxu0 0
    %1039 = vmatprep.subr.bf16.mxu0 0
    %1040 = vmatpush1.bf16.msra.mxu0 0
    %1041 = vmatprep.subr.bf16.mxu0 0
    %1042 = vmatpush1.bf16.msra.mxu0 0
    %1043 = vmatprep.subr.bf16.mxu0 0
    %1044 = vmatpush1.bf16.msra.mxu0 0
    %1045 = vmatprep.subr.bf16.mxu0 0
    %1046 = vmatpush1.bf16.msra.mxu0 0
    %1047 = vmatprep.subr.bf16.mxu0 0
    %1048 = vmatpush1.bf16.msra.mxu0 0
    %1049 = vmatprep.subr.bf16.mxu0 0
    %1050 = vmatpush1.bf16.msra.mxu0 0
    %1051 = vmatprep.subr.bf16.mxu0 0
    %1052 = vmatpush1.bf16.msra.mxu0 0
    %1053 = vmatprep.mubr.bf16.mxu0 0
    %1054 = vmatmul.mubr.bf16.gmra.mrb[0].mxu0 %v1019
    %v1055 = vpop.f32.mrb[0].mxu0
    %v1056 = vadd.f32 0.0, %v1055
    %v1057 = vpop.f32.mrb[0].mxu0
    %v1058 = vpop.f32.mrb[0].mxu0
    %v1059 = vadd.f32 0.0, %v1058
    %v1060 = vpop.f32.mrb[0].mxu0
    %1061 = vdwg.mxu0
    %v1062 = vpack.c.bf16 %v1059, %v1056
    %s1063 = scalar_lea.vmem [#allocation8], 80
    %v1064 = vld [vmem:[%s1063] sm:$0xf]
    %v1065 = vld [vmem:[%s1063 + $0x4] sm:$0x1]
    %v1068 = vunpack.c.l.b16 %v1064
    %v1069 = vunpack.c.l.b16 %v1065
    %v1070 = vpack.c.b16 %v1069, %v1068
    %v1072 = vsel %vm540, %v1070, 0
    %1074 = vmatprep.subr.bf16.mxu0 0
    %1075 = vmatpush1.bf16.msra.mxu0 %v525
    %1076 = vmatprep.subr.bf16.mxu0 0
    %1077 = vmatpush1.bf16.msra.mxu0 %v526
    %1078 = vmatprep.subr.bf16.mxu0 0
    %1079 = vmatpush1.bf16.msra.mxu0 %v527
    %1080 = vmatprep.subr.bf16.mxu0 0
    %1081 = vmatpush1.bf16.msra.mxu0 %v528
    %1082 = vmatprep.subr.bf16.mxu0 0
    %1083 = vmatpush1.bf16.msra.mxu0 0
    %1084 = vmatprep.subr.bf16.mxu0 0
    %1085 = vmatpush1.bf16.msra.mxu0 0
    %1086 = vmatprep.subr.bf16.mxu0 0
    %1087 = vmatpush1.bf16.msra.mxu0 0
    %1088 = vmatprep.subr.bf16.mxu0 0
    %1089 = vmatpush1.bf16.msra.mxu0 0
    %1090 = vmatprep.subr.bf16.mxu0 0
    %1091 = vmatpush1.bf16.msra.mxu0 0
    %1092 = vmatprep.subr.bf16.mxu0 0
    %1093 = vmatpush1.bf16.msra.mxu0 0
    %1094 = vmatprep.subr.bf16.mxu0 0
    %1095 = vmatpush1.bf16.msra.mxu0 0
    %1096 = vmatprep.subr.bf16.mxu0 0
    %1097 = vmatpush1.bf16.msra.mxu0 0
    %1098 = vmatprep.subr.bf16.mxu0 0
    %1099 = vmatpush1.bf16.msra.mxu0 0
    %1100 = vmatprep.subr.bf16.mxu0 0
    %1101 = vmatpush1.bf16.msra.mxu0 0
    %1102 = vmatprep.subr.bf16.mxu0 0
    %1103 = vmatpush1.bf16.msra.mxu0 0
    %1104 = vmatprep.subr.bf16.mxu0 0
    %1105 = vmatpush1.bf16.msra.mxu0 0
    %1106 = vmatprep.mubr.bf16.mxu0 0
    %1107 = vmatmul.mubr.bf16.gmra.mrb[0].mxu0 %v1072
    %v1108 = vpop.f32.mrb[0].mxu0
    %v1109 = vadd.f32 0.0, %v1108
    %v1110 = vpop.f32.mrb[0].mxu0
    %v1111 = vpop.f32.mrb[0].mxu0
    %v1112 = vadd.f32 0.0, %v1111
    %v1113 = vpop.f32.mrb[0].mxu0
    %1114 = vdwg.mxu0
    %v1115 = vpack.c.bf16 %v1112, %v1109
    %s1116 = scalar_lea.vmem [#allocation8], 88
    %v1117 = vld [vmem:[%s1116] sm:$0xf]
    %v1118 = vld [vmem:[%s1116 + $0x4] sm:$0x1]
    %v1121 = vunpack.c.l.b16 %v1117
    %v1122 = vunpack.c.l.b16 %v1118
    %v1123 = vpack.c.b16 %v1122, %v1121
    %v1125 = vsel %vm540, %v1123, 0
    %1127 = vmatprep.subr.bf16.mxu0 0
    %1128 = vmatpush1.bf16.msra.mxu0 %v525
    %1129 = vmatprep.subr.bf16.mxu0 0
    %1130 = vmatpush1.bf16.msra.mxu0 %v526
    %1131 = vmatprep.subr.bf16.mxu0 0
    %1132 = vmatpush1.bf16.msra.mxu0 %v527
    %1133 = vmatprep.subr.bf16.mxu0 0
    %1134 = vmatpush1.bf16.msra.mxu0 %v528
    %1135 = vmatprep.subr.bf16.mxu0 0
    %1136 = vmatpush1.bf16.msra.mxu0 0
    %1137 = vmatprep.subr.bf16.mxu0 0
    %1138 = vmatpush1.bf16.msra.mxu0 0
    %1139 = vmatprep.subr.bf16.mxu0 0
    %1140 = vmatpush1.bf16.msra.mxu0 0
    %1141 = vmatprep.subr.bf16.mxu0 0
    %1142 = vmatpush1.bf16.msra.mxu0 0
    %1143 = vmatprep.subr.bf16.mxu0 0
    %1144 = vmatpush1.bf16.msra.mxu0 0
    %1145 = vmatprep.subr.bf16.mxu0 0
    %1146 = vmatpush1.bf16.msra.mxu0 0
    %1147 = vmatprep.subr.bf16.mxu0 0
    %1148 = vmatpush1.bf16.msra.mxu0 0
    %1149 = vmatprep.subr.bf16.mxu0 0
    %1150 = vmatpush1.bf16.msra.mxu0 0
    %1151 = vmatprep.subr.bf16.mxu0 0
    %1152 = vmatpush1.bf16.msra.mxu0 0
    %1153 = vmatprep.subr.bf16.mxu0 0
    %1154 = vmatpush1.bf16.msra.mxu0 0
    %1155 = vmatprep.subr.bf16.mxu0 0
    %1156 = vmatpush1.bf16.msra.mxu0 0
    %1157 = vmatprep.subr.bf16.mxu0 0
    %1158 = vmatpush1.bf16.msra.mxu0 0
    %1159 = vmatprep.mubr.bf16.mxu0 0
    %1160 = vmatmul.mubr.bf16.gmra.mrb[0].mxu0 %v1125
    %v1161 = vpop.f32.mrb[0].mxu0
    %v1162 = vadd.f32 0.0, %v1161
    %v1163 = vpop.f32.mrb[0].mxu0
    %v1164 = vpop.f32.mrb[0].mxu0
    %v1165 = vadd.f32 0.0, %v1164
    %v1166 = vpop.f32.mrb[0].mxu0
    %1167 = vdwg.mxu0
    %v1168 = vpack.c.bf16 %v1165, %v1162
    %s1169 = scalar_lea.vmem [#allocation8], 96
    %v1170 = vld [vmem:[%s1169] sm:$0xf]
    %v1171 = vld [vmem:[%s1169 + $0x4] sm:$0x1]
    %v1174 = vunpack.c.l.b16 %v1170
    %v1175 = vunpack.c.l.b16 %v1171
    %v1176 = vpack.c.b16 %v1175, %v1174
    %v1178 = vsel %vm540, %v1176, 0
    %1180 = vmatprep.subr.bf16.mxu0 0
    %1181 = vmatpush1.bf16.msra.mxu0 %v525
    %1182 = vmatprep.subr.bf16.mxu0 0
    %1183 = vmatpush1.bf16.msra.mxu0 %v526
    %1184 = vmatprep.subr.bf16.mxu0 0
    %1185 = vmatpush1.bf16.msra.mxu0 %v527
    %1186 = vmatprep.subr.bf16.mxu0 0
    %1187 = vmatpush1.bf16.msra.mxu0 %v528
    %1188 = vmatprep.subr.bf16.mxu0 0
    %1189 = vmatpush1.bf16.msra.mxu0 0
    %1190 = vmatprep.subr.bf16.mxu0 0
    %1191 = vmatpush1.bf16.msra.mxu0 0
    %1192 = vmatprep.subr.bf16.mxu0 0
    %1193 = vmatpush1.bf16.msra.mxu0 0
    %1194 = vmatprep.subr.bf16.mxu0 0
    %1195 = vmatpush1.bf16.msra.mxu0 0
    %1196 = vmatprep.subr.bf16.mxu0 0
    %1197 = vmatpush1.bf16.msra.mxu0 0
    %1198 = vmatprep.subr.bf16.mxu0 0
    %1199 = vmatpush1.bf16.msra.mxu0 0
    %1200 = vmatprep.subr.bf16.mxu0 0
    %1201 = vmatpush1.bf16.msra.mxu0 0
    %1202 = vmatprep.subr.bf16.mxu0 0
    %1203 = vmatpush1.bf16.msra.mxu0 0
    %1204 = vmatprep.subr.bf16.mxu0 0
    %1205 = vmatpush1.bf16.msra.mxu0 0
    %1206 = vmatprep.subr.bf16.mxu0 0
    %1207 = vmatpush1.bf16.msra.mxu0 0
    %1208 = vmatprep.subr.bf16.mxu0 0
    %1209 = vmatpush1.bf16.msra.mxu0 0
    %1210 = vmatprep.subr.bf16.mxu0 0
    %1211 = vmatpush1.bf16.msra.mxu0 0
    %1212 = vmatprep.mubr.bf16.mxu0 0
    %1213 = vmatmul.mubr.bf16.gmra.mrb[0].mxu0 %v1178
    %v1214 = vpop.f32.mrb[0].mxu0
    %v1215 = vadd.f32 0.0, %v1214
    %v1216 = vpop.f32.mrb[0].mxu0
    %v1217 = vpop.f32.mrb[0].mxu0
    %v1218 = vadd.f32 0.0, %v1217
    %v1219 = vpop.f32.mrb[0].mxu0
    %1220 = vdwg.mxu0
    %v1221 = vpack.c.bf16 %v1218, %v1215
    %s1222 = scalar_lea.vmem [#allocation8], 104
    %v1223 = vld [vmem:[%s1222] sm:$0xf]
    %v1224 = vld [vmem:[%s1222 + $0x4] sm:$0x1]
    %v1227 = vunpack.c.l.b16 %v1223
    %v1228 = vunpack.c.l.b16 %v1224
    %v1229 = vpack.c.b16 %v1228, %v1227
    %v1231 = vsel %vm540, %v1229, 0
    %1233 = vmatprep.subr.bf16.mxu0 0
    %1234 = vmatpush1.bf16.msra.mxu0 %v525
    %1235 = vmatprep.subr.bf16.mxu0 0
    %1236 = vmatpush1.bf16.msra.mxu0 %v526
    %1237 = vmatprep.subr.bf16.mxu0 0
    %1238 = vmatpush1.bf16.msra.mxu0 %v527
    %1239 = vmatprep.subr.bf16.mxu0 0
    %1240 = vmatpush1.bf16.msra.mxu0 %v528
    %1241 = vmatprep.subr.bf16.mxu0 0
    %1242 = vmatpush1.bf16.msra.mxu0 0
    %1243 = vmatprep.subr.bf16.mxu0 0
    %1244 = vmatpush1.bf16.msra.mxu0 0
    %1245 = vmatprep.subr.bf16.mxu0 0
    %1246 = vmatpush1.bf16.msra.mxu0 0
    %1247 = vmatprep.subr.bf16.mxu0 0
    %1248 = vmatpush1.bf16.msra.mxu0 0
    %1249 = vmatprep.subr.bf16.mxu0 0
    %1250 = vmatpush1.bf16.msra.mxu0 0
    %1251 = vmatprep.subr.bf16.mxu0 0
    %1252 = vmatpush1.bf16.msra.mxu0 0
    %1253 = vmatprep.subr.bf16.mxu0 0
    %1254 = vmatpush1.bf16.msra.mxu0 0
    %1255 = vmatprep.subr.bf16.mxu0 0
    %1256 = vmatpush1.bf16.msra.mxu0 0
    %1257 = vmatprep.subr.bf16.mxu0 0
    %1258 = vmatpush1.bf16.msra.mxu0 0
    %1259 = vmatprep.subr.bf16.mxu0 0
    %1260 = vmatpush1.bf16.msra.mxu0 0
    %1261 = vmatprep.subr.bf16.mxu0 0
    %1262 = vmatpush1.bf16.msra.mxu0 0
    %1263 = vmatprep.subr.bf16.mxu0 0
    %1264 = vmatpush1.bf16.msra.mxu0 0
    %1265 = vmatprep.mubr.bf16.mxu0 0
    %1266 = vmatmul.mubr.bf16.gmra.mrb[0].mxu0 %v1231
    %v1267 = vpop.f32.mrb[0].mxu0
    %v1268 = vadd.f32 0.0, %v1267
    %v1269 = vpop.f32.mrb[0].mxu0
    %v1270 = vpop.f32.mrb[0].mxu0
    %v1271 = vadd.f32 0.0, %v1270
    %v1272 = vpop.f32.mrb[0].mxu0
    %1273 = vdwg.mxu0
    %v1274 = vpack.c.bf16 %v1271, %v1268
    %s1275 = scalar_lea.vmem [#allocation8], 112
    %v1276 = vld [vmem:[%s1275] sm:$0xf]
    %v1277 = vld [vmem:[%s1275 + $0x4] sm:$0x1]
    %v1280 = vunpack.c.l.b16 %v1276
    %v1281 = vunpack.c.l.b16 %v1277
    %v1282 = vpack.c.b16 %v1281, %v1280
    %v1284 = vsel %vm540, %v1282, 0
    %1286 = vmatprep.subr.bf16.mxu0 0
    %1287 = vmatpush1.bf16.msra.mxu0 %v525
    %1288 = vmatprep.subr.bf16.mxu0 0
    %1289 = vmatpush1.bf16.msra.mxu0 %v526
    %1290 = vmatprep.subr.bf16.mxu0 0
    %1291 = vmatpush1.bf16.msra.mxu0 %v527
    %1292 = vmatprep.subr.bf16.mxu0 0
    %1293 = vmatpush1.bf16.msra.mxu0 %v528
    %1294 = vmatprep.subr.bf16.mxu0 0
    %1295 = vmatpush1.bf16.msra.mxu0 0
    %1296 = vmatprep.subr.bf16.mxu0 0
    %1297 = vmatpush1.bf16.msra.mxu0 0
    %1298 = vmatprep.subr.bf16.mxu0 0
    %1299 = vmatpush1.bf16.msra.mxu0 0
    %1300 = vmatprep.subr.bf16.mxu0 0
    %1301 = vmatpush1.bf16.msra.mxu0 0
    %1302 = vmatprep.subr.bf16.mxu0 0
    %1303 = vmatpush1.bf16.msra.mxu0 0
    %1304 = vmatprep.subr.bf16.mxu0 0
    %1305 = vmatpush1.bf16.msra.mxu0 0
    %1306 = vmatprep.subr.bf16.mxu0 0
    %1307 = vmatpush1.bf16.msra.mxu0 0
    %1308 = vmatprep.subr.bf16.mxu0 0
    %1309 = vmatpush1.bf16.msra.mxu0 0
    %1310 = vmatprep.subr.bf16.mxu0 0
    %1311 = vmatpush1.bf16.msra.mxu0 0
    %1312 = vmatprep.subr.bf16.mxu0 0
    %1313 = vmatpush1.bf16.msra.mxu0 0
    %1314 = vmatprep.subr.bf16.mxu0 0
    %1315 = vmatpush1.bf16.msra.mxu0 0
    %1316 = vmatprep.subr.bf16.mxu0 0
    %1317 = vmatpush1.bf16.msra.mxu0 0
    %1318 = vmatprep.mubr.bf16.mxu0 0
    %1319 = vmatmul.mubr.bf16.gmra.mrb[0].mxu0 %v1284
    %v1320 = vpop.f32.mrb[0].mxu0
    %v1321 = vadd.f32 0.0, %v1320
    %v1322 = vpop.f32.mrb[0].mxu0
    %v1323 = vpop.f32.mrb[0].mxu0
    %v1324 = vadd.f32 0.0, %v1323
    %v1325 = vpop.f32.mrb[0].mxu0
    %1326 = vdwg.mxu0
    %v1327 = vpack.c.bf16 %v1324, %v1321
    %s1328 = scalar_lea.vmem [#allocation8], 120
    %v1329 = vld [vmem:[%s1328] sm:$0xf]
    %v1330 = vld [vmem:[%s1328 + $0x4] sm:$0x1]
    %v1333 = vunpack.c.l.b16 %v1329
    %v1334 = vunpack.c.l.b16 %v1330
    %v1335 = vpack.c.b16 %v1334, %v1333
    %v1337 = vsel %vm540, %v1335, 0
    %1339 = vmatprep.subr.bf16.mxu0 0
    %1340 = vmatpush1.bf16.msra.mxu0 %v525
    %1341 = vmatprep.subr.bf16.mxu0 0
    %1342 = vmatpush1.bf16.msra.mxu0 %v526
    %1343 = vmatprep.subr.bf16.mxu0 0
    %1344 = vmatpush1.bf16.msra.mxu0 %v527
    %1345 = vmatprep.subr.bf16.mxu0 0
    %1346 = vmatpush1.bf16.msra.mxu0 %v528
    %1347 = vmatprep.subr.bf16.mxu0 0
    %1348 = vmatpush1.bf16.msra.mxu0 0
    %1349 = vmatprep.subr.bf16.mxu0 0
    %1350 = vmatpush1.bf16.msra.mxu0 0
    %1351 = vmatprep.subr.bf16.mxu0 0
    %1352 = vmatpush1.bf16.msra.mxu0 0
    %1353 = vmatprep.subr.bf16.mxu0 0
    %1354 = vmatpush1.bf16.msra.mxu0 0
    %1355 = vmatprep.subr.bf16.mxu0 0
    %1356 = vmatpush1.bf16.msra.mxu0 0
    %1357 = vmatprep.subr.bf16.mxu0 0
    %1358 = vmatpush1.bf16.msra.mxu0 0
    %1359 = vmatprep.subr.bf16.mxu0 0
    %1360 = vmatpush1.bf16.msra.mxu0 0
    %1361 = vmatprep.subr.bf16.mxu0 0
    %1362 = vmatpush1.bf16.msra.mxu0 0
    %1363 = vmatprep.subr.bf16.mxu0 0
    %1364 = vmatpush1.bf16.msra.mxu0 0
    %1365 = vmatprep.subr.bf16.mxu0 0
    %1366 = vmatpush1.bf16.msra.mxu0 0
    %1367 = vmatprep.subr.bf16.mxu0 0
    %1368 = vmatpush1.bf16.msra.mxu0 0
    %1369 = vmatprep.subr.bf16.mxu0 0
    %1370 = vmatpush1.bf16.msra.mxu0 0
    %1371 = vmatprep.mubr.bf16.mxu0 0
    %1372 = vmatmul.mubr.bf16.gmra.mrb[0].mxu0 %v1337
    %v1373 = vpop.f32.mrb[0].mxu0
    %v1374 = vadd.f32 0.0, %v1373
    %v1375 = vpop.f32.mrb[0].mxu0
    %v1376 = vpop.f32.mrb[0].mxu0
    %v1377 = vadd.f32 0.0, %v1376
    %v1378 = vpop.f32.mrb[0].mxu0
    %1379 = vdwg.mxu0
    %v1380 = vpack.c.bf16 %v1377, %v1374
    %1382 = vrot.lane.b32.xlu0 %v638, 32
    %v1383 = vpop.permute.xlu0 %1382
    %1385 = vrot.lane.b32.xlu0 %v691, 64
    %v1386 = vpop.permute.xlu0 %1385
    %1388 = vrot.lane.b32.xlu0 %v744, 96
    %v1389 = vpop.permute.xlu0 %1388
    %1391 = vrot.lane.b32.xlu0 %v850, 32
    %v1392 = vpop.permute.xlu0 %1391
    %1394 = vrot.lane.b32.xlu0 %v903, 64
    %v1395 = vpop.permute.xlu0 %1394
    %1397 = vrot.lane.b32.xlu0 %v956, 96
    %v1398 = vpop.permute.xlu0 %1397
    %1400 = vrot.lane.b32.xlu0 %v1062, 32
    %v1401 = vpop.permute.xlu0 %1400
    %1403 = vrot.lane.b32.xlu0 %v1115, 64
    %v1404 = vpop.permute.xlu0 %1403
    %1406 = vrot.lane.b32.xlu0 %v1168, 96
    %v1407 = vpop.permute.xlu0 %1406
    %1409 = vrot.lane.b32.xlu0 %v1274, 32
    %v1410 = vpop.permute.xlu0 %1409
    %1412 = vrot.lane.b32.xlu0 %v1327, 64
    %v1413 = vpop.permute.xlu0 %1412
    %1415 = vrot.lane.b32.xlu0 %v1380, 96
    %v1416 = vpop.permute.xlu0 %1415
    %vm1417 = vcmask 261120
    %v1420 = vsel %vm1417, %v585, %v1383
    %v1422 = vsel %vm540, %v1420, %v1386
    %vm1423 = vcmask 785408
    %v1425 = vsel %vm1423, %v1422, %v1389
    %v1429 = vsel %vm1417, %v797, %v1392
    %v1431 = vsel %vm540, %v1429, %v1395
    %v1433 = vsel %vm1423, %v1431, %v1398
    %v1437 = vsel %vm1417, %v1009, %v1401
    %v1439 = vsel %vm540, %v1437, %v1404
    %v1441 = vsel %vm1423, %v1439, %v1407
    %v1445 = vsel %vm1417, %v1221, %v1410
    %v1447 = vsel %vm540, %v1445, %v1413
    %v1449 = vsel %vm1423, %v1447, %v1416
    %v1451 = vld [vmem:[#allocation10] sm:$0xf]
    %v1452 = vld [vmem:[#allocation10 + $0x4] sm:$0xf]
    %v1453 = vld [vmem:[#allocation10 + $0x8] sm:$0xf]
    %v1454 = vld [vmem:[#allocation10 + $0xc] sm:$0xf]
    %v1455 = vld [vmem:[#allocation10 + $0x10] sm:$0xf]
    %v1456 = vld [vmem:[#allocation10 + $0x14] sm:$0xf]
    %v1457 = vld [vmem:[#allocation10 + $0x18] sm:$0xf]
    %v1458 = vld [vmem:[#allocation10 + $0x1c] sm:$0xf]
    %v1459 = vld [vmem:[#allocation10 + $0x20] sm:$0xf]
    %v1460 = vld [vmem:[#allocation10 + $0x24] sm:$0xf]
    %v1461 = vld [vmem:[#allocation10 + $0x28] sm:$0xf]
    %v1462 = vld [vmem:[#allocation10 + $0x2c] sm:$0xf]
    %v1463 = vld [vmem:[#allocation10 + $0x30] sm:$0xf]
    %v1464 = vld [vmem:[#allocation10 + $0x34] sm:$0xf]
    %v1465 = vld [vmem:[#allocation10 + $0x38] sm:$0xf]
    %v1466 = vld [vmem:[#allocation10 + $0x3c] sm:$0xf]
    %v1467 = vld [vmem:[#allocation10 + $0x40] sm:$0xf]
    %v1468 = vld [vmem:[#allocation10 + $0x44] sm:$0xf]
    %v1469 = vld [vmem:[#allocation10 + $0x48] sm:$0xf]
    %v1470 = vld [vmem:[#allocation10 + $0x4c] sm:$0xf]
    %v1471 = vld [vmem:[#allocation10 + $0x50] sm:$0xf]
    %v1472 = vld [vmem:[#allocation10 + $0x54] sm:$0xf]
    %v1473 = vld [vmem:[#allocation10 + $0x58] sm:$0xf]
    %v1474 = vld [vmem:[#allocation10 + $0x5c] sm:$0xf]
    %v1475 = vld [vmem:[#allocation10 + $0x60] sm:$0xf]
    %v1476 = vld [vmem:[#allocation10 + $0x64] sm:$0xf]
    %v1477 = vld [vmem:[#allocation10 + $0x68] sm:$0xf]
    %v1478 = vld [vmem:[#allocation10 + $0x6c] sm:$0xf]
    %v1479 = vld [vmem:[#allocation10 + $0x70] sm:$0xf]
    %v1480 = vld [vmem:[#allocation10 + $0x74] sm:$0xf]
    %v1481 = vld [vmem:[#allocation10 + $0x78] sm:$0xf]
    %v1482 = vld [vmem:[#allocation10 + $0x7c] sm:$0xf]
    %v1483 = vld [vmem:[#allocation10 + $0x80] sm:$0xf]
    %v1484 = vld [vmem:[#allocation10 + $0x84] sm:$0xf]
    %v1485 = vld [vmem:[#allocation10 + $0x88] sm:$0xf]
    %v1486 = vld [vmem:[#allocation10 + $0x8c] sm:$0xf]
    %v1487 = vld [vmem:[#allocation10 + $0x90] sm:$0xf]
    %v1488 = vld [vmem:[#allocation10 + $0x94] sm:$0xf]
    %v1489 = vld [vmem:[#allocation10 + $0x98] sm:$0xf]
    %v1490 = vld [vmem:[#allocation10 + $0x9c] sm:$0xf]
    %v1491 = vld [vmem:[#allocation10 + $0xa0] sm:$0xf]
    %v1492 = vld [vmem:[#allocation10 + $0xa4] sm:$0xf]
    %v1493 = vld [vmem:[#allocation10 + $0xa8] sm:$0xf]
    %v1494 = vld [vmem:[#allocation10 + $0xac] sm:$0xf]
    %v1495 = vld [vmem:[#allocation10 + $0xb0] sm:$0xf]
    %v1496 = vld [vmem:[#allocation10 + $0xb4] sm:$0xf]
    %v1497 = vld [vmem:[#allocation10 + $0xb8] sm:$0xf]
    %v1498 = vld [vmem:[#allocation10 + $0xbc] sm:$0xf]
    %v1499 = vld [vmem:[#allocation10 + $0xc0] sm:$0xf]
    %v1500 = vld [vmem:[#allocation10 + $0xc4] sm:$0xf]
    %v1501 = vld [vmem:[#allocation10 + $0xc8] sm:$0xf]
    %v1502 = vld [vmem:[#allocation10 + $0xcc] sm:$0xf]
    %v1503 = vld [vmem:[#allocation10 + $0xd0] sm:$0xf]
    %v1504 = vld [vmem:[#allocation10 + $0xd4] sm:$0xf]
    %v1505 = vld [vmem:[#allocation10 + $0xd8] sm:$0xf]
    %v1506 = vld [vmem:[#allocation10 + $0xdc] sm:$0xf]
    %v1507 = vld [vmem:[#allocation10 + $0xe0] sm:$0xf]
    %v1508 = vld [vmem:[#allocation10 + $0xe4] sm:$0xf]
    %v1509 = vld [vmem:[#allocation10 + $0xe8] sm:$0xf]
    %v1510 = vld [vmem:[#allocation10 + $0xec] sm:$0xf]
    %v1511 = vld [vmem:[#allocation10 + $0xf0] sm:$0xf]
    %v1512 = vld [vmem:[#allocation10 + $0xf4] sm:$0xf]
    %v1513 = vld [vmem:[#allocation10 + $0xf8] sm:$0xf]
    %v1514 = vld [vmem:[#allocation10 + $0xfc] sm:$0xf]
    %v1515 = vld [vmem:[#allocation11] sm:$0x1]
    %v1517 = vlaneseq
    %v1518 = vshrl.u32 %v1517, 7
    %v1519 = vsub.s32 0, %v1518
    %v1520 = vrot.slane %v1515, %v1519
    %v1586 = vunpack.c.l.b16 %v1451
    %v1587 = vunpack.c.l.b16 %v1452
    %v1588 = vunpack.c.l.b16 %v1453
    %v1589 = vunpack.c.l.b16 %v1454
    %v1590 = vunpack.c.l.b16 %v1455
    %v1591 = vunpack.c.l.b16 %v1456
    %v1592 = vunpack.c.l.b16 %v1457
    %v1593 = vunpack.c.l.b16 %v1458
    %v1594 = vunpack.c.l.b16 %v1459
    %v1595 = vunpack.c.l.b16 %v1460
    %v1596 = vunpack.c.l.b16 %v1461
    %v1597 = vunpack.c.l.b16 %v1462
    %v1598 = vunpack.c.l.b16 %v1463
    %v1599 = vunpack.c.l.b16 %v1464
    %v1600 = vunpack.c.l.b16 %v1465
    %v1601 = vunpack.c.l.b16 %v1466
    %v1602 = vunpack.c.l.b16 %v1467
    %v1603 = vunpack.c.l.b16 %v1468
    %v1604 = vunpack.c.l.b16 %v1469
    %v1605 = vunpack.c.l.b16 %v1470
    %v1606 = vunpack.c.l.b16 %v1471
    %v1607 = vunpack.c.l.b16 %v1472
    %v1608 = vunpack.c.l.b16 %v1473
    %v1609 = vunpack.c.l.b16 %v1474
    %v1610 = vunpack.c.l.b16 %v1475
    %v1611 = vunpack.c.l.b16 %v1476
    %v1612 = vunpack.c.l.b16 %v1477
    %v1613 = vunpack.c.l.b16 %v1478
    %v1614 = vunpack.c.l.b16 %v1479
    %v1615 = vunpack.c.l.b16 %v1480
    %v1616 = vunpack.c.l.b16 %v1481
    %v1617 = vunpack.c.l.b16 %v1482
    %v1618 = vunpack.c.l.b16 %v1483
    %v1619 = vunpack.c.l.b16 %v1484
    %v1620 = vunpack.c.l.b16 %v1485
    %v1621 = vunpack.c.l.b16 %v1486
    %v1622 = vunpack.c.l.b16 %v1487
    %v1623 = vunpack.c.l.b16 %v1488
    %v1624 = vunpack.c.l.b16 %v1489
    %v1625 = vunpack.c.l.b16 %v1490
    %v1626 = vunpack.c.l.b16 %v1491
    %v1627 = vunpack.c.l.b16 %v1492
    %v1628 = vunpack.c.l.b16 %v1493
    %v1629 = vunpack.c.l.b16 %v1494
    %v1630 = vunpack.c.l.b16 %v1495
    %v1631 = vunpack.c.l.b16 %v1496
    %v1632 = vunpack.c.l.b16 %v1497
    %v1633 = vunpack.c.l.b16 %v1498
    %v1634 = vunpack.c.l.b16 %v1499
    %v1635 = vunpack.c.l.b16 %v1500
    %v1636 = vunpack.c.l.b16 %v1501
    %v1637 = vunpack.c.l.b16 %v1502
    %v1638 = vunpack.c.l.b16 %v1503
    %v1639 = vunpack.c.l.b16 %v1504
    %v1640 = vunpack.c.l.b16 %v1505
    %v1641 = vunpack.c.l.b16 %v1506
    %v1642 = vunpack.c.l.b16 %v1507
    %v1643 = vunpack.c.l.b16 %v1508
    %v1644 = vunpack.c.l.b16 %v1509
    %v1645 = vunpack.c.l.b16 %v1510
    %v1646 = vunpack.c.l.b16 %v1511
    %v1647 = vunpack.c.l.b16 %v1512
    %v1648 = vunpack.c.l.b16 %v1513
    %v1649 = vunpack.c.l.b16 %v1514
    %v1650 = vpack.c.b16 %v1587, %v1586
    %v1651 = vpack.c.b16 %v1589, %v1588
    %v1652 = vpack.c.b16 %v1591, %v1590
    %v1653 = vpack.c.b16 %v1593, %v1592
    %v1654 = vpack.c.b16 %v1595, %v1594
    %v1655 = vpack.c.b16 %v1597, %v1596
    %v1656 = vpack.c.b16 %v1599, %v1598
    %v1657 = vpack.c.b16 %v1601, %v1600
    %v1658 = vpack.c.b16 %v1603, %v1602
    %v1659 = vpack.c.b16 %v1605, %v1604
    %v1660 = vpack.c.b16 %v1607, %v1606
    %v1661 = vpack.c.b16 %v1609, %v1608
    %v1662 = vpack.c.b16 %v1611, %v1610
    %v1663 = vpack.c.b16 %v1613, %v1612
    %v1664 = vpack.c.b16 %v1615, %v1614
    %v1665 = vpack.c.b16 %v1617, %v1616
    %v1666 = vpack.c.b16 %v1619, %v1618
    %v1667 = vpack.c.b16 %v1621, %v1620
    %v1668 = vpack.c.b16 %v1623, %v1622
    %v1669 = vpack.c.b16 %v1625, %v1624
    %v1670 = vpack.c.b16 %v1627, %v1626
    %v1671 = vpack.c.b16 %v1629, %v1628
    %v1672 = vpack.c.b16 %v1631, %v1630
    %v1673 = vpack.c.b16 %v1633, %v1632
    %v1674 = vpack.c.b16 %v1635, %v1634
    %v1675 = vpack.c.b16 %v1637, %v1636
    %v1676 = vpack.c.b16 %v1639, %v1638
    %v1677 = vpack.c.b16 %v1641, %v1640
    %v1678 = vpack.c.b16 %v1643, %v1642
    %v1679 = vpack.c.b16 %v1645, %v1644
    %v1680 = vpack.c.b16 %v1647, %v1646
    %v1681 = vpack.c.b16 %v1649, %v1648
    %1714 = vmatprep.subr.bf16.mxu0 0
    %1715 = vmatpush1.bf16.msra.mxu0 %v1650
    %1716 = vmatprep.subr.bf16.mxu0 0
    %1717 = vmatpush1.bf16.msra.mxu0 %v1651
    %1718 = vmatprep.subr.bf16.mxu0 0
    %1719 = vmatpush1.bf16.msra.mxu0 %v1652
    %1720 = vmatprep.subr.bf16.mxu0 0
    %1721 = vmatpush1.bf16.msra.mxu0 %v1653
    %1722 = vmatprep.subr.bf16.mxu0 0
    %1723 = vmatpush1.bf16.msra.mxu0 %v1654
    %1724 = vmatprep.subr.bf16.mxu0 0
    %1725 = vmatpush1.bf16.msra.mxu0 %v1655
    %1726 = vmatprep.subr.bf16.mxu0 0
    %1727 = vmatpush1.bf16.msra.mxu0 %v1656
    %1728 = vmatprep.subr.bf16.mxu0 0
    %1729 = vmatpush1.bf16.msra.mxu0 %v1657
    %1730 = vmatprep.subr.bf16.mxu0 0
    %1731 = vmatpush1.bf16.msra.mxu0 %v1658
    %1732 = vmatprep.subr.bf16.mxu0 0
    %1733 = vmatpush1.bf16.msra.mxu0 %v1659
    %1734 = vmatprep.subr.bf16.mxu0 0
    %1735 = vmatpush1.bf16.msra.mxu0 %v1660
    %1736 = vmatprep.subr.bf16.mxu0 0
    %1737 = vmatpush1.bf16.msra.mxu0 %v1661
    %1738 = vmatprep.subr.bf16.mxu0 0
    %1739 = vmatpush1.bf16.msra.mxu0 %v1662
    %1740 = vmatprep.subr.bf16.mxu0 0
    %1741 = vmatpush1.bf16.msra.mxu0 %v1663
    %1742 = vmatprep.subr.bf16.mxu0 0
    %1743 = vmatpush1.bf16.msra.mxu0 %v1664
    %1744 = vmatprep.subr.bf16.mxu0 0
    %1745 = vmatpush1.bf16.msra.mxu0 %v1665
    %1746 = vmatprep.mubr.bf16.mxu0 %v1433
    %1747 = vmatmul.mubr.bf16.gmra.mrb[0].mxu0 %v1425
    %v1748 = vpop.f32.mrb[0].mxu0
    %v1749 = vadd.f32 %v1520, %v1748
    %v1750 = vpop.f32.mrb[0].mxu0
    %v1751 = vpop.f32.mrb[0].mxu0
    %v1752 = vadd.f32 %v1520, %v1751
    %v1753 = vpop.f32.mrb[0].mxu0
    %1754 = vdwg.mxu0
    %1755 = vmatprep.subr.bf16.mxu0 0
    %1756 = vmatpush1.bf16.msra.mxu0 %v1666
    %1757 = vmatprep.subr.bf16.mxu0 0
    %1758 = vmatpush1.bf16.msra.mxu0 %v1667
    %1759 = vmatprep.subr.bf16.mxu0 0
    %1760 = vmatpush1.bf16.msra.mxu0 %v1668
    %1761 = vmatprep.subr.bf16.mxu0 0
    %1762 = vmatpush1.bf16.msra.mxu0 %v1669
    %1763 = vmatprep.subr.bf16.mxu0 0
    %1764 = vmatpush1.bf16.msra.mxu0 %v1670
    %1765 = vmatprep.subr.bf16.mxu0 0
    %1766 = vmatpush1.bf16.msra.mxu0 %v1671
    %1767 = vmatprep.subr.bf16.mxu0 0
    %1768 = vmatpush1.bf16.msra.mxu0 %v1672
    %1769 = vmatprep.subr.bf16.mxu0 0
    %1770 = vmatpush1.bf16.msra.mxu0 %v1673
    %1771 = vmatprep.subr.bf16.mxu0 0
    %1772 = vmatpush1.bf16.msra.mxu0 %v1674
    %1773 = vmatprep.subr.bf16.mxu0 0
    %1774 = vmatpush1.bf16.msra.mxu0 %v1675
    %1775 = vmatprep.subr.bf16.mxu0 0
    %1776 = vmatpush1.bf16.msra.mxu0 %v1676
    %1777 = vmatprep.subr.bf16.mxu0 0
    %1778 = vmatpush1.bf16.msra.mxu0 %v1677
    %1779 = vmatprep.subr.bf16.mxu0 0
    %1780 = vmatpush1.bf16.msra.mxu0 %v1678
    %1781 = vmatprep.subr.bf16.mxu0 0
    %1782 = vmatpush1.bf16.msra.mxu0 %v1679
    %1783 = vmatprep.subr.bf16.mxu0 0
    %1784 = vmatpush1.bf16.msra.mxu0 %v1680
    %1785 = vmatprep.subr.bf16.mxu0 0
    %1786 = vmatpush1.bf16.msra.mxu0 %v1681
    %1787 = vmatprep.mubr.bf16.mxu0 %v1449
    %1788 = vmatmul.mubr.bf16.gmra.mrb[0].mxu0 %v1441
    %v1789 = vpop.f32.mrb[0].mxu0
    %v1790 = vadd.f32 %v1749, %v1789
    %v1791 = vpop.f32.mrb[0].mxu0
    %v1792 = vpop.f32.mrb[0].mxu0
    %v1793 = vadd.f32 %v1752, %v1792
    %v1794 = vpop.f32.mrb[0].mxu0
    %1795 = vdwg.mxu0
    %v1796 = vmax.f32 %v1790, 0.0
    %v1797 = vmax.f32 %v1793, 0.0
    %v1798 = vpack.c.bf16 %v1797, %v1796
    %v1799 = vld [vmem:[#allocation13] sm:$0x1]
    %vm1800 = vcmask 72704
    %v1802 = vsel %vm1800, %v1799, 0
    %vm1804 = vcmask 1043456
    %vm1805 = vcmask 1044480
    %v1806 = vsel %vm1804, 4294967295, 65535
    %v1807 = vsel %vm1805, %v1806, 0
    %v1809 = vand.u32 %v1798, %v1807
    %1811 = vmatprep.subr.bf16.mxu0 0
    %1812 = vmatpush1.bf16.msra.mxu0 %v1809
    %1813 = vmatprep.subr.bf16.mxu0 0
    %1814 = vmatpush1.bf16.msra.mxu0 0
    %1815 = vmatprep.subr.bf16.mxu0 0
    %1816 = vmatpush1.bf16.msra.mxu0 0
    %1817 = vmatprep.subr.bf16.mxu0 0
    %1818 = vmatpush1.bf16.msra.mxu0 0
    %1819 = vmatprep.subr.bf16.mxu0 0
    %1820 = vmatpush1.bf16.msra.mxu0 0
    %1821 = vmatprep.subr.bf16.mxu0 0
    %1822 = vmatpush1.bf16.msra.mxu0 0
    %1823 = vmatprep.subr.bf16.mxu0 0
    %1824 = vmatpush1.bf16.msra.mxu0 0
    %1825 = vmatprep.subr.bf16.mxu0 0
    %1826 = vmatpush1.bf16.msra.mxu0 0
    %1827 = vmatprep.subr.bf16.mxu0 0
    %1828 = vmatpush1.bf16.msra.mxu0 0
    %1829 = vmatprep.subr.bf16.mxu0 0
    %1830 = vmatpush1.bf16.msra.mxu0 0
    %1831 = vmatprep.subr.bf16.mxu0 0
    %1832 = vmatpush1.bf16.msra.mxu0 0
    %1833 = vmatprep.subr.bf16.mxu0 0
    %1834 = vmatpush1.bf16.msra.mxu0 0
    %1835 = vmatprep.subr.bf16.mxu0 0
    %1836 = vmatpush1.bf16.msra.mxu0 0
    %1837 = vmatprep.subr.bf16.mxu0 0
    %1838 = vmatpush1.bf16.msra.mxu0 0
    %1839 = vmatprep.subr.bf16.mxu0 0
    %1840 = vmatpush1.bf16.msra.mxu0 0
    %1841 = vmatprep.subr.bf16.mxu0 0
    %1842 = vmatpush1.bf16.msra.mxu0 0
    %1843 = vmatprep.mubr.bf16.mxu0 0
    %1844 = vmatmul.mubr.bf16.gmra.mrb[0].mxu0 %v1802
    %v1845 = vpop.f32.mrb[0].mxu0
    %v1846 = vadd.f32 0.0, %v1845
    %v1847 = vpop.f32.mrb[0].mxu0
    %v1848 = vpop.f32.mrb[0].mxu0
    %v1849 = vpop.f32.mrb[0].mxu0
    %1850 = vdwg.mxu0
    %v1851 = vpack.c.bf16 %v1846, %v1846
    %s1852 = scalar_lea.vmem [#allocation13], 1
    %v1853 = vld [vmem:[%s1852] sm:$0x1]
    %v1855 = vsel %vm1800, %v1853, 0
    %1857 = vmatprep.subr.bf16.mxu0 0
    %1858 = vmatpush1.bf16.msra.mxu0 %v1809
    %1859 = vmatprep.subr.bf16.mxu0 0
    %1860 = vmatpush1.bf16.msra.mxu0 0
    %1861 = vmatprep.subr.bf16.mxu0 0
    %1862 = vmatpush1.bf16.msra.mxu0 0
    %1863 = vmatprep.subr.bf16.mxu0 0
    %1864 = vmatpush1.bf16.msra.mxu0 0
    %1865 = vmatprep.subr.bf16.mxu0 0
    %1866 = vmatpush1.bf16.msra.mxu0 0
    %1867 = vmatprep.subr.bf16.mxu0 0
    %1868 = vmatpush1.bf16.msra.mxu0 0
    %1869 = vmatprep.subr.bf16.mxu0 0
    %1870 = vmatpush1.bf16.msra.mxu0 0
    %1871 = vmatprep.subr.bf16.mxu0 0
    %1872 = vmatpush1.bf16.msra.mxu0 0
    %1873 = vmatprep.subr.bf16.mxu0 0
    %1874 = vmatpush1.bf16.msra.mxu0 0
    %1875 = vmatprep.subr.bf16.mxu0 0
    %1876 = vmatpush1.bf16.msra.mxu0 0
    %1877 = vmatprep.subr.bf16.mxu0 0
    %1878 = vmatpush1.bf16.msra.mxu0 0
    %1879 = vmatprep.subr.bf16.mxu0 0
    %1880 = vmatpush1.bf16.msra.mxu0 0
    %1881 = vmatprep.subr.bf16.mxu0 0
    %1882 = vmatpush1.bf16.msra.mxu0 0
    %1883 = vmatprep.subr.bf16.mxu0 0
    %1884 = vmatpush1.bf16.msra.mxu0 0
    %1885 = vmatprep.subr.bf16.mxu0 0
    %1886 = vmatpush1.bf16.msra.mxu0 0
    %1887 = vmatprep.subr.bf16.mxu0 0
    %1888 = vmatpush1.bf16.msra.mxu0 0
    %1889 = vmatprep.mubr.bf16.mxu0 0
    %1890 = vmatmul.mubr.bf16.gmra.mrb[0].mxu0 %v1855
    %v1891 = vpop.f32.mrb[0].mxu0
    %v1892 = vadd.f32 0.0, %v1891
    %v1893 = vpop.f32.mrb[0].mxu0
    %v1894 = vpop.f32.mrb[0].mxu0
    %v1895 = vpop.f32.mrb[0].mxu0
    %1896 = vdwg.mxu0
    %v1897 = vpack.c.bf16 %v1892, %v1892
    %s1898 = scalar_lea.vmem [#allocation13], 2
    %v1899 = vld [vmem:[%s1898] sm:$0x1]
    %v1901 = vsel %vm1800, %v1899, 0
    %1903 = vmatprep.subr.bf16.mxu0 0
    %1904 = vmatpush1.bf16.msra.mxu0 %v1809
    %1905 = vmatprep.subr.bf16.mxu0 0
    %1906 = vmatpush1.bf16.msra.mxu0 0
    %1907 = vmatprep.subr.bf16.mxu0 0
    %1908 = vmatpush1.bf16.msra.mxu0 0
    %1909 = vmatprep.subr.bf16.mxu0 0
    %1910 = vmatpush1.bf16.msra.mxu0 0
    %1911 = vmatprep.subr.bf16.mxu0 0
    %1912 = vmatpush1.bf16.msra.mxu0 0
    %1913 = vmatprep.subr.bf16.mxu0 0
    %1914 = vmatpush1.bf16.msra.mxu0 0
    %1915 = vmatprep.subr.bf16.mxu0 0
    %1916 = vmatpush1.bf16.msra.mxu0 0
    %1917 = vmatprep.subr.bf16.mxu0 0
    %1918 = vmatpush1.bf16.msra.mxu0 0
    %1919 = vmatprep.subr.bf16.mxu0 0
    %1920 = vmatpush1.bf16.msra.mxu0 0
    %1921 = vmatprep.subr.bf16.mxu0 0
    %1922 = vmatpush1.bf16.msra.mxu0 0
    %1923 = vmatprep.subr.bf16.mxu0 0
    %1924 = vmatpush1.bf16.msra.mxu0 0
    %1925 = vmatprep.subr.bf16.mxu0 0
    %1926 = vmatpush1.bf16.msra.mxu0 0
    %1927 = vmatprep.subr.bf16.mxu0 0
    %1928 = vmatpush1.bf16.msra.mxu0 0
    %1929 = vmatprep.subr.bf16.mxu0 0
    %1930 = vmatpush1.bf16.msra.mxu0 0
    %1931 = vmatprep.subr.bf16.mxu0 0
    %1932 = vmatpush1.bf16.msra.mxu0 0
    %1933 = vmatprep.subr.bf16.mxu0 0
    %1934 = vmatpush1.bf16.msra.mxu0 0
    %1935 = vmatprep.mubr.bf16.mxu0 0
    %1936 = vmatmul.mubr.bf16.gmra.mrb[0].mxu0 %v1901
    %v1937 = vpop.f32.mrb[0].mxu0
    %v1938 = vadd.f32 0.0, %v1937
    %v1939 = vpop.f32.mrb[0].mxu0
    %v1940 = vpop.f32.mrb[0].mxu0
    %v1941 = vpop.f32.mrb[0].mxu0
    %1942 = vdwg.mxu0
    %v1943 = vpack.c.bf16 %v1938, %v1938
    %s1944 = scalar_lea.vmem [#allocation13], 3
    %v1945 = vld [vmem:[%s1944] sm:$0x1]
    %v1947 = vsel %vm1800, %v1945, 0
    %1949 = vmatprep.subr.bf16.mxu0 0
    %1950 = vmatpush1.bf16.msra.mxu0 %v1809
    %1951 = vmatprep.subr.bf16.mxu0 0
    %1952 = vmatpush1.bf16.msra.mxu0 0
    %1953 = vmatprep.subr.bf16.mxu0 0
    %1954 = vmatpush1.bf16.msra.mxu0 0
    %1955 = vmatprep.subr.bf16.mxu0 0
    %1956 = vmatpush1.bf16.msra.mxu0 0
    %1957 = vmatprep.subr.bf16.mxu0 0
    %1958 = vmatpush1.bf16.msra.mxu0 0
    %1959 = vmatprep.subr.bf16.mxu0 0
    %1960 = vmatpush1.bf16.msra.mxu0 0
    %1961 = vmatprep.subr.bf16.mxu0 0
    %1962 = vmatpush1.bf16.msra.mxu0 0
    %1963 = vmatprep.subr.bf16.mxu0 0
    %1964 = vmatpush1.bf16.msra.mxu0 0
    %1965 = vmatprep.subr.bf16.mxu0 0
    %1966 = vmatpush1.bf16.msra.mxu0 0
    %1967 = vmatprep.subr.bf16.mxu0 0
    %1968 = vmatpush1.bf16.msra.mxu0 0
    %1969 = vmatprep.subr.bf16.mxu0 0
    %1970 = vmatpush1.bf16.msra.mxu0 0
    %1971 = vmatprep.subr.bf16.mxu0 0
    %1972 = vmatpush1.bf16.msra.mxu0 0
    %1973 = vmatprep.subr.bf16.mxu0 0
    %1974 = vmatpush1.bf16.msra.mxu0 0
    %1975 = vmatprep.subr.bf16.mxu0 0
    %1976 = vmatpush1.bf16.msra.mxu0 0
    %1977 = vmatprep.subr.bf16.mxu0 0
    %1978 = vmatpush1.bf16.msra.mxu0 0
    %1979 = vmatprep.subr.bf16.mxu0 0
    %1980 = vmatpush1.bf16.msra.mxu0 0
    %1981 = vmatprep.mubr.bf16.mxu0 0
    %1982 = vmatmul.mubr.bf16.gmra.mrb[0].mxu0 %v1947
    %v1983 = vpop.f32.mrb[0].mxu0
    %v1984 = vadd.f32 0.0, %v1983
    %v1985 = vpop.f32.mrb[0].mxu0
    %v1986 = vpop.f32.mrb[0].mxu0
    %v1987 = vpop.f32.mrb[0].mxu0
    %1988 = vdwg.mxu0
    %v1989 = vpack.c.bf16 %v1984, %v1984
    %s1990 = scalar_lea.vmem [#allocation13], 4
    %v1991 = vld [vmem:[%s1990] sm:$0x1]
    %v1993 = vsel %vm1800, %v1991, 0
    %1995 = vmatprep.subr.bf16.mxu0 0
    %1996 = vmatpush1.bf16.msra.mxu0 %v1809
    %1997 = vmatprep.subr.bf16.mxu0 0
    %1998 = vmatpush1.bf16.msra.mxu0 0
    %1999 = vmatprep.subr.bf16.mxu0 0
    %2000 = vmatpush1.bf16.msra.mxu0 0
    %2001 = vmatprep.subr.bf16.mxu0 0
    %2002 = vmatpush1.bf16.msra.mxu0 0
    %2003 = vmatprep.subr.bf16.mxu0 0
    %2004 = vmatpush1.bf16.msra.mxu0 0
    %2005 = vmatprep.subr.bf16.mxu0 0
    %2006 = vmatpush1.bf16.msra.mxu0 0
    %2007 = vmatprep.subr.bf16.mxu0 0
    %2008 = vmatpush1.bf16.msra.mxu0 0
    %2009 = vmatprep.subr.bf16.mxu0 0
    %2010 = vmatpush1.bf16.msra.mxu0 0
    %2011 = vmatprep.subr.bf16.mxu0 0
    %2012 = vmatpush1.bf16.msra.mxu0 0
    %2013 = vmatprep.subr.bf16.mxu0 0
    %2014 = vmatpush1.bf16.msra.mxu0 0
    %2015 = vmatprep.subr.bf16.mxu0 0
    %2016 = vmatpush1.bf16.msra.mxu0 0
    %2017 = vmatprep.subr.bf16.mxu0 0
    %2018 = vmatpush1.bf16.msra.mxu0 0
    %2019 = vmatprep.subr.bf16.mxu0 0
    %2020 = vmatpush1.bf16.msra.mxu0 0
    %2021 = vmatprep.subr.bf16.mxu0 0
    %2022 = vmatpush1.bf16.msra.mxu0 0
    %2023 = vmatprep.subr.bf16.mxu0 0
    %2024 = vmatpush1.bf16.msra.mxu0 0
    %2025 = vmatprep.subr.bf16.mxu0 0
    %2026 = vmatpush1.bf16.msra.mxu0 0
    %2027 = vmatprep.mubr.bf16.mxu0 0
    %2028 = vmatmul.mubr.bf16.gmra.mrb[0].mxu0 %v1993
    %v2029 = vpop.f32.mrb[0].mxu0
    %v2030 = vadd.f32 0.0, %v2029
    %v2031 = vpop.f32.mrb[0].mxu0
    %v2032 = vpop.f32.mrb[0].mxu0
    %v2033 = vpop.f32.mrb[0].mxu0
    %2034 = vdwg.mxu0
    %v2035 = vpack.c.bf16 %v2030, %v2030
    %s2036 = scalar_lea.vmem [#allocation13], 5
    %v2037 = vld [vmem:[%s2036] sm:$0x1]
    %v2039 = vsel %vm1800, %v2037, 0
    %2041 = vmatprep.subr.bf16.mxu0 0
    %2042 = vmatpush1.bf16.msra.mxu0 %v1809
    %2043 = vmatprep.subr.bf16.mxu0 0
    %2044 = vmatpush1.bf16.msra.mxu0 0
    %2045 = vmatprep.subr.bf16.mxu0 0
    %2046 = vmatpush1.bf16.msra.mxu0 0
    %2047 = vmatprep.subr.bf16.mxu0 0
    %2048 = vmatpush1.bf16.msra.mxu0 0
    %2049 = vmatprep.subr.bf16.mxu0 0
    %2050 = vmatpush1.bf16.msra.mxu0 0
    %2051 = vmatprep.subr.bf16.mxu0 0
    %2052 = vmatpush1.bf16.msra.mxu0 0
    %2053 = vmatprep.subr.bf16.mxu0 0
    %2054 = vmatpush1.bf16.msra.mxu0 0
    %2055 = vmatprep.subr.bf16.mxu0 0
    %2056 = vmatpush1.bf16.msra.mxu0 0
    %2057 = vmatprep.subr.bf16.mxu0 0
    %2058 = vmatpush1.bf16.msra.mxu0 0
    %2059 = vmatprep.subr.bf16.mxu0 0
    %2060 = vmatpush1.bf16.msra.mxu0 0
    %2061 = vmatprep.subr.bf16.mxu0 0
    %2062 = vmatpush1.bf16.msra.mxu0 0
    %2063 = vmatprep.subr.bf16.mxu0 0
    %2064 = vmatpush1.bf16.msra.mxu0 0
    %2065 = vmatprep.subr.bf16.mxu0 0
    %2066 = vmatpush1.bf16.msra.mxu0 0
    %2067 = vmatprep.subr.bf16.mxu0 0
    %2068 = vmatpush1.bf16.msra.mxu0 0
    %2069 = vmatprep.subr.bf16.mxu0 0
    %2070 = vmatpush1.bf16.msra.mxu0 0
    %2071 = vmatprep.subr.bf16.mxu0 0
    %2072 = vmatpush1.bf16.msra.mxu0 0
    %2073 = vmatprep.mubr.bf16.mxu0 0
    %2074 = vmatmul.mubr.bf16.gmra.mrb[0].mxu0 %v2039
    %v2075 = vpop.f32.mrb[0].mxu0
    %v2076 = vadd.f32 0.0, %v2075
    %v2077 = vpop.f32.mrb[0].mxu0
    %v2078 = vpop.f32.mrb[0].mxu0
    %v2079 = vpop.f32.mrb[0].mxu0
    %2080 = vdwg.mxu0
    %v2081 = vpack.c.bf16 %v2076, %v2076
    %s2082 = scalar_lea.vmem [#allocation13], 6
    %v2083 = vld [vmem:[%s2082] sm:$0x1]
    %v2085 = vsel %vm1800, %v2083, 0
    %2087 = vmatprep.subr.bf16.mxu0 0
    %2088 = vmatpush1.bf16.msra.mxu0 %v1809
    %2089 = vmatprep.subr.bf16.mxu0 0
    %2090 = vmatpush1.bf16.msra.mxu0 0
    %2091 = vmatprep.subr.bf16.mxu0 0
    %2092 = vmatpush1.bf16.msra.mxu0 0
    %2093 = vmatprep.subr.bf16.mxu0 0
    %2094 = vmatpush1.bf16.msra.mxu0 0
    %2095 = vmatprep.subr.bf16.mxu0 0
    %2096 = vmatpush1.bf16.msra.mxu0 0
    %2097 = vmatprep.subr.bf16.mxu0 0
    %2098 = vmatpush1.bf16.msra.mxu0 0
    %2099 = vmatprep.subr.bf16.mxu0 0
    %2100 = vmatpush1.bf16.msra.mxu0 0
    %2101 = vmatprep.subr.bf16.mxu0 0
    %2102 = vmatpush1.bf16.msra.mxu0 0
    %2103 = vmatprep.subr.bf16.mxu0 0
    %2104 = vmatpush1.bf16.msra.mxu0 0
    %2105 = vmatprep.subr.bf16.mxu0 0
    %2106 = vmatpush1.bf16.msra.mxu0 0
    %2107 = vmatprep.subr.bf16.mxu0 0
    %2108 = vmatpush1.bf16.msra.mxu0 0
    %2109 = vmatprep.subr.bf16.mxu0 0
    %2110 = vmatpush1.bf16.msra.mxu0 0
    %2111 = vmatprep.subr.bf16.mxu0 0
    %2112 = vmatpush1.bf16.msra.mxu0 0
    %2113 = vmatprep.subr.bf16.mxu0 0
    %2114 = vmatpush1.bf16.msra.mxu0 0
    %2115 = vmatprep.subr.bf16.mxu0 0
    %2116 = vmatpush1.bf16.msra.mxu0 0
    %2117 = vmatprep.subr.bf16.mxu0 0
    %2118 = vmatpush1.bf16.msra.mxu0 0
    %2119 = vmatprep.mubr.bf16.mxu0 0
    %2120 = vmatmul.mubr.bf16.gmra.mrb[0].mxu0 %v2085
    %v2121 = vpop.f32.mrb[0].mxu0
    %v2122 = vadd.f32 0.0, %v2121
    %v2123 = vpop.f32.mrb[0].mxu0
    %v2124 = vpop.f32.mrb[0].mxu0
    %v2125 = vpop.f32.mrb[0].mxu0
    %2126 = vdwg.mxu0
    %v2127 = vpack.c.bf16 %v2122, %v2122
    %s2128 = scalar_lea.vmem [#allocation13], 7
    %v2129 = vld [vmem:[%s2128] sm:$0x1]
    %v2131 = vsel %vm1800, %v2129, 0
    %2133 = vmatprep.subr.bf16.mxu0 0
    %2134 = vmatpush1.bf16.msra.mxu0 %v1809
    %2135 = vmatprep.subr.bf16.mxu0 0
    %2136 = vmatpush1.bf16.msra.mxu0 0
    %2137 = vmatprep.subr.bf16.mxu0 0
    %2138 = vmatpush1.bf16.msra.mxu0 0
    %2139 = vmatprep.subr.bf16.mxu0 0
    %2140 = vmatpush1.bf16.msra.mxu0 0
    %2141 = vmatprep.subr.bf16.mxu0 0
    %2142 = vmatpush1.bf16.msra.mxu0 0
    %2143 = vmatprep.subr.bf16.mxu0 0
    %2144 = vmatpush1.bf16.msra.mxu0 0
    %2145 = vmatprep.subr.bf16.mxu0 0
    %2146 = vmatpush1.bf16.msra.mxu0 0
    %2147 = vmatprep.subr.bf16.mxu0 0
    %2148 = vmatpush1.bf16.msra.mxu0 0
    %2149 = vmatprep.subr.bf16.mxu0 0
    %2150 = vmatpush1.bf16.msra.mxu0 0
    %2151 = vmatprep.subr.bf16.mxu0 0
    %2152 = vmatpush1.bf16.msra.mxu0 0
    %2153 = vmatprep.subr.bf16.mxu0 0
    %2154 = vmatpush1.bf16.msra.mxu0 0
    %2155 = vmatprep.subr.bf16.mxu0 0
    %2156 = vmatpush1.bf16.msra.mxu0 0
    %2157 = vmatprep.subr.bf16.mxu0 0
    %2158 = vmatpush1.bf16.msra.mxu0 0
    %2159 = vmatprep.subr.bf16.mxu0 0
    %2160 = vmatpush1.bf16.msra.mxu0 0
    %2161 = vmatprep.subr.bf16.mxu0 0
    %2162 = vmatpush1.bf16.msra.mxu0 0
    %2163 = vmatprep.subr.bf16.mxu0 0
    %2164 = vmatpush1.bf16.msra.mxu0 0
    %2165 = vmatprep.mubr.bf16.mxu0 0
    %2166 = vmatmul.mubr.bf16.gmra.mrb[0].mxu0 %v2131
    %v2167 = vpop.f32.mrb[0].mxu0
    %v2168 = vadd.f32 0.0, %v2167
    %v2169 = vpop.f32.mrb[0].mxu0
    %v2170 = vpop.f32.mrb[0].mxu0
    %v2171 = vpop.f32.mrb[0].mxu0
    %2172 = vdwg.mxu0
    %v2173 = vpack.c.bf16 %v2168, %v2168
    %s2174 = scalar_lea.vmem [#allocation13], 8
    %v2175 = vld [vmem:[%s2174] sm:$0x1]
    %v2177 = vsel %vm1800, %v2175, 0
    %2179 = vmatprep.subr.bf16.mxu0 0
    %2180 = vmatpush1.bf16.msra.mxu0 %v1809
    %2181 = vmatprep.subr.bf16.mxu0 0
    %2182 = vmatpush1.bf16.msra.mxu0 0
    %2183 = vmatprep.subr.bf16.mxu0 0
    %2184 = vmatpush1.bf16.msra.mxu0 0
    %2185 = vmatprep.subr.bf16.mxu0 0
    %2186 = vmatpush1.bf16.msra.mxu0 0
    %2187 = vmatprep.subr.bf16.mxu0 0
    %2188 = vmatpush1.bf16.msra.mxu0 0
    %2189 = vmatprep.subr.bf16.mxu0 0
    %2190 = vmatpush1.bf16.msra.mxu0 0
    %2191 = vmatprep.subr.bf16.mxu0 0
    %2192 = vmatpush1.bf16.msra.mxu0 0
    %2193 = vmatprep.subr.bf16.mxu0 0
    %2194 = vmatpush1.bf16.msra.mxu0 0
    %2195 = vmatprep.subr.bf16.mxu0 0
    %2196 = vmatpush1.bf16.msra.mxu0 0
    %2197 = vmatprep.subr.bf16.mxu0 0
    %2198 = vmatpush1.bf16.msra.mxu0 0
    %2199 = vmatprep.subr.bf16.mxu0 0
    %2200 = vmatpush1.bf16.msra.mxu0 0
    %2201 = vmatprep.subr.bf16.mxu0 0
    %2202 = vmatpush1.bf16.msra.mxu0 0
    %2203 = vmatprep.subr.bf16.mxu0 0
    %2204 = vmatpush1.bf16.msra.mxu0 0
    %2205 = vmatprep.subr.bf16.mxu0 0
    %2206 = vmatpush1.bf16.msra.mxu0 0
    %2207 = vmatprep.subr.bf16.mxu0 0
    %2208 = vmatpush1.bf16.msra.mxu0 0
    %2209 = vmatprep.subr.bf16.mxu0 0
    %2210 = vmatpush1.bf16.msra.mxu0 0
    %2211 = vmatprep.mubr.bf16.mxu0 0
    %2212 = vmatmul.mubr.bf16.gmra.mrb[0].mxu0 %v2177
    %v2213 = vpop.f32.mrb[0].mxu0
    %v2214 = vadd.f32 0.0, %v2213
    %v2215 = vpop.f32.mrb[0].mxu0
    %v2216 = vpop.f32.mrb[0].mxu0
    %v2217 = vpop.f32.mrb[0].mxu0
    %2218 = vdwg.mxu0
    %v2219 = vpack.c.bf16 %v2214, %v2214
    %2221 = vrot.lane.b32.xlu0 %v1897, 64
    %v2222 = vpop.permute.xlu0 %2221
    %2224 = vrot.lane.b32.xlu0 %v1989, 64
    %v2225 = vpop.permute.xlu0 %2224
    %2227 = vrot.lane.b32.xlu0 %v2081, 64
    %v2228 = vpop.permute.xlu0 %2227
    %2230 = vrot.lane.b32.xlu0 %v2173, 64
    %v2231 = vpop.permute.xlu0 %2230
    %v2234 = vsel %vm540, %v1851, %v2222
    %v2238 = vsel %vm540, %v1943, %v2225
    %v2242 = vsel %vm540, %v2035, %v2228
    %v2246 = vsel %vm540, %v2127, %v2231
    %v2248 = vld [vmem:[#allocation14] sm:$0xf]
    %v2249 = vld [vmem:[#allocation14 + $0x4] sm:$0xf]
    %v2250 = vld [vmem:[#allocation14 + $0x8] sm:$0xf]
    %v2251 = vld [vmem:[#allocation14 + $0xc] sm:$0xf]
    %v2252 = vld [vmem:[#allocation14 + $0x10] sm:$0xf]
    %v2253 = vld [vmem:[#allocation14 + $0x14] sm:$0xf]
    %v2254 = vld [vmem:[#allocation14 + $0x18] sm:$0xf]
    %v2255 = vld [vmem:[#allocation14 + $0x1c] sm:$0xf]
    %v2256 = vld [vmem:[#allocation14 + $0x20] sm:$0xf]
    %v2257 = vld [vmem:[#allocation14 + $0x24] sm:$0xf]
    %v2258 = vld [vmem:[#allocation14 + $0x28] sm:$0xf]
    %v2259 = vld [vmem:[#allocation14 + $0x2c] sm:$0xf]
    %v2260 = vld [vmem:[#allocation14 + $0x30] sm:$0xf]
    %v2261 = vld [vmem:[#allocation14 + $0x34] sm:$0xf]
    %v2262 = vld [vmem:[#allocation14 + $0x38] sm:$0xf]
    %v2263 = vld [vmem:[#allocation14 + $0x3c] sm:$0xf]
    %v2264 = vld [vmem:[#allocation14 + $0x40] sm:$0xf]
    %v2265 = vld [vmem:[#allocation14 + $0x44] sm:$0xf]
    %v2266 = vld [vmem:[#allocation14 + $0x48] sm:$0xf]
    %v2267 = vld [vmem:[#allocation14 + $0x4c] sm:$0xf]
    %v2268 = vld [vmem:[#allocation14 + $0x50] sm:$0xf]
    %v2269 = vld [vmem:[#allocation14 + $0x54] sm:$0xf]
    %v2270 = vld [vmem:[#allocation14 + $0x58] sm:$0xf]
    %v2271 = vld [vmem:[#allocation14 + $0x5c] sm:$0xf]
    %v2272 = vld [vmem:[#allocation14 + $0x60] sm:$0xf]
    %v2273 = vld [vmem:[#allocation14 + $0x64] sm:$0xf]
    %v2274 = vld [vmem:[#allocation14 + $0x68] sm:$0xf]
    %v2275 = vld [vmem:[#allocation14 + $0x6c] sm:$0xf]
    %v2276 = vld [vmem:[#allocation14 + $0x70] sm:$0xf]
    %v2277 = vld [vmem:[#allocation14 + $0x74] sm:$0xf]
    %v2278 = vld [vmem:[#allocation14 + $0x78] sm:$0xf]
    %v2279 = vld [vmem:[#allocation14 + $0x7c] sm:$0xf]
    %v2280 = vld [vmem:[#allocation14 + $0x80] sm:$0xf]
    %v2281 = vld [vmem:[#allocation14 + $0x84] sm:$0xf]
    %v2282 = vld [vmem:[#allocation14 + $0x88] sm:$0xf]
    %v2283 = vld [vmem:[#allocation14 + $0x8c] sm:$0xf]
    %v2284 = vld [vmem:[#allocation14 + $0x90] sm:$0xf]
    %v2285 = vld [vmem:[#allocation14 + $0x94] sm:$0xf]
    %v2286 = vld [vmem:[#allocation14 + $0x98] sm:$0xf]
    %v2287 = vld [vmem:[#allocation14 + $0x9c] sm:$0xf]
    %v2288 = vld [vmem:[#allocation14 + $0xa0] sm:$0xf]
    %v2289 = vld [vmem:[#allocation14 + $0xa4] sm:$0xf]
    %v2290 = vld [vmem:[#allocation14 + $0xa8] sm:$0xf]
    %v2291 = vld [vmem:[#allocation14 + $0xac] sm:$0xf]
    %v2292 = vld [vmem:[#allocation14 + $0xb0] sm:$0xf]
    %v2293 = vld [vmem:[#allocation14 + $0xb4] sm:$0xf]
    %v2294 = vld [vmem:[#allocation14 + $0xb8] sm:$0xf]
    %v2295 = vld [vmem:[#allocation14 + $0xbc] sm:$0xf]
    %v2296 = vld [vmem:[#allocation14 + $0xc0] sm:$0xf]
    %v2297 = vld [vmem:[#allocation14 + $0xc4] sm:$0xf]
    %v2298 = vld [vmem:[#allocation14 + $0xc8] sm:$0xf]
    %v2299 = vld [vmem:[#allocation14 + $0xcc] sm:$0xf]
    %v2300 = vld [vmem:[#allocation14 + $0xd0] sm:$0xf]
    %v2301 = vld [vmem:[#allocation14 + $0xd4] sm:$0xf]
    %v2302 = vld [vmem:[#allocation14 + $0xd8] sm:$0xf]
    %v2303 = vld [vmem:[#allocation14 + $0xdc] sm:$0xf]
    %v2304 = vld [vmem:[#allocation14 + $0xe0] sm:$0xf]
    %v2305 = vld [vmem:[#allocation14 + $0xe4] sm:$0xf]
    %v2306 = vld [vmem:[#allocation14 + $0xe8] sm:$0xf]
    %v2307 = vld [vmem:[#allocation14 + $0xec] sm:$0xf]
    %v2308 = vld [vmem:[#allocation14 + $0xf0] sm:$0xf]
    %v2309 = vld [vmem:[#allocation14 + $0xf4] sm:$0xf]
    %v2310 = vld [vmem:[#allocation14 + $0xf8] sm:$0xf]
    %v2311 = vld [vmem:[#allocation14 + $0xfc] sm:$0xf]
    %v2312 = vld [vmem:[#allocation14 + $0x100] sm:$0xf]
    %v2313 = vld [vmem:[#allocation14 + $0x104] sm:$0xf]
    %v2314 = vld [vmem:[#allocation14 + $0x108] sm:$0xf]
    %v2315 = vld [vmem:[#allocation14 + $0x10c] sm:$0xf]
    %v2316 = vld [vmem:[#allocation14 + $0x110] sm:$0xf]
    %v2317 = vld [vmem:[#allocation14 + $0x114] sm:$0xf]
    %v2318 = vld [vmem:[#allocation14 + $0x118] sm:$0xf]
    %v2319 = vld [vmem:[#allocation14 + $0x11c] sm:$0xf]
    %v2320 = vld [vmem:[#allocation16] sm:$0x1]
    %v2393 = vunpack.c.l.b16 %v2248
    %v2394 = vunpack.c.l.b16 %v2249
    %v2395 = vunpack.c.l.b16 %v2250
    %v2396 = vunpack.c.l.b16 %v2251
    %v2397 = vunpack.c.l.b16 %v2252
    %v2398 = vunpack.c.l.b16 %v2253
    %v2399 = vunpack.c.l.b16 %v2254
    %v2400 = vunpack.c.l.b16 %v2255
    %v2401 = vunpack.c.l.b16 %v2256
    %v2402 = vunpack.c.l.b16 %v2257
    %v2403 = vunpack.c.l.b16 %v2258
    %v2404 = vunpack.c.l.b16 %v2259
    %v2405 = vunpack.c.l.b16 %v2260
    %v2406 = vunpack.c.l.b16 %v2261
    %v2407 = vunpack.c.l.b16 %v2262
    %v2408 = vunpack.c.l.b16 %v2263
    %v2409 = vunpack.c.l.b16 %v2264
    %v2410 = vunpack.c.l.b16 %v2265
    %v2411 = vunpack.c.l.b16 %v2266
    %v2412 = vunpack.c.l.b16 %v2267
    %v2413 = vunpack.c.l.b16 %v2268
    %v2414 = vunpack.c.l.b16 %v2269
    %v2415 = vunpack.c.l.b16 %v2270
    %v2416 = vunpack.c.l.b16 %v2271
    %v2417 = vunpack.c.l.b16 %v2272
    %v2418 = vunpack.c.l.b16 %v2273
    %v2419 = vunpack.c.l.b16 %v2274
    %v2420 = vunpack.c.l.b16 %v2275
    %v2421 = vunpack.c.l.b16 %v2276
    %v2422 = vunpack.c.l.b16 %v2277
    %v2423 = vunpack.c.l.b16 %v2278
    %v2424 = vunpack.c.l.b16 %v2279
    %v2425 = vunpack.c.l.b16 %v2280
    %v2426 = vunpack.c.l.b16 %v2281
    %v2427 = vunpack.c.l.b16 %v2282
    %v2428 = vunpack.c.l.b16 %v2283
    %v2429 = vunpack.c.l.b16 %v2284
    %v2430 = vunpack.c.l.b16 %v2285
    %v2431 = vunpack.c.l.b16 %v2286
    %v2432 = vunpack.c.l.b16 %v2287
    %v2433 = vunpack.c.l.b16 %v2288
    %v2434 = vunpack.c.l.b16 %v2289
    %v2435 = vunpack.c.l.b16 %v2290
    %v2436 = vunpack.c.l.b16 %v2291
    %v2437 = vunpack.c.l.b16 %v2292
    %v2438 = vunpack.c.l.b16 %v2293
    %v2439 = vunpack.c.l.b16 %v2294
    %v2440 = vunpack.c.l.b16 %v2295
    %v2441 = vunpack.c.l.b16 %v2296
    %v2442 = vunpack.c.l.b16 %v2297
    %v2443 = vunpack.c.l.b16 %v2298
    %v2444 = vunpack.c.l.b16 %v2299
    %v2445 = vunpack.c.l.b16 %v2300
    %v2446 = vunpack.c.l.b16 %v2301
    %v2447 = vunpack.c.l.b16 %v2302
    %v2448 = vunpack.c.l.b16 %v2303
    %v2449 = vunpack.c.l.b16 %v2304
    %v2450 = vunpack.c.l.b16 %v2305
    %v2451 = vunpack.c.l.b16 %v2306
    %v2452 = vunpack.c.l.b16 %v2307
    %v2453 = vunpack.c.l.b16 %v2308
    %v2454 = vunpack.c.l.b16 %v2309
    %v2455 = vunpack.c.l.b16 %v2310
    %v2456 = vunpack.c.l.b16 %v2311
    %v2457 = vunpack.c.l.b16 %v2312
    %v2458 = vunpack.c.l.b16 %v2313
    %v2459 = vunpack.c.l.b16 %v2314
    %v2460 = vunpack.c.l.b16 %v2315
    %v2461 = vunpack.c.l.b16 %v2316
    %v2462 = vunpack.c.l.b16 %v2317
    %v2463 = vunpack.c.l.b16 %v2318
    %v2464 = vunpack.c.l.b16 %v2319
    %v2465 = vpack.c.b16 %v2394, %v2393
    %v2466 = vpack.c.b16 %v2396, %v2395
    %v2467 = vpack.c.b16 %v2398, %v2397
    %v2468 = vpack.c.b16 %v2400, %v2399
    %v2469 = vpack.c.b16 %v2402, %v2401
    %v2470 = vpack.c.b16 %v2404, %v2403
    %v2471 = vpack.c.b16 %v2406, %v2405
    %v2472 = vpack.c.b16 %v2408, %v2407
    %v2473 = vpack.c.b16 %v2410, %v2409
    %v2474 = vpack.c.b16 %v2412, %v2411
    %v2475 = vpack.c.b16 %v2414, %v2413
    %v2476 = vpack.c.b16 %v2416, %v2415
    %v2477 = vpack.c.b16 %v2418, %v2417
    %v2478 = vpack.c.b16 %v2420, %v2419
    %v2479 = vpack.c.b16 %v2422, %v2421
    %v2480 = vpack.c.b16 %v2424, %v2423
    %v2481 = vpack.c.b16 %v2426, %v2425
    %v2482 = vpack.c.b16 %v2428, %v2427
    %v2483 = vpack.c.b16 %v2430, %v2429
    %v2484 = vpack.c.b16 %v2432, %v2431
    %v2485 = vpack.c.b16 %v2434, %v2433
    %v2486 = vpack.c.b16 %v2436, %v2435
    %v2487 = vpack.c.b16 %v2438, %v2437
    %v2488 = vpack.c.b16 %v2440, %v2439
    %v2489 = vpack.c.b16 %v2442, %v2441
    %v2490 = vpack.c.b16 %v2444, %v2443
    %v2491 = vpack.c.b16 %v2446, %v2445
    %v2492 = vpack.c.b16 %v2448, %v2447
    %v2493 = vpack.c.b16 %v2450, %v2449
    %v2494 = vpack.c.b16 %v2452, %v2451
    %v2495 = vpack.c.b16 %v2454, %v2453
    %v2496 = vpack.c.b16 %v2456, %v2455
    %v2497 = vpack.c.b16 %v2458, %v2457
    %v2498 = vpack.c.b16 %v2460, %v2459
    %v2499 = vpack.c.b16 %v2462, %v2461
    %v2500 = vpack.c.b16 %v2464, %v2463
    %v2538 = vsel %vm540, %v2219, 0
    %2540 = vmatprep.subr.bf16.mxu0 0
    %2541 = vmatpush1.bf16.msra.mxu0 %v2465
    %2542 = vmatprep.subr.bf16.mxu0 0
    %2543 = vmatpush1.bf16.msra.mxu0 %v2466
    %2544 = vmatprep.subr.bf16.mxu0 0
    %2545 = vmatpush1.bf16.msra.mxu0 %v2467
    %2546 = vmatprep.subr.bf16.mxu0 0
    %2547 = vmatpush1.bf16.msra.mxu0 %v2468
    %2548 = vmatprep.subr.bf16.mxu0 0
    %2549 = vmatpush1.bf16.msra.mxu0 %v2469
    %2550 = vmatprep.subr.bf16.mxu0 0
    %2551 = vmatpush1.bf16.msra.mxu0 %v2470
    %2552 = vmatprep.subr.bf16.mxu0 0
    %2553 = vmatpush1.bf16.msra.mxu0 %v2471
    %2554 = vmatprep.subr.bf16.mxu0 0
    %2555 = vmatpush1.bf16.msra.mxu0 %v2472
    %2556 = vmatprep.subr.bf16.mxu0 0
    %2557 = vmatpush1.bf16.msra.mxu0 %v2473
    %2558 = vmatprep.subr.bf16.mxu0 0
    %2559 = vmatpush1.bf16.msra.mxu0 %v2474
    %2560 = vmatprep.subr.bf16.mxu0 0
    %2561 = vmatpush1.bf16.msra.mxu0 %v2475
    %2562 = vmatprep.subr.bf16.mxu0 0
    %2563 = vmatpush1.bf16.msra.mxu0 %v2476
    %2564 = vmatprep.subr.bf16.mxu0 0
    %2565 = vmatpush1.bf16.msra.mxu0 %v2477
    %2566 = vmatprep.subr.bf16.mxu0 0
    %2567 = vmatpush1.bf16.msra.mxu0 %v2478
    %2568 = vmatprep.subr.bf16.mxu0 0
    %2569 = vmatpush1.bf16.msra.mxu0 %v2479
    %2570 = vmatprep.subr.bf16.mxu0 0
    %2571 = vmatpush1.bf16.msra.mxu0 %v2480
    %2572 = vmatprep.mubr.bf16.mxu0 %v2238
    %2573 = vmatmul.mubr.bf16.gmra.mrb[0].mxu0 %v2234
    %v2574 = vpop.f32.mrb[0].mxu0
    %v2575 = vadd.f32 %v2320, %v2574
    %v2576 = vpop.f32.mrb[0].mxu0
    %v2577 = vpop.f32.mrb[0].mxu0
    %v2578 = vpop.f32.mrb[0].mxu0
    %2579 = vdwg.mxu0
    %2580 = vmatprep.subr.bf16.mxu0 0
    %2581 = vmatpush1.bf16.msra.mxu0 %v2481
    %2582 = vmatprep.subr.bf16.mxu0 0
    %2583 = vmatpush1.bf16.msra.mxu0 %v2482
    %2584 = vmatprep.subr.bf16.mxu0 0
    %2585 = vmatpush1.bf16.msra.mxu0 %v2483
    %2586 = vmatprep.subr.bf16.mxu0 0
    %2587 = vmatpush1.bf16.msra.mxu0 %v2484
    %2588 = vmatprep.subr.bf16.mxu0 0
    %2589 = vmatpush1.bf16.msra.mxu0 %v2485
    %2590 = vmatprep.subr.bf16.mxu0 0
    %2591 = vmatpush1.bf16.msra.mxu0 %v2486
    %2592 = vmatprep.subr.bf16.mxu0 0
    %2593 = vmatpush1.bf16.msra.mxu0 %v2487
    %2594 = vmatprep.subr.bf16.mxu0 0
    %2595 = vmatpush1.bf16.msra.mxu0 %v2488
    %2596 = vmatprep.subr.bf16.mxu0 0
    %2597 = vmatpush1.bf16.msra.mxu0 %v2489
    %2598 = vmatprep.subr.bf16.mxu0 0
    %2599 = vmatpush1.bf16.msra.mxu0 %v2490
    %2600 = vmatprep.subr.bf16.mxu0 0
    %2601 = vmatpush1.bf16.msra.mxu0 %v2491
    %2602 = vmatprep.subr.bf16.mxu0 0
    %2603 = vmatpush1.bf16.msra.mxu0 %v2492
    %2604 = vmatprep.subr.bf16.mxu0 0
    %2605 = vmatpush1.bf16.msra.mxu0 %v2493
    %2606 = vmatprep.subr.bf16.mxu0 0
    %2607 = vmatpush1.bf16.msra.mxu0 %v2494
    %2608 = vmatprep.subr.bf16.mxu0 0
    %2609 = vmatpush1.bf16.msra.mxu0 %v2495
    %2610 = vmatprep.subr.bf16.mxu0 0
    %2611 = vmatpush1.bf16.msra.mxu0 %v2496
    %2612 = vmatprep.mubr.bf16.mxu0 %v2246
    %2613 = vmatmul.mubr.bf16.gmra.mrb[0].mxu0 %v2242
    %v2614 = vpop.f32.mrb[0].mxu0
    %v2615 = vadd.f32 %v2575, %v2614
    %v2616 = vpop.f32.mrb[0].mxu0
    %v2617 = vpop.f32.mrb[0].mxu0
    %v2618 = vpop.f32.mrb[0].mxu0
    %2619 = vdwg.mxu0
    %2620 = vmatprep.subr.bf16.mxu0 0
    %2621 = vmatpush1.bf16.msra.mxu0 %v2497
    %2622 = vmatprep.subr.bf16.mxu0 0
    %2623 = vmatpush1.bf16.msra.mxu0 %v2498
    %2624 = vmatprep.subr.bf16.mxu0 0
    %2625 = vmatpush1.bf16.msra.mxu0 %v2499
    %2626 = vmatprep.subr.bf16.mxu0 0
    %2627 = vmatpush1.bf16.msra.mxu0 %v2500
    %2628 = vmatprep.subr.bf16.mxu0 0
    %2629 = vmatpush1.bf16.msra.mxu0 0
    %2630 = vmatprep.subr.bf16.mxu0 0
    %2631 = vmatpush1.bf16.msra.mxu0 0
    %2632 = vmatprep.subr.bf16.mxu0 0
    %2633 = vmatpush1.bf16.msra.mxu0 0
    %2634 = vmatprep.subr.bf16.mxu0 0
    %2635 = vmatpush1.bf16.msra.mxu0 0
    %2636 = vmatprep.subr.bf16.mxu0 0
    %2637 = vmatpush1.bf16.msra.mxu0 0
    %2638 = vmatprep.subr.bf16.mxu0 0
    %2639 = vmatpush1.bf16.msra.mxu0 0
    %2640 = vmatprep.subr.bf16.mxu0 0
    %2641 = vmatpush1.bf16.msra.mxu0 0
    %2642 = vmatprep.subr.bf16.mxu0 0
    %2643 = vmatpush1.bf16.msra.mxu0 0
    %2644 = vmatprep.subr.bf16.mxu0 0
    %2645 = vmatpush1.bf16.msra.mxu0 0
    %2646 = vmatprep.subr.bf16.mxu0 0
    %2647 = vmatpush1.bf16.msra.mxu0 0
    %2648 = vmatprep.subr.bf16.mxu0 0
    %2649 = vmatpush1.bf16.msra.mxu0 0
    %2650 = vmatprep.subr.bf16.mxu0 0
    %2651 = vmatpush1.bf16.msra.mxu0 0
    %2652 = vmatprep.mubr.bf16.mxu0 0
    %2653 = vmatmul.mubr.bf16.gmra.mrb[0].mxu0 %v2538
    %v2654 = vpop.f32.mrb[0].mxu0
    %v2655 = vadd.f32 %v2615, %v2654
    %v2656 = vpop.f32.mrb[0].mxu0
    %v2657 = vpop.f32.mrb[0].mxu0
    %v2658 = vpop.f32.mrb[0].mxu0
    %2659 = vdwg.mxu0
    %v2660 = vmax.f32 %v2655, 0.0
    %v2661 = vpack.c.bf16 %v2660, %v2660
    %2662 = vmatprep.subr.bf16.mxu0 0
    %2663 = vmatpush1.bf16.msra.mxu0 %v529
    %2664 = vmatprep.subr.bf16.mxu0 0
    %2665 = vmatpush1.bf16.msra.mxu0 %v530
    %2666 = vmatprep.subr.bf16.mxu0 0
    %2667 = vmatpush1.bf16.msra.mxu0 %v531
    %2668 = vmatprep.subr.bf16.mxu0 0
    %2669 = vmatpush1.bf16.msra.mxu0 %v532
    %2670 = vmatprep.subr.bf16.mxu0 0
    %2671 = vmatpush1.bf16.msra.mxu0 0
    %2672 = vmatprep.subr.bf16.mxu0 0
    %2673 = vmatpush1.bf16.msra.mxu0 0
    %2674 = vmatprep.subr.bf16.mxu0 0
    %2675 = vmatpush1.bf16.msra.mxu0 0
    %2676 = vmatprep.subr.bf16.mxu0 0
    %2677 = vmatpush1.bf16.msra.mxu0 0
    %2678 = vmatprep.subr.bf16.mxu0 0
    %2679 = vmatpush1.bf16.msra.mxu0 0
    %2680 = vmatprep.subr.bf16.mxu0 0
    %2681 = vmatpush1.bf16.msra.mxu0 0
    %2682 = vmatprep.subr.bf16.mxu0 0
    %2683 = vmatpush1.bf16.msra.mxu0 0
    %2684 = vmatprep.subr.bf16.mxu0 0
    %2685 = vmatpush1.bf16.msra.mxu0 0
    %2686 = vmatprep.subr.bf16.mxu0 0
    %2687 = vmatpush1.bf16.msra.mxu0 0
    %2688 = vmatprep.subr.bf16.mxu0 0
    %2689 = vmatpush1.bf16.msra.mxu0 0
    %2690 = vmatprep.subr.bf16.mxu0 0
    %2691 = vmatpush1.bf16.msra.mxu0 0
    %2692 = vmatprep.subr.bf16.mxu0 0
    %2693 = vmatpush1.bf16.msra.mxu0 0
    %2694 = vmatprep.mubr.bf16.mxu0 0
    %2695 = vmatmul.mubr.bf16.gmra.mrb[0].mxu0 %v542
    %v2696 = vpop.f32.mrb[0].mxu0
    %v2697 = vadd.f32 0.0, %v2696
    %v2698 = vpop.f32.mrb[0].mxu0
    %v2699 = vpop.f32.mrb[0].mxu0
    %v2700 = vadd.f32 0.0, %v2699
    %v2701 = vpop.f32.mrb[0].mxu0
    %2702 = vdwg.mxu0
    %v2703 = vpack.c.bf16 %v2700, %v2697
    %2704 = vmatprep.subr.bf16.mxu0 0
    %2705 = vmatpush1.bf16.msra.mxu0 %v529
    %2706 = vmatprep.subr.bf16.mxu0 0
    %2707 = vmatpush1.bf16.msra.mxu0 %v530
    %2708 = vmatprep.subr.bf16.mxu0 0
    %2709 = vmatpush1.bf16.msra.mxu0 %v531
    %2710 = vmatprep.subr.bf16.mxu0 0
    %2711 = vmatpush1.bf16.msra.mxu0 %v532
    %2712 = vmatprep.subr.bf16.mxu0 0
    %2713 = vmatpush1.bf16.msra.mxu0 0
    %2714 = vmatprep.subr.bf16.mxu0 0
    %2715 = vmatpush1.bf16.msra.mxu0 0
    %2716 = vmatprep.subr.bf16.mxu0 0
    %2717 = vmatpush1.bf16.msra.mxu0 0
    %2718 = vmatprep.subr.bf16.mxu0 0
    %2719 = vmatpush1.bf16.msra.mxu0 0
    %2720 = vmatprep.subr.bf16.mxu0 0
    %2721 = vmatpush1.bf16.msra.mxu0 0
    %2722 = vmatprep.subr.bf16.mxu0 0
    %2723 = vmatpush1.bf16.msra.mxu0 0
    %2724 = vmatprep.subr.bf16.mxu0 0
    %2725 = vmatpush1.bf16.msra.mxu0 0
    %2726 = vmatprep.subr.bf16.mxu0 0
    %2727 = vmatpush1.bf16.msra.mxu0 0
    %2728 = vmatprep.subr.bf16.mxu0 0
    %2729 = vmatpush1.bf16.msra.mxu0 0
    %2730 = vmatprep.subr.bf16.mxu0 0
    %2731 = vmatpush1.bf16.msra.mxu0 0
    %2732 = vmatprep.subr.bf16.mxu0 0
    %2733 = vmatpush1.bf16.msra.mxu0 0
    %2734 = vmatprep.subr.bf16.mxu0 0
    %2735 = vmatpush1.bf16.msra.mxu0 0
    %2736 = vmatprep.mubr.bf16.mxu0 0
    %2737 = vmatmul.mubr.bf16.gmra.mrb[0].mxu0 %v595
    %v2738 = vpop.f32.mrb[0].mxu0
    %v2739 = vadd.f32 0.0, %v2738
    %v2740 = vpop.f32.mrb[0].mxu0
    %v2741 = vpop.f32.mrb[0].mxu0
    %v2742 = vadd.f32 0.0, %v2741
    %v2743 = vpop.f32.mrb[0].mxu0
    %2744 = vdwg.mxu0
    %v2745 = vpack.c.bf16 %v2742, %v2739
    %2746 = vmatprep.subr.bf16.mxu0 0
    %2747 = vmatpush1.bf16.msra.mxu0 %v529
    %2748 = vmatprep.subr.bf16.mxu0 0
    %2749 = vmatpush1.bf16.msra.mxu0 %v530
    %2750 = vmatprep.subr.bf16.mxu0 0
    %2751 = vmatpush1.bf16.msra.mxu0 %v531
    %2752 = vmatprep.subr.bf16.mxu0 0
    %2753 = vmatpush1.bf16.msra.mxu0 %v532
    %2754 = vmatprep.subr.bf16.mxu0 0
    %2755 = vmatpush1.bf16.msra.mxu0 0
    %2756 = vmatprep.subr.bf16.mxu0 0
    %2757 = vmatpush1.bf16.msra.mxu0 0
    %2758 = vmatprep.subr.bf16.mxu0 0
    %2759 = vmatpush1.bf16.msra.mxu0 0
    %2760 = vmatprep.subr.bf16.mxu0 0
    %2761 = vmatpush1.bf16.msra.mxu0 0
    %2762 = vmatprep.subr.bf16.mxu0 0
    %2763 = vmatpush1.bf16.msra.mxu0 0
    %2764 = vmatprep.subr.bf16.mxu0 0
    %2765 = vmatpush1.bf16.msra.mxu0 0
    %2766 = vmatprep.subr.bf16.mxu0 0
    %2767 = vmatpush1.bf16.msra.mxu0 0
    %2768 = vmatprep.subr.bf16.mxu0 0
    %2769 = vmatpush1.bf16.msra.mxu0 0
    %2770 = vmatprep.subr.bf16.mxu0 0
    %2771 = vmatpush1.bf16.msra.mxu0 0
    %2772 = vmatprep.subr.bf16.mxu0 0
    %2773 = vmatpush1.bf16.msra.mxu0 0
    %2774 = vmatprep.subr.bf16.mxu0 0
    %2775 = vmatpush1.bf16.msra.mxu0 0
    %2776 = vmatprep.subr.bf16.mxu0 0
    %2777 = vmatpush1.bf16.msra.mxu0 0
    %2778 = vmatprep.mubr.bf16.mxu0 0
    %2779 = vmatmul.mubr.bf16.gmra.mrb[0].mxu0 %v648
    %v2780 = vpop.f32.mrb[0].mxu0
    %v2781 = vadd.f32 0.0, %v2780
    %v2782 = vpop.f32.mrb[0].mxu0
    %v2783 = vpop.f32.mrb[0].mxu0
    %v2784 = vadd.f32 0.0, %v2783
    %v2785 = vpop.f32.mrb[0].mxu0
    %2786 = vdwg.mxu0
    %v2787 = vpack.c.bf16 %v2784, %v2781
    %2788 = vmatprep.subr.bf16.mxu0 0
    %2789 = vmatpush1.bf16.msra.mxu0 %v529
    %2790 = vmatprep.subr.bf16.mxu0 0
    %2791 = vmatpush1.bf16.msra.mxu0 %v530
    %2792 = vmatprep.subr.bf16.mxu0 0
    %2793 = vmatpush1.bf16.msra.mxu0 %v531
    %2794 = vmatprep.subr.bf16.mxu0 0
    %2795 = vmatpush1.bf16.msra.mxu0 %v532
    %2796 = vmatprep.subr.bf16.mxu0 0
    %2797 = vmatpush1.bf16.msra.mxu0 0
    %2798 = vmatprep.subr.bf16.mxu0 0
    %2799 = vmatpush1.bf16.msra.mxu0 0
    %2800 = vmatprep.subr.bf16.mxu0 0
    %2801 = vmatpush1.bf16.msra.mxu0 0
    %2802 = vmatprep.subr.bf16.mxu0 0
    %2803 = vmatpush1.bf16.msra.mxu0 0
    %2804 = vmatprep.subr.bf16.mxu0 0
    %2805 = vmatpush1.bf16.msra.mxu0 0
    %2806 = vmatprep.subr.bf16.mxu0 0
    %2807 = vmatpush1.bf16.msra.mxu0 0
    %2808 = vmatprep.subr.bf16.mxu0 0
    %2809 = vmatpush1.bf16.msra.mxu0 0
    %2810 = vmatprep.subr.bf16.mxu0 0
    %2811 = vmatpush1.bf16.msra.mxu0 0
    %2812 = vmatprep.subr.bf16.mxu0 0
    %2813 = vmatpush1.bf16.msra.mxu0 0
    %2814 = vmatprep.subr.bf16.mxu0 0
    %2815 = vmatpush1.bf16.msra.mxu0 0
    %2816 = vmatprep.subr.bf16.mxu0 0
    %2817 = vmatpush1.bf16.msra.mxu0 0
    %2818 = vmatprep.subr.bf16.mxu0 0
    %2819 = vmatpush1.bf16.msra.mxu0 0
    %2820 = vmatprep.mubr.bf16.mxu0 0
    %2821 = vmatmul.mubr.bf16.gmra.mrb[0].mxu0 %v701
    %v2822 = vpop.f32.mrb[0].mxu0
    %v2823 = vadd.f32 0.0, %v2822
    %v2824 = vpop.f32.mrb[0].mxu0
    %v2825 = vpop.f32.mrb[0].mxu0
    %v2826 = vadd.f32 0.0, %v2825
    %v2827 = vpop.f32.mrb[0].mxu0
    %2828 = vdwg.mxu0
    %v2829 = vpack.c.bf16 %v2826, %v2823
    %2830 = vmatprep.subr.bf16.mxu0 0
    %2831 = vmatpush1.bf16.msra.mxu0 %v529
    %2832 = vmatprep.subr.bf16.mxu0 0
    %2833 = vmatpush1.bf16.msra.mxu0 %v530
    %2834 = vmatprep.subr.bf16.mxu0 0
    %2835 = vmatpush1.bf16.msra.mxu0 %v531
    %2836 = vmatprep.subr.bf16.mxu0 0
    %2837 = vmatpush1.bf16.msra.mxu0 %v532
    %2838 = vmatprep.subr.bf16.mxu0 0
    %2839 = vmatpush1.bf16.msra.mxu0 0
    %2840 = vmatprep.subr.bf16.mxu0 0
    %2841 = vmatpush1.bf16.msra.mxu0 0
    %2842 = vmatprep.subr.bf16.mxu0 0
    %2843 = vmatpush1.bf16.msra.mxu0 0
    %2844 = vmatprep.subr.bf16.mxu0 0
    %2845 = vmatpush1.bf16.msra.mxu0 0
    %2846 = vmatprep.subr.bf16.mxu0 0
    %2847 = vmatpush1.bf16.msra.mxu0 0
    %2848 = vmatprep.subr.bf16.mxu0 0
    %2849 = vmatpush1.bf16.msra.mxu0 0
    %2850 = vmatprep.subr.bf16.mxu0 0
    %2851 = vmatpush1.bf16.msra.mxu0 0
    %2852 = vmatprep.subr.bf16.mxu0 0
    %2853 = vmatpush1.bf16.msra.mxu0 0
    %2854 = vmatprep.subr.bf16.mxu0 0
    %2855 = vmatpush1.bf16.msra.mxu0 0
    %2856 = vmatprep.subr.bf16.mxu0 0
    %2857 = vmatpush1.bf16.msra.mxu0 0
    %2858 = vmatprep.subr.bf16.mxu0 0
    %2859 = vmatpush1.bf16.msra.mxu0 0
    %2860 = vmatprep.subr.bf16.mxu0 0
    %2861 = vmatpush1.bf16.msra.mxu0 0
    %2862 = vmatprep.mubr.bf16.mxu0 0
    %2863 = vmatmul.mubr.bf16.gmra.mrb[0].mxu0 %v754
    %v2864 = vpop.f32.mrb[0].mxu0
    %v2865 = vadd.f32 0.0, %v2864
    %v2866 = vpop.f32.mrb[0].mxu0
    %v2867 = vpop.f32.mrb[0].mxu0
    %v2868 = vadd.f32 0.0, %v2867
    %v2869 = vpop.f32.mrb[0].mxu0
    %2870 = vdwg.mxu0
    %v2871 = vpack.c.bf16 %v2868, %v2865
    %2872 = vmatprep.subr.bf16.mxu0 0
    %2873 = vmatpush1.bf16.msra.mxu0 %v529
    %2874 = vmatprep.subr.bf16.mxu0 0
    %2875 = vmatpush1.bf16.msra.mxu0 %v530
    %2876 = vmatprep.subr.bf16.mxu0 0
    %2877 = vmatpush1.bf16.msra.mxu0 %v531
    %2878 = vmatprep.subr.bf16.mxu0 0
    %2879 = vmatpush1.bf16.msra.mxu0 %v532
    %2880 = vmatprep.subr.bf16.mxu0 0
    %2881 = vmatpush1.bf16.msra.mxu0 0
    %2882 = vmatprep.subr.bf16.mxu0 0
    %2883 = vmatpush1.bf16.msra.mxu0 0
    %2884 = vmatprep.subr.bf16.mxu0 0
    %2885 = vmatpush1.bf16.msra.mxu0 0
    %2886 = vmatprep.subr.bf16.mxu0 0
    %2887 = vmatpush1.bf16.msra.mxu0 0
    %2888 = vmatprep.subr.bf16.mxu0 0
    %2889 = vmatpush1.bf16.msra.mxu0 0
    %2890 = vmatprep.subr.bf16.mxu0 0
    %2891 = vmatpush1.bf16.msra.mxu0 0
    %2892 = vmatprep.subr.bf16.mxu0 0
    %2893 = vmatpush1.bf16.msra.mxu0 0
    %2894 = vmatprep.subr.bf16.mxu0 0
    %2895 = vmatpush1.bf16.msra.mxu0 0
    %2896 = vmatprep.subr.bf16.mxu0 0
    %2897 = vmatpush1.bf16.msra.mxu0 0
    %2898 = vmatprep.subr.bf16.mxu0 0
    %2899 = vmatpush1.bf16.msra.mxu0 0
    %2900 = vmatprep.subr.bf16.mxu0 0
    %2901 = vmatpush1.bf16.msra.mxu0 0
    %2902 = vmatprep.subr.bf16.mxu0 0
    %2903 = vmatpush1.bf16.msra.mxu0 0
    %2904 = vmatprep.mubr.bf16.mxu0 0
    %2905 = vmatmul.mubr.bf16.gmra.mrb[0].mxu0 %v807
    %v2906 = vpop.f32.mrb[0].mxu0
    %v2907 = vadd.f32 0.0, %v2906
    %v2908 = vpop.f32.mrb[0].mxu0
    %v2909 = vpop.f32.mrb[0].mxu0
    %v2910 = vadd.f32 0.0, %v2909
    %v2911 = vpop.f32.mrb[0].mxu0
    %2912 = vdwg.mxu0
    %v2913 = vpack.c.bf16 %v2910, %v2907
    %2914 = vmatprep.subr.bf16.mxu0 0
    %2915 = vmatpush1.bf16.msra.mxu0 %v529
    %2916 = vmatprep.subr.bf16.mxu0 0
    %2917 = vmatpush1.bf16.msra.mxu0 %v530
    %2918 = vmatprep.subr.bf16.mxu0 0
    %2919 = vmatpush1.bf16.msra.mxu0 %v531
    %2920 = vmatprep.subr.bf16.mxu0 0
    %2921 = vmatpush1.bf16.msra.mxu0 %v532
    %2922 = vmatprep.subr.bf16.mxu0 0
    %2923 = vmatpush1.bf16.msra.mxu0 0
    %2924 = vmatprep.subr.bf16.mxu0 0
    %2925 = vmatpush1.bf16.msra.mxu0 0
    %2926 = vmatprep.subr.bf16.mxu0 0
    %2927 = vmatpush1.bf16.msra.mxu0 0
    %2928 = vmatprep.subr.bf16.mxu0 0
    %2929 = vmatpush1.bf16.msra.mxu0 0
    %2930 = vmatprep.subr.bf16.mxu0 0
    %2931 = vmatpush1.bf16.msra.mxu0 0
    %2932 = vmatprep.subr.bf16.mxu0 0
    %2933 = vmatpush1.bf16.msra.mxu0 0
    %2934 = vmatprep.subr.bf16.mxu0 0
    %2935 = vmatpush1.bf16.msra.mxu0 0
    %2936 = vmatprep.subr.bf16.mxu0 0
    %2937 = vmatpush1.bf16.msra.mxu0 0
    %2938 = vmatprep.subr.bf16.mxu0 0
    %2939 = vmatpush1.bf16.msra.mxu0 0
    %2940 = vmatprep.subr.bf16.mxu0 0
    %2941 = vmatpush1.bf16.msra.mxu0 0
    %2942 = vmatprep.subr.bf16.mxu0 0
    %2943 = vmatpush1.bf16.msra.mxu0 0
    %2944 = vmatprep.subr.bf16.mxu0 0
    %2945 = vmatpush1.bf16.msra.mxu0 0
    %2946 = vmatprep.mubr.bf16.mxu0 0
    %2947 = vmatmul.mubr.bf16.gmra.mrb[0].mxu0 %v860
    %v2948 = vpop.f32.mrb[0].mxu0
    %v2949 = vadd.f32 0.0, %v2948
    %v2950 = vpop.f32.mrb[0].mxu0
    %v2951 = vpop.f32.mrb[0].mxu0
    %v2952 = vadd.f32 0.0, %v2951
    %v2953 = vpop.f32.mrb[0].mxu0
    %2954 = vdwg.mxu0
    %v2955 = vpack.c.bf16 %v2952, %v2949
    %2956 = vmatprep.subr.bf16.mxu0 0
    %2957 = vmatpush1.bf16.msra.mxu0 %v529
    %2958 = vmatprep.subr.bf16.mxu0 0
    %2959 = vmatpush1.bf16.msra.mxu0 %v530
    %2960 = vmatprep.subr.bf16.mxu0 0
    %2961 = vmatpush1.bf16.msra.mxu0 %v531
    %2962 = vmatprep.subr.bf16.mxu0 0
    %2963 = vmatpush1.bf16.msra.mxu0 %v532
    %2964 = vmatprep.subr.bf16.mxu0 0
    %2965 = vmatpush1.bf16.msra.mxu0 0
    %2966 = vmatprep.subr.bf16.mxu0 0
    %2967 = vmatpush1.bf16.msra.mxu0 0
    %2968 = vmatprep.subr.bf16.mxu0 0
    %2969 = vmatpush1.bf16.msra.mxu0 0
    %2970 = vmatprep.subr.bf16.mxu0 0
    %2971 = vmatpush1.bf16.msra.mxu0 0
    %2972 = vmatprep.subr.bf16.mxu0 0
    %2973 = vmatpush1.bf16.msra.mxu0 0
    %2974 = vmatprep.subr.bf16.mxu0 0
    %2975 = vmatpush1.bf16.msra.mxu0 0
    %2976 = vmatprep.subr.bf16.mxu0 0
    %2977 = vmatpush1.bf16.msra.mxu0 0
    %2978 = vmatprep.subr.bf16.mxu0 0
    %2979 = vmatpush1.bf16.msra.mxu0 0
    %2980 = vmatprep.subr.bf16.mxu0 0
    %2981 = vmatpush1.bf16.msra.mxu0 0
    %2982 = vmatprep.subr.bf16.mxu0 0
    %2983 = vmatpush1.bf16.msra.mxu0 0
    %2984 = vmatprep.subr.bf16.mxu0 0
    %2985 = vmatpush1.bf16.msra.mxu0 0
    %2986 = vmatprep.subr.bf16.mxu0 0
    %2987 = vmatpush1.bf16.msra.mxu0 0
    %2988 = vmatprep.mubr.bf16.mxu0 0
    %2989 = vmatmul.mubr.bf16.gmra.mrb[0].mxu0 %v913
    %v2990 = vpop.f32.mrb[0].mxu0
    %v2991 = vadd.f32 0.0, %v2990
    %v2992 = vpop.f32.mrb[0].mxu0
    %v2993 = vpop.f32.mrb[0].mxu0
    %v2994 = vadd.f32 0.0, %v2993
    %v2995 = vpop.f32.mrb[0].mxu0
    %2996 = vdwg.mxu0
    %v2997 = vpack.c.bf16 %v2994, %v2991
    %2998 = vmatprep.subr.bf16.mxu0 0
    %2999 = vmatpush1.bf16.msra.mxu0 %v529
    %3000 = vmatprep.subr.bf16.mxu0 0
    %3001 = vmatpush1.bf16.msra.mxu0 %v530
    %3002 = vmatprep.subr.bf16.mxu0 0
    %3003 = vmatpush1.bf16.msra.mxu0 %v531
    %3004 = vmatprep.subr.bf16.mxu0 0
    %3005 = vmatpush1.bf16.msra.mxu0 %v532
    %3006 = vmatprep.subr.bf16.mxu0 0
    %3007 = vmatpush1.bf16.msra.mxu0 0
    %3008 = vmatprep.subr.bf16.mxu0 0
    %3009 = vmatpush1.bf16.msra.mxu0 0
    %3010 = vmatprep.subr.bf16.mxu0 0
    %3011 = vmatpush1.bf16.msra.mxu0 0
    %3012 = vmatprep.subr.bf16.mxu0 0
    %3013 = vmatpush1.bf16.msra.mxu0 0
    %3014 = vmatprep.subr.bf16.mxu0 0
    %3015 = vmatpush1.bf16.msra.mxu0 0
    %3016 = vmatprep.subr.bf16.mxu0 0
    %3017 = vmatpush1.bf16.msra.mxu0 0
    %3018 = vmatprep.subr.bf16.mxu0 0
    %3019 = vmatpush1.bf16.msra.mxu0 0
    %3020 = vmatprep.subr.bf16.mxu0 0
    %3021 = vmatpush1.bf16.msra.mxu0 0
    %3022 = vmatprep.subr.bf16.mxu0 0
    %3023 = vmatpush1.bf16.msra.mxu0 0
    %3024 = vmatprep.subr.bf16.mxu0 0
    %3025 = vmatpush1.bf16.msra.mxu0 0
    %3026 = vmatprep.subr.bf16.mxu0 0
    %3027 = vmatpush1.bf16.msra.mxu0 0
    %3028 = vmatprep.subr.bf16.mxu0 0
    %3029 = vmatpush1.bf16.msra.mxu0 0
    %3030 = vmatprep.mubr.bf16.mxu0 0
    %3031 = vmatmul.mubr.bf16.gmra.mrb[0].mxu0 %v966
    %v3032 = vpop.f32.mrb[0].mxu0
    %v3033 = vadd.f32 0.0, %v3032
    %v3034 = vpop.f32.mrb[0].mxu0
    %v3035 = vpop.f32.mrb[0].mxu0
    %v3036 = vadd.f32 0.0, %v3035
    %v3037 = vpop.f32.mrb[0].mxu0
    %3038 = vdwg.mxu0
    %v3039 = vpack.c.bf16 %v3036, %v3033
    %3040 = vmatprep.subr.bf16.mxu0 0
    %3041 = vmatpush1.bf16.msra.mxu0 %v529
    %3042 = vmatprep.subr.bf16.mxu0 0
    %3043 = vmatpush1.bf16.msra.mxu0 %v530
    %3044 = vmatprep.subr.bf16.mxu0 0
    %3045 = vmatpush1.bf16.msra.mxu0 %v531
    %3046 = vmatprep.subr.bf16.mxu0 0
    %3047 = vmatpush1.bf16.msra.mxu0 %v532
    %3048 = vmatprep.subr.bf16.mxu0 0
    %3049 = vmatpush1.bf16.msra.mxu0 0
    %3050 = vmatprep.subr.bf16.mxu0 0
    %3051 = vmatpush1.bf16.msra.mxu0 0
    %3052 = vmatprep.subr.bf16.mxu0 0
    %3053 = vmatpush1.bf16.msra.mxu0 0
    %3054 = vmatprep.subr.bf16.mxu0 0
    %3055 = vmatpush1.bf16.msra.mxu0 0
    %3056 = vmatprep.subr.bf16.mxu0 0
    %3057 = vmatpush1.bf16.msra.mxu0 0
    %3058 = vmatprep.subr.bf16.mxu0 0
    %3059 = vmatpush1.bf16.msra.mxu0 0
    %3060 = vmatprep.subr.bf16.mxu0 0
    %3061 = vmatpush1.bf16.msra.mxu0 0
    %3062 = vmatprep.subr.bf16.mxu0 0
    %3063 = vmatpush1.bf16.msra.mxu0 0
    %3064 = vmatprep.subr.bf16.mxu0 0
    %3065 = vmatpush1.bf16.msra.mxu0 0
    %3066 = vmatprep.subr.bf16.mxu0 0
    %3067 = vmatpush1.bf16.msra.mxu0 0
    %3068 = vmatprep.subr.bf16.mxu0 0
    %3069 = vmatpush1.bf16.msra.mxu0 0
    %3070 = vmatprep.subr.bf16.mxu0 0
    %3071 = vmatpush1.bf16.msra.mxu0 0
    %3072 = vmatprep.mubr.bf16.mxu0 0
    %3073 = vmatmul.mubr.bf16.gmra.mrb[0].mxu0 %v1019
    %v3074 = vpop.f32.mrb[0].mxu0
    %v3075 = vadd.f32 0.0, %v3074
    %v3076 = vpop.f32.mrb[0].mxu0
    %v3077 = vpop.f32.mrb[0].mxu0
    %v3078 = vadd.f32 0.0, %v3077
    %v3079 = vpop.f32.mrb[0].mxu0
    %3080 = vdwg.mxu0
    %v3081 = vpack.c.bf16 %v3078, %v3075
    %3082 = vmatprep.subr.bf16.mxu0 0
    %3083 = vmatpush1.bf16.msra.mxu0 %v529
    %3084 = vmatprep.subr.bf16.mxu0 0
    %3085 = vmatpush1.bf16.msra.mxu0 %v530
    %3086 = vmatprep.subr.bf16.mxu0 0
    %3087 = vmatpush1.bf16.msra.mxu0 %v531
    %3088 = vmatprep.subr.bf16.mxu0 0
    %3089 = vmatpush1.bf16.msra.mxu0 %v532
    %3090 = vmatprep.subr.bf16.mxu0 0
    %3091 = vmatpush1.bf16.msra.mxu0 0
    %3092 = vmatprep.subr.bf16.mxu0 0
    %3093 = vmatpush1.bf16.msra.mxu0 0
    %3094 = vmatprep.subr.bf16.mxu0 0
    %3095 = vmatpush1.bf16.msra.mxu0 0
    %3096 = vmatprep.subr.bf16.mxu0 0
    %3097 = vmatpush1.bf16.msra.mxu0 0
    %3098 = vmatprep.subr.bf16.mxu0 0
    %3099 = vmatpush1.bf16.msra.mxu0 0
    %3100 = vmatprep.subr.bf16.mxu0 0
    %3101 = vmatpush1.bf16.msra.mxu0 0
    %3102 = vmatprep.subr.bf16.mxu0 0
    %3103 = vmatpush1.bf16.msra.mxu0 0
    %3104 = vmatprep.subr.bf16.mxu0 0
    %3105 = vmatpush1.bf16.msra.mxu0 0
    %3106 = vmatprep.subr.bf16.mxu0 0
    %3107 = vmatpush1.bf16.msra.mxu0 0
    %3108 = vmatprep.subr.bf16.mxu0 0
    %3109 = vmatpush1.bf16.msra.mxu0 0
    %3110 = vmatprep.subr.bf16.mxu0 0
    %3111 = vmatpush1.bf16.msra.mxu0 0
    %3112 = vmatprep.subr.bf16.mxu0 0
    %3113 = vmatpush1.bf16.msra.mxu0 0
    %3114 = vmatprep.mubr.bf16.mxu0 0
    %3115 = vmatmul.mubr.bf16.gmra.mrb[0].mxu0 %v1072
    %v3116 = vpop.f32.mrb[0].mxu0
    %v3117 = vadd.f32 0.0, %v3116
    %v3118 = vpop.f32.mrb[0].mxu0
    %v3119 = vpop.f32.mrb[0].mxu0
    %v3120 = vadd.f32 0.0, %v3119
    %v3121 = vpop.f32.mrb[0].mxu0
    %3122 = vdwg.mxu0
    %v3123 = vpack.c.bf16 %v3120, %v3117
    %3124 = vmatprep.subr.bf16.mxu0 0
    %3125 = vmatpush1.bf16.msra.mxu0 %v529
    %3126 = vmatprep.subr.bf16.mxu0 0
    %3127 = vmatpush1.bf16.msra.mxu0 %v530
    %3128 = vmatprep.subr.bf16.mxu0 0
    %3129 = vmatpush1.bf16.msra.mxu0 %v531
    %3130 = vmatprep.subr.bf16.mxu0 0
    %3131 = vmatpush1.bf16.msra.mxu0 %v532
    %3132 = vmatprep.subr.bf16.mxu0 0
    %3133 = vmatpush1.bf16.msra.mxu0 0
    %3134 = vmatprep.subr.bf16.mxu0 0
    %3135 = vmatpush1.bf16.msra.mxu0 0
    %3136 = vmatprep.subr.bf16.mxu0 0
    %3137 = vmatpush1.bf16.msra.mxu0 0
    %3138 = vmatprep.subr.bf16.mxu0 0
    %3139 = vmatpush1.bf16.msra.mxu0 0
    %3140 = vmatprep.subr.bf16.mxu0 0
    %3141 = vmatpush1.bf16.msra.mxu0 0
    %3142 = vmatprep.subr.bf16.mxu0 0
    %3143 = vmatpush1.bf16.msra.mxu0 0
    %3144 = vmatprep.subr.bf16.mxu0 0
    %3145 = vmatpush1.bf16.msra.mxu0 0
    %3146 = vmatprep.subr.bf16.mxu0 0
    %3147 = vmatpush1.bf16.msra.mxu0 0
    %3148 = vmatprep.subr.bf16.mxu0 0
    %3149 = vmatpush1.bf16.msra.mxu0 0
    %3150 = vmatprep.subr.bf16.mxu0 0
    %3151 = vmatpush1.bf16.msra.mxu0 0
    %3152 = vmatprep.subr.bf16.mxu0 0
    %3153 = vmatpush1.bf16.msra.mxu0 0
    %3154 = vmatprep.subr.bf16.mxu0 0
    %3155 = vmatpush1.bf16.msra.mxu0 0
    %3156 = vmatprep.mubr.bf16.mxu0 0
    %3157 = vmatmul.mubr.bf16.gmra.mrb[0].mxu0 %v1125
    %v3158 = vpop.f32.mrb[0].mxu0
    %v3159 = vadd.f32 0.0, %v3158
    %v3160 = vpop.f32.mrb[0].mxu0
    %v3161 = vpop.f32.mrb[0].mxu0
    %v3162 = vadd.f32 0.0, %v3161
    %v3163 = vpop.f32.mrb[0].mxu0
    %3164 = vdwg.mxu0
    %v3165 = vpack.c.bf16 %v3162, %v3159
    %3166 = vmatprep.subr.bf16.mxu0 0
    %3167 = vmatpush1.bf16.msra.mxu0 %v529
    %3168 = vmatprep.subr.bf16.mxu0 0
    %3169 = vmatpush1.bf16.msra.mxu0 %v530
    %3170 = vmatprep.subr.bf16.mxu0 0
    %3171 = vmatpush1.bf16.msra.mxu0 %v531
    %3172 = vmatprep.subr.bf16.mxu0 0
    %3173 = vmatpush1.bf16.msra.mxu0 %v532
    %3174 = vmatprep.subr.bf16.mxu0 0
    %3175 = vmatpush1.bf16.msra.mxu0 0
    %3176 = vmatprep.subr.bf16.mxu0 0
    %3177 = vmatpush1.bf16.msra.mxu0 0
    %3178 = vmatprep.subr.bf16.mxu0 0
    %3179 = vmatpush1.bf16.msra.mxu0 0
    %3180 = vmatprep.subr.bf16.mxu0 0
    %3181 = vmatpush1.bf16.msra.mxu0 0
    %3182 = vmatprep.subr.bf16.mxu0 0
    %3183 = vmatpush1.bf16.msra.mxu0 0
    %3184 = vmatprep.subr.bf16.mxu0 0
    %3185 = vmatpush1.bf16.msra.mxu0 0
    %3186 = vmatprep.subr.bf16.mxu0 0
    %3187 = vmatpush1.bf16.msra.mxu0 0
    %3188 = vmatprep.subr.bf16.mxu0 0
    %3189 = vmatpush1.bf16.msra.mxu0 0
    %3190 = vmatprep.subr.bf16.mxu0 0
    %3191 = vmatpush1.bf16.msra.mxu0 0
    %3192 = vmatprep.subr.bf16.mxu0 0
    %3193 = vmatpush1.bf16.msra.mxu0 0
    %3194 = vmatprep.subr.bf16.mxu0 0
    %3195 = vmatpush1.bf16.msra.mxu0 0
    %3196 = vmatprep.subr.bf16.mxu0 0
    %3197 = vmatpush1.bf16.msra.mxu0 0
    %3198 = vmatprep.mubr.bf16.mxu0 0
    %3199 = vmatmul.mubr.bf16.gmra.mrb[0].mxu0 %v1178
    %v3200 = vpop.f32.mrb[0].mxu0
    %v3201 = vadd.f32 0.0, %v3200
    %v3202 = vpop.f32.mrb[0].mxu0
    %v3203 = vpop.f32.mrb[0].mxu0
    %v3204 = vadd.f32 0.0, %v3203
    %v3205 = vpop.f32.mrb[0].mxu0
    %3206 = vdwg.mxu0
    %v3207 = vpack.c.bf16 %v3204, %v3201
    %3208 = vmatprep.subr.bf16.mxu0 0
    %3209 = vmatpush1.bf16.msra.mxu0 %v529
    %3210 = vmatprep.subr.bf16.mxu0 0
    %3211 = vmatpush1.bf16.msra.mxu0 %v530
    %3212 = vmatprep.subr.bf16.mxu0 0
    %3213 = vmatpush1.bf16.msra.mxu0 %v531
    %3214 = vmatprep.subr.bf16.mxu0 0
    %3215 = vmatpush1.bf16.msra.mxu0 %v532
    %3216 = vmatprep.subr.bf16.mxu0 0
    %3217 = vmatpush1.bf16.msra.mxu0 0
    %3218 = vmatprep.subr.bf16.mxu0 0
    %3219 = vmatpush1.bf16.msra.mxu0 0
    %3220 = vmatprep.subr.bf16.mxu0 0
    %3221 = vmatpush1.bf16.msra.mxu0 0
    %3222 = vmatprep.subr.bf16.mxu0 0
    %3223 = vmatpush1.bf16.msra.mxu0 0
    %3224 = vmatprep.subr.bf16.mxu0 0
    %3225 = vmatpush1.bf16.msra.mxu0 0
    %3226 = vmatprep.subr.bf16.mxu0 0
    %3227 = vmatpush1.bf16.msra.mxu0 0
    %3228 = vmatprep.subr.bf16.mxu0 0
    %3229 = vmatpush1.bf16.msra.mxu0 0
    %3230 = vmatprep.subr.bf16.mxu0 0
    %3231 = vmatpush1.bf16.msra.mxu0 0
    %3232 = vmatprep.subr.bf16.mxu0 0
    %3233 = vmatpush1.bf16.msra.mxu0 0
    %3234 = vmatprep.subr.bf16.mxu0 0
    %3235 = vmatpush1.bf16.msra.mxu0 0
    %3236 = vmatprep.subr.bf16.mxu0 0
    %3237 = vmatpush1.bf16.msra.mxu0 0
    %3238 = vmatprep.subr.bf16.mxu0 0
    %3239 = vmatpush1.bf16.msra.mxu0 0
    %3240 = vmatprep.mubr.bf16.mxu0 0
    %3241 = vmatmul.mubr.bf16.gmra.mrb[0].mxu0 %v1231
    %v3242 = vpop.f32.mrb[0].mxu0
    %v3243 = vadd.f32 0.0, %v3242
    %v3244 = vpop.f32.mrb[0].mxu0
    %v3245 = vpop.f32.mrb[0].mxu0
    %v3246 = vadd.f32 0.0, %v3245
    %v3247 = vpop.f32.mrb[0].mxu0
    %3248 = vdwg.mxu0
    %v3249 = vpack.c.bf16 %v3246, %v3243
    %3250 = vmatprep.subr.bf16.mxu0 0
    %3251 = vmatpush1.bf16.msra.mxu0 %v529
    %3252 = vmatprep.subr.bf16.mxu0 0
    %3253 = vmatpush1.bf16.msra.mxu0 %v530
    %3254 = vmatprep.subr.bf16.mxu0 0
    %3255 = vmatpush1.bf16.msra.mxu0 %v531
    %3256 = vmatprep.subr.bf16.mxu0 0
    %3257 = vmatpush1.bf16.msra.mxu0 %v532
    %3258 = vmatprep.subr.bf16.mxu0 0
    %3259 = vmatpush1.bf16.msra.mxu0 0
    %3260 = vmatprep.subr.bf16.mxu0 0
    %3261 = vmatpush1.bf16.msra.mxu0 0
    %3262 = vmatprep.subr.bf16.mxu0 0
    %3263 = vmatpush1.bf16.msra.mxu0 0
    %3264 = vmatprep.subr.bf16.mxu0 0
    %3265 = vmatpush1.bf16.msra.mxu0 0
    %3266 = vmatprep.subr.bf16.mxu0 0
    %3267 = vmatpush1.bf16.msra.mxu0 0
    %3268 = vmatprep.subr.bf16.mxu0 0
    %3269 = vmatpush1.bf16.msra.mxu0 0
    %3270 = vmatprep.subr.bf16.mxu0 0
    %3271 = vmatpush1.bf16.msra.mxu0 0
    %3272 = vmatprep.subr.bf16.mxu0 0
    %3273 = vmatpush1.bf16.msra.mxu0 0
    %3274 = vmatprep.subr.bf16.mxu0 0
    %3275 = vmatpush1.bf16.msra.mxu0 0
    %3276 = vmatprep.subr.bf16.mxu0 0
    %3277 = vmatpush1.bf16.msra.mxu0 0
    %3278 = vmatprep.subr.bf16.mxu0 0
    %3279 = vmatpush1.bf16.msra.mxu0 0
    %3280 = vmatprep.subr.bf16.mxu0 0
    %3281 = vmatpush1.bf16.msra.mxu0 0
    %3282 = vmatprep.mubr.bf16.mxu0 0
    %3283 = vmatmul.mubr.bf16.gmra.mrb[0].mxu0 %v1284
    %v3284 = vpop.f32.mrb[0].mxu0
    %v3285 = vadd.f32 0.0, %v3284
    %v3286 = vpop.f32.mrb[0].mxu0
    %v3287 = vpop.f32.mrb[0].mxu0
    %v3288 = vadd.f32 0.0, %v3287
    %v3289 = vpop.f32.mrb[0].mxu0
    %3290 = vdwg.mxu0
    %v3291 = vpack.c.bf16 %v3288, %v3285
    %3292 = vmatprep.subr.bf16.mxu0 0
    %3293 = vmatpush1.bf16.msra.mxu0 %v529
    %3294 = vmatprep.subr.bf16.mxu0 0
    %3295 = vmatpush1.bf16.msra.mxu0 %v530
    %3296 = vmatprep.subr.bf16.mxu0 0
    %3297 = vmatpush1.bf16.msra.mxu0 %v531
    %3298 = vmatprep.subr.bf16.mxu0 0
    %3299 = vmatpush1.bf16.msra.mxu0 %v532
    %3300 = vmatprep.subr.bf16.mxu0 0
    %3301 = vmatpush1.bf16.msra.mxu0 0
    %3302 = vmatprep.subr.bf16.mxu0 0
    %3303 = vmatpush1.bf16.msra.mxu0 0
    %3304 = vmatprep.subr.bf16.mxu0 0
    %3305 = vmatpush1.bf16.msra.mxu0 0
    %3306 = vmatprep.subr.bf16.mxu0 0
    %3307 = vmatpush1.bf16.msra.mxu0 0
    %3308 = vmatprep.subr.bf16.mxu0 0
    %3309 = vmatpush1.bf16.msra.mxu0 0
    %3310 = vmatprep.subr.bf16.mxu0 0
    %3311 = vmatpush1.bf16.msra.mxu0 0
    %3312 = vmatprep.subr.bf16.mxu0 0
    %3313 = vmatpush1.bf16.msra.mxu0 0
    %3314 = vmatprep.subr.bf16.mxu0 0
    %3315 = vmatpush1.bf16.msra.mxu0 0
    %3316 = vmatprep.subr.bf16.mxu0 0
    %3317 = vmatpush1.bf16.msra.mxu0 0
    %3318 = vmatprep.subr.bf16.mxu0 0
    %3319 = vmatpush1.bf16.msra.mxu0 0
    %3320 = vmatprep.subr.bf16.mxu0 0
    %3321 = vmatpush1.bf16.msra.mxu0 0
    %3322 = vmatprep.subr.bf16.mxu0 0
    %3323 = vmatpush1.bf16.msra.mxu0 0
    %3324 = vmatprep.mubr.bf16.mxu0 0
    %3325 = vmatmul.mubr.bf16.gmra.mrb[0].mxu0 %v1337
    %v3326 = vpop.f32.mrb[0].mxu0
    %v3327 = vadd.f32 0.0, %v3326
    %v3328 = vpop.f32.mrb[0].mxu0
    %v3329 = vpop.f32.mrb[0].mxu0
    %v3330 = vadd.f32 0.0, %v3329
    %v3331 = vpop.f32.mrb[0].mxu0
    %3332 = vdwg.mxu0
    %v3333 = vpack.c.bf16 %v3330, %v3327
    %3335 = vrot.lane.b32.xlu0 %v2745, 32
    %v3336 = vpop.permute.xlu0 %3335
    %3338 = vrot.lane.b32.xlu0 %v2787, 64
    %v3339 = vpop.permute.xlu0 %3338
    %3341 = vrot.lane.b32.xlu0 %v2829, 96
    %v3342 = vpop.permute.xlu0 %3341
    %3344 = vrot.lane.b32.xlu0 %v2913, 32
    %v3345 = vpop.permute.xlu0 %3344
    %3347 = vrot.lane.b32.xlu0 %v2955, 64
    %v3348 = vpop.permute.xlu0 %3347
    %3350 = vrot.lane.b32.xlu0 %v2997, 96
    %v3351 = vpop.permute.xlu0 %3350
    %3353 = vrot.lane.b32.xlu0 %v3081, 32
    %v3354 = vpop.permute.xlu0 %3353
    %3356 = vrot.lane.b32.xlu0 %v3123, 64
    %v3357 = vpop.permute.xlu0 %3356
    %3359 = vrot.lane.b32.xlu0 %v3165, 96
    %v3360 = vpop.permute.xlu0 %3359
    %3362 = vrot.lane.b32.xlu0 %v3249, 32
    %v3363 = vpop.permute.xlu0 %3362
    %3365 = vrot.lane.b32.xlu0 %v3291, 64
    %v3366 = vpop.permute.xlu0 %3365
    %3368 = vrot.lane.b32.xlu0 %v3333, 96
    %v3369 = vpop.permute.xlu0 %3368
    %v3372 = vsel %vm1417, %v2703, %v3336
    %v3374 = vsel %vm540, %v3372, %v3339
    %v3376 = vsel %vm1423, %v3374, %v3342
    %v3380 = vsel %vm1417, %v2871, %v3345
    %v3382 = vsel %vm540, %v3380, %v3348
    %v3384 = vsel %vm1423, %v3382, %v3351
    %v3388 = vsel %vm1417, %v3039, %v3354
    %v3390 = vsel %vm540, %v3388, %v3357
    %v3392 = vsel %vm1423, %v3390, %v3360
    %v3396 = vsel %vm1417, %v3207, %v3363
    %v3398 = vsel %vm540, %v3396, %v3366
    %v3400 = vsel %vm1423, %v3398, %v3369
    %3402 = vmatprep.subr.bf16.mxu0 0
    %3403 = vmatpush1.bf16.msra.mxu0 %v1650
    %3404 = vmatprep.subr.bf16.mxu0 0
    %3405 = vmatpush1.bf16.msra.mxu0 %v1651
    %3406 = vmatprep.subr.bf16.mxu0 0
    %3407 = vmatpush1.bf16.msra.mxu0 %v1652
    %3408 = vmatprep.subr.bf16.mxu0 0
    %3409 = vmatpush1.bf16.msra.mxu0 %v1653
    %3410 = vmatprep.subr.bf16.mxu0 0
    %3411 = vmatpush1.bf16.msra.mxu0 %v1654
    %3412 = vmatprep.subr.bf16.mxu0 0
    %3413 = vmatpush1.bf16.msra.mxu0 %v1655
    %3414 = vmatprep.subr.bf16.mxu0 0
    %3415 = vmatpush1.bf16.msra.mxu0 %v1656
    %3416 = vmatprep.subr.bf16.mxu0 0
    %3417 = vmatpush1.bf16.msra.mxu0 %v1657
    %3418 = vmatprep.subr.bf16.mxu0 0
    %3419 = vmatpush1.bf16.msra.mxu0 %v1658
    %3420 = vmatprep.subr.bf16.mxu0 0
    %3421 = vmatpush1.bf16.msra.mxu0 %v1659
    %3422 = vmatprep.subr.bf16.mxu0 0
    %3423 = vmatpush1.bf16.msra.mxu0 %v1660
    %3424 = vmatprep.subr.bf16.mxu0 0
    %3425 = vmatpush1.bf16.msra.mxu0 %v1661
    %3426 = vmatprep.subr.bf16.mxu0 0
    %3427 = vmatpush1.bf16.msra.mxu0 %v1662
    %3428 = vmatprep.subr.bf16.mxu0 0
    %3429 = vmatpush1.bf16.msra.mxu0 %v1663
    %3430 = vmatprep.subr.bf16.mxu0 0
    %3431 = vmatpush1.bf16.msra.mxu0 %v1664
    %3432 = vmatprep.subr.bf16.mxu0 0
    %3433 = vmatpush1.bf16.msra.mxu0 %v1665
    %3434 = vmatprep.mubr.bf16.mxu0 %v3384
    %3435 = vmatmul.mubr.bf16.gmra.mrb[0].mxu0 %v3376
    %v3436 = vpop.f32.mrb[0].mxu0
    %v3437 = vadd.f32 %v1520, %v3436
    %v3438 = vpop.f32.mrb[0].mxu0
    %v3439 = vpop.f32.mrb[0].mxu0
    %v3440 = vadd.f32 %v1520, %v3439
    %v3441 = vpop.f32.mrb[0].mxu0
    %3442 = vdwg.mxu0
    %3443 = vmatprep.subr.bf16.mxu0 0
    %3444 = vmatpush1.bf16.msra.mxu0 %v1666
    %3445 = vmatprep.subr.bf16.mxu0 0
    %3446 = vmatpush1.bf16.msra.mxu0 %v1667
    %3447 = vmatprep.subr.bf16.mxu0 0
    %3448 = vmatpush1.bf16.msra.mxu0 %v1668
    %3449 = vmatprep.subr.bf16.mxu0 0
    %3450 = vmatpush1.bf16.msra.mxu0 %v1669
    %3451 = vmatprep.subr.bf16.mxu0 0
    %3452 = vmatpush1.bf16.msra.mxu0 %v1670
    %3453 = vmatprep.subr.bf16.mxu0 0
    %3454 = vmatpush1.bf16.msra.mxu0 %v1671
    %3455 = vmatprep.subr.bf16.mxu0 0
    %3456 = vmatpush1.bf16.msra.mxu0 %v1672
    %3457 = vmatprep.subr.bf16.mxu0 0
    %3458 = vmatpush1.bf16.msra.mxu0 %v1673
    %3459 = vmatprep.subr.bf16.mxu0 0
    %3460 = vmatpush1.bf16.msra.mxu0 %v1674
    %3461 = vmatprep.subr.bf16.mxu0 0
    %3462 = vmatpush1.bf16.msra.mxu0 %v1675
    %3463 = vmatprep.subr.bf16.mxu0 0
    %3464 = vmatpush1.bf16.msra.mxu0 %v1676
    %3465 = vmatprep.subr.bf16.mxu0 0
    %3466 = vmatpush1.bf16.msra.mxu0 %v1677
    %3467 = vmatprep.subr.bf16.mxu0 0
    %3468 = vmatpush1.bf16.msra.mxu0 %v1678
    %3469 = vmatprep.subr.bf16.mxu0 0
    %3470 = vmatpush1.bf16.msra.mxu0 %v1679
    %3471 = vmatprep.subr.bf16.mxu0 0
    %3472 = vmatpush1.bf16.msra.mxu0 %v1680
    %3473 = vmatprep.subr.bf16.mxu0 0
    %3474 = vmatpush1.bf16.msra.mxu0 %v1681
    %3475 = vmatprep.mubr.bf16.mxu0 %v3400
    %3476 = vmatmul.mubr.bf16.gmra.mrb[0].mxu0 %v3392
    %v3477 = vpop.f32.mrb[0].mxu0
    %v3478 = vadd.f32 %v3437, %v3477
    %v3479 = vpop.f32.mrb[0].mxu0
    %v3480 = vpop.f32.mrb[0].mxu0
    %v3481 = vadd.f32 %v3440, %v3480
    %v3482 = vpop.f32.mrb[0].mxu0
    %3483 = vdwg.mxu0
    %v3484 = vmax.f32 %v3478, 0.0
    %v3485 = vmax.f32 %v3481, 0.0
    %v3486 = vpack.c.bf16 %v3485, %v3484
    %v3488 = vand.u32 %v3486, %v1807
    %3490 = vmatprep.subr.bf16.mxu0 0
    %3491 = vmatpush1.bf16.msra.mxu0 %v3488
    %3492 = vmatprep.subr.bf16.mxu0 0
    %3493 = vmatpush1.bf16.msra.mxu0 0
    %3494 = vmatprep.subr.bf16.mxu0 0
    %3495 = vmatpush1.bf16.msra.mxu0 0
    %3496 = vmatprep.subr.bf16.mxu0 0
    %3497 = vmatpush1.bf16.msra.mxu0 0
    %3498 = vmatprep.subr.bf16.mxu0 0
    %3499 = vmatpush1.bf16.msra.mxu0 0
    %3500 = vmatprep.subr.bf16.mxu0 0
    %3501 = vmatpush1.bf16.msra.mxu0 0
    %3502 = vmatprep.subr.bf16.mxu0 0
    %3503 = vmatpush1.bf16.msra.mxu0 0
    %3504 = vmatprep.subr.bf16.mxu0 0
    %3505 = vmatpush1.bf16.msra.mxu0 0
    %3506 = vmatprep.subr.bf16.mxu0 0
    %3507 = vmatpush1.bf16.msra.mxu0 0
    %3508 = vmatprep.subr.bf16.mxu0 0
    %3509 = vmatpush1.bf16.msra.mxu0 0
    %3510 = vmatprep.subr.bf16.mxu0 0
    %3511 = vmatpush1.bf16.msra.mxu0 0
    %3512 = vmatprep.subr.bf16.mxu0 0
    %3513 = vmatpush1.bf16.msra.mxu0 0
    %3514 = vmatprep.subr.bf16.mxu0 0
    %3515 = vmatpush1.bf16.msra.mxu0 0
    %3516 = vmatprep.subr.bf16.mxu0 0
    %3517 = vmatpush1.bf16.msra.mxu0 0
    %3518 = vmatprep.subr.bf16.mxu0 0
    %3519 = vmatpush1.bf16.msra.mxu0 0
    %3520 = vmatprep.subr.bf16.mxu0 0
    %3521 = vmatpush1.bf16.msra.mxu0 0
    %3522 = vmatprep.mubr.bf16.mxu0 0
    %3523 = vmatmul.mubr.bf16.gmra.mrb[0].mxu0 %v1802
    %v3524 = vpop.f32.mrb[0].mxu0
    %v3525 = vadd.f32 0.0, %v3524
    %v3526 = vpop.f32.mrb[0].mxu0
    %v3527 = vpop.f32.mrb[0].mxu0
    %v3528 = vpop.f32.mrb[0].mxu0
    %3529 = vdwg.mxu0
    %v3530 = vpack.c.bf16 %v3525, %v3525
    %3531 = vmatprep.subr.bf16.mxu0 0
    %3532 = vmatpush1.bf16.msra.mxu0 %v3488
    %3533 = vmatprep.subr.bf16.mxu0 0
    %3534 = vmatpush1.bf16.msra.mxu0 0
    %3535 = vmatprep.subr.bf16.mxu0 0
    %3536 = vmatpush1.bf16.msra.mxu0 0
    %3537 = vmatprep.subr.bf16.mxu0 0
    %3538 = vmatpush1.bf16.msra.mxu0 0
    %3539 = vmatprep.subr.bf16.mxu0 0
    %3540 = vmatpush1.bf16.msra.mxu0 0
    %3541 = vmatprep.subr.bf16.mxu0 0
    %3542 = vmatpush1.bf16.msra.mxu0 0
    %3543 = vmatprep.subr.bf16.mxu0 0
    %3544 = vmatpush1.bf16.msra.mxu0 0
    %3545 = vmatprep.subr.bf16.mxu0 0
    %3546 = vmatpush1.bf16.msra.mxu0 0
    %3547 = vmatprep.subr.bf16.mxu0 0
    %3548 = vmatpush1.bf16.msra.mxu0 0
    %3549 = vmatprep.subr.bf16.mxu0 0
    %3550 = vmatpush1.bf16.msra.mxu0 0
    %3551 = vmatprep.subr.bf16.mxu0 0
    %3552 = vmatpush1.bf16.msra.mxu0 0
    %3553 = vmatprep.subr.bf16.mxu0 0
    %3554 = vmatpush1.bf16.msra.mxu0 0
    %3555 = vmatprep.subr.bf16.mxu0 0
    %3556 = vmatpush1.bf16.msra.mxu0 0
    %3557 = vmatprep.subr.bf16.mxu0 0
    %3558 = vmatpush1.bf16.msra.mxu0 0
    %3559 = vmatprep.subr.bf16.mxu0 0
    %3560 = vmatpush1.bf16.msra.mxu0 0
    %3561 = vmatprep.subr.bf16.mxu0 0
    %3562 = vmatpush1.bf16.msra.mxu0 0
    %3563 = vmatprep.mubr.bf16.mxu0 0
    %3564 = vmatmul.mubr.bf16.gmra.mrb[0].mxu0 %v1855
    %v3565 = vpop.f32.mrb[0].mxu0
    %v3566 = vadd.f32 0.0, %v3565
    %v3567 = vpop.f32.mrb[0].mxu0
    %v3568 = vpop.f32.mrb[0].mxu0
    %v3569 = vpop.f32.mrb[0].mxu0
    %3570 = vdwg.mxu0
    %v3571 = vpack.c.bf16 %v3566, %v3566
    %3572 = vmatprep.subr.bf16.mxu0 0
    %3573 = vmatpush1.bf16.msra.mxu0 %v3488
    %3574 = vmatprep.subr.bf16.mxu0 0
    %3575 = vmatpush1.bf16.msra.mxu0 0
    %3576 = vmatprep.subr.bf16.mxu0 0
    %3577 = vmatpush1.bf16.msra.mxu0 0
    %3578 = vmatprep.subr.bf16.mxu0 0
    %3579 = vmatpush1.bf16.msra.mxu0 0
    %3580 = vmatprep.subr.bf16.mxu0 0
    %3581 = vmatpush1.bf16.msra.mxu0 0
    %3582 = vmatprep.subr.bf16.mxu0 0
    %3583 = vmatpush1.bf16.msra.mxu0 0
    %3584 = vmatprep.subr.bf16.mxu0 0
    %3585 = vmatpush1.bf16.msra.mxu0 0
    %3586 = vmatprep.subr.bf16.mxu0 0
    %3587 = vmatpush1.bf16.msra.mxu0 0
    %3588 = vmatprep.subr.bf16.mxu0 0
    %3589 = vmatpush1.bf16.msra.mxu0 0
    %3590 = vmatprep.subr.bf16.mxu0 0
    %3591 = vmatpush1.bf16.msra.mxu0 0
    %3592 = vmatprep.subr.bf16.mxu0 0
    %3593 = vmatpush1.bf16.msra.mxu0 0
    %3594 = vmatprep.subr.bf16.mxu0 0
    %3595 = vmatpush1.bf16.msra.mxu0 0
    %3596 = vmatprep.subr.bf16.mxu0 0
    %3597 = vmatpush1.bf16.msra.mxu0 0
    %3598 = vmatprep.subr.bf16.mxu0 0
    %3599 = vmatpush1.bf16.msra.mxu0 0
    %3600 = vmatprep.subr.bf16.mxu0 0
    %3601 = vmatpush1.bf16.msra.mxu0 0
    %3602 = vmatprep.subr.bf16.mxu0 0
    %3603 = vmatpush1.bf16.msra.mxu0 0
    %3604 = vmatprep.mubr.bf16.mxu0 0
    %3605 = vmatmul.mubr.bf16.gmra.mrb[0].mxu0 %v1901
    %v3606 = vpop.f32.mrb[0].mxu0
    %v3607 = vadd.f32 0.0, %v3606
    %v3608 = vpop.f32.mrb[0].mxu0
    %v3609 = vpop.f32.mrb[0].mxu0
    %v3610 = vpop.f32.mrb[0].mxu0
    %3611 = vdwg.mxu0
    %v3612 = vpack.c.bf16 %v3607, %v3607
    %3613 = vmatprep.subr.bf16.mxu0 0
    %3614 = vmatpush1.bf16.msra.mxu0 %v3488
    %3615 = vmatprep.subr.bf16.mxu0 0
    %3616 = vmatpush1.bf16.msra.mxu0 0
    %3617 = vmatprep.subr.bf16.mxu0 0
    %3618 = vmatpush1.bf16.msra.mxu0 0
    %3619 = vmatprep.subr.bf16.mxu0 0
    %3620 = vmatpush1.bf16.msra.mxu0 0
    %3621 = vmatprep.subr.bf16.mxu0 0
    %3622 = vmatpush1.bf16.msra.mxu0 0
    %3623 = vmatprep.subr.bf16.mxu0 0
    %3624 = vmatpush1.bf16.msra.mxu0 0
    %3625 = vmatprep.subr.bf16.mxu0 0
    %3626 = vmatpush1.bf16.msra.mxu0 0
    %3627 = vmatprep.subr.bf16.mxu0 0
    %3628 = vmatpush1.bf16.msra.mxu0 0
    %3629 = vmatprep.subr.bf16.mxu0 0
    %3630 = vmatpush1.bf16.msra.mxu0 0
    %3631 = vmatprep.subr.bf16.mxu0 0
    %3632 = vmatpush1.bf16.msra.mxu0 0
    %3633 = vmatprep.subr.bf16.mxu0 0
    %3634 = vmatpush1.bf16.msra.mxu0 0
    %3635 = vmatprep.subr.bf16.mxu0 0
    %3636 = vmatpush1.bf16.msra.mxu0 0
    %3637 = vmatprep.subr.bf16.mxu0 0
    %3638 = vmatpush1.bf16.msra.mxu0 0
    %3639 = vmatprep.subr.bf16.mxu0 0
    %3640 = vmatpush1.bf16.msra.mxu0 0
    %3641 = vmatprep.subr.bf16.mxu0 0
    %3642 = vmatpush1.bf16.msra.mxu0 0
    %3643 = vmatprep.subr.bf16.mxu0 0
    %3644 = vmatpush1.bf16.msra.mxu0 0
    %3645 = vmatprep.mubr.bf16.mxu0 0
    %3646 = vmatmul.mubr.bf16.gmra.mrb[0].mxu0 %v1947
    %v3647 = vpop.f32.mrb[0].mxu0
    %v3648 = vadd.f32 0.0, %v3647
    %v3649 = vpop.f32.mrb[0].mxu0
    %v3650 = vpop.f32.mrb[0].mxu0
    %v3651 = vpop.f32.mrb[0].mxu0
    %3652 = vdwg.mxu0
    %v3653 = vpack.c.bf16 %v3648, %v3648
    %3654 = vmatprep.subr.bf16.mxu0 0
    %3655 = vmatpush1.bf16.msra.mxu0 %v3488
    %3656 = vmatprep.subr.bf16.mxu0 0
    %3657 = vmatpush1.bf16.msra.mxu0 0
    %3658 = vmatprep.subr.bf16.mxu0 0
    %3659 = vmatpush1.bf16.msra.mxu0 0
    %3660 = vmatprep.subr.bf16.mxu0 0
    %3661 = vmatpush1.bf16.msra.mxu0 0
    %3662 = vmatprep.subr.bf16.mxu0 0
    %3663 = vmatpush1.bf16.msra.mxu0 0
    %3664 = vmatprep.subr.bf16.mxu0 0
    %3665 = vmatpush1.bf16.msra.mxu0 0
    %3666 = vmatprep.subr.bf16.mxu0 0
    %3667 = vmatpush1.bf16.msra.mxu0 0
    %3668 = vmatprep.subr.bf16.mxu0 0
    %3669 = vmatpush1.bf16.msra.mxu0 0
    %3670 = vmatprep.subr.bf16.mxu0 0
    %3671 = vmatpush1.bf16.msra.mxu0 0
    %3672 = vmatprep.subr.bf16.mxu0 0
    %3673 = vmatpush1.bf16.msra.mxu0 0
    %3674 = vmatprep.subr.bf16.mxu0 0
    %3675 = vmatpush1.bf16.msra.mxu0 0
    %3676 = vmatprep.subr.bf16.mxu0 0
    %3677 = vmatpush1.bf16.msra.mxu0 0
    %3678 = vmatprep.subr.bf16.mxu0 0
    %3679 = vmatpush1.bf16.msra.mxu0 0
    %3680 = vmatprep.subr.bf16.mxu0 0
    %3681 = vmatpush1.bf16.msra.mxu0 0
    %3682 = vmatprep.subr.bf16.mxu0 0
    %3683 = vmatpush1.bf16.msra.mxu0 0
    %3684 = vmatprep.subr.bf16.mxu0 0
    %3685 = vmatpush1.bf16.msra.mxu0 0
    %3686 = vmatprep.mubr.bf16.mxu0 0
    %3687 = vmatmul.mubr.bf16.gmra.mrb[0].mxu0 %v1993
    %v3688 = vpop.f32.mrb[0].mxu0
    %v3689 = vadd.f32 0.0, %v3688
    %v3690 = vpop.f32.mrb[0].mxu0
    %v3691 = vpop.f32.mrb[0].mxu0
    %v3692 = vpop.f32.mrb[0].mxu0
    %3693 = vdwg.mxu0
    %v3694 = vpack.c.bf16 %v3689, %v3689
    %3695 = vmatprep.subr.bf16.mxu0 0
    %3696 = vmatpush1.bf16.msra.mxu0 %v3488
    %3697 = vmatprep.subr.bf16.mxu0 0
    %3698 = vmatpush1.bf16.msra.mxu0 0
    %3699 = vmatprep.subr.bf16.mxu0 0
    %3700 = vmatpush1.bf16.msra.mxu0 0
    %3701 = vmatprep.subr.bf16.mxu0 0
    %3702 = vmatpush1.bf16.msra.mxu0 0
    %3703 = vmatprep.subr.bf16.mxu0 0
    %3704 = vmatpush1.bf16.msra.mxu0 0
    %3705 = vmatprep.subr.bf16.mxu0 0
    %3706 = vmatpush1.bf16.msra.mxu0 0
    %3707 = vmatprep.subr.bf16.mxu0 0
    %3708 = vmatpush1.bf16.msra.mxu0 0
    %3709 = vmatprep.subr.bf16.mxu0 0
    %3710 = vmatpush1.bf16.msra.mxu0 0
    %3711 = vmatprep.subr.bf16.mxu0 0
    %3712 = vmatpush1.bf16.msra.mxu0 0
    %3713 = vmatprep.subr.bf16.mxu0 0
    %3714 = vmatpush1.bf16.msra.mxu0 0
    %3715 = vmatprep.subr.bf16.mxu0 0
    %3716 = vmatpush1.bf16.msra.mxu0 0
    %3717 = vmatprep.subr.bf16.mxu0 0
    %3718 = vmatpush1.bf16.msra.mxu0 0
    %3719 = vmatprep.subr.bf16.mxu0 0
    %3720 = vmatpush1.bf16.msra.mxu0 0
    %3721 = vmatprep.subr.bf16.mxu0 0
    %3722 = vmatpush1.bf16.msra.mxu0 0
    %3723 = vmatprep.subr.bf16.mxu0 0
    %3724 = vmatpush1.bf16.msra.mxu0 0
    %3725 = vmatprep.subr.bf16.mxu0 0
    %3726 = vmatpush1.bf16.msra.mxu0 0
    %3727 = vmatprep.mubr.bf16.mxu0 0
    %3728 = vmatmul.mubr.bf16.gmra.mrb[0].mxu0 %v2039
    %v3729 = vpop.f32.mrb[0].mxu0
    %v3730 = vadd.f32 0.0, %v3729
    %v3731 = vpop.f32.mrb[0].mxu0
    %v3732 = vpop.f32.mrb[0].mxu0
    %v3733 = vpop.f32.mrb[0].mxu0
    %3734 = vdwg.mxu0
    %v3735 = vpack.c.bf16 %v3730, %v3730
    %3736 = vmatprep.subr.bf16.mxu0 0
    %3737 = vmatpush1.bf16.msra.mxu0 %v3488
    %3738 = vmatprep.subr.bf16.mxu0 0
    %3739 = vmatpush1.bf16.msra.mxu0 0
    %3740 = vmatprep.subr.bf16.mxu0 0
    %3741 = vmatpush1.bf16.msra.mxu0 0
    %3742 = vmatprep.subr.bf16.mxu0 0
    %3743 = vmatpush1.bf16.msra.mxu0 0
    %3744 = vmatprep.subr.bf16.mxu0 0
    %3745 = vmatpush1.bf16.msra.mxu0 0
    %3746 = vmatprep.subr.bf16.mxu0 0
    %3747 = vmatpush1.bf16.msra.mxu0 0
    %3748 = vmatprep.subr.bf16.mxu0 0
    %3749 = vmatpush1.bf16.msra.mxu0 0
    %3750 = vmatprep.subr.bf16.mxu0 0
    %3751 = vmatpush1.bf16.msra.mxu0 0
    %3752 = vmatprep.subr.bf16.mxu0 0
    %3753 = vmatpush1.bf16.msra.mxu0 0
    %3754 = vmatprep.subr.bf16.mxu0 0
    %3755 = vmatpush1.bf16.msra.mxu0 0
    %3756 = vmatprep.subr.bf16.mxu0 0
    %3757 = vmatpush1.bf16.msra.mxu0 0
    %3758 = vmatprep.subr.bf16.mxu0 0
    %3759 = vmatpush1.bf16.msra.mxu0 0
    %3760 = vmatprep.subr.bf16.mxu0 0
    %3761 = vmatpush1.bf16.msra.mxu0 0
    %3762 = vmatprep.subr.bf16.mxu0 0
    %3763 = vmatpush1.bf16.msra.mxu0 0
    %3764 = vmatprep.subr.bf16.mxu0 0
    %3765 = vmatpush1.bf16.msra.mxu0 0
    %3766 = vmatprep.subr.bf16.mxu0 0
    %3767 = vmatpush1.bf16.msra.mxu0 0
    %3768 = vmatprep.mubr.bf16.mxu0 0
    %3769 = vmatmul.mubr.bf16.gmra.mrb[0].mxu0 %v2085
    %v3770 = vpop.f32.mrb[0].mxu0
    %v3771 = vadd.f32 0.0, %v3770
    %v3772 = vpop.f32.mrb[0].mxu0
    %v3773 = vpop.f32.mrb[0].mxu0
    %v3774 = vpop.f32.mrb[0].mxu0
    %3775 = vdwg.mxu0
    %v3776 = vpack.c.bf16 %v3771, %v3771
    %3777 = vmatprep.subr.bf16.mxu0 0
    %3778 = vmatpush1.bf16.msra.mxu0 %v3488
    %3779 = vmatprep.subr.bf16.mxu0 0
    %3780 = vmatpush1.bf16.msra.mxu0 0
    %3781 = vmatprep.subr.bf16.mxu0 0
    %3782 = vmatpush1.bf16.msra.mxu0 0
    %3783 = vmatprep.subr.bf16.mxu0 0
    %3784 = vmatpush1.bf16.msra.mxu0 0
    %3785 = vmatprep.subr.bf16.mxu0 0
    %3786 = vmatpush1.bf16.msra.mxu0 0
    %3787 = vmatprep.subr.bf16.mxu0 0
    %3788 = vmatpush1.bf16.msra.mxu0 0
    %3789 = vmatprep.subr.bf16.mxu0 0
    %3790 = vmatpush1.bf16.msra.mxu0 0
    %3791 = vmatprep.subr.bf16.mxu0 0
    %3792 = vmatpush1.bf16.msra.mxu0 0
    %3793 = vmatprep.subr.bf16.mxu0 0
    %3794 = vmatpush1.bf16.msra.mxu0 0
    %3795 = vmatprep.subr.bf16.mxu0 0
    %3796 = vmatpush1.bf16.msra.mxu0 0
    %3797 = vmatprep.subr.bf16.mxu0 0
    %3798 = vmatpush1.bf16.msra.mxu0 0
    %3799 = vmatprep.subr.bf16.mxu0 0
    %3800 = vmatpush1.bf16.msra.mxu0 0
    %3801 = vmatprep.subr.bf16.mxu0 0
    %3802 = vmatpush1.bf16.msra.mxu0 0
    %3803 = vmatprep.subr.bf16.mxu0 0
    %3804 = vmatpush1.bf16.msra.mxu0 0
    %3805 = vmatprep.subr.bf16.mxu0 0
    %3806 = vmatpush1.bf16.msra.mxu0 0
    %3807 = vmatprep.subr.bf16.mxu0 0
    %3808 = vmatpush1.bf16.msra.mxu0 0
    %3809 = vmatprep.mubr.bf16.mxu0 0
    %3810 = vmatmul.mubr.bf16.gmra.mrb[0].mxu0 %v2131
    %v3811 = vpop.f32.mrb[0].mxu0
    %v3812 = vadd.f32 0.0, %v3811
    %v3813 = vpop.f32.mrb[0].mxu0
    %v3814 = vpop.f32.mrb[0].mxu0
    %v3815 = vpop.f32.mrb[0].mxu0
    %3816 = vdwg.mxu0
    %v3817 = vpack.c.bf16 %v3812, %v3812
    %3818 = vmatprep.subr.bf16.mxu0 0
    %3819 = vmatpush1.bf16.msra.mxu0 %v3488
    %3820 = vmatprep.subr.bf16.mxu0 0
    %3821 = vmatpush1.bf16.msra.mxu0 0
    %3822 = vmatprep.subr.bf16.mxu0 0
    %3823 = vmatpush1.bf16.msra.mxu0 0
    %3824 = vmatprep.subr.bf16.mxu0 0
    %3825 = vmatpush1.bf16.msra.mxu0 0
    %3826 = vmatprep.subr.bf16.mxu0 0
    %3827 = vmatpush1.bf16.msra.mxu0 0
    %3828 = vmatprep.subr.bf16.mxu0 0
    %3829 = vmatpush1.bf16.msra.mxu0 0
    %3830 = vmatprep.subr.bf16.mxu0 0
    %3831 = vmatpush1.bf16.msra.mxu0 0
    %3832 = vmatprep.subr.bf16.mxu0 0
    %3833 = vmatpush1.bf16.msra.mxu0 0
    %3834 = vmatprep.subr.bf16.mxu0 0
    %3835 = vmatpush1.bf16.msra.mxu0 0
    %3836 = vmatprep.subr.bf16.mxu0 0
    %3837 = vmatpush1.bf16.msra.mxu0 0
    %3838 = vmatprep.subr.bf16.mxu0 0
    %3839 = vmatpush1.bf16.msra.mxu0 0
    %3840 = vmatprep.subr.bf16.mxu0 0
    %3841 = vmatpush1.bf16.msra.mxu0 0
    %3842 = vmatprep.subr.bf16.mxu0 0
    %3843 = vmatpush1.bf16.msra.mxu0 0
    %3844 = vmatprep.subr.bf16.mxu0 0
    %3845 = vmatpush1.bf16.msra.mxu0 0
    %3846 = vmatprep.subr.bf16.mxu0 0
    %3847 = vmatpush1.bf16.msra.mxu0 0
    %3848 = vmatprep.subr.bf16.mxu0 0
    %3849 = vmatpush1.bf16.msra.mxu0 0
    %3850 = vmatprep.mubr.bf16.mxu0 0
    %3851 = vmatmul.mubr.bf16.gmra.mrb[0].mxu0 %v2177
    %v3852 = vpop.f32.mrb[0].mxu0
    %v3853 = vadd.f32 0.0, %v3852
    %v3854 = vpop.f32.mrb[0].mxu0
    %v3855 = vpop.f32.mrb[0].mxu0
    %v3856 = vpop.f32.mrb[0].mxu0
    %3857 = vdwg.mxu0
    %v3858 = vpack.c.bf16 %v3853, %v3853
    %3860 = vrot.lane.b32.xlu0 %v3571, 64
    %v3861 = vpop.permute.xlu0 %3860
    %3863 = vrot.lane.b32.xlu0 %v3653, 64
    %v3864 = vpop.permute.xlu0 %3863
    %3866 = vrot.lane.b32.xlu0 %v3735, 64
    %v3867 = vpop.permute.xlu0 %3866
    %3869 = vrot.lane.b32.xlu0 %v3817, 64
    %v3870 = vpop.permute.xlu0 %3869
    %v3873 = vsel %vm540, %v3530, %v3861
    %v3877 = vsel %vm540, %v3612, %v3864
    %v3881 = vsel %vm540, %v3694, %v3867
    %v3885 = vsel %vm540, %v3776, %v3870
    %v3888 = vsel %vm540, %v3858, 0
    %3890 = vmatprep.subr.bf16.mxu0 0
    %3891 = vmatpush1.bf16.msra.mxu0 %v2465
    %3892 = vmatprep.subr.bf16.mxu0 0
    %3893 = vmatpush1.bf16.msra.mxu0 %v2466
    %3894 = vmatprep.subr.bf16.mxu0 0
    %3895 = vmatpush1.bf16.msra.mxu0 %v2467
    %3896 = vmatprep.subr.bf16.mxu0 0
    %3897 = vmatpush1.bf16.msra.mxu0 %v2468
    %3898 = vmatprep.subr.bf16.mxu0 0
    %3899 = vmatpush1.bf16.msra.mxu0 %v2469
    %3900 = vmatprep.subr.bf16.mxu0 0
    %3901 = vmatpush1.bf16.msra.mxu0 %v2470
    %3902 = vmatprep.subr.bf16.mxu0 0
    %3903 = vmatpush1.bf16.msra.mxu0 %v2471
    %3904 = vmatprep.subr.bf16.mxu0 0
    %3905 = vmatpush1.bf16.msra.mxu0 %v2472
    %3906 = vmatprep.subr.bf16.mxu0 0
    %3907 = vmatpush1.bf16.msra.mxu0 %v2473
    %3908 = vmatprep.subr.bf16.mxu0 0
    %3909 = vmatpush1.bf16.msra.mxu0 %v2474
    %3910 = vmatprep.subr.bf16.mxu0 0
    %3911 = vmatpush1.bf16.msra.mxu0 %v2475
    %3912 = vmatprep.subr.bf16.mxu0 0
    %3913 = vmatpush1.bf16.msra.mxu0 %v2476
    %3914 = vmatprep.subr.bf16.mxu0 0
    %3915 = vmatpush1.bf16.msra.mxu0 %v2477
    %3916 = vmatprep.subr.bf16.mxu0 0
    %3917 = vmatpush1.bf16.msra.mxu0 %v2478
    %3918 = vmatprep.subr.bf16.mxu0 0
    %3919 = vmatpush1.bf16.msra.mxu0 %v2479
    %3920 = vmatprep.subr.bf16.mxu0 0
    %3921 = vmatpush1.bf16.msra.mxu0 %v2480
    %3922 = vmatprep.mubr.bf16.mxu0 %v3877
    %3923 = vmatmul.mubr.bf16.gmra.mrb[0].mxu0 %v3873
    %v3924 = vpop.f32.mrb[0].mxu0
    %v3925 = vadd.f32 %v2320, %v3924
    %v3926 = vpop.f32.mrb[0].mxu0
    %v3927 = vpop.f32.mrb[0].mxu0
    %v3928 = vpop.f32.mrb[0].mxu0
    %3929 = vdwg.mxu0
    %3930 = vmatprep.subr.bf16.mxu0 0
    %3931 = vmatpush1.bf16.msra.mxu0 %v2481
    %3932 = vmatprep.subr.bf16.mxu0 0
    %3933 = vmatpush1.bf16.msra.mxu0 %v2482
    %3934 = vmatprep.subr.bf16.mxu0 0
    %3935 = vmatpush1.bf16.msra.mxu0 %v2483
    %3936 = vmatprep.subr.bf16.mxu0 0
    %3937 = vmatpush1.bf16.msra.mxu0 %v2484
    %3938 = vmatprep.subr.bf16.mxu0 0
    %3939 = vmatpush1.bf16.msra.mxu0 %v2485
    %3940 = vmatprep.subr.bf16.mxu0 0
    %3941 = vmatpush1.bf16.msra.mxu0 %v2486
    %3942 = vmatprep.subr.bf16.mxu0 0
    %3943 = vmatpush1.bf16.msra.mxu0 %v2487
    %3944 = vmatprep.subr.bf16.mxu0 0
    %3945 = vmatpush1.bf16.msra.mxu0 %v2488
    %3946 = vmatprep.subr.bf16.mxu0 0
    %3947 = vmatpush1.bf16.msra.mxu0 %v2489
    %3948 = vmatprep.subr.bf16.mxu0 0
    %3949 = vmatpush1.bf16.msra.mxu0 %v2490
    %3950 = vmatprep.subr.bf16.mxu0 0
    %3951 = vmatpush1.bf16.msra.mxu0 %v2491
    %3952 = vmatprep.subr.bf16.mxu0 0
    %3953 = vmatpush1.bf16.msra.mxu0 %v2492
    %3954 = vmatprep.subr.bf16.mxu0 0
    %3955 = vmatpush1.bf16.msra.mxu0 %v2493
    %3956 = vmatprep.subr.bf16.mxu0 0
    %3957 = vmatpush1.bf16.msra.mxu0 %v2494
    %3958 = vmatprep.subr.bf16.mxu0 0
    %3959 = vmatpush1.bf16.msra.mxu0 %v2495
    %3960 = vmatprep.subr.bf16.mxu0 0
    %3961 = vmatpush1.bf16.msra.mxu0 %v2496
    %3962 = vmatprep.mubr.bf16.mxu0 %v3885
    %3963 = vmatmul.mubr.bf16.gmra.mrb[0].mxu0 %v3881
    %v3964 = vpop.f32.mrb[0].mxu0
    %v3965 = vadd.f32 %v3925, %v3964
    %v3966 = vpop.f32.mrb[0].mxu0
    %v3967 = vpop.f32.mrb[0].mxu0
    %v3968 = vpop.f32.mrb[0].mxu0
    %3969 = vdwg.mxu0
    %3970 = vmatprep.subr.bf16.mxu0 0
    %3971 = vmatpush1.bf16.msra.mxu0 %v2497
    %3972 = vmatprep.subr.bf16.mxu0 0
    %3973 = vmatpush1.bf16.msra.mxu0 %v2498
    %3974 = vmatprep.subr.bf16.mxu0 0
    %3975 = vmatpush1.bf16.msra.mxu0 %v2499
    %3976 = vmatprep.subr.bf16.mxu0 0
    %3977 = vmatpush1.bf16.msra.mxu0 %v2500
    %3978 = vmatprep.subr.bf16.mxu0 0
    %3979 = vmatpush1.bf16.msra.mxu0 0
    %3980 = vmatprep.subr.bf16.mxu0 0
    %3981 = vmatpush1.bf16.msra.mxu0 0
    %3982 = vmatprep.subr.bf16.mxu0 0
    %3983 = vmatpush1.bf16.msra.mxu0 0
    %3984 = vmatprep.subr.bf16.mxu0 0
    %3985 = vmatpush1.bf16.msra.mxu0 0
    %3986 = vmatprep.subr.bf16.mxu0 0
    %3987 = vmatpush1.bf16.msra.mxu0 0
    %3988 = vmatprep.subr.bf16.mxu0 0
    %3989 = vmatpush1.bf16.msra.mxu0 0
    %3990 = vmatprep.subr.bf16.mxu0 0
    %3991 = vmatpush1.bf16.msra.mxu0 0
    %3992 = vmatprep.subr.bf16.mxu0 0
    %3993 = vmatpush1.bf16.msra.mxu0 0
    %3994 = vmatprep.subr.bf16.mxu0 0
    %3995 = vmatpush1.bf16.msra.mxu0 0
    %3996 = vmatprep.subr.bf16.mxu0 0
    %3997 = vmatpush1.bf16.msra.mxu0 0
    %3998 = vmatprep.subr.bf16.mxu0 0
    %3999 = vmatpush1.bf16.msra.mxu0 0
    %4000 = vmatprep.subr.bf16.mxu0 0
    %4001 = vmatpush1.bf16.msra.mxu0 0
    %4002 = vmatprep.mubr.bf16.mxu0 0
    %4003 = vmatmul.mubr.bf16.gmra.mrb[0].mxu0 %v3888
    %v4004 = vpop.f32.mrb[0].mxu0
    %v4005 = vadd.f32 %v3965, %v4004
    %v4006 = vpop.f32.mrb[0].mxu0
    %v4007 = vpop.f32.mrb[0].mxu0
    %v4008 = vpop.f32.mrb[0].mxu0
    %4009 = vdwg.mxu0
    %v4010 = vmax.f32 %v4005, 0.0
    %v4011 = vpack.c.bf16 %v4010, %v4010
    %v4013 = vshll.u32 %v4011, 16
    %vm4016 = vcmask 1040384
    %vm4017 = vsmask.f32 256
    %vm4018 = vmand %vm4016, %vm4017
    %v4019 = vsel %vm4018, %v2661, %v4013
    %v4020 = vld [vmem:[#allocation17] sm:$0xf]
    %v4021 = vld [vmem:[#allocation17 + $0x4] sm:$0xf]
    %v4022 = vld [vmem:[#allocation17 + $0x8] sm:$0xf]
    %v4023 = vld [vmem:[#allocation17 + $0xc] sm:$0xf]
    %v4024 = vld [vmem:[#allocation17 + $0x10] sm:$0xf]
    %v4025 = vld [vmem:[#allocation17 + $0x14] sm:$0xf]
    %v4026 = vld [vmem:[#allocation17 + $0x18] sm:$0xf]
    %v4027 = vld [vmem:[#allocation17 + $0x1c] sm:$0xf]
    %v4028 = vld [vmem:[#allocation19] sm:$0x1]
    %v4030 = vlaneseq
    %v4031 = vshrl.u32 %v4030, 7
    %v4032 = vsub.s32 0, %v4031
    %v4033 = vrot.slane %v4028, %v4032
    %v4043 = vunpack.c.l.b16 %v4020
    %v4044 = vunpack.c.l.b16 %v4021
    %v4045 = vunpack.c.l.b16 %v4022
    %v4046 = vunpack.c.l.b16 %v4023
    %v4047 = vunpack.c.l.b16 %v4024
    %v4048 = vunpack.c.l.b16 %v4025
    %v4049 = vunpack.c.l.b16 %v4026
    %v4050 = vunpack.c.l.b16 %v4027
    %v4051 = vpack.c.b16 %v4044, %v4043
    %v4052 = vpack.c.b16 %v4046, %v4045
    %v4053 = vpack.c.b16 %v4048, %v4047
    %v4054 = vpack.c.b16 %v4050, %v4049
    %v4060 = vsel %vm540, %v4019, 0
    %4062 = vmatprep.subr.bf16.mxu0 0
    %4063 = vmatpush1.bf16.msra.mxu0 %v4051
    %4064 = vmatprep.subr.bf16.mxu0 0
    %4065 = vmatpush1.bf16.msra.mxu0 %v4052
    %4066 = vmatprep.subr.bf16.mxu0 0
    %4067 = vmatpush1.bf16.msra.mxu0 %v4053
    %4068 = vmatprep.subr.bf16.mxu0 0
    %4069 = vmatpush1.bf16.msra.mxu0 %v4054
    %4070 = vmatprep.subr.bf16.mxu0 0
    %4071 = vmatpush1.bf16.msra.mxu0 0
    %4072 = vmatprep.subr.bf16.mxu0 0
    %4073 = vmatpush1.bf16.msra.mxu0 0
    %4074 = vmatprep.subr.bf16.mxu0 0
    %4075 = vmatpush1.bf16.msra.mxu0 0
    %4076 = vmatprep.subr.bf16.mxu0 0
    %4077 = vmatpush1.bf16.msra.mxu0 0
    %4078 = vmatprep.subr.bf16.mxu0 0
    %4079 = vmatpush1.bf16.msra.mxu0 0
    %4080 = vmatprep.subr.bf16.mxu0 0
    %4081 = vmatpush1.bf16.msra.mxu0 0
    %4082 = vmatprep.subr.bf16.mxu0 0
    %4083 = vmatpush1.bf16.msra.mxu0 0
    %4084 = vmatprep.subr.bf16.mxu0 0
    %4085 = vmatpush1.bf16.msra.mxu0 0
    %4086 = vmatprep.subr.bf16.mxu0 0
    %4087 = vmatpush1.bf16.msra.mxu0 0
    %4088 = vmatprep.subr.bf16.mxu0 0
    %4089 = vmatpush1.bf16.msra.mxu0 0
    %4090 = vmatprep.subr.bf16.mxu0 0
    %4091 = vmatpush1.bf16.msra.mxu0 0
    %4092 = vmatprep.subr.bf16.mxu0 0
    %4093 = vmatpush1.bf16.msra.mxu0 0
    %4094 = vmatprep.mubr.bf16.mxu0 0
    %4095 = vmatmul.mubr.bf16.gmra.mrb[0].mxu0 %v4060
    %v4096 = vpop.f32.mrb[0].mxu0
    %v4097 = vadd.f32 %v4033, %v4096
    %v4098 = vpop.f32.mrb[0].mxu0
    %v4099 = vpop.f32.mrb[0].mxu0
    %v4100 = vpop.f32.mrb[0].mxu0
    %4101 = vdwg.mxu0
    %v4102 = vmax.f32 %v4097, 0.0
    %4103 = vst [vmem:[#allocation20] sm:$0x3] %v4102
    // Predicated region
    $region90: #{tpu_custom_call.1} parent=1 // pred_check
      _
    $region91: #{tpu_custom_call.1} parent=1 // pred_check_branch
      %4105 = sbr.rel (0) target = $region93
    $region92: #{tpu_custom_call.1} parent=1 // pred_region
      %s4107 = ssub.s32 32, 32
      %4108 = vsyncadd [#allocation4], %s4107
      %s4110 = sshll.u32 [#allocation20], 4
      %s4111 = int_to_ptr.vmem [resolvable:$true] %s4110
      %4113 = dma.vmem_to_hbm [thread:$0]  %s4111, 32, %s11, [#allocation4]
    $region93: #{tpu_custom_call.1} parent=1 // pred_fallthru
      _
    // Predicated region
    $region94: #{tpu_custom_call.1} parent=1 // pred_check
      _
    $region95: #{tpu_custom_call.1} parent=1 // pred_check_branch
      %4115 = sbr.rel (0) target = $region97
    $region96: #{tpu_custom_call.1} parent=1 // pred_region
      %4116 = dma.done [#allocation4], 32
    $region97: #{tpu_custom_call.1} parent=1 // pred_fallthru
      _
    %4117 = vsyncpa [#allocation3], 1
    %4118 = vsyncpa [#allocation6], 1
    %4119 = vsyncpa [#allocation9], 1
    %4120 = vsyncpa [#allocation12], 1
    %4121 = vsyncpa [#allocation15], 1
    %4122 = vsyncpa [#allocation18], 1
    %4123 = vsyncpa [#allocation4], 1

// kernel: tpu_custom_call.1
$region0: #{tpu_custom_call.1}
  #allocation0 [shape = 'u32[]', space=smem, size = 0x4, offset = 0x4, fixed_abs, tag = 'smem constant byte address 0x4 - core index']
  #allocation1 [shape = 'u32[144,128]{1,0:T(1,128)}', space=vmem, size = 0x12000, scoped, tag = 'internal scratch']
  %s0 = inlined_call_operand.hbm [shape: bf16[128,256], index: 0, kind: input, shape index: {}]
  %s1 = inlined_call_operand.hbm [shape: bf16[256,32], index: 1, kind: input, shape index: {}]
  %s2 = inlined_call_operand.hbm [shape: f32[1,32], index: 2, kind: input, shape index: {}]
  %s3 = inlined_call_operand.hbm [shape: bf16[16,9,64], index: 3, kind: input, shape index: {}]
  %s4 = inlined_call_operand.hbm [shape: bf16[512,64], index: 4, kind: input, shape index: {}]
  %s5 = inlined_call_operand.hbm [shape: f32[1,64], index: 5, kind: input, shape index: {}]
  %s6 = inlined_call_operand.hbm [shape: bf16[9,1,9], index: 6, kind: input, shape index: {}]
  %s7 = inlined_call_operand.hbm [shape: bf16[576,64], index: 7, kind: input, shape index: {}]
  %s8 = inlined_call_operand.hbm [shape: f32[1,64], index: 8, kind: input, shape index: {}]
  %s9 = inlined_call_operand.hbm [shape: bf16[64,128], index: 9, kind: input, shape index: {}]
  %s10 = inlined_call_operand.hbm [shape: f32[1,128], index: 10, kind: input, shape index: {}]
  %s11 = inlined_call_operand.hbm [shape: f32[2,128], index: 11, kind: output, shape index: {}]
  %s12 = sld [smem:[#allocation0]]
  $region98: #{tpu_custom_call.1} parent=0
    _
  %s14 = ssub.s32 1, %s12
  %s15 = scalar_select 0, %s14, %s12
  $region1: #{tpu_custom_call.1} parent=0
    #allocation2 [shape = 'u8[65536]{0}', space=vmem, size = 0x10000, scoped, tag = 'input window, operand 0, single buffered']
    #allocation3 [shape = 's32[1]{0}', space=sflag, size = 0x4, scoped, tag = 'scoped memory for tpu_custom_call.1']
    #allocation4 [shape = 's32[1]{0}', space=sflag, size = 0x4, scoped, tag = 'scoped memory for tpu_custom_call.1']
    #allocation5 [shape = 'u8[65536]{0}', space=vmem, size = 0x10000, scoped, tag = 'input window, operand 1, single buffered']
    #allocation6 [shape = 's32[1]{0}', space=sflag, size = 0x4, scoped, tag = 'scoped memory for tpu_custom_call.1']
    #allocation7 [shape = 'u8[512]{0}', space=vmem, size = 0x400, scoped, tag = 'input window, operand 2, single buffered']
    #allocation8 [shape = 'u8[65536]{0}', space=vmem, size = 0x10000, scoped, tag = 'input window, operand 3, single buffered']
    #allocation9 [shape = 's32[1]{0}', space=sflag, size = 0x4, scoped, tag = 'scoped memory for tpu_custom_call.1']
    #allocation10 [shape = 'u8[131072]{0}', space=vmem, size = 0x20000, scoped, tag = 'input window, operand 4, single buffered']
    #allocation11 [shape = 'u8[512]{0}', space=vmem, size = 0x400, scoped, tag = 'input window, operand 5, single buffered']
    #allocation12 [shape = 's32[1]{0}', space=sflag, size = 0x4, scoped, tag = 'scoped memory for tpu_custom_call.1']
    #allocation13 [shape = 'u8[4608]{0}', space=vmem, size = 0x1400, scoped, tag = 'input window, operand 6, single buffered']
    #allocation14 [shape = 'u8[147456]{0}', space=vmem, size = 0x24000, scoped, tag = 'input window, operand 7, single buffered']
    #allocation15 [shape = 's32[1]{0}', space=sflag, size = 0x4, scoped, tag = 'scoped memory for tpu_custom_call.1']
    #allocation16 [shape = 'u8[512]{0}', space=vmem, size = 0x400, scoped, tag = 'input window, operand 8, single buffered']
    #allocation17 [shape = 'u8[16384]{0}', space=vmem, size = 0x4000, scoped, tag = 'input window, operand 9, single buffered']
    #allocation18 [shape = 's32[1]{0}', space=sflag, size = 0x4, scoped, tag = 'scoped memory for tpu_custom_call.1']
    #allocation19 [shape = 'u8[512]{0}', space=vmem, size = 0x400, scoped, tag = 'input window, operand 10, single buffered']
    #allocation20 [shape = 'u8[1024]{0}', space=vmem, size = 0x400, scoped, tag = 'output window, operand 0, single buffered']
    %16 = vsyncpa [#allocation3], 0
    %17 = vsyncpa [#allocation6], 0
    %18 = vsyncpa [#allocation9], 0
    %19 = vsyncpa [#allocation12], 0
    %20 = vsyncpa [#allocation15], 0
    %21 = vsyncpa [#allocation18], 0
    %22 = vsyncpa [#allocation4], 0
    // Predicated region
    $region2: #{tpu_custom_call.1} parent=1 // pred_check
      _
    $region3: #{tpu_custom_call.1} parent=1 // pred_check_branch
      %24 = sbr.rel (0) target = $region5
    $region4: #{tpu_custom_call.1} parent=1 // pred_region
      %s26 = ssub.s32 2048, 2048
      %27 = vsyncadd [#allocation3], %s26
      %s28 = sshll.u32 [#allocation2], 4
      %s29 = int_to_ptr.vmem [resolvable:$true] %s28
      %34 = dma.hbm_to_vmem [thread:$0]  %s0, 2048, %s29, [#allocation3], 128, 128, 8
    $region5: #{tpu_custom_call.1} parent=1 // pred_fallthru
      _
    // Predicated region
    $region6: #{tpu_custom_call.1} parent=1 // pred_check
      _
    $region7: #{tpu_custom_call.1} parent=1 // pred_check_branch
      %36 = sbr.rel (0) target = $region9
    $region8: #{tpu_custom_call.1} parent=1 // pred_region
      %s38 = ssub.s32 2048, 2048
      %39 = vsyncadd [#allocation6], %s38
      %s40 = sshll.u32 [#allocation5], 4
      %s41 = int_to_ptr.vmem [resolvable:$true] %s40
      %46 = dma.hbm_to_vmem [thread:$0]  %s1, 2048, %s41, [#allocation6], 64, 64, 4
    $region9: #{tpu_custom_call.1} parent=1 // pred_fallthru
      _
    // Predicated region
    $region10: #{tpu_custom_call.1} parent=1 // pred_check
      _
    $region11: #{tpu_custom_call.1} parent=1 // pred_check_branch
      %48 = sbr.rel (0) target = $region13
    $region12: #{tpu_custom_call.1} parent=1 // pred_region
      %s50 = ssub.s32 16, 16
      %51 = vsyncadd [#allocation6], %s50
      %s53 = sshll.u32 [#allocation7], 4
      %s54 = int_to_ptr.vmem [resolvable:$true] %s53
      %56 = dma.hbm_to_vmem [thread:$0]  %s2, 16, %s54, [#allocation6]
    $region13: #{tpu_custom_call.1} parent=1 // pred_fallthru
      _
    // Predicated region
    $region14: #{tpu_custom_call.1} parent=1 // pred_check
      _
    $region15: #{tpu_custom_call.1} parent=1 // pred_check_branch
      %58 = sbr.rel (0) target = $region17
    $region16: #{tpu_custom_call.1} parent=1 // pred_region
      %s60 = ssub.s32 2048, 2048
      %61 = vsyncadd [#allocation9], %s60
      %s62 = sshll.u32 [#allocation8], 4
      %s63 = int_to_ptr.vmem [resolvable:$true] %s62
      %68 = dma.hbm_to_vmem [thread:$0]  %s3, 2048, %s63, [#allocation9], 64, 64, 4
    $region17: #{tpu_custom_call.1} parent=1 // pred_fallthru
      _
    // Predicated region
    $region18: #{tpu_custom_call.1} parent=1 // pred_check
      _
    $region19: #{tpu_custom_call.1} parent=1 // pred_check_branch
      %70 = sbr.rel (0) target = $region21
    $region20: #{tpu_custom_call.1} parent=1 // pred_region
      %s72 = ssub.s32 4096, 4096
      %73 = vsyncadd [#allocation9], %s72
      %s74 = sshll.u32 [#allocation10], 4
      %s75 = int_to_ptr.vmem [resolvable:$true] %s74
      %80 = dma.hbm_to_vmem [thread:$0]  %s4, 4096, %s75, [#allocation9], 64, 64, 4
    $region21: #{tpu_custom_call.1} parent=1 // pred_fallthru
      _
    // Predicated region
    $region22: #{tpu_custom_call.1} parent=1 // pred_check
      _
    $region23: #{tpu_custom_call.1} parent=1 // pred_check_branch
      %82 = sbr.rel (0) target = $region25
    $region24: #{tpu_custom_call.1} parent=1 // pred_region
      %s84 = ssub.s32 16, 16
      %85 = vsyncadd [#allocation12], %s84
      %s87 = sshll.u32 [#allocation11], 4
      %s88 = int_to_ptr.vmem [resolvable:$true] %s87
      %90 = dma.hbm_to_vmem [thread:$0]  %s5, 16, %s88, [#allocation12]
    $region25: #{tpu_custom_call.1} parent=1 // pred_fallthru
      _
    // Predicated region
    $region26: #{tpu_custom_call.1} parent=1 // pred_check
      _
    $region27: #{tpu_custom_call.1} parent=1 // pred_check_branch
      %92 = sbr.rel (0) target = $region29
    $region28: #{tpu_custom_call.1} parent=1 // pred_region
      %s94 = ssub.s32 144, 144
      %95 = vsyncadd [#allocation12], %s94
      %s96 = sshll.u32 [#allocation13], 4
      %s97 = int_to_ptr.vmem [resolvable:$true] %s96
      %102 = dma.hbm_to_vmem [thread:$0]  %s6, 144, %s97, [#allocation12], 16, 16, 1
    $region29: #{tpu_custom_call.1} parent=1 // pred_fallthru
      _
    // Predicated region
    $region30: #{tpu_custom_call.1} parent=1 // pred_check
      _
    $region31: #{tpu_custom_call.1} parent=1 // pred_check_branch
      %104 = sbr.rel (0) target = $region33
    $region32: #{tpu_custom_call.1} parent=1 // pred_region
      %s106 = ssub.s32 4608, 4608
      %107 = vsyncadd [#allocation15], %s106
      %s108 = sshll.u32 [#allocation14], 4
      %s109 = int_to_ptr.vmem [resolvable:$true] %s108
      %114 = dma.hbm_to_vmem [thread:$0]  %s7, 4608, %s109, [#allocation15], 64, 64, 4
    $region33: #{tpu_custom_call.1} parent=1 // pred_fallthru
      _
    // Predicated region
    $region34: #{tpu_custom_call.1} parent=1 // pred_check
      _
    $region35: #{tpu_custom_call.1} parent=1 // pred_check_branch
      %116 = sbr.rel (0) target = $region37
    $region36: #{tpu_custom_call.1} parent=1 // pred_region
      %s118 = ssub.s32 16, 16
      %119 = vsyncadd [#allocation15], %s118
      %s121 = sshll.u32 [#allocation16], 4
      %s122 = int_to_ptr.vmem [resolvable:$true] %s121
      %124 = dma.hbm_to_vmem [thread:$0]  %s8, 16, %s122, [#allocation15]
    $region37: #{tpu_custom_call.1} parent=1 // pred_fallthru
      _
    // Predicated region
    $region38: #{tpu_custom_call.1} parent=1 // pred_check
      _
    $region39: #{tpu_custom_call.1} parent=1 // pred_check_branch
      %126 = sbr.rel (0) target = $region41
    $region40: #{tpu_custom_call.1} parent=1 // pred_region
      %s128 = ssub.s32 512, 512
      %129 = vsyncadd [#allocation18], %s128
      %s130 = sshll.u32 [#allocation17], 4
      %s131 = int_to_ptr.vmem [resolvable:$true] %s130
      %136 = dma.hbm_to_vmem [thread:$0]  %s9, 512, %s131, [#allocation18], 64, 64, 4
    $region41: #{tpu_custom_call.1} parent=1 // pred_fallthru
      _
    // Predicated region
    $region42: #{tpu_custom_call.1} parent=1 // pred_check
      _
    $region43: #{tpu_custom_call.1} parent=1 // pred_check_branch
      %138 = sbr.rel (0) target = $region45
    $region44: #{tpu_custom_call.1} parent=1 // pred_region
      %s140 = ssub.s32 16, 16
      %141 = vsyncadd [#allocation18], %s140
      %s143 = sshll.u32 [#allocation19], 4
      %s144 = int_to_ptr.vmem [resolvable:$true] %s143
      %146 = dma.hbm_to_vmem [thread:$0]  %s10, 16, %s144, [#allocation18]
    $region45: #{tpu_custom_call.1} parent=1 // pred_fallthru
      _
    // Predicated region
    $region46: #{tpu_custom_call.1} parent=1 // pred_check
      _
    $region47: #{tpu_custom_call.1} parent=1 // pred_check_branch
      %148 = sbr.rel (0) target = $region49
    $region48: #{tpu_custom_call.1} parent=1 // pred_region
      %149 = dma.done [#allocation3], 2048
    $region49: #{tpu_custom_call.1} parent=1 // pred_fallthru
      _
    // Predicated region
    $region50: #{tpu_custom_call.1} parent=1 // pred_check
      _
    $region51: #{tpu_custom_call.1} parent=1 // pred_check_branch
      %151 = sbr.rel (0) target = $region53
    $region52: #{tpu_custom_call.1} parent=1 // pred_region
      %152 = dma.done [#allocation6], 2048
    $region53: #{tpu_custom_call.1} parent=1 // pred_fallthru
      _
    // Predicated region
    $region54: #{tpu_custom_call.1} parent=1 // pred_check
      _
    $region55: #{tpu_custom_call.1} parent=1 // pred_check_branch
      %154 = sbr.rel (0) target = $region57
    $region56: #{tpu_custom_call.1} parent=1 // pred_region
      %155 = dma.done [#allocation6], 16
    $region57: #{tpu_custom_call.1} parent=1 // pred_fallthru
      _
    // Predicated region
    $region58: #{tpu_custom_call.1} parent=1 // pred_check
      _
    $region59: #{tpu_custom_call.1} parent=1 // pred_check_branch
      %157 = sbr.rel (0) target = $region61
    $region60: #{tpu_custom_call.1} parent=1 // pred_region
      %158 = dma.done [#allocation9], 2048
    $region61: #{tpu_custom_call.1} parent=1 // pred_fallthru
      _
    // Predicated region
    $region62: #{tpu_custom_call.1} parent=1 // pred_check
      _
    $region63: #{tpu_custom_call.1} parent=1 // pred_check_branch
      %160 = sbr.rel (0) target = $region65
    $region64: #{tpu_custom_call.1} parent=1 // pred_region
      %161 = dma.done [#allocation9], 4096
    $region65: #{tpu_custom_call.1} parent=1 // pred_fallthru
      _
    // Predicated region
    $region66: #{tpu_custom_call.1} parent=1 // pred_check
      _
    $region67: #{tpu_custom_call.1} parent=1 // pred_check_branch
      %163 = sbr.rel (0) target = $region69
    $region68: #{tpu_custom_call.1} parent=1 // pred_region
      %164 = dma.done [#allocation12], 16
    $region69: #{tpu_custom_call.1} parent=1 // pred_fallthru
      _
    // Predicated region
    $region70: #{tpu_custom_call.1} parent=1 // pred_check
      _
    $region71: #{tpu_custom_call.1} parent=1 // pred_check_branch
      %166 = sbr.rel (0) target = $region73
    $region72: #{tpu_custom_call.1} parent=1 // pred_region
      %167 = dma.done [#allocation12], 144
    $region73: #{tpu_custom_call.1} parent=1 // pred_fallthru
      _
    // Predicated region
    $region74: #{tpu_custom_call.1} parent=1 // pred_check
      _
    $region75: #{tpu_custom_call.1} parent=1 // pred_check_branch
      %169 = sbr.rel (0) target = $region77
    $region76: #{tpu_custom_call.1} parent=1 // pred_region
      %170 = dma.done [#allocation15], 4608
    $region77: #{tpu_custom_call.1} parent=1 // pred_fallthru
      _
    // Predicated region
    $region78: #{tpu_custom_call.1} parent=1 // pred_check
      _
    $region79: #{tpu_custom_call.1} parent=1 // pred_check_branch
      %172 = sbr.rel (0) target = $region81
    $region80: #{tpu_custom_call.1} parent=1 // pred_region
      %173 = dma.done [#allocation15], 16
    $region81: #{tpu_custom_call.1} parent=1 // pred_fallthru
      _
    // Predicated region
    $region82: #{tpu_custom_call.1} parent=1 // pred_check
      _
    $region83: #{tpu_custom_call.1} parent=1 // pred_check_branch
      %175 = sbr.rel (0) target = $region85
    $region84: #{tpu_custom_call.1} parent=1 // pred_region
      %176 = dma.done [#allocation18], 512
    $region85: #{tpu_custom_call.1} parent=1 // pred_fallthru
      _
    // Predicated region
    $region86: #{tpu_custom_call.1} parent=1 // pred_check
      _
    $region87: #{tpu_custom_call.1} parent=1 // pred_check_branch
      %178 = sbr.rel (0) target = $region89
    $region88: #{tpu_custom_call.1} parent=1 // pred_region
      %179 = dma.done [#allocation18], 16
    $region89: #{tpu_custom_call.1} parent=1 // pred_fallthru
      _
    %v181 = vld [vmem:[#allocation2] sm:$0xff]
    %v182 = vld [vmem:[#allocation2 + $0x8] sm:$0xff]
    %v183 = vld [vmem:[#allocation2 + $0x10] sm:$0xff]
    %v184 = vld [vmem:[#allocation2 + $0x18] sm:$0xff]
    %v185 = vld [vmem:[#allocation2 + $0x20] sm:$0xff]
    %v186 = vld [vmem:[#allocation2 + $0x28] sm:$0xff]
    %v187 = vld [vmem:[#allocation2 + $0x30] sm:$0xff]
    %v188 = vld [vmem:[#allocation2 + $0x38] sm:$0xff]
    %v189 = vld [vmem:[#allocation2 + $0x40] sm:$0xff]
    %v190 = vld [vmem:[#allocation2 + $0x48] sm:$0xff]
    %v191 = vld [vmem:[#allocation2 + $0x50] sm:$0xff]
    %v192 = vld [vmem:[#allocation2 + $0x58] sm:$0xff]
    %v193 = vld [vmem:[#allocation2 + $0x60] sm:$0xff]
    %v194 = vld [vmem:[#allocation2 + $0x68] sm:$0xff]
    %v195 = vld [vmem:[#allocation2 + $0x70] sm:$0xff]
    %v196 = vld [vmem:[#allocation2 + $0x78] sm:$0xff]
    %v197 = vld [vmem:[#allocation5] sm:$0xf]
    %v198 = vld [vmem:[#allocation5 + $0x4] sm:$0xf]
    %v199 = vld [vmem:[#allocation5 + $0x8] sm:$0xf]
    %v200 = vld [vmem:[#allocation5 + $0xc] sm:$0xf]
    %v201 = vld [vmem:[#allocation5 + $0x10] sm:$0xf]
    %v202 = vld [vmem:[#allocation5 + $0x14] sm:$0xf]
    %v203 = vld [vmem:[#allocation5 + $0x18] sm:$0xf]
    %v204 = vld [vmem:[#allocation5 + $0x1c] sm:$0xf]
    %v205 = vld [vmem:[#allocation5 + $0x20] sm:$0xf]
    %v206 = vld [vmem:[#allocation5 + $0x24] sm:$0xf]
    %v207 = vld [vmem:[#allocation5 + $0x28] sm:$0xf]
    %v208 = vld [vmem:[#allocation5 + $0x2c] sm:$0xf]
    %v209 = vld [vmem:[#allocation5 + $0x30] sm:$0xf]
    %v210 = vld [vmem:[#allocation5 + $0x34] sm:$0xf]
    %v211 = vld [vmem:[#allocation5 + $0x38] sm:$0xf]
    %v212 = vld [vmem:[#allocation5 + $0x3c] sm:$0xf]
    %v213 = vld [vmem:[#allocation5 + $0x40] sm:$0xf]
    %v214 = vld [vmem:[#allocation5 + $0x44] sm:$0xf]
    %v215 = vld [vmem:[#allocation5 + $0x48] sm:$0xf]
    %v216 = vld [vmem:[#allocation5 + $0x4c] sm:$0xf]
    %v217 = vld [vmem:[#allocation5 + $0x50] sm:$0xf]
    %v218 = vld [vmem:[#allocation5 + $0x54] sm:$0xf]
    %v219 = vld [vmem:[#allocation5 + $0x58] sm:$0xf]
    %v220 = vld [vmem:[#allocation5 + $0x5c] sm:$0xf]
    %v221 = vld [vmem:[#allocation5 + $0x60] sm:$0xf]
    %v222 = vld [vmem:[#allocation5 + $0x64] sm:$0xf]
    %v223 = vld [vmem:[#allocation5 + $0x68] sm:$0xf]
    %v224 = vld [vmem:[#allocation5 + $0x6c] sm:$0xf]
    %v225 = vld [vmem:[#allocation5 + $0x70] sm:$0xf]
    %v226 = vld [vmem:[#allocation5 + $0x74] sm:$0xf]
    %v227 = vld [vmem:[#allocation5 + $0x78] sm:$0xf]
    %v228 = vld [vmem:[#allocation5 + $0x7c] sm:$0xf]
    %v229 = vld [vmem:[#allocation7] sm:$0x1]
    %v231 = vlaneseq
    %v232 = vshrl.u32 %v231, 7
    %v233 = vsub.s32 0, %v232
    %v234 = vrot.slane %v229, %v233
    %v252 = vunpack.c.l.b16 %v181
    %v253 = vunpack.c.h.b16 %v181
    %v254 = vunpack.c.l.b16 %v182
    %v255 = vunpack.c.h.b16 %v182
    %v256 = vunpack.c.l.b16 %v183
    %v257 = vunpack.c.h.b16 %v183
    %v258 = vunpack.c.l.b16 %v184
    %v259 = vunpack.c.h.b16 %v184
    %v260 = vunpack.c.l.b16 %v185
    %v261 = vunpack.c.h.b16 %v185
    %v262 = vunpack.c.l.b16 %v186
    %v263 = vunpack.c.h.b16 %v186
    %v264 = vunpack.c.l.b16 %v187
    %v265 = vunpack.c.h.b16 %v187
    %v266 = vunpack.c.l.b16 %v188
    %v267 = vunpack.c.h.b16 %v188
    %v268 = vunpack.c.l.b16 %v189
    %v269 = vunpack.c.h.b16 %v189
    %v270 = vunpack.c.l.b16 %v190
    %v271 = vunpack.c.h.b16 %v190
    %v272 = vunpack.c.l.b16 %v191
    %v273 = vunpack.c.h.b16 %v191
    %v274 = vunpack.c.l.b16 %v192
    %v275 = vunpack.c.h.b16 %v192
    %v276 = vunpack.c.l.b16 %v193
    %v277 = vunpack.c.h.b16 %v193
    %v278 = vunpack.c.l.b16 %v194
    %v279 = vunpack.c.h.b16 %v194
    %v280 = vunpack.c.l.b16 %v195
    %v281 = vunpack.c.h.b16 %v195
    %v282 = vunpack.c.l.b16 %v196
    %v283 = vunpack.c.h.b16 %v196
    %v284 = vpack.c.b16 %v254, %v252
    %v285 = vpack.c.b16 %v255, %v253
    %v286 = vpack.c.b16 %v258, %v256
    %v287 = vpack.c.b16 %v259, %v257
    %v288 = vpack.c.b16 %v262, %v260
    %v289 = vpack.c.b16 %v263, %v261
    %v290 = vpack.c.b16 %v266, %v264
    %v291 = vpack.c.b16 %v267, %v265
    %v292 = vpack.c.b16 %v270, %v268
    %v293 = vpack.c.b16 %v271, %v269
    %v294 = vpack.c.b16 %v274, %v272
    %v295 = vpack.c.b16 %v275, %v273
    %v296 = vpack.c.b16 %v278, %v276
    %v297 = vpack.c.b16 %v279, %v277
    %v298 = vpack.c.b16 %v282, %v280
    %v299 = vpack.c.b16 %v283, %v281
    %v348 = vunpack.c.l.b16 %v197
    %v349 = vunpack.c.l.b16 %v198
    %v350 = vunpack.c.l.b16 %v199
    %v351 = vunpack.c.l.b16 %v200
    %v352 = vunpack.c.l.b16 %v201
    %v353 = vunpack.c.l.b16 %v202
    %v354 = vunpack.c.l.b16 %v203
    %v355 = vunpack.c.l.b16 %v204
    %v356 = vunpack.c.l.b16 %v205
    %v357 = vunpack.c.l.b16 %v206
    %v358 = vunpack.c.l.b16 %v207
    %v359 = vunpack.c.l.b16 %v208
    %v360 = vunpack.c.l.b16 %v209
    %v361 = vunpack.c.l.b16 %v210
    %v362 = vunpack.c.l.b16 %v211
    %v363 = vunpack.c.l.b16 %v212
    %v364 = vunpack.c.l.b16 %v213
    %v365 = vunpack.c.l.b16 %v214
    %v366 = vunpack.c.l.b16 %v215
    %v367 = vunpack.c.l.b16 %v216
    %v368 = vunpack.c.l.b16 %v217
    %v369 = vunpack.c.l.b16 %v218
    %v370 = vunpack.c.l.b16 %v219
    %v371 = vunpack.c.l.b16 %v220
    %v372 = vunpack.c.l.b16 %v221
    %v373 = vunpack.c.l.b16 %v222
    %v374 = vunpack.c.l.b16 %v223
    %v375 = vunpack.c.l.b16 %v224
    %v376 = vunpack.c.l.b16 %v225
    %v377 = vunpack.c.l.b16 %v226
    %v378 = vunpack.c.l.b16 %v227
    %v379 = vunpack.c.l.b16 %v228
    %v380 = vpack.c.b16 %v349, %v348
    %v381 = vpack.c.b16 %v351, %v350
    %v382 = vpack.c.b16 %v353, %v352
    %v383 = vpack.c.b16 %v355, %v354
    %v384 = vpack.c.b16 %v357, %v356
    %v385 = vpack.c.b16 %v359, %v358
    %v386 = vpack.c.b16 %v361, %v360
    %v387 = vpack.c.b16 %v363, %v362
    %v388 = vpack.c.b16 %v365, %v364
    %v389 = vpack.c.b16 %v367, %v366
    %v390 = vpack.c.b16 %v369, %v368
    %v391 = vpack.c.b16 %v371, %v370
    %v392 = vpack.c.b16 %v373, %v372
    %v393 = vpack.c.b16 %v375, %v374
    %v394 = vpack.c.b16 %v377, %v376
    %v395 = vpack.c.b16 %v379, %v378
    %412 = vmatprep.subr.bf16.mxu0 0
    %413 = vmatpush1.bf16.msra.mxu0 %v380
    %414 = vmatprep.subr.bf16.mxu0 0
    %415 = vmatpush1.bf16.msra.mxu0 %v381
    %416 = vmatprep.subr.bf16.mxu0 0
    %417 = vmatpush1.bf16.msra.mxu0 %v382
    %418 = vmatprep.subr.bf16.mxu0 0
    %419 = vmatpush1.bf16.msra.mxu0 %v383
    %420 = vmatprep.subr.bf16.mxu0 0
    %421 = vmatpush1.bf16.msra.mxu0 %v384
    %422 = vmatprep.subr.bf16.mxu0 0
    %423 = vmatpush1.bf16.msra.mxu0 %v385
    %424 = vmatprep.subr.bf16.mxu0 0
    %425 = vmatpush1.bf16.msra.mxu0 %v386
    %426 = vmatprep.subr.bf16.mxu0 0
    %427 = vmatpush1.bf16.msra.mxu0 %v387
    %428 = vmatprep.subr.bf16.mxu0 0
    %429 = vmatpush1.bf16.msra.mxu0 %v388
    %430 = vmatprep.subr.bf16.mxu0 0
    %431 = vmatpush1.bf16.msra.mxu0 %v389
    %432 = vmatprep.subr.bf16.mxu0 0
    %433 = vmatpush1.bf16.msra.mxu0 %v390
    %434 = vmatprep.subr.bf16.mxu0 0
    %435 = vmatpush1.bf16.msra.mxu0 %v391
    %436 = vmatprep.subr.bf16.mxu0 0
    %437 = vmatpush1.bf16.msra.mxu0 %v392
    %438 = vmatprep.subr.bf16.mxu0 0
    %439 = vmatpush1.bf16.msra.mxu0 %v393
    %440 = vmatprep.subr.bf16.mxu0 0
    %441 = vmatpush1.bf16.msra.mxu0 %v394
    %442 = vmatprep.subr.bf16.mxu0 0
    %443 = vmatpush1.bf16.msra.mxu0 %v395
    %444 = vmatprep.mubr.bf16.mxu0 %v285
    %445 = vmatmul.mubr.bf16.gmra.mrb[0].mxu0 %v284
    %v446 = vpop.f32.mrb[0].mxu0
    %v447 = vadd.f32 %v234, %v446
    %v448 = vpop.f32.mrb[0].mxu0
    %v449 = vpop.f32.mrb[0].mxu0
    %v450 = vadd.f32 %v234, %v449
    %v451 = vpop.f32.mrb[0].mxu0
    %452 = vmatprep.mubr.bf16.mxu0 %v287
    %453 = vmatmul.mubr.bf16.gmra.mrb[0].mxu0 %v286
    %v454 = vpop.f32.mrb[0].mxu0
    %v455 = vadd.f32 %v234, %v454
    %v456 = vpop.f32.mrb[0].mxu0
    %v457 = vpop.f32.mrb[0].mxu0
    %v458 = vadd.f32 %v234, %v457
    %v459 = vpop.f32.mrb[0].mxu0
    %460 = vmatprep.mubr.bf16.mxu0 %v289
    %461 = vmatmul.mubr.bf16.gmra.mrb[0].mxu0 %v288
    %v462 = vpop.f32.mrb[0].mxu0
    %v463 = vadd.f32 %v234, %v462
    %v464 = vpop.f32.mrb[0].mxu0
    %v465 = vpop.f32.mrb[0].mxu0
    %v466 = vadd.f32 %v234, %v465
    %v467 = vpop.f32.mrb[0].mxu0
    %468 = vmatprep.mubr.bf16.mxu0 %v291
    %469 = vmatmul.mubr.bf16.gmra.mrb[0].mxu0 %v290
    %v470 = vpop.f32.mrb[0].mxu0
    %v471 = vadd.f32 %v234, %v470
    %v472 = vpop.f32.mrb[0].mxu0
    %v473 = vpop.f32.mrb[0].mxu0
    %v474 = vadd.f32 %v234, %v473
    %v475 = vpop.f32.mrb[0].mxu0
    %476 = vmatprep.mubr.bf16.mxu0 %v293
    %477 = vmatmul.mubr.bf16.gmra.mrb[0].mxu0 %v292
    %v478 = vpop.f32.mrb[0].mxu0
    %v479 = vadd.f32 %v234, %v478
    %v480 = vpop.f32.mrb[0].mxu0
    %v481 = vpop.f32.mrb[0].mxu0
    %v482 = vadd.f32 %v234, %v481
    %v483 = vpop.f32.mrb[0].mxu0
    %484 = vmatprep.mubr.bf16.mxu0 %v295
    %485 = vmatmul.mubr.bf16.gmra.mrb[0].mxu0 %v294
    %v486 = vpop.f32.mrb[0].mxu0
    %v487 = vadd.f32 %v234, %v486
    %v488 = vpop.f32.mrb[0].mxu0
    %v489 = vpop.f32.mrb[0].mxu0
    %v490 = vadd.f32 %v234, %v489
    %v491 = vpop.f32.mrb[0].mxu0
    %492 = vmatprep.mubr.bf16.mxu0 %v297
    %493 = vmatmul.mubr.bf16.gmra.mrb[0].mxu0 %v296
    %v494 = vpop.f32.mrb[0].mxu0
    %v495 = vadd.f32 %v234, %v494
    %v496 = vpop.f32.mrb[0].mxu0
    %v497 = vpop.f32.mrb[0].mxu0
    %v498 = vadd.f32 %v234, %v497
    %v499 = vpop.f32.mrb[0].mxu0
    %500 = vmatprep.mubr.bf16.mxu0 %v299
    %501 = vmatmul.mubr.bf16.gmra.mrb[0].mxu0 %v298
    %v502 = vpop.f32.mrb[0].mxu0
    %v503 = vadd.f32 %v234, %v502
    %v504 = vpop.f32.mrb[0].mxu0
    %v505 = vpop.f32.mrb[0].mxu0
    %v506 = vadd.f32 %v234, %v505
    %v507 = vpop.f32.mrb[0].mxu0
    %508 = vdwg.mxu0
    %v509 = vmax.f32 %v447, 0.0
    %v510 = vmax.f32 %v450, 0.0
    %v511 = vmax.f32 %v455, 0.0
    %v512 = vmax.f32 %v458, 0.0
    %v513 = vmax.f32 %v463, 0.0
    %v514 = vmax.f32 %v466, 0.0
    %v515 = vmax.f32 %v471, 0.0
    %v516 = vmax.f32 %v474, 0.0
    %v517 = vmax.f32 %v479, 0.0
    %v518 = vmax.f32 %v482, 0.0
    %v519 = vmax.f32 %v487, 0.0
    %v520 = vmax.f32 %v490, 0.0
    %v521 = vmax.f32 %v495, 0.0
    %v522 = vmax.f32 %v498, 0.0
    %v523 = vmax.f32 %v503, 0.0
    %v524 = vmax.f32 %v506, 0.0
    %v525 = vpack.c.bf16 %v510, %v509
    %v526 = vpack.c.bf16 %v512, %v511
    %v527 = vpack.c.bf16 %v514, %v513
    %v528 = vpack.c.bf16 %v516, %v515
    %v529 = vpack.c.bf16 %v518, %v517
    %v530 = vpack.c.bf16 %v520, %v519
    %v531 = vpack.c.bf16 %v522, %v521
    %v532 = vpack.c.bf16 %v524, %v523
    %v533 = vld [vmem:[#allocation8] sm:$0xf]
    %v534 = vld [vmem:[#allocation8 + $0x4] sm:$0x1]
    %v537 = vunpack.c.l.b16 %v533
    %v538 = vunpack.c.l.b16 %v534
    %v539 = vpack.c.b16 %v538, %v537
    %vm540 = vcmask 523264
    %v542 = vsel %vm540, %v539, 0
    %544 = vmatprep.subr.bf16.mxu0 0
    %545 = vmatpush1.bf16.msra.mxu0 %v525
    %546 = vmatprep.subr.bf16.mxu0 0
    %547 = vmatpush1.bf16.msra.mxu0 %v526
    %548 = vmatprep.subr.bf16.mxu0 0
    %549 = vmatpush1.bf16.msra.mxu0 %v527
    %550 = vmatprep.subr.bf16.mxu0 0
    %551 = vmatpush1.bf16.msra.mxu0 %v528
    %552 = vmatprep.subr.bf16.mxu0 0
    %553 = vmatpush1.bf16.msra.mxu0 0
    %554 = vmatprep.subr.bf16.mxu0 0
    %555 = vmatpush1.bf16.msra.mxu0 0
    %556 = vmatprep.subr.bf16.mxu0 0
    %557 = vmatpush1.bf16.msra.mxu0 0
    %558 = vmatprep.subr.bf16.mxu0 0
    %559 = vmatpush1.bf16.msra.mxu0 0
    %560 = vmatprep.subr.bf16.mxu0 0
    %561 = vmatpush1.bf16.msra.mxu0 0
    %562 = vmatprep.subr.bf16.mxu0 0
    %563 = vmatpush1.bf16.msra.mxu0 0
    %564 = vmatprep.subr.bf16.mxu0 0
    %565 = vmatpush1.bf16.msra.mxu0 0
    %566 = vmatprep.subr.bf16.mxu0 0
    %567 = vmatpush1.bf16.msra.mxu0 0
    %568 = vmatprep.subr.bf16.mxu0 0
    %569 = vmatpush1.bf16.msra.mxu0 0
    %570 = vmatprep.subr.bf16.mxu0 0
    %571 = vmatpush1.bf16.msra.mxu0 0
    %572 = vmatprep.subr.bf16.mxu0 0
    %573 = vmatpush1.bf16.msra.mxu0 0
    %574 = vmatprep.subr.bf16.mxu0 0
    %575 = vmatpush1.bf16.msra.mxu0 0
    %576 = vmatprep.mubr.bf16.mxu0 0
    %577 = vmatmul.mubr.bf16.gmra.mrb[0].mxu0 %v542
    %v578 = vpop.f32.mrb[0].mxu0
    %v579 = vadd.f32 0.0, %v578
    %v580 = vpop.f32.mrb[0].mxu0
    %v581 = vpop.f32.mrb[0].mxu0
    %v582 = vadd.f32 0.0, %v581
    %v583 = vpop.f32.mrb[0].mxu0
    %584 = vdwg.mxu0
    %v585 = vpack.c.bf16 %v582, %v579
    %s586 = scalar_lea.vmem [#allocation8], 8
    %v587 = vld [vmem:[%s586] sm:$0xf]
    %v588 = vld [vmem:[%s586 + $0x4] sm:$0x1]
    %v591 = vunpack.c.l.b16 %v587
    %v592 = vunpack.c.l.b16 %v588
    %v593 = vpack.c.b16 %v592, %v591
    %v595 = vsel %vm540, %v593, 0
    %597 = vmatprep.subr.bf16.mxu0 0
    %598 = vmatpush1.bf16.msra.mxu0 %v525
    %599 = vmatprep.subr.bf16.mxu0 0
    %600 = vmatpush1.bf16.msra.mxu0 %v526
    %601 = vmatprep.subr.bf16.mxu0 0
    %602 = vmatpush1.bf16.msra.mxu0 %v527
    %603 = vmatprep.subr.bf16.mxu0 0
    %604 = vmatpush1.bf16.msra.mxu0 %v528
    %605 = vmatprep.subr.bf16.mxu0 0
    %606 = vmatpush1.bf16.msra.mxu0 0
    %607 = vmatprep.subr.bf16.mxu0 0
    %608 = vmatpush1.bf16.msra.mxu0 0
    %609 = vmatprep.subr.bf16.mxu0 0
    %610 = vmatpush1.bf16.msra.mxu0 0
    %611 = vmatprep.subr.bf16.mxu0 0
    %612 = vmatpush1.bf16.msra.mxu0 0
    %613 = vmatprep.subr.bf16.mxu0 0
    %614 = vmatpush1.bf16.msra.mxu0 0
    %615 = vmatprep.subr.bf16.mxu0 0
    %616 = vmatpush1.bf16.msra.mxu0 0
    %617 = vmatprep.subr.bf16.mxu0 0
    %618 = vmatpush1.bf16.msra.mxu0 0
    %619 = vmatprep.subr.bf16.mxu0 0
    %620 = vmatpush1.bf16.msra.mxu0 0
    %621 = vmatprep.subr.bf16.mxu0 0
    %622 = vmatpush1.bf16.msra.mxu0 0
    %623 = vmatprep.subr.bf16.mxu0 0
    %624 = vmatpush1.bf16.msra.mxu0 0
    %625 = vmatprep.subr.bf16.mxu0 0
    %626 = vmatpush1.bf16.msra.mxu0 0
    %627 = vmatprep.subr.bf16.mxu0 0
    %628 = vmatpush1.bf16.msra.mxu0 0
    %629 = vmatprep.mubr.bf16.mxu0 0
    %630 = vmatmul.mubr.bf16.gmra.mrb[0].mxu0 %v595
    %v631 = vpop.f32.mrb[0].mxu0
    %v632 = vadd.f32 0.0, %v631
    %v633 = vpop.f32.mrb[0].mxu0
    %v634 = vpop.f32.mrb[0].mxu0
    %v635 = vadd.f32 0.0, %v634
    %v636 = vpop.f32.mrb[0].mxu0
    %637 = vdwg.mxu0
    %v638 = vpack.c.bf16 %v635, %v632
    %s639 = scalar_lea.vmem [#allocation8], 16
    %v640 = vld [vmem:[%s639] sm:$0xf]
    %v641 = vld [vmem:[%s639 + $0x4] sm:$0x1]
    %v644 = vunpack.c.l.b16 %v640
    %v645 = vunpack.c.l.b16 %v641
    %v646 = vpack.c.b16 %v645, %v644
    %v648 = vsel %vm540, %v646, 0
    %650 = vmatprep.subr.bf16.mxu0 0
    %651 = vmatpush1.bf16.msra.mxu0 %v525
    %652 = vmatprep.subr.bf16.mxu0 0
    %653 = vmatpush1.bf16.msra.mxu0 %v526
    %654 = vmatprep.subr.bf16.mxu0 0
    %655 = vmatpush1.bf16.msra.mxu0 %v527
    %656 = vmatprep.subr.bf16.mxu0 0
    %657 = vmatpush1.bf16.msra.mxu0 %v528
    %658 = vmatprep.subr.bf16.mxu0 0
    %659 = vmatpush1.bf16.msra.mxu0 0
    %660 = vmatprep.subr.bf16.mxu0 0
    %661 = vmatpush1.bf16.msra.mxu0 0
    %662 = vmatprep.subr.bf16.mxu0 0
    %663 = vmatpush1.bf16.msra.mxu0 0
    %664 = vmatprep.subr.bf16.mxu0 0
    %665 = vmatpush1.bf16.msra.mxu0 0
    %666 = vmatprep.subr.bf16.mxu0 0
    %667 = vmatpush1.bf16.msra.mxu0 0
    %668 = vmatprep.subr.bf16.mxu0 0
    %669 = vmatpush1.bf16.msra.mxu0 0
    %670 = vmatprep.subr.bf16.mxu0 0
    %671 = vmatpush1.bf16.msra.mxu0 0
    %672 = vmatprep.subr.bf16.mxu0 0
    %673 = vmatpush1.bf16.msra.mxu0 0
    %674 = vmatprep.subr.bf16.mxu0 0
    %675 = vmatpush1.bf16.msra.mxu0 0
    %676 = vmatprep.subr.bf16.mxu0 0
    %677 = vmatpush1.bf16.msra.mxu0 0
    %678 = vmatprep.subr.bf16.mxu0 0
    %679 = vmatpush1.bf16.msra.mxu0 0
    %680 = vmatprep.subr.bf16.mxu0 0
    %681 = vmatpush1.bf16.msra.mxu0 0
    %682 = vmatprep.mubr.bf16.mxu0 0
    %683 = vmatmul.mubr.bf16.gmra.mrb[0].mxu0 %v648
    %v684 = vpop.f32.mrb[0].mxu0
    %v685 = vadd.f32 0.0, %v684
    %v686 = vpop.f32.mrb[0].mxu0
    %v687 = vpop.f32.mrb[0].mxu0
    %v688 = vadd.f32 0.0, %v687
    %v689 = vpop.f32.mrb[0].mxu0
    %690 = vdwg.mxu0
    %v691 = vpack.c.bf16 %v688, %v685
    %s692 = scalar_lea.vmem [#allocation8], 24
    %v693 = vld [vmem:[%s692] sm:$0xf]
    %v694 = vld [vmem:[%s692 + $0x4] sm:$0x1]
    %v697 = vunpack.c.l.b16 %v693
    %v698 = vunpack.c.l.b16 %v694
    %v699 = vpack.c.b16 %v698, %v697
    %v701 = vsel %vm540, %v699, 0
    %703 = vmatprep.subr.bf16.mxu0 0
    %704 = vmatpush1.bf16.msra.mxu0 %v525
    %705 = vmatprep.subr.bf16.mxu0 0
    %706 = vmatpush1.bf16.msra.mxu0 %v526
    %707 = vmatprep.subr.bf16.mxu0 0
    %708 = vmatpush1.bf16.msra.mxu0 %v527
    %709 = vmatprep.subr.bf16.mxu0 0
    %710 = vmatpush1.bf16.msra.mxu0 %v528
    %711 = vmatprep.subr.bf16.mxu0 0
    %712 = vmatpush1.bf16.msra.mxu0 0
    %713 = vmatprep.subr.bf16.mxu0 0
    %714 = vmatpush1.bf16.msra.mxu0 0
    %715 = vmatprep.subr.bf16.mxu0 0
    %716 = vmatpush1.bf16.msra.mxu0 0
    %717 = vmatprep.subr.bf16.mxu0 0
    %718 = vmatpush1.bf16.msra.mxu0 0
    %719 = vmatprep.subr.bf16.mxu0 0
    %720 = vmatpush1.bf16.msra.mxu0 0
    %721 = vmatprep.subr.bf16.mxu0 0
    %722 = vmatpush1.bf16.msra.mxu0 0
    %723 = vmatprep.subr.bf16.mxu0 0
    %724 = vmatpush1.bf16.msra.mxu0 0
    %725 = vmatprep.subr.bf16.mxu0 0
    %726 = vmatpush1.bf16.msra.mxu0 0
    %727 = vmatprep.subr.bf16.mxu0 0
    %728 = vmatpush1.bf16.msra.mxu0 0
    %729 = vmatprep.subr.bf16.mxu0 0
    %730 = vmatpush1.bf16.msra.mxu0 0
    %731 = vmatprep.subr.bf16.mxu0 0
    %732 = vmatpush1.bf16.msra.mxu0 0
    %733 = vmatprep.subr.bf16.mxu0 0
    %734 = vmatpush1.bf16.msra.mxu0 0
    %735 = vmatprep.mubr.bf16.mxu0 0
    %736 = vmatmul.mubr.bf16.gmra.mrb[0].mxu0 %v701
    %v737 = vpop.f32.mrb[0].mxu0
    %v738 = vadd.f32 0.0, %v737
    %v739 = vpop.f32.mrb[0].mxu0
    %v740 = vpop.f32.mrb[0].mxu0
    %v741 = vadd.f32 0.0, %v740
    %v742 = vpop.f32.mrb[0].mxu0
    %743 = vdwg.mxu0
    %v744 = vpack.c.bf16 %v741, %v738
    %s745 = scalar_lea.vmem [#allocation8], 32
    %v746 = vld [vmem:[%s745] sm:$0xf]
    %v747 = vld [vmem:[%s745 + $0x4] sm:$0x1]
    %v750 = vunpack.c.l.b16 %v746
    %v751 = vunpack.c.l.b16 %v747
    %v752 = vpack.c.b16 %v751, %v750
    %v754 = vsel %vm540, %v752, 0
    %756 = vmatprep.subr.bf16.mxu0 0
    %757 = vmatpush1.bf16.msra.mxu0 %v525
    %758 = vmatprep.subr.bf16.mxu0 0
    %759 = vmatpush1.bf16.msra.mxu0 %v526
    %760 = vmatprep.subr.bf16.mxu0 0
    %761 = vmatpush1.bf16.msra.mxu0 %v527
    %762 = vmatprep.subr.bf16.mxu0 0
    %763 = vmatpush1.bf16.msra.mxu0 %v528
    %764 = vmatprep.subr.bf16.mxu0 0
    %765 = vmatpush1.bf16.msra.mxu0 0
    %766 = vmatprep.subr.bf16.mxu0 0
    %767 = vmatpush1.bf16.msra.mxu0 0
    %768 = vmatprep.subr.bf16.mxu0 0
    %769 = vmatpush1.bf16.msra.mxu0 0
    %770 = vmatprep.subr.bf16.mxu0 0
    %771 = vmatpush1.bf16.msra.mxu0 0
    %772 = vmatprep.subr.bf16.mxu0 0
    %773 = vmatpush1.bf16.msra.mxu0 0
    %774 = vmatprep.subr.bf16.mxu0 0
    %775 = vmatpush1.bf16.msra.mxu0 0
    %776 = vmatprep.subr.bf16.mxu0 0
    %777 = vmatpush1.bf16.msra.mxu0 0
    %778 = vmatprep.subr.bf16.mxu0 0
    %779 = vmatpush1.bf16.msra.mxu0 0
    %780 = vmatprep.subr.bf16.mxu0 0
    %781 = vmatpush1.bf16.msra.mxu0 0
    %782 = vmatprep.subr.bf16.mxu0 0
    %783 = vmatpush1.bf16.msra.mxu0 0
    %784 = vmatprep.subr.bf16.mxu0 0
    %785 = vmatpush1.bf16.msra.mxu0 0
    %786 = vmatprep.subr.bf16.mxu0 0
    %787 = vmatpush1.bf16.msra.mxu0 0
    %788 = vmatprep.mubr.bf16.mxu0 0
    %789 = vmatmul.mubr.bf16.gmra.mrb[0].mxu0 %v754
    %v790 = vpop.f32.mrb[0].mxu0
    %v791 = vadd.f32 0.0, %v790
    %v792 = vpop.f32.mrb[0].mxu0
    %v793 = vpop.f32.mrb[0].mxu0
    %v794 = vadd.f32 0.0, %v793
    %v795 = vpop.f32.mrb[0].mxu0
    %796 = vdwg.mxu0
    %v797 = vpack.c.bf16 %v794, %v791
    %s798 = scalar_lea.vmem [#allocation8], 40
    %v799 = vld [vmem:[%s798] sm:$0xf]
    %v800 = vld [vmem:[%s798 + $0x4] sm:$0x1]
    %v803 = vunpack.c.l.b16 %v799
    %v804 = vunpack.c.l.b16 %v800
    %v805 = vpack.c.b16 %v804, %v803
    %v807 = vsel %vm540, %v805, 0
    %809 = vmatprep.subr.bf16.mxu0 0
    %810 = vmatpush1.bf16.msra.mxu0 %v525
    %811 = vmatprep.subr.bf16.mxu0 0
    %812 = vmatpush1.bf16.msra.mxu0 %v526
    %813 = vmatprep.subr.bf16.mxu0 0
    %814 = vmatpush1.bf16.msra.mxu0 %v527
    %815 = vmatprep.subr.bf16.mxu0 0
    %816 = vmatpush1.bf16.msra.mxu0 %v528
    %817 = vmatprep.subr.bf16.mxu0 0
    %818 = vmatpush1.bf16.msra.mxu0 0
    %819 = vmatprep.subr.bf16.mxu0 0
    %820 = vmatpush1.bf16.msra.mxu0 0
    %821 = vmatprep.subr.bf16.mxu0 0
    %822 = vmatpush1.bf16.msra.mxu0 0
    %823 = vmatprep.subr.bf16.mxu0 0
    %824 = vmatpush1.bf16.msra.mxu0 0
    %825 = vmatprep.subr.bf16.mxu0 0
    %826 = vmatpush1.bf16.msra.mxu0 0
    %827 = vmatprep.subr.bf16.mxu0 0
    %828 = vmatpush1.bf16.msra.mxu0 0
    %829 = vmatprep.subr.bf16.mxu0 0
    %830 = vmatpush1.bf16.msra.mxu0 0
    %831 = vmatprep.subr.bf16.mxu0 0
    %832 = vmatpush1.bf16.msra.mxu0 0
    %833 = vmatprep.subr.bf16.mxu0 0
    %834 = vmatpush1.bf16.msra.mxu0 0
    %835 = vmatprep.subr.bf16.mxu0 0
    %836 = vmatpush1.bf16.msra.mxu0 0
    %837 = vmatprep.subr.bf16.mxu0 0
    %838 = vmatpush1.bf16.msra.mxu0 0
    %839 = vmatprep.subr.bf16.mxu0 0
    %840 = vmatpush1.bf16.msra.mxu0 0
    %841 = vmatprep.mubr.bf16.mxu0 0
    %842 = vmatmul.mubr.bf16.gmra.mrb[0].mxu0 %v807
    %v843 = vpop.f32.mrb[0].mxu0
    %v844 = vadd.f32 0.0, %v843
    %v845 = vpop.f32.mrb[0].mxu0
    %v846 = vpop.f32.mrb[0].mxu0
    %v847 = vadd.f32 0.0, %v846
    %v848 = vpop.f32.mrb[0].mxu0
    %849 = vdwg.mxu0
    %v850 = vpack.c.bf16 %v847, %v844
    %s851 = scalar_lea.vmem [#allocation8], 48
    %v852 = vld [vmem:[%s851] sm:$0xf]
    %v853 = vld [vmem:[%s851 + $0x4] sm:$0x1]
    %v856 = vunpack.c.l.b16 %v852
    %v857 = vunpack.c.l.b16 %v853
    %v858 = vpack.c.b16 %v857, %v856
    %v860 = vsel %vm540, %v858, 0
    %862 = vmatprep.subr.bf16.mxu0 0
    %863 = vmatpush1.bf16.msra.mxu0 %v525
    %864 = vmatprep.subr.bf16.mxu0 0
    %865 = vmatpush1.bf16.msra.mxu0 %v526
    %866 = vmatprep.subr.bf16.mxu0 0
    %867 = vmatpush1.bf16.msra.mxu0 %v527
    %868 = vmatprep.subr.bf16.mxu0 0
    %869 = vmatpush1.bf16.msra.mxu0 %v528
    %870 = vmatprep.subr.bf16.mxu0 0
    %871 = vmatpush1.bf16.msra.mxu0 0
    %872 = vmatprep.subr.bf16.mxu0 0
    %873 = vmatpush1.bf16.msra.mxu0 0
    %874 = vmatprep.subr.bf16.mxu0 0
    %875 = vmatpush1.bf16.msra.mxu0 0
    %876 = vmatprep.subr.bf16.mxu0 0
    %877 = vmatpush1.bf16.msra.mxu0 0
    %878 = vmatprep.subr.bf16.mxu0 0
    %879 = vmatpush1.bf16.msra.mxu0 0
    %880 = vmatprep.subr.bf16.mxu0 0
    %881 = vmatpush1.bf16.msra.mxu0 0
    %882 = vmatprep.subr.bf16.mxu0 0
    %883 = vmatpush1.bf16.msra.mxu0 0
    %884 = vmatprep.subr.bf16.mxu0 0
    %885 = vmatpush1.bf16.msra.mxu0 0
    %886 = vmatprep.subr.bf16.mxu0 0
    %887 = vmatpush1.bf16.msra.mxu0 0
    %888 = vmatprep.subr.bf16.mxu0 0
    %889 = vmatpush1.bf16.msra.mxu0 0
    %890 = vmatprep.subr.bf16.mxu0 0
    %891 = vmatpush1.bf16.msra.mxu0 0
    %892 = vmatprep.subr.bf16.mxu0 0
    %893 = vmatpush1.bf16.msra.mxu0 0
    %894 = vmatprep.mubr.bf16.mxu0 0
    %895 = vmatmul.mubr.bf16.gmra.mrb[0].mxu0 %v860
    %v896 = vpop.f32.mrb[0].mxu0
    %v897 = vadd.f32 0.0, %v896
    %v898 = vpop.f32.mrb[0].mxu0
    %v899 = vpop.f32.mrb[0].mxu0
    %v900 = vadd.f32 0.0, %v899
    %v901 = vpop.f32.mrb[0].mxu0
    %902 = vdwg.mxu0
    %v903 = vpack.c.bf16 %v900, %v897
    %s904 = scalar_lea.vmem [#allocation8], 56
    %v905 = vld [vmem:[%s904] sm:$0xf]
    %v906 = vld [vmem:[%s904 + $0x4] sm:$0x1]
    %v909 = vunpack.c.l.b16 %v905
    %v910 = vunpack.c.l.b16 %v906
    %v911 = vpack.c.b16 %v910, %v909
    %v913 = vsel %vm540, %v911, 0
    %915 = vmatprep.subr.bf16.mxu0 0
    %916 = vmatpush1.bf16.msra.mxu0 %v525
    %917 = vmatprep.subr.bf16.mxu0 0
    %918 = vmatpush1.bf16.msra.mxu0 %v526
    %919 = vmatprep.subr.bf16.mxu0 0
    %920 = vmatpush1.bf16.msra.mxu0 %v527
    %921 = vmatprep.subr.bf16.mxu0 0
    %922 = vmatpush1.bf16.msra.mxu0 %v528
    %923 = vmatprep.subr.bf16.mxu0 0
    %924 = vmatpush1.bf16.msra.mxu0 0
    %925 = vmatprep.subr.bf16.mxu0 0
    %926 = vmatpush1.bf16.msra.mxu0 0
    %927 = vmatprep.subr.bf16.mxu0 0
    %928 = vmatpush1.bf16.msra.mxu0 0
    %929 = vmatprep.subr.bf16.mxu0 0
    %930 = vmatpush1.bf16.msra.mxu0 0
    %931 = vmatprep.subr.bf16.mxu0 0
    %932 = vmatpush1.bf16.msra.mxu0 0
    %933 = vmatprep.subr.bf16.mxu0 0
    %934 = vmatpush1.bf16.msra.mxu0 0
    %935 = vmatprep.subr.bf16.mxu0 0
    %936 = vmatpush1.bf16.msra.mxu0 0
    %937 = vmatprep.subr.bf16.mxu0 0
    %938 = vmatpush1.bf16.msra.mxu0 0
    %939 = vmatprep.subr.bf16.mxu0 0
    %940 = vmatpush1.bf16.msra.mxu0 0
    %941 = vmatprep.subr.bf16.mxu0 0
    %942 = vmatpush1.bf16.msra.mxu0 0
    %943 = vmatprep.subr.bf16.mxu0 0
    %944 = vmatpush1.bf16.msra.mxu0 0
    %945 = vmatprep.subr.bf16.mxu0 0
    %946 = vmatpush1.bf16.msra.mxu0 0
    %947 = vmatprep.mubr.bf16.mxu0 0
    %948 = vmatmul.mubr.bf16.gmra.mrb[0].mxu0 %v913
    %v949 = vpop.f32.mrb[0].mxu0
    %v950 = vadd.f32 0.0, %v949
    %v951 = vpop.f32.mrb[0].mxu0
    %v952 = vpop.f32.mrb[0].mxu0
    %v953 = vadd.f32 0.0, %v952
    %v954 = vpop.f32.mrb[0].mxu0
    %955 = vdwg.mxu0
    %v956 = vpack.c.bf16 %v953, %v950
    %s957 = scalar_lea.vmem [#allocation8], 64
    %v958 = vld [vmem:[%s957] sm:$0xf]
    %v959 = vld [vmem:[%s957 + $0x4] sm:$0x1]
    %v962 = vunpack.c.l.b16 %v958
    %v963 = vunpack.c.l.b16 %v959
    %v964 = vpack.c.b16 %v963, %v962
    %v966 = vsel %vm540, %v964, 0
    %968 = vmatprep.subr.bf16.mxu0 0
    %969 = vmatpush1.bf16.msra.mxu0 %v525
    %970 = vmatprep.subr.bf16.mxu0 0
    %971 = vmatpush1.bf16.msra.mxu0 %v526
    %972 = vmatprep.subr.bf16.mxu0 0
    %973 = vmatpush1.bf16.msra.mxu0 %v527
    %974 = vmatprep.subr.bf16.mxu0 0
    %975 = vmatpush1.bf16.msra.mxu0 %v528
    %976 = vmatprep.subr.bf16.mxu0 0
    %977 = vmatpush1.bf16.msra.mxu0 0
    %978 = vmatprep.subr.bf16.mxu0 0
    %979 = vmatpush1.bf16.msra.mxu0 0
    %980 = vmatprep.subr.bf16.mxu0 0
    %981 = vmatpush1.bf16.msra.mxu0 0
    %982 = vmatprep.subr.bf16.mxu0 0
    %983 = vmatpush1.bf16.msra.mxu0 0
    %984 = vmatprep.subr.bf16.mxu0 0
    %985 = vmatpush1.bf16.msra.mxu0 0
    %986 = vmatprep.subr.bf16.mxu0 0
    %987 = vmatpush1.bf16.msra.mxu0 0
    %988 = vmatprep.subr.bf16.mxu0 0
    %989 = vmatpush1.bf16.msra.mxu0 0
    %990 = vmatprep.subr.bf16.mxu0 0
    %991 = vmatpush1.bf16.msra.mxu0 0
    %992 = vmatprep.subr.bf16.mxu0 0
    %993 = vmatpush1.bf16.msra.mxu0 0
    %994 = vmatprep.subr.bf16.mxu0 0
    %995 = vmatpush1.bf16.msra.mxu0 0
    %996 = vmatprep.subr.bf16.mxu0 0
    %997 = vmatpush1.bf16.msra.mxu0 0
    %998 = vmatprep.subr.bf16.mxu0 0
    %999 = vmatpush1.bf16.msra.mxu0 0
    %1000 = vmatprep.mubr.bf16.mxu0 0
    %1001 = vmatmul.mubr.bf16.gmra.mrb[0].mxu0 %v966
    %v1002 = vpop.f32.mrb[0].mxu0
    %v1003 = vadd.f32 0.0, %v1002
    %v1004 = vpop.f32.mrb[0].mxu0
    %v1005 = vpop.f32.mrb[0].mxu0
    %v1006 = vadd.f32 0.0, %v1005
    %v1007 = vpop.f32.mrb[0].mxu0
    %1008 = vdwg.mxu0
    %v1009 = vpack.c.bf16 %v1006, %v1003
    %s1010 = scalar_lea.vmem [#allocation8], 72
    %v1011 = vld [vmem:[%s1010] sm:$0xf]
    %v1012 = vld [vmem:[%s1010 + $0x4] sm:$0x1]
    %v1015 = vunpack.c.l.b16 %v1011
    %v1016 = vunpack.c.l.b16 %v1012
    %v1017 = vpack.c.b16 %v1016, %v1015
    %v1019 = vsel %vm540, %v1017, 0
    %1021 = vmatprep.subr.bf16.mxu0 0
    %1022 = vmatpush1.bf16.msra.mxu0 %v525
    %1023 = vmatprep.subr.bf16.mxu0 0
    %1024 = vmatpush1.bf16.msra.mxu0 %v526
    %1025 = vmatprep.subr.bf16.mxu0 0
    %1026 = vmatpush1.bf16.msra.mxu0 %v527
    %1027 = vmatprep.subr.bf16.mxu0 0
    %1028 = vmatpush1.bf16.msra.mxu0 %v528
    %1029 = vmatprep.subr.bf16.mxu0 0
    %1030 = vmatpush1.bf16.msra.mxu0 0
    %1031 = vmatprep.subr.bf16.mxu0 0
    %1032 = vmatpush1.bf16.msra.mxu0 0
    %1033 = vmatprep.subr.bf16.mxu0 0
    %1034 = vmatpush1.bf16.msra.mxu0 0
    %1035 = vmatprep.subr.bf16.mxu0 0
    %1036 = vmatpush1.bf16.msra.mxu0 0
    %1037 = vmatprep.subr.bf16.mxu0 0
    %1038 = vmatpush1.bf16.msra.mxu0 0
    %1039 = vmatprep.subr.bf16.mxu0 0
    %1040 = vmatpush1.bf16.msra.mxu0 0
    %1041 = vmatprep.subr.bf16.mxu0 0
    %1042 = vmatpush1.bf16.msra.mxu0 0
    %1043 = vmatprep.subr.bf16.mxu0 0
    %1044 = vmatpush1.bf16.msra.mxu0 0
    %1045 = vmatprep.subr.bf16.mxu0 0
    %1046 = vmatpush1.bf16.msra.mxu0 0
    %1047 = vmatprep.subr.bf16.mxu0 0
    %1048 = vmatpush1.bf16.msra.mxu0 0
    %1049 = vmatprep.subr.bf16.mxu0 0
    %1050 = vmatpush1.bf16.msra.mxu0 0
    %1051 = vmatprep.subr.bf16.mxu0 0
    %1052 = vmatpush1.bf16.msra.mxu0 0
    %1053 = vmatprep.mubr.bf16.mxu0 0
    %1054 = vmatmul.mubr.bf16.gmra.mrb[0].mxu0 %v1019
    %v1055 = vpop.f32.mrb[0].mxu0
    %v1056 = vadd.f32 0.0, %v1055
    %v1057 = vpop.f32.mrb[0].mxu0
    %v1058 = vpop.f32.mrb[0].mxu0
    %v1059 = vadd.f32 0.0, %v1058
    %v1060 = vpop.f32.mrb[0].mxu0
    %1061 = vdwg.mxu0
    %v1062 = vpack.c.bf16 %v1059, %v1056
    %s1063 = scalar_lea.vmem [#allocation8], 80
    %v1064 = vld [vmem:[%s1063] sm:$0xf]
    %v1065 = vld [vmem:[%s1063 + $0x4] sm:$0x1]
    %v1068 = vunpack.c.l.b16 %v1064
    %v1069 = vunpack.c.l.b16 %v1065
    %v1070 = vpack.c.b16 %v1069, %v1068
    %v1072 = vsel %vm540, %v1070, 0
    %1074 = vmatprep.subr.bf16.mxu0 0
    %1075 = vmatpush1.bf16.msra.mxu0 %v525
    %1076 = vmatprep.subr.bf16.mxu0 0
    %1077 = vmatpush1.bf16.msra.mxu0 %v526
    %1078 = vmatprep.subr.bf16.mxu0 0
    %1079 = vmatpush1.bf16.msra.mxu0 %v527
    %1080 = vmatprep.subr.bf16.mxu0 0
    %1081 = vmatpush1.bf16.msra.mxu0 %v528
    %1082 = vmatprep.subr.bf16.mxu0 0
    %1083 = vmatpush1.bf16.msra.mxu0 0
    %1084 = vmatprep.subr.bf16.mxu0 0
    %1085 = vmatpush1.bf16.msra.mxu0 0
    %1086 = vmatprep.subr.bf16.mxu0 0
    %1087 = vmatpush1.bf16.msra.mxu0 0
    %1088 = vmatprep.subr.bf16.mxu0 0
    %1089 = vmatpush1.bf16.msra.mxu0 0
    %1090 = vmatprep.subr.bf16.mxu0 0
    %1091 = vmatpush1.bf16.msra.mxu0 0
    %1092 = vmatprep.subr.bf16.mxu0 0
    %1093 = vmatpush1.bf16.msra.mxu0 0
    %1094 = vmatprep.subr.bf16.mxu0 0
    %1095 = vmatpush1.bf16.msra.mxu0 0
    %1096 = vmatprep.subr.bf16.mxu0 0
    %1097 = vmatpush1.bf16.msra.mxu0 0
    %1098 = vmatprep.subr.bf16.mxu0 0
    %1099 = vmatpush1.bf16.msra.mxu0 0
    %1100 = vmatprep.subr.bf16.mxu0 0
    %1101 = vmatpush1.bf16.msra.mxu0 0
    %1102 = vmatprep.subr.bf16.mxu0 0
    %1103 = vmatpush1.bf16.msra.mxu0 0
    %1104 = vmatprep.subr.bf16.mxu0 0
    %1105 = vmatpush1.bf16.msra.mxu0 0
    %1106 = vmatprep.mubr.bf16.mxu0 0
    %1107 = vmatmul.mubr.bf16.gmra.mrb[0].mxu0 %v1072
    %v1108 = vpop.f32.mrb[0].mxu0
    %v1109 = vadd.f32 0.0, %v1108
    %v1110 = vpop.f32.mrb[0].mxu0
    %v1111 = vpop.f32.mrb[0].mxu0
    %v1112 = vadd.f32 0.0, %v1111
    %v1113 = vpop.f32.mrb[0].mxu0
    %1114 = vdwg.mxu0
    %v1115 = vpack.c.bf16 %v1112, %v1109
    %s1116 = scalar_lea.vmem [#allocation8], 88
    %v1117 = vld [vmem:[%s1116] sm:$0xf]
    %v1118 = vld [vmem:[%s1116 + $0x4] sm:$0x1]
    %v1121 = vunpack.c.l.b16 %v1117
    %v1122 = vunpack.c.l.b16 %v1118
    %v1123 = vpack.c.b16 %v1122, %v1121
    %v1125 = vsel %vm540, %v1123, 0
    %1127 = vmatprep.subr.bf16.mxu0 0
    %1128 = vmatpush1.bf16.msra.mxu0 %v525
    %1129 = vmatprep.subr.bf16.mxu0 0
    %1130 = vmatpush1.bf16.msra.mxu0 %v526
    %1131 = vmatprep.subr.bf16.mxu0 0
    %1132 = vmatpush1.bf16.msra.mxu0 %v527
    %1133 = vmatprep.subr.bf16.mxu0 0
    %1134 = vmatpush1.bf16.msra.mxu0 %v528
    %1135 = vmatprep.subr.bf16.mxu0 0
    %1136 = vmatpush1.bf16.msra.mxu0 0
    %1137 = vmatprep.subr.bf16.mxu0 0
    %1138 = vmatpush1.bf16.msra.mxu0 0
    %1139 = vmatprep.subr.bf16.mxu0 0
    %1140 = vmatpush1.bf16.msra.mxu0 0
    %1141 = vmatprep.subr.bf16.mxu0 0
    %1142 = vmatpush1.bf16.msra.mxu0 0
    %1143 = vmatprep.subr.bf16.mxu0 0
    %1144 = vmatpush1.bf16.msra.mxu0 0
    %1145 = vmatprep.subr.bf16.mxu0 0
    %1146 = vmatpush1.bf16.msra.mxu0 0
    %1147 = vmatprep.subr.bf16.mxu0 0
    %1148 = vmatpush1.bf16.msra.mxu0 0
    %1149 = vmatprep.subr.bf16.mxu0 0
    %1150 = vmatpush1.bf16.msra.mxu0 0
    %1151 = vmatprep.subr.bf16.mxu0 0
    %1152 = vmatpush1.bf16.msra.mxu0 0
    %1153 = vmatprep.subr.bf16.mxu0 0
    %1154 = vmatpush1.bf16.msra.mxu0 0
    %1155 = vmatprep.subr.bf16.mxu0 0
    %1156 = vmatpush1.bf16.msra.mxu0 0
    %1157 = vmatprep.subr.bf16.mxu0 0
    %1158 = vmatpush1.bf16.msra.mxu0 0
    %1159 = vmatprep.mubr.bf16.mxu0 0
    %1160 = vmatmul.mubr.bf16.gmra.mrb[0].mxu0 %v1125
    %v1161 = vpop.f32.mrb[0].mxu0
    %v1162 = vadd.f32 0.0, %v1161
    %v1163 = vpop.f32.mrb[0].mxu0
    %v1164 = vpop.f32.mrb[0].mxu0
    %v1165 = vadd.f32 0.0, %v1164
    %v1166 = vpop.f32.mrb[0].mxu0
    %1167 = vdwg.mxu0
    %v1168 = vpack.c.bf16 %v1165, %v1162
    %s1169 = scalar_lea.vmem [#allocation8], 96
    %v1170 = vld [vmem:[%s1169] sm:$0xf]
    %v1171 = vld [vmem:[%s1169 + $0x4] sm:$0x1]
    %v1174 = vunpack.c.l.b16 %v1170
    %v1175 = vunpack.c.l.b16 %v1171
    %v1176 = vpack.c.b16 %v1175, %v1174
    %v1178 = vsel %vm540, %v1176, 0
    %1180 = vmatprep.subr.bf16.mxu0 0
    %1181 = vmatpush1.bf16.msra.mxu0 %v525
    %1182 = vmatprep.subr.bf16.mxu0 0
    %1183 = vmatpush1.bf16.msra.mxu0 %v526
    %1184 = vmatprep.subr.bf16.mxu0 0
    %1185 = vmatpush1.bf16.msra.mxu0 %v527
    %1186 = vmatprep.subr.bf16.mxu0 0
    %1187 = vmatpush1.bf16.msra.mxu0 %v528
    %1188 = vmatprep.subr.bf16.mxu0 0
    %1189 = vmatpush1.bf16.msra.mxu0 0
    %1190 = vmatprep.subr.bf16.mxu0 0
    %1191 = vmatpush1.bf16.msra.mxu0 0
    %1192 = vmatprep.subr.bf16.mxu0 0
    %1193 = vmatpush1.bf16.msra.mxu0 0
    %1194 = vmatprep.subr.bf16.mxu0 0
    %1195 = vmatpush1.bf16.msra.mxu0 0
    %1196 = vmatprep.subr.bf16.mxu0 0
    %1197 = vmatpush1.bf16.msra.mxu0 0
    %1198 = vmatprep.subr.bf16.mxu0 0
    %1199 = vmatpush1.bf16.msra.mxu0 0
    %1200 = vmatprep.subr.bf16.mxu0 0
    %1201 = vmatpush1.bf16.msra.mxu0 0
    %1202 = vmatprep.subr.bf16.mxu0 0
    %1203 = vmatpush1.bf16.msra.mxu0 0
    %1204 = vmatprep.subr.bf16.mxu0 0
    %1205 = vmatpush1.bf16.msra.mxu0 0
    %1206 = vmatprep.subr.bf16.mxu0 0
    %1207 = vmatpush1.bf16.msra.mxu0 0
    %1208 = vmatprep.subr.bf16.mxu0 0
    %1209 = vmatpush1.bf16.msra.mxu0 0
    %1210 = vmatprep.subr.bf16.mxu0 0
    %1211 = vmatpush1.bf16.msra.mxu0 0
    %1212 = vmatprep.mubr.bf16.mxu0 0
    %1213 = vmatmul.mubr.bf16.gmra.mrb[0].mxu0 %v1178
    %v1214 = vpop.f32.mrb[0].mxu0
    %v1215 = vadd.f32 0.0, %v1214
    %v1216 = vpop.f32.mrb[0].mxu0
    %v1217 = vpop.f32.mrb[0].mxu0
    %v1218 = vadd.f32 0.0, %v1217
    %v1219 = vpop.f32.mrb[0].mxu0
    %1220 = vdwg.mxu0
    %v1221 = vpack.c.bf16 %v1218, %v1215
    %s1222 = scalar_lea.vmem [#allocation8], 104
    %v1223 = vld [vmem:[%s1222] sm:$0xf]
    %v1224 = vld [vmem:[%s1222 + $0x4] sm:$0x1]
    %v1227 = vunpack.c.l.b16 %v1223
    %v1228 = vunpack.c.l.b16 %v1224
    %v1229 = vpack.c.b16 %v1228, %v1227
    %v1231 = vsel %vm540, %v1229, 0
    %1233 = vmatprep.subr.bf16.mxu0 0
    %1234 = vmatpush1.bf16.msra.mxu0 %v525
    %1235 = vmatprep.subr.bf16.mxu0 0
    %1236 = vmatpush1.bf16.msra.mxu0 %v526
    %1237 = vmatprep.subr.bf16.mxu0 0
    %1238 = vmatpush1.bf16.msra.mxu0 %v527
    %1239 = vmatprep.subr.bf16.mxu0 0
    %1240 = vmatpush1.bf16.msra.mxu0 %v528
    %1241 = vmatprep.subr.bf16.mxu0 0
    %1242 = vmatpush1.bf16.msra.mxu0 0
    %1243 = vmatprep.subr.bf16.mxu0 0
    %1244 = vmatpush1.bf16.msra.mxu0 0
    %1245 = vmatprep.subr.bf16.mxu0 0
    %1246 = vmatpush1.bf16.msra.mxu0 0
    %1247 = vmatprep.subr.bf16.mxu0 0
    %1248 = vmatpush1.bf16.msra.mxu0 0
    %1249 = vmatprep.subr.bf16.mxu0 0
    %1250 = vmatpush1.bf16.msra.mxu0 0
    %1251 = vmatprep.subr.bf16.mxu0 0
    %1252 = vmatpush1.bf16.msra.mxu0 0
    %1253 = vmatprep.subr.bf16.mxu0 0
    %1254 = vmatpush1.bf16.msra.mxu0 0
    %1255 = vmatprep.subr.bf16.mxu0 0
    %1256 = vmatpush1.bf16.msra.mxu0 0
    %1257 = vmatprep.subr.bf16.mxu0 0
    %1258 = vmatpush1.bf16.msra.mxu0 0
    %1259 = vmatprep.subr.bf16.mxu0 0
    %1260 = vmatpush1.bf16.msra.mxu0 0
    %1261 = vmatprep.subr.bf16.mxu0 0
    %1262 = vmatpush1.bf16.msra.mxu0 0
    %1263 = vmatprep.subr.bf16.mxu0 0
    %1264 = vmatpush1.bf16.msra.mxu0 0
    %1265 = vmatprep.mubr.bf16.mxu0 0
    %1266 = vmatmul.mubr.bf16.gmra.mrb[0].mxu0 %v1231
    %v1267 = vpop.f32.mrb[0].mxu0
    %v1268 = vadd.f32 0.0, %v1267
    %v1269 = vpop.f32.mrb[0].mxu0
    %v1270 = vpop.f32.mrb[0].mxu0
    %v1271 = vadd.f32 0.0, %v1270
    %v1272 = vpop.f32.mrb[0].mxu0
    %1273 = vdwg.mxu0
    %v1274 = vpack.c.bf16 %v1271, %v1268
    %s1275 = scalar_lea.vmem [#allocation8], 112
    %v1276 = vld [vmem:[%s1275] sm:$0xf]
    %v1277 = vld [vmem:[%s1275 + $0x4] sm:$0x1]
    %v1280 = vunpack.c.l.b16 %v1276
    %v1281 = vunpack.c.l.b16 %v1277
    %v1282 = vpack.c.b16 %v1281, %v1280
    %v1284 = vsel %vm540, %v1282, 0
    %1286 = vmatprep.subr.bf16.mxu0 0
    %1287 = vmatpush1.bf16.msra.mxu0 %v525
    %1288 = vmatprep.subr.bf16.mxu0 0
    %1289 = vmatpush1.bf16.msra.mxu0 %v526
    %1290 = vmatprep.subr.bf16.mxu0 0
    %1291 = vmatpush1.bf16.msra.mxu0 %v527
    %1292 = vmatprep.subr.bf16.mxu0 0
    %1293 = vmatpush1.bf16.msra.mxu0 %v528
    %1294 = vmatprep.subr.bf16.mxu0 0
    %1295 = vmatpush1.bf16.msra.mxu0 0
    %1296 = vmatprep.subr.bf16.mxu0 0
    %1297 = vmatpush1.bf16.msra.mxu0 0
    %1298 = vmatprep.subr.bf16.mxu0 0
    %1299 = vmatpush1.bf16.msra.mxu0 0
    %1300 = vmatprep.subr.bf16.mxu0 0
    %1301 = vmatpush1.bf16.msra.mxu0 0
    %1302 = vmatprep.subr.bf16.mxu0 0
    %1303 = vmatpush1.bf16.msra.mxu0 0
    %1304 = vmatprep.subr.bf16.mxu0 0
    %1305 = vmatpush1.bf16.msra.mxu0 0
    %1306 = vmatprep.subr.bf16.mxu0 0
    %1307 = vmatpush1.bf16.msra.mxu0 0
    %1308 = vmatprep.subr.bf16.mxu0 0
    %1309 = vmatpush1.bf16.msra.mxu0 0
    %1310 = vmatprep.subr.bf16.mxu0 0
    %1311 = vmatpush1.bf16.msra.mxu0 0
    %1312 = vmatprep.subr.bf16.mxu0 0
    %1313 = vmatpush1.bf16.msra.mxu0 0
    %1314 = vmatprep.subr.bf16.mxu0 0
    %1315 = vmatpush1.bf16.msra.mxu0 0
    %1316 = vmatprep.subr.bf16.mxu0 0
    %1317 = vmatpush1.bf16.msra.mxu0 0
    %1318 = vmatprep.mubr.bf16.mxu0 0
    %1319 = vmatmul.mubr.bf16.gmra.mrb[0].mxu0 %v1284
    %v1320 = vpop.f32.mrb[0].mxu0
    %v1321 = vadd.f32 0.0, %v1320
    %v1322 = vpop.f32.mrb[0].mxu0
    %v1323 = vpop.f32.mrb[0].mxu0
    %v1324 = vadd.f32 0.0, %v1323
    %v1325 = vpop.f32.mrb[0].mxu0
    %1326 = vdwg.mxu0
    %v1327 = vpack.c.bf16 %v1324, %v1321
    %s1328 = scalar_lea.vmem [#allocation8], 120
    %v1329 = vld [vmem:[%s1328] sm:$0xf]
    %v1330 = vld [vmem:[%s1328 + $0x4] sm:$0x1]
    %v1333 = vunpack.c.l.b16 %v1329
    %v1334 = vunpack.c.l.b16 %v1330
    %v1335 = vpack.c.b16 %v1334, %v1333
    %v1337 = vsel %vm540, %v1335, 0
    %1339 = vmatprep.subr.bf16.mxu0 0
    %1340 = vmatpush1.bf16.msra.mxu0 %v525
    %1341 = vmatprep.subr.bf16.mxu0 0
    %1342 = vmatpush1.bf16.msra.mxu0 %v526
    %1343 = vmatprep.subr.bf16.mxu0 0
    %1344 = vmatpush1.bf16.msra.mxu0 %v527
    %1345 = vmatprep.subr.bf16.mxu0 0
    %1346 = vmatpush1.bf16.msra.mxu0 %v528
    %1347 = vmatprep.subr.bf16.mxu0 0
    %1348 = vmatpush1.bf16.msra.mxu0 0
    %1349 = vmatprep.subr.bf16.mxu0 0
    %1350 = vmatpush1.bf16.msra.mxu0 0
    %1351 = vmatprep.subr.bf16.mxu0 0
    %1352 = vmatpush1.bf16.msra.mxu0 0
    %1353 = vmatprep.subr.bf16.mxu0 0
    %1354 = vmatpush1.bf16.msra.mxu0 0
    %1355 = vmatprep.subr.bf16.mxu0 0
    %1356 = vmatpush1.bf16.msra.mxu0 0
    %1357 = vmatprep.subr.bf16.mxu0 0
    %1358 = vmatpush1.bf16.msra.mxu0 0
    %1359 = vmatprep.subr.bf16.mxu0 0
    %1360 = vmatpush1.bf16.msra.mxu0 0
    %1361 = vmatprep.subr.bf16.mxu0 0
    %1362 = vmatpush1.bf16.msra.mxu0 0
    %1363 = vmatprep.subr.bf16.mxu0 0
    %1364 = vmatpush1.bf16.msra.mxu0 0
    %1365 = vmatprep.subr.bf16.mxu0 0
    %1366 = vmatpush1.bf16.msra.mxu0 0
    %1367 = vmatprep.subr.bf16.mxu0 0
    %1368 = vmatpush1.bf16.msra.mxu0 0
    %1369 = vmatprep.subr.bf16.mxu0 0
    %1370 = vmatpush1.bf16.msra.mxu0 0
    %1371 = vmatprep.mubr.bf16.mxu0 0
    %1372 = vmatmul.mubr.bf16.gmra.mrb[0].mxu0 %v1337
    %v1373 = vpop.f32.mrb[0].mxu0
    %v1374 = vadd.f32 0.0, %v1373
    %v1375 = vpop.f32.mrb[0].mxu0
    %v1376 = vpop.f32.mrb[0].mxu0
    %v1377 = vadd.f32 0.0, %v1376
    %v1378 = vpop.f32.mrb[0].mxu0
    %1379 = vdwg.mxu0
    %v1380 = vpack.c.bf16 %v1377, %v1374
    %1382 = vrot.lane.b32.xlu0 %v638, 32
    %v1383 = vpop.permute.xlu0 %1382
    %1385 = vrot.lane.b32.xlu0 %v691, 64
    %v1386 = vpop.permute.xlu0 %1385
    %1388 = vrot.lane.b32.xlu0 %v744, 96
    %v1389 = vpop.permute.xlu0 %1388
    %1391 = vrot.lane.b32.xlu0 %v850, 32
    %v1392 = vpop.permute.xlu0 %1391
    %1394 = vrot.lane.b32.xlu0 %v903, 64
    %v1395 = vpop.permute.xlu0 %1394
    %1397 = vrot.lane.b32.xlu0 %v956, 96
    %v1398 = vpop.permute.xlu0 %1397
    %1400 = vrot.lane.b32.xlu0 %v1062, 32
    %v1401 = vpop.permute.xlu0 %1400
    %1403 = vrot.lane.b32.xlu0 %v1115, 64
    %v1404 = vpop.permute.xlu0 %1403
    %1406 = vrot.lane.b32.xlu0 %v1168, 96
    %v1407 = vpop.permute.xlu0 %1406
    %1409 = vrot.lane.b32.xlu0 %v1274, 32
    %v1410 = vpop.permute.xlu0 %1409
    %1412 = vrot.lane.b32.xlu0 %v1327, 64
    %v1413 = vpop.permute.xlu0 %1412
    %1415 = vrot.lane.b32.xlu0 %v1380, 96
    %v1416 = vpop.permute.xlu0 %1415
    %vm1417 = vcmask 261120
    %v1420 = vsel %vm1417, %v585, %v1383
    %v1422 = vsel %vm540, %v1420, %v1386
    %vm1423 = vcmask 785408
    %v1425 = vsel %vm1423, %v1422, %v1389
    %v1429 = vsel %vm1417, %v797, %v1392
    %v1431 = vsel %vm540, %v1429, %v1395
    %v1433 = vsel %vm1423, %v1431, %v1398
    %v1437 = vsel %vm1417, %v1009, %v1401
    %v1439 = vsel %vm540, %v1437, %v1404
    %v1441 = vsel %vm1423, %v1439, %v1407
    %v1445 = vsel %vm1417, %v1221, %v1410
    %v1447 = vsel %vm540, %v1445, %v1413
    %v1449 = vsel %vm1423, %v1447, %v1416
    %v1451 = vld [vmem:[#allocation10] sm:$0xf]
    %v1452 = vld [vmem:[#allocation10 + $0x4] sm:$0xf]
    %v1453 = vld [vmem:[#allocation10 + $0x8] sm:$0xf]
    %v1454 = vld [vmem:[#allocation10 + $0xc] sm:$0xf]
    %v1455 = vld [vmem:[#allocation10 + $0x10] sm:$0xf]
    %v1456 = vld [vmem:[#allocation10 + $0x14] sm:$0xf]
    %v1457 = vld [vmem:[#allocation10 + $0x18] sm:$0xf]
    %v1458 = vld [vmem:[#allocation10 + $0x1c] sm:$0xf]
    %v1459 = vld [vmem:[#allocation10 + $0x20] sm:$0xf]
    %v1460 = vld [vmem:[#allocation10 + $0x24] sm:$0xf]
    %v1461 = vld [vmem:[#allocation10 + $0x28] sm:$0xf]
    %v1462 = vld [vmem:[#allocation10 + $0x2c] sm:$0xf]
    %v1463 = vld [vmem:[#allocation10 + $0x30] sm:$0xf]
    %v1464 = vld [vmem:[#allocation10 + $0x34] sm:$0xf]
    %v1465 = vld [vmem:[#allocation10 + $0x38] sm:$0xf]
    %v1466 = vld [vmem:[#allocation10 + $0x3c] sm:$0xf]
    %v1467 = vld [vmem:[#allocation10 + $0x40] sm:$0xf]
    %v1468 = vld [vmem:[#allocation10 + $0x44] sm:$0xf]
    %v1469 = vld [vmem:[#allocation10 + $0x48] sm:$0xf]
    %v1470 = vld [vmem:[#allocation10 + $0x4c] sm:$0xf]
    %v1471 = vld [vmem:[#allocation10 + $0x50] sm:$0xf]
    %v1472 = vld [vmem:[#allocation10 + $0x54] sm:$0xf]
    %v1473 = vld [vmem:[#allocation10 + $0x58] sm:$0xf]
    %v1474 = vld [vmem:[#allocation10 + $0x5c] sm:$0xf]
    %v1475 = vld [vmem:[#allocation10 + $0x60] sm:$0xf]
    %v1476 = vld [vmem:[#allocation10 + $0x64] sm:$0xf]
    %v1477 = vld [vmem:[#allocation10 + $0x68] sm:$0xf]
    %v1478 = vld [vmem:[#allocation10 + $0x6c] sm:$0xf]
    %v1479 = vld [vmem:[#allocation10 + $0x70] sm:$0xf]
    %v1480 = vld [vmem:[#allocation10 + $0x74] sm:$0xf]
    %v1481 = vld [vmem:[#allocation10 + $0x78] sm:$0xf]
    %v1482 = vld [vmem:[#allocation10 + $0x7c] sm:$0xf]
    %v1483 = vld [vmem:[#allocation10 + $0x80] sm:$0xf]
    %v1484 = vld [vmem:[#allocation10 + $0x84] sm:$0xf]
    %v1485 = vld [vmem:[#allocation10 + $0x88] sm:$0xf]
    %v1486 = vld [vmem:[#allocation10 + $0x8c] sm:$0xf]
    %v1487 = vld [vmem:[#allocation10 + $0x90] sm:$0xf]
    %v1488 = vld [vmem:[#allocation10 + $0x94] sm:$0xf]
    %v1489 = vld [vmem:[#allocation10 + $0x98] sm:$0xf]
    %v1490 = vld [vmem:[#allocation10 + $0x9c] sm:$0xf]
    %v1491 = vld [vmem:[#allocation10 + $0xa0] sm:$0xf]
    %v1492 = vld [vmem:[#allocation10 + $0xa4] sm:$0xf]
    %v1493 = vld [vmem:[#allocation10 + $0xa8] sm:$0xf]
    %v1494 = vld [vmem:[#allocation10 + $0xac] sm:$0xf]
    %v1495 = vld [vmem:[#allocation10 + $0xb0] sm:$0xf]
    %v1496 = vld [vmem:[#allocation10 + $0xb4] sm:$0xf]
    %v1497 = vld [vmem:[#allocation10 + $0xb8] sm:$0xf]
    %v1498 = vld [vmem:[#allocation10 + $0xbc] sm:$0xf]
    %v1499 = vld [vmem:[#allocation10 + $0xc0] sm:$0xf]
    %v1500 = vld [vmem:[#allocation10 + $0xc4] sm:$0xf]
    %v1501 = vld [vmem:[#allocation10 + $0xc8] sm:$0xf]
    %v1502 = vld [vmem:[#allocation10 + $0xcc] sm:$0xf]
    %v1503 = vld [vmem:[#allocation10 + $0xd0] sm:$0xf]
    %v1504 = vld [vmem:[#allocation10 + $0xd4] sm:$0xf]
    %v1505 = vld [vmem:[#allocation10 + $0xd8] sm:$0xf]
    %v1506 = vld [vmem:[#allocation10 + $0xdc] sm:$0xf]
    %v1507 = vld [vmem:[#allocation10 + $0xe0] sm:$0xf]
    %v1508 = vld [vmem:[#allocation10 + $0xe4] sm:$0xf]
    %v1509 = vld [vmem:[#allocation10 + $0xe8] sm:$0xf]
    %v1510 = vld [vmem:[#allocation10 + $0xec] sm:$0xf]
    %v1511 = vld [vmem:[#allocation10 + $0xf0] sm:$0xf]
    %v1512 = vld [vmem:[#allocation10 + $0xf4] sm:$0xf]
    %v1513 = vld [vmem:[#allocation10 + $0xf8] sm:$0xf]
    %v1514 = vld [vmem:[#allocation10 + $0xfc] sm:$0xf]
    %v1515 = vld [vmem:[#allocation11] sm:$0x1]
    %v1517 = vlaneseq
    %v1518 = vshrl.u32 %v1517, 7
    %v1519 = vsub.s32 0, %v1518
    %v1520 = vrot.slane %v1515, %v1519
    %v1586 = vunpack.c.l.b16 %v1451
    %v1587 = vunpack.c.l.b16 %v1452
    %v1588 = vunpack.c.l.b16 %v1453
    %v1589 = vunpack.c.l.b16 %v1454
    %v1590 = vunpack.c.l.b16 %v1455
    %v1591 = vunpack.c.l.b16 %v1456
    %v1592 = vunpack.c.l.b16 %v1457
    %v1593 = vunpack.c.l.b16 %v1458
    %v1594 = vunpack.c.l.b16 %v1459
    %v1595 = vunpack.c.l.b16 %v1460
    %v1596 = vunpack.c.l.b16 %v1461
    %v1597 = vunpack.c.l.b16 %v1462
    %v1598 = vunpack.c.l.b16 %v1463
    %v1599 = vunpack.c.l.b16 %v1464
    %v1600 = vunpack.c.l.b16 %v1465
    %v1601 = vunpack.c.l.b16 %v1466
    %v1602 = vunpack.c.l.b16 %v1467
    %v1603 = vunpack.c.l.b16 %v1468
    %v1604 = vunpack.c.l.b16 %v1469
    %v1605 = vunpack.c.l.b16 %v1470
    %v1606 = vunpack.c.l.b16 %v1471
    %v1607 = vunpack.c.l.b16 %v1472
    %v1608 = vunpack.c.l.b16 %v1473
    %v1609 = vunpack.c.l.b16 %v1474
    %v1610 = vunpack.c.l.b16 %v1475
    %v1611 = vunpack.c.l.b16 %v1476
    %v1612 = vunpack.c.l.b16 %v1477
    %v1613 = vunpack.c.l.b16 %v1478
    %v1614 = vunpack.c.l.b16 %v1479
    %v1615 = vunpack.c.l.b16 %v1480
    %v1616 = vunpack.c.l.b16 %v1481
    %v1617 = vunpack.c.l.b16 %v1482
    %v1618 = vunpack.c.l.b16 %v1483
    %v1619 = vunpack.c.l.b16 %v1484
    %v1620 = vunpack.c.l.b16 %v1485
    %v1621 = vunpack.c.l.b16 %v1486
    %v1622 = vunpack.c.l.b16 %v1487
    %v1623 = vunpack.c.l.b16 %v1488
    %v1624 = vunpack.c.l.b16 %v1489
    %v1625 = vunpack.c.l.b16 %v1490
    %v1626 = vunpack.c.l.b16 %v1491
    %v1627 = vunpack.c.l.b16 %v1492
    %v1628 = vunpack.c.l.b16 %v1493
    %v1629 = vunpack.c.l.b16 %v1494
    %v1630 = vunpack.c.l.b16 %v1495
    %v1631 = vunpack.c.l.b16 %v1496
    %v1632 = vunpack.c.l.b16 %v1497
    %v1633 = vunpack.c.l.b16 %v1498
    %v1634 = vunpack.c.l.b16 %v1499
    %v1635 = vunpack.c.l.b16 %v1500
    %v1636 = vunpack.c.l.b16 %v1501
    %v1637 = vunpack.c.l.b16 %v1502
    %v1638 = vunpack.c.l.b16 %v1503
    %v1639 = vunpack.c.l.b16 %v1504
    %v1640 = vunpack.c.l.b16 %v1505
    %v1641 = vunpack.c.l.b16 %v1506
    %v1642 = vunpack.c.l.b16 %v1507
    %v1643 = vunpack.c.l.b16 %v1508
    %v1644 = vunpack.c.l.b16 %v1509
    %v1645 = vunpack.c.l.b16 %v1510
    %v1646 = vunpack.c.l.b16 %v1511
    %v1647 = vunpack.c.l.b16 %v1512
    %v1648 = vunpack.c.l.b16 %v1513
    %v1649 = vunpack.c.l.b16 %v1514
    %v1650 = vpack.c.b16 %v1587, %v1586
    %v1651 = vpack.c.b16 %v1589, %v1588
    %v1652 = vpack.c.b16 %v1591, %v1590
    %v1653 = vpack.c.b16 %v1593, %v1592
    %v1654 = vpack.c.b16 %v1595, %v1594
    %v1655 = vpack.c.b16 %v1597, %v1596
    %v1656 = vpack.c.b16 %v1599, %v1598
    %v1657 = vpack.c.b16 %v1601, %v1600
    %v1658 = vpack.c.b16 %v1603, %v1602
    %v1659 = vpack.c.b16 %v1605, %v1604
    %v1660 = vpack.c.b16 %v1607, %v1606
    %v1661 = vpack.c.b16 %v1609, %v1608
    %v1662 = vpack.c.b16 %v1611, %v1610
    %v1663 = vpack.c.b16 %v1613, %v1612
    %v1664 = vpack.c.b16 %v1615, %v1614
    %v1665 = vpack.c.b16 %v1617, %v1616
    %v1666 = vpack.c.b16 %v1619, %v1618
    %v1667 = vpack.c.b16 %v1621, %v1620
    %v1668 = vpack.c.b16 %v1623, %v1622
    %v1669 = vpack.c.b16 %v1625, %v1624
    %v1670 = vpack.c.b16 %v1627, %v1626
    %v1671 = vpack.c.b16 %v1629, %v1628
    %v1672 = vpack.c.b16 %v1631, %v1630
    %v1673 = vpack.c.b16 %v1633, %v1632
    %v1674 = vpack.c.b16 %v1635, %v1634
    %v1675 = vpack.c.b16 %v1637, %v1636
    %v1676 = vpack.c.b16 %v1639, %v1638
    %v1677 = vpack.c.b16 %v1641, %v1640
    %v1678 = vpack.c.b16 %v1643, %v1642
    %v1679 = vpack.c.b16 %v1645, %v1644
    %v1680 = vpack.c.b16 %v1647, %v1646
    %v1681 = vpack.c.b16 %v1649, %v1648
    %1714 = vmatprep.subr.bf16.mxu0 0
    %1715 = vmatpush1.bf16.msra.mxu0 %v1650
    %1716 = vmatprep.subr.bf16.mxu0 0
    %1717 = vmatpush1.bf16.msra.mxu0 %v1651
    %1718 = vmatprep.subr.bf16.mxu0 0
    %1719 = vmatpush1.bf16.msra.mxu0 %v1652
    %1720 = vmatprep.subr.bf16.mxu0 0
    %1721 = vmatpush1.bf16.msra.mxu0 %v1653
    %1722 = vmatprep.subr.bf16.mxu0 0
    %1723 = vmatpush1.bf16.msra.mxu0 %v1654
    %1724 = vmatprep.subr.bf16.mxu0 0
    %1725 = vmatpush1.bf16.msra.mxu0 %v1655
    %1726 = vmatprep.subr.bf16.mxu0 0
    %1727 = vmatpush1.bf16.msra.mxu0 %v1656
    %1728 = vmatprep.subr.bf16.mxu0 0
    %1729 = vmatpush1.bf16.msra.mxu0 %v1657
    %1730 = vmatprep.subr.bf16.mxu0 0
    %1731 = vmatpush1.bf16.msra.mxu0 %v1658
    %1732 = vmatprep.subr.bf16.mxu0 0
    %1733 = vmatpush1.bf16.msra.mxu0 %v1659
    %1734 = vmatprep.subr.bf16.mxu0 0
    %1735 = vmatpush1.bf16.msra.mxu0 %v1660
    %1736 = vmatprep.subr.bf16.mxu0 0
    %1737 = vmatpush1.bf16.msra.mxu0 %v1661
    %1738 = vmatprep.subr.bf16.mxu0 0
    %1739 = vmatpush1.bf16.msra.mxu0 %v1662
    %1740 = vmatprep.subr.bf16.mxu0 0
    %1741 = vmatpush1.bf16.msra.mxu0 %v1663
    %1742 = vmatprep.subr.bf16.mxu0 0
    %1743 = vmatpush1.bf16.msra.mxu0 %v1664
    %1744 = vmatprep.subr.bf16.mxu0 0
    %1745 = vmatpush1.bf16.msra.mxu0 %v1665
    %1746 = vmatprep.mubr.bf16.mxu0 %v1433
    %1747 = vmatmul.mubr.bf16.gmra.mrb[0].mxu0 %v1425
    %v1748 = vpop.f32.mrb[0].mxu0
    %v1749 = vadd.f32 %v1520, %v1748
    %v1750 = vpop.f32.mrb[0].mxu0
    %v1751 = vpop.f32.mrb[0].mxu0
    %v1752 = vadd.f32 %v1520, %v1751
    %v1753 = vpop.f32.mrb[0].mxu0
    %1754 = vdwg.mxu0
    %1755 = vmatprep.subr.bf16.mxu0 0
    %1756 = vmatpush1.bf16.msra.mxu0 %v1666
    %1757 = vmatprep.subr.bf16.mxu0 0
    %1758 = vmatpush1.bf16.msra.mxu0 %v1667
    %1759 = vmatprep.subr.bf16.mxu0 0
    %1760 = vmatpush1.bf16.msra.mxu0 %v1668
    %1761 = vmatprep.subr.bf16.mxu0 0
    %1762 = vmatpush1.bf16.msra.mxu0 %v1669
    %1763 = vmatprep.subr.bf16.mxu0 0
    %1764 = vmatpush1.bf16.msra.mxu0 %v1670
    %1765 = vmatprep.subr.bf16.mxu0 0
    %1766 = vmatpush1.bf16.msra.mxu0 %v1671
    %1767 = vmatprep.subr.bf16.mxu0 0
    %1768 = vmatpush1.bf16.msra.mxu0 %v1672
    %1769 = vmatprep.subr.bf16.mxu0 0
    %1770 = vmatpush1.bf16.msra.mxu0 %v1673
    %1771 = vmatprep.subr.bf16.mxu0 0
    %1772 = vmatpush1.bf16.msra.mxu0 %v1674
    %1773 = vmatprep.subr.bf16.mxu0 0
    %1774 = vmatpush1.bf16.msra.mxu0 %v1675
    %1775 = vmatprep.subr.bf16.mxu0 0
    %1776 = vmatpush1.bf16.msra.mxu0 %v1676
    %1777 = vmatprep.subr.bf16.mxu0 0
    %1778 = vmatpush1.bf16.msra.mxu0 %v1677
    %1779 = vmatprep.subr.bf16.mxu0 0
    %1780 = vmatpush1.bf16.msra.mxu0 %v1678
    %1781 = vmatprep.subr.bf16.mxu0 0
    %1782 = vmatpush1.bf16.msra.mxu0 %v1679
    %1783 = vmatprep.subr.bf16.mxu0 0
    %1784 = vmatpush1.bf16.msra.mxu0 %v1680
    %1785 = vmatprep.subr.bf16.mxu0 0
    %1786 = vmatpush1.bf16.msra.mxu0 %v1681
    %1787 = vmatprep.mubr.bf16.mxu0 %v1449
    %1788 = vmatmul.mubr.bf16.gmra.mrb[0].mxu0 %v1441
    %v1789 = vpop.f32.mrb[0].mxu0
    %v1790 = vadd.f32 %v1749, %v1789
    %v1791 = vpop.f32.mrb[0].mxu0
    %v1792 = vpop.f32.mrb[0].mxu0
    %v1793 = vadd.f32 %v1752, %v1792
    %v1794 = vpop.f32.mrb[0].mxu0
    %1795 = vdwg.mxu0
    %v1796 = vmax.f32 %v1790, 0.0
    %v1797 = vmax.f32 %v1793, 0.0
    %v1798 = vpack.c.bf16 %v1797, %v1796
    %v1799 = vld [vmem:[#allocation13] sm:$0x1]
    %vm1800 = vcmask 72704
    %v1802 = vsel %vm1800, %v1799, 0
    %vm1804 = vcmask 1043456
    %vm1805 = vcmask 1044480
    %v1806 = vsel %vm1804, 4294967295, 65535
    %v1807 = vsel %vm1805, %v1806, 0
    %v1809 = vand.u32 %v1798, %v1807
    %1811 = vmatprep.subr.bf16.mxu0 0
    %1812 = vmatpush1.bf16.msra.mxu0 %v1809
    %1813 = vmatprep.subr.bf16.mxu0 0
    %1814 = vmatpush1.bf16.msra.mxu0 0
    %1815 = vmatprep.subr.bf16.mxu0 0
    %1816 = vmatpush1.bf16.msra.mxu0 0
    %1817 = vmatprep.subr.bf16.mxu0 0
    %1818 = vmatpush1.bf16.msra.mxu0 0
    %1819 = vmatprep.subr.bf16.mxu0 0
    %1820 = vmatpush1.bf16.msra.mxu0 0
    %1821 = vmatprep.subr.bf16.mxu0 0
    %1822 = vmatpush1.bf16.msra.mxu0 0
    %1823 = vmatprep.subr.bf16.mxu0 0
    %1824 = vmatpush1.bf16.msra.mxu0 0
    %1825 = vmatprep.subr.bf16.mxu0 0
    %1826 = vmatpush1.bf16.msra.mxu0 0
    %1827 = vmatprep.subr.bf16.mxu0 0
    %1828 = vmatpush1.bf16.msra.mxu0 0
    %1829 = vmatprep.subr.bf16.mxu0 0
    %1830 = vmatpush1.bf16.msra.mxu0 0
    %1831 = vmatprep.subr.bf16.mxu0 0
    %1832 = vmatpush1.bf16.msra.mxu0 0
    %1833 = vmatprep.subr.bf16.mxu0 0
    %1834 = vmatpush1.bf16.msra.mxu0 0
    %1835 = vmatprep.subr.bf16.mxu0 0
    %1836 = vmatpush1.bf16.msra.mxu0 0
    %1837 = vmatprep.subr.bf16.mxu0 0
    %1838 = vmatpush1.bf16.msra.mxu0 0
    %1839 = vmatprep.subr.bf16.mxu0 0
    %1840 = vmatpush1.bf16.msra.mxu0 0
    %1841 = vmatprep.subr.bf16.mxu0 0
    %1842 = vmatpush1.bf16.msra.mxu0 0
    %1843 = vmatprep.mubr.bf16.mxu0 0
    %1844 = vmatmul.mubr.bf16.gmra.mrb[0].mxu0 %v1802
    %v1845 = vpop.f32.mrb[0].mxu0
    %v1846 = vadd.f32 0.0, %v1845
    %v1847 = vpop.f32.mrb[0].mxu0
    %v1848 = vpop.f32.mrb[0].mxu0
    %v1849 = vpop.f32.mrb[0].mxu0
    %1850 = vdwg.mxu0
    %v1851 = vpack.c.bf16 %v1846, %v1846
    %s1852 = scalar_lea.vmem [#allocation13], 1
    %v1853 = vld [vmem:[%s1852] sm:$0x1]
    %v1855 = vsel %vm1800, %v1853, 0
    %1857 = vmatprep.subr.bf16.mxu0 0
    %1858 = vmatpush1.bf16.msra.mxu0 %v1809
    %1859 = vmatprep.subr.bf16.mxu0 0
    %1860 = vmatpush1.bf16.msra.mxu0 0
    %1861 = vmatprep.subr.bf16.mxu0 0
    %1862 = vmatpush1.bf16.msra.mxu0 0
    %1863 = vmatprep.subr.bf16.mxu0 0
    %1864 = vmatpush1.bf16.msra.mxu0 0
    %1865 = vmatprep.subr.bf16.mxu0 0
    %1866 = vmatpush1.bf16.msra.mxu0 0
    %1867 = vmatprep.subr.bf16.mxu0 0
    %1868 = vmatpush1.bf16.msra.mxu0 0
    %1869 = vmatprep.subr.bf16.mxu0 0
    %1870 = vmatpush1.bf16.msra.mxu0 0
    %1871 = vmatprep.subr.bf16.mxu0 0
    %1872 = vmatpush1.bf16.msra.mxu0 0
    %1873 = vmatprep.subr.bf16.mxu0 0
    %1874 = vmatpush1.bf16.msra.mxu0 0
    %1875 = vmatprep.subr.bf16.mxu0 0
    %1876 = vmatpush1.bf16.msra.mxu0 0
    %1877 = vmatprep.subr.bf16.mxu0 0
    %1878 = vmatpush1.bf16.msra.mxu0 0
    %1879 = vmatprep.subr.bf16.mxu0 0
    %1880 = vmatpush1.bf16.msra.mxu0 0
    %1881 = vmatprep.subr.bf16.mxu0 0
    %1882 = vmatpush1.bf16.msra.mxu0 0
    %1883 = vmatprep.subr.bf16.mxu0 0
    %1884 = vmatpush1.bf16.msra.mxu0 0
    %1885 = vmatprep.subr.bf16.mxu0 0
    %1886 = vmatpush1.bf16.msra.mxu0 0
    %1887 = vmatprep.subr.bf16.mxu0 0
    %1888 = vmatpush1.bf16.msra.mxu0 0
    %1889 = vmatprep.mubr.bf16.mxu0 0
    %1890 = vmatmul.mubr.bf16.gmra.mrb[0].mxu0 %v1855
    %v1891 = vpop.f32.mrb[0].mxu0
    %v1892 = vadd.f32 0.0, %v1891
    %v1893 = vpop.f32.mrb[0].mxu0
    %v1894 = vpop.f32.mrb[0].mxu0
    %v1895 = vpop.f32.mrb[0].mxu0
    %1896 = vdwg.mxu0
    %v1897 = vpack.c.bf16 %v1892, %v1892
    %s1898 = scalar_lea.vmem [#allocation13], 2
    %v1899 = vld [vmem:[%s1898] sm:$0x1]
    %v1901 = vsel %vm1800, %v1899, 0
    %1903 = vmatprep.subr.bf16.mxu0 0
    %1904 = vmatpush1.bf16.msra.mxu0 %v1809
    %1905 = vmatprep.subr.bf16.mxu0 0
    %1906 = vmatpush1.bf16.msra.mxu0 0
    %1907 = vmatprep.subr.bf16.mxu0 0
    %1908 = vmatpush1.bf16.msra.mxu0 0
    %1909 = vmatprep.subr.bf16.mxu0 0
    %1910 = vmatpush1.bf16.msra.mxu0 0
    %1911 = vmatprep.subr.bf16.mxu0 0
    %1912 = vmatpush1.bf16.msra.mxu0 0
    %1913 = vmatprep.subr.bf16.mxu0 0
    %1914 = vmatpush1.bf16.msra.mxu0 0
    %1915 = vmatprep.subr.bf16.mxu0 0
    %1916 = vmatpush1.bf16.msra.mxu0 0
    %1917 = vmatprep.subr.bf16.mxu0 0
    %1918 = vmatpush1.bf16.msra.mxu0 0
    %1919 = vmatprep.subr.bf16.mxu0 0
    %1920 = vmatpush1.bf16.msra.mxu0 0
    %1921 = vmatprep.subr.bf16.mxu0 0
    %1922 = vmatpush1.bf16.msra.mxu0 0
    %1923 = vmatprep.subr.bf16.mxu0 0
    %1924 = vmatpush1.bf16.msra.mxu0 0
    %1925 = vmatprep.subr.bf16.mxu0 0
    %1926 = vmatpush1.bf16.msra.mxu0 0
    %1927 = vmatprep.subr.bf16.mxu0 0
    %1928 = vmatpush1.bf16.msra.mxu0 0
    %1929 = vmatprep.subr.bf16.mxu0 0
    %1930 = vmatpush1.bf16.msra.mxu0 0
    %1931 = vmatprep.subr.bf16.mxu0 0
    %1932 = vmatpush1.bf16.msra.mxu0 0
    %1933 = vmatprep.subr.bf16.mxu0 0
    %1934 = vmatpush1.bf16.msra.mxu0 0
    %1935 = vmatprep.mubr.bf16.mxu0 0
    %1936 = vmatmul.mubr.bf16.gmra.mrb[0].mxu0 %v1901
    %v1937 = vpop.f32.mrb[0].mxu0
    %v1938 = vadd.f32 0.0, %v1937
    %v1939 = vpop.f32.mrb[0].mxu0
    %v1940 = vpop.f32.mrb[0].mxu0
    %v1941 = vpop.f32.mrb[0].mxu0
    %1942 = vdwg.mxu0
    %v1943 = vpack.c.bf16 %v1938, %v1938
    %s1944 = scalar_lea.vmem [#allocation13], 3
    %v1945 = vld [vmem:[%s1944] sm:$0x1]
    %v1947 = vsel %vm1800, %v1945, 0
    %1949 = vmatprep.subr.bf16.mxu0 0
    %1950 = vmatpush1.bf16.msra.mxu0 %v1809
    %1951 = vmatprep.subr.bf16.mxu0 0
    %1952 = vmatpush1.bf16.msra.mxu0 0
    %1953 = vmatprep.subr.bf16.mxu0 0
    %1954 = vmatpush1.bf16.msra.mxu0 0
    %1955 = vmatprep.subr.bf16.mxu0 0
    %1956 = vmatpush1.bf16.msra.mxu0 0
    %1957 = vmatprep.subr.bf16.mxu0 0
    %1958 = vmatpush1.bf16.msra.mxu0 0
    %1959 = vmatprep.subr.bf16.mxu0 0
    %1960 = vmatpush1.bf16.msra.mxu0 0
    %1961 = vmatprep.subr.bf16.mxu0 0
    %1962 = vmatpush1.bf16.msra.mxu0 0
    %1963 = vmatprep.subr.bf16.mxu0 0
    %1964 = vmatpush1.bf16.msra.mxu0 0
    %1965 = vmatprep.subr.bf16.mxu0 0
    %1966 = vmatpush1.bf16.msra.mxu0 0
    %1967 = vmatprep.subr.bf16.mxu0 0
    %1968 = vmatpush1.bf16.msra.mxu0 0
    %1969 = vmatprep.subr.bf16.mxu0 0
    %1970 = vmatpush1.bf16.msra.mxu0 0
    %1971 = vmatprep.subr.bf16.mxu0 0
    %1972 = vmatpush1.bf16.msra.mxu0 0
    %1973 = vmatprep.subr.bf16.mxu0 0
    %1974 = vmatpush1.bf16.msra.mxu0 0
    %1975 = vmatprep.subr.bf16.mxu0 0
    %1976 = vmatpush1.bf16.msra.mxu0 0
    %1977 = vmatprep.subr.bf16.mxu0 0
    %1978 = vmatpush1.bf16.msra.mxu0 0
    %1979 = vmatprep.subr.bf16.mxu0 0
    %1980 = vmatpush1.bf16.msra.mxu0 0
    %1981 = vmatprep.mubr.bf16.mxu0 0
    %1982 = vmatmul.mubr.bf16.gmra.mrb[0].mxu0 %v1947
    %v1983 = vpop.f32.mrb[0].mxu0
    %v1984 = vadd.f32 0.0, %v1983
    %v1985 = vpop.f32.mrb[0].mxu0
    %v1986 = vpop.f32.mrb[0].mxu0
    %v1987 = vpop.f32.mrb[0].mxu0
    %1988 = vdwg.mxu0
    %v1989 = vpack.c.bf16 %v1984, %v1984
    %s1990 = scalar_lea.vmem [#allocation13], 4
    %v1991 = vld [vmem:[%s1990] sm:$0x1]
    %v1993 = vsel %vm1800, %v1991, 0
    %1995 = vmatprep.subr.bf16.mxu0 0
    %1996 = vmatpush1.bf16.msra.mxu0 %v1809
    %1997 = vmatprep.subr.bf16.mxu0 0
    %1998 = vmatpush1.bf16.msra.mxu0 0
    %1999 = vmatprep.subr.bf16.mxu0 0
    %2000 = vmatpush1.bf16.msra.mxu0 0
    %2001 = vmatprep.subr.bf16.mxu0 0
    %2002 = vmatpush1.bf16.msra.mxu0 0
    %2003 = vmatprep.subr.bf16.mxu0 0
    %2004 = vmatpush1.bf16.msra.mxu0 0
    %2005 = vmatprep.subr.bf16.mxu0 0
    %2006 = vmatpush1.bf16.msra.mxu0 0
    %2007 = vmatprep.subr.bf16.mxu0 0
    %2008 = vmatpush1.bf16.msra.mxu0 0
    %2009 = vmatprep.subr.bf16.mxu0 0
    %2010 = vmatpush1.bf16.msra.mxu0 0
    %2011 = vmatprep.subr.bf16.mxu0 0
    %2012 = vmatpush1.bf16.msra.mxu0 0
    %2013 = vmatprep.subr.bf16.mxu0 0
    %2014 = vmatpush1.bf16.msra.mxu0 0
    %2015 = vmatprep.subr.bf16.mxu0 0
    %2016 = vmatpush1.bf16.msra.mxu0 0
    %2017 = vmatprep.subr.bf16.mxu0 0
    %2018 = vmatpush1.bf16.msra.mxu0 0
    %2019 = vmatprep.subr.bf16.mxu0 0
    %2020 = vmatpush1.bf16.msra.mxu0 0
    %2021 = vmatprep.subr.bf16.mxu0 0
    %2022 = vmatpush1.bf16.msra.mxu0 0
    %2023 = vmatprep.subr.bf16.mxu0 0
    %2024 = vmatpush1.bf16.msra.mxu0 0
    %2025 = vmatprep.subr.bf16.mxu0 0
    %2026 = vmatpush1.bf16.msra.mxu0 0
    %2027 = vmatprep.mubr.bf16.mxu0 0
    %2028 = vmatmul.mubr.bf16.gmra.mrb[0].mxu0 %v1993
    %v2029 = vpop.f32.mrb[0].mxu0
    %v2030 = vadd.f32 0.0, %v2029
    %v2031 = vpop.f32.mrb[0].mxu0
    %v2032 = vpop.f32.mrb[0].mxu0
    %v2033 = vpop.f32.mrb[0].mxu0
    %2034 = vdwg.mxu0
    %v2035 = vpack.c.bf16 %v2030, %v2030
    %s2036 = scalar_lea.vmem [#allocation13], 5
    %v2037 = vld [vmem:[%s2036] sm:$0x1]
    %v2039 = vsel %vm1800, %v2037, 0
    %2041 = vmatprep.subr.bf16.mxu0 0
    %2042 = vmatpush1.bf16.msra.mxu0 %v1809
    %2043 = vmatprep.subr.bf16.mxu0 0
    %2044 = vmatpush1.bf16.msra.mxu0 0
    %2045 = vmatprep.subr.bf16.mxu0 0
    %2046 = vmatpush1.bf16.msra.mxu0 0
    %2047 = vmatprep.subr.bf16.mxu0 0
    %2048 = vmatpush1.bf16.msra.mxu0 0
    %2049 = vmatprep.subr.bf16.mxu0 0
    %2050 = vmatpush1.bf16.msra.mxu0 0
    %2051 = vmatprep.subr.bf16.mxu0 0
    %2052 = vmatpush1.bf16.msra.mxu0 0
    %2053 = vmatprep.subr.bf16.mxu0 0
    %2054 = vmatpush1.bf16.msra.mxu0 0
    %2055 = vmatprep.subr.bf16.mxu0 0
    %2056 = vmatpush1.bf16.msra.mxu0 0
    %2057 = vmatprep.subr.bf16.mxu0 0
    %2058 = vmatpush1.bf16.msra.mxu0 0
    %2059 = vmatprep.subr.bf16.mxu0 0
    %2060 = vmatpush1.bf16.msra.mxu0 0
    %2061 = vmatprep.subr.bf16.mxu0 0
    %2062 = vmatpush1.bf16.msra.mxu0 0
    %2063 = vmatprep.subr.bf16.mxu0 0
    %2064 = vmatpush1.bf16.msra.mxu0 0
    %2065 = vmatprep.subr.bf16.mxu0 0
    %2066 = vmatpush1.bf16.msra.mxu0 0
    %2067 = vmatprep.subr.bf16.mxu0 0
    %2068 = vmatpush1.bf16.msra.mxu0 0
    %2069 = vmatprep.subr.bf16.mxu0 0
    %2070 = vmatpush1.bf16.msra.mxu0 0
    %2071 = vmatprep.subr.bf16.mxu0 0
    %2072 = vmatpush1.bf16.msra.mxu0 0
    %2073 = vmatprep.mubr.bf16.mxu0 0
    %2074 = vmatmul.mubr.bf16.gmra.mrb[0].mxu0 %v2039
    %v2075 = vpop.f32.mrb[0].mxu0
    %v2076 = vadd.f32 0.0, %v2075
    %v2077 = vpop.f32.mrb[0].mxu0
    %v2078 = vpop.f32.mrb[0].mxu0
    %v2079 = vpop.f32.mrb[0].mxu0
    %2080 = vdwg.mxu0
    %v2081 = vpack.c.bf16 %v2076, %v2076
    %s2082 = scalar_lea.vmem [#allocation13], 6
    %v2083 = vld [vmem:[%s2082] sm:$0x1]
    %v2085 = vsel %vm1800, %v2083, 0
    %2087 = vmatprep.subr.bf16.mxu0 0
    %2088 = vmatpush1.bf16.msra.mxu0 %v1809
    %2089 = vmatprep.subr.bf16.mxu0 0
    %2090 = vmatpush1.bf16.msra.mxu0 0
    %2091 = vmatprep.subr.bf16.mxu0 0
    %2092 = vmatpush1.bf16.msra.mxu0 0
    %2093 = vmatprep.subr.bf16.mxu0 0
    %2094 = vmatpush1.bf16.msra.mxu0 0
    %2095 = vmatprep.subr.bf16.mxu0 0
    %2096 = vmatpush1.bf16.msra.mxu0 0
    %2097 = vmatprep.subr.bf16.mxu0 0
    %2098 = vmatpush1.bf16.msra.mxu0 0
    %2099 = vmatprep.subr.bf16.mxu0 0
    %2100 = vmatpush1.bf16.msra.mxu0 0
    %2101 = vmatprep.subr.bf16.mxu0 0
    %2102 = vmatpush1.bf16.msra.mxu0 0
    %2103 = vmatprep.subr.bf16.mxu0 0
    %2104 = vmatpush1.bf16.msra.mxu0 0
    %2105 = vmatprep.subr.bf16.mxu0 0
    %2106 = vmatpush1.bf16.msra.mxu0 0
    %2107 = vmatprep.subr.bf16.mxu0 0
    %2108 = vmatpush1.bf16.msra.mxu0 0
    %2109 = vmatprep.subr.bf16.mxu0 0
    %2110 = vmatpush1.bf16.msra.mxu0 0
    %2111 = vmatprep.subr.bf16.mxu0 0
    %2112 = vmatpush1.bf16.msra.mxu0 0
    %2113 = vmatprep.subr.bf16.mxu0 0
    %2114 = vmatpush1.bf16.msra.mxu0 0
    %2115 = vmatprep.subr.bf16.mxu0 0
    %2116 = vmatpush1.bf16.msra.mxu0 0
    %2117 = vmatprep.subr.bf16.mxu0 0
    %2118 = vmatpush1.bf16.msra.mxu0 0
    %2119 = vmatprep.mubr.bf16.mxu0 0
    %2120 = vmatmul.mubr.bf16.gmra.mrb[0].mxu0 %v2085
    %v2121 = vpop.f32.mrb[0].mxu0
    %v2122 = vadd.f32 0.0, %v2121
    %v2123 = vpop.f32.mrb[0].mxu0
    %v2124 = vpop.f32.mrb[0].mxu0
    %v2125 = vpop.f32.mrb[0].mxu0
    %2126 = vdwg.mxu0
    %v2127 = vpack.c.bf16 %v2122, %v2122
    %s2128 = scalar_lea.vmem [#allocation13], 7
    %v2129 = vld [vmem:[%s2128] sm:$0x1]
    %v2131 = vsel %vm1800, %v2129, 0
    %2133 = vmatprep.subr.bf16.mxu0 0
    %2134 = vmatpush1.bf16.msra.mxu0 %v1809
    %2135 = vmatprep.subr.bf16.mxu0 0
    %2136 = vmatpush1.bf16.msra.mxu0 0
    %2137 = vmatprep.subr.bf16.mxu0 0
    %2138 = vmatpush1.bf16.msra.mxu0 0
    %2139 = vmatprep.subr.bf16.mxu0 0
    %2140 = vmatpush1.bf16.msra.mxu0 0
    %2141 = vmatprep.subr.bf16.mxu0 0
    %2142 = vmatpush1.bf16.msra.mxu0 0
    %2143 = vmatprep.subr.bf16.mxu0 0
    %2144 = vmatpush1.bf16.msra.mxu0 0
    %2145 = vmatprep.subr.bf16.mxu0 0
    %2146 = vmatpush1.bf16.msra.mxu0 0
    %2147 = vmatprep.subr.bf16.mxu0 0
    %2148 = vmatpush1.bf16.msra.mxu0 0
    %2149 = vmatprep.subr.bf16.mxu0 0
    %2150 = vmatpush1.bf16.msra.mxu0 0
    %2151 = vmatprep.subr.bf16.mxu0 0
    %2152 = vmatpush1.bf16.msra.mxu0 0
    %2153 = vmatprep.subr.bf16.mxu0 0
    %2154 = vmatpush1.bf16.msra.mxu0 0
    %2155 = vmatprep.subr.bf16.mxu0 0
    %2156 = vmatpush1.bf16.msra.mxu0 0
    %2157 = vmatprep.subr.bf16.mxu0 0
    %2158 = vmatpush1.bf16.msra.mxu0 0
    %2159 = vmatprep.subr.bf16.mxu0 0
    %2160 = vmatpush1.bf16.msra.mxu0 0
    %2161 = vmatprep.subr.bf16.mxu0 0
    %2162 = vmatpush1.bf16.msra.mxu0 0
    %2163 = vmatprep.subr.bf16.mxu0 0
    %2164 = vmatpush1.bf16.msra.mxu0 0
    %2165 = vmatprep.mubr.bf16.mxu0 0
    %2166 = vmatmul.mubr.bf16.gmra.mrb[0].mxu0 %v2131
    %v2167 = vpop.f32.mrb[0].mxu0
    %v2168 = vadd.f32 0.0, %v2167
    %v2169 = vpop.f32.mrb[0].mxu0
    %v2170 = vpop.f32.mrb[0].mxu0
    %v2171 = vpop.f32.mrb[0].mxu0
    %2172 = vdwg.mxu0
    %v2173 = vpack.c.bf16 %v2168, %v2168
    %s2174 = scalar_lea.vmem [#allocation13], 8
    %v2175 = vld [vmem:[%s2174] sm:$0x1]
    %v2177 = vsel %vm1800, %v2175, 0
    %2179 = vmatprep.subr.bf16.mxu0 0
    %2180 = vmatpush1.bf16.msra.mxu0 %v1809
    %2181 = vmatprep.subr.bf16.mxu0 0
    %2182 = vmatpush1.bf16.msra.mxu0 0
    %2183 = vmatprep.subr.bf16.mxu0 0
    %2184 = vmatpush1.bf16.msra.mxu0 0
    %2185 = vmatprep.subr.bf16.mxu0 0
    %2186 = vmatpush1.bf16.msra.mxu0 0
    %2187 = vmatprep.subr.bf16.mxu0 0
    %2188 = vmatpush1.bf16.msra.mxu0 0
    %2189 = vmatprep.subr.bf16.mxu0 0
    %2190 = vmatpush1.bf16.msra.mxu0 0
    %2191 = vmatprep.subr.bf16.mxu0 0
    %2192 = vmatpush1.bf16.msra.mxu0 0
    %2193 = vmatprep.subr.bf16.mxu0 0
    %2194 = vmatpush1.bf16.msra.mxu0 0
    %2195 = vmatprep.subr.bf16.mxu0 0
    %2196 = vmatpush1.bf16.msra.mxu0 0
    %2197 = vmatprep.subr.bf16.mxu0 0
    %2198 = vmatpush1.bf16.msra.mxu0 0
    %2199 = vmatprep.subr.bf16.mxu0 0
    %2200 = vmatpush1.bf16.msra.mxu0 0
    %2201 = vmatprep.subr.bf16.mxu0 0
    %2202 = vmatpush1.bf16.msra.mxu0 0
    %2203 = vmatprep.subr.bf16.mxu0 0
    %2204 = vmatpush1.bf16.msra.mxu0 0
    %2205 = vmatprep.subr.bf16.mxu0 0
    %2206 = vmatpush1.bf16.msra.mxu0 0
    %2207 = vmatprep.subr.bf16.mxu0 0
    %2208 = vmatpush1.bf16.msra.mxu0 0
    %2209 = vmatprep.subr.bf16.mxu0 0
    %2210 = vmatpush1.bf16.msra.mxu0 0
    %2211 = vmatprep.mubr.bf16.mxu0 0
    %2212 = vmatmul.mubr.bf16.gmra.mrb[0].mxu0 %v2177
    %v2213 = vpop.f32.mrb[0].mxu0
    %v2214 = vadd.f32 0.0, %v2213
    %v2215 = vpop.f32.mrb[0].mxu0
    %v2216 = vpop.f32.mrb[0].mxu0
    %v2217 = vpop.f32.mrb[0].mxu0
    %2218 = vdwg.mxu0
    %v2219 = vpack.c.bf16 %v2214, %v2214
    %2221 = vrot.lane.b32.xlu0 %v1897, 64
    %v2222 = vpop.permute.xlu0 %2221
    %2224 = vrot.lane.b32.xlu0 %v1989, 64
    %v2225 = vpop.permute.xlu0 %2224
    %2227 = vrot.lane.b32.xlu0 %v2081, 64
    %v2228 = vpop.permute.xlu0 %2227
    %2230 = vrot.lane.b32.xlu0 %v2173, 64
    %v2231 = vpop.permute.xlu0 %2230
    %v2234 = vsel %vm540, %v1851, %v2222
    %v2238 = vsel %vm540, %v1943, %v2225
    %v2242 = vsel %vm540, %v2035, %v2228
    %v2246 = vsel %vm540, %v2127, %v2231
    %v2248 = vld [vmem:[#allocation14] sm:$0xf]
    %v2249 = vld [vmem:[#allocation14 + $0x4] sm:$0xf]
    %v2250 = vld [vmem:[#allocation14 + $0x8] sm:$0xf]
    %v2251 = vld [vmem:[#allocation14 + $0xc] sm:$0xf]
    %v2252 = vld [vmem:[#allocation14 + $0x10] sm:$0xf]
    %v2253 = vld [vmem:[#allocation14 + $0x14] sm:$0xf]
    %v2254 = vld [vmem:[#allocation14 + $0x18] sm:$0xf]
    %v2255 = vld [vmem:[#allocation14 + $0x1c] sm:$0xf]
    %v2256 = vld [vmem:[#allocation14 + $0x20] sm:$0xf]
    %v2257 = vld [vmem:[#allocation14 + $0x24] sm:$0xf]
    %v2258 = vld [vmem:[#allocation14 + $0x28] sm:$0xf]
    %v2259 = vld [vmem:[#allocation14 + $0x2c] sm:$0xf]
    %v2260 = vld [vmem:[#allocation14 + $0x30] sm:$0xf]
    %v2261 = vld [vmem:[#allocation14 + $0x34] sm:$0xf]
    %v2262 = vld [vmem:[#allocation14 + $0x38] sm:$0xf]
    %v2263 = vld [vmem:[#allocation14 + $0x3c] sm:$0xf]
    %v2264 = vld [vmem:[#allocation14 + $0x40] sm:$0xf]
    %v2265 = vld [vmem:[#allocation14 + $0x44] sm:$0xf]
    %v2266 = vld [vmem:[#allocation14 + $0x48] sm:$0xf]
    %v2267 = vld [vmem:[#allocation14 + $0x4c] sm:$0xf]
    %v2268 = vld [vmem:[#allocation14 + $0x50] sm:$0xf]
    %v2269 = vld [vmem:[#allocation14 + $0x54] sm:$0xf]
    %v2270 = vld [vmem:[#allocation14 + $0x58] sm:$0xf]
    %v2271 = vld [vmem:[#allocation14 + $0x5c] sm:$0xf]
    %v2272 = vld [vmem:[#allocation14 + $0x60] sm:$0xf]
    %v2273 = vld [vmem:[#allocation14 + $0x64] sm:$0xf]
    %v2274 = vld [vmem:[#allocation14 + $0x68] sm:$0xf]
    %v2275 = vld [vmem:[#allocation14 + $0x6c] sm:$0xf]
    %v2276 = vld [vmem:[#allocation14 + $0x70] sm:$0xf]
    %v2277 = vld [vmem:[#allocation14 + $0x74] sm:$0xf]
    %v2278 = vld [vmem:[#allocation14 + $0x78] sm:$0xf]
    %v2279 = vld [vmem:[#allocation14 + $0x7c] sm:$0xf]
    %v2280 = vld [vmem:[#allocation14 + $0x80] sm:$0xf]
    %v2281 = vld [vmem:[#allocation14 + $0x84] sm:$0xf]
    %v2282 = vld [vmem:[#allocation14 + $0x88] sm:$0xf]
    %v2283 = vld [vmem:[#allocation14 + $0x8c] sm:$0xf]
    %v2284 = vld [vmem:[#allocation14 + $0x90] sm:$0xf]
    %v2285 = vld [vmem:[#allocation14 + $0x94] sm:$0xf]
    %v2286 = vld [vmem:[#allocation14 + $0x98] sm:$0xf]
    %v2287 = vld [vmem:[#allocation14 + $0x9c] sm:$0xf]
    %v2288 = vld [vmem:[#allocation14 + $0xa0] sm:$0xf]
    %v2289 = vld [vmem:[#allocation14 + $0xa4] sm:$0xf]
    %v2290 = vld [vmem:[#allocation14 + $0xa8] sm:$0xf]
    %v2291 = vld [vmem:[#allocation14 + $0xac] sm:$0xf]
    %v2292 = vld [vmem:[#allocation14 + $0xb0] sm:$0xf]
    %v2293 = vld [vmem:[#allocation14 + $0xb4] sm:$0xf]
    %v2294 = vld [vmem:[#allocation14 + $0xb8] sm:$0xf]
    %v2295 = vld [vmem:[#allocation14 + $0xbc] sm:$0xf]
    %v2296 = vld [vmem:[#allocation14 + $0xc0] sm:$0xf]
    %v2297 = vld [vmem:[#allocation14 + $0xc4] sm:$0xf]
    %v2298 = vld [vmem:[#allocation14 + $0xc8] sm:$0xf]
    %v2299 = vld [vmem:[#allocation14 + $0xcc] sm:$0xf]
    %v2300 = vld [vmem:[#allocation14 + $0xd0] sm:$0xf]
    %v2301 = vld [vmem:[#allocation14 + $0xd4] sm:$0xf]
    %v2302 = vld [vmem:[#allocation14 + $0xd8] sm:$0xf]
    %v2303 = vld [vmem:[#allocation14 + $0xdc] sm:$0xf]
    %v2304 = vld [vmem:[#allocation14 + $0xe0] sm:$0xf]
    %v2305 = vld [vmem:[#allocation14 + $0xe4] sm:$0xf]
    %v2306 = vld [vmem:[#allocation14 + $0xe8] sm:$0xf]
    %v2307 = vld [vmem:[#allocation14 + $0xec] sm:$0xf]
    %v2308 = vld [vmem:[#allocation14 + $0xf0] sm:$0xf]
    %v2309 = vld [vmem:[#allocation14 + $0xf4] sm:$0xf]
    %v2310 = vld [vmem:[#allocation14 + $0xf8] sm:$0xf]
    %v2311 = vld [vmem:[#allocation14 + $0xfc] sm:$0xf]
    %v2312 = vld [vmem:[#allocation14 + $0x100] sm:$0xf]
    %v2313 = vld [vmem:[#allocation14 + $0x104] sm:$0xf]
    %v2314 = vld [vmem:[#allocation14 + $0x108] sm:$0xf]
    %v2315 = vld [vmem:[#allocation14 + $0x10c] sm:$0xf]
    %v2316 = vld [vmem:[#allocation14 + $0x110] sm:$0xf]
    %v2317 = vld [vmem:[#allocation14 + $0x114] sm:$0xf]
    %v2318 = vld [vmem:[#allocation14 + $0x118] sm:$0xf]
    %v2319 = vld [vmem:[#allocation14 + $0x11c] sm:$0xf]
    %v2320 = vld [vmem:[#allocation16] sm:$0x1]
    %v2393 = vunpack.c.l.b16 %v2248
    %v2394 = vunpack.c.l.b16 %v2249
    %v2395 = vunpack.c.l.b16 %v2250
    %v2396 = vunpack.c.l.b16 %v2251
    %v2397 = vunpack.c.l.b16 %v2252
    %v2398 = vunpack.c.l.b16 %v2253
    %v2399 = vunpack.c.l.b16 %v2254
    %v2400 = vunpack.c.l.b16 %v2255
    %v2401 = vunpack.c.l.b16 %v2256
    %v2402 = vunpack.c.l.b16 %v2257
    %v2403 = vunpack.c.l.b16 %v2258
    %v2404 = vunpack.c.l.b16 %v2259
    %v2405 = vunpack.c.l.b16 %v2260
    %v2406 = vunpack.c.l.b16 %v2261
    %v2407 = vunpack.c.l.b16 %v2262
    %v2408 = vunpack.c.l.b16 %v2263
    %v2409 = vunpack.c.l.b16 %v2264
    %v2410 = vunpack.c.l.b16 %v2265
    %v2411 = vunpack.c.l.b16 %v2266
    %v2412 = vunpack.c.l.b16 %v2267
    %v2413 = vunpack.c.l.b16 %v2268
    %v2414 = vunpack.c.l.b16 %v2269
    %v2415 = vunpack.c.l.b16 %v2270
    %v2416 = vunpack.c.l.b16 %v2271
    %v2417 = vunpack.c.l.b16 %v2272
    %v2418 = vunpack.c.l.b16 %v2273
    %v2419 = vunpack.c.l.b16 %v2274
    %v2420 = vunpack.c.l.b16 %v2275
    %v2421 = vunpack.c.l.b16 %v2276
    %v2422 = vunpack.c.l.b16 %v2277
    %v2423 = vunpack.c.l.b16 %v2278
    %v2424 = vunpack.c.l.b16 %v2279
    %v2425 = vunpack.c.l.b16 %v2280
    %v2426 = vunpack.c.l.b16 %v2281
    %v2427 = vunpack.c.l.b16 %v2282
    %v2428 = vunpack.c.l.b16 %v2283
    %v2429 = vunpack.c.l.b16 %v2284
    %v2430 = vunpack.c.l.b16 %v2285
    %v2431 = vunpack.c.l.b16 %v2286
    %v2432 = vunpack.c.l.b16 %v2287
    %v2433 = vunpack.c.l.b16 %v2288
    %v2434 = vunpack.c.l.b16 %v2289
    %v2435 = vunpack.c.l.b16 %v2290
    %v2436 = vunpack.c.l.b16 %v2291
    %v2437 = vunpack.c.l.b16 %v2292
    %v2438 = vunpack.c.l.b16 %v2293
    %v2439 = vunpack.c.l.b16 %v2294
    %v2440 = vunpack.c.l.b16 %v2295
    %v2441 = vunpack.c.l.b16 %v2296
    %v2442 = vunpack.c.l.b16 %v2297
    %v2443 = vunpack.c.l.b16 %v2298
    %v2444 = vunpack.c.l.b16 %v2299
    %v2445 = vunpack.c.l.b16 %v2300
    %v2446 = vunpack.c.l.b16 %v2301
    %v2447 = vunpack.c.l.b16 %v2302
    %v2448 = vunpack.c.l.b16 %v2303
    %v2449 = vunpack.c.l.b16 %v2304
    %v2450 = vunpack.c.l.b16 %v2305
    %v2451 = vunpack.c.l.b16 %v2306
    %v2452 = vunpack.c.l.b16 %v2307
    %v2453 = vunpack.c.l.b16 %v2308
    %v2454 = vunpack.c.l.b16 %v2309
    %v2455 = vunpack.c.l.b16 %v2310
    %v2456 = vunpack.c.l.b16 %v2311
    %v2457 = vunpack.c.l.b16 %v2312
    %v2458 = vunpack.c.l.b16 %v2313
    %v2459 = vunpack.c.l.b16 %v2314
    %v2460 = vunpack.c.l.b16 %v2315
    %v2461 = vunpack.c.l.b16 %v2316
    %v2462 = vunpack.c.l.b16 %v2317
    %v2463 = vunpack.c.l.b16 %v2318
    %v2464 = vunpack.c.l.b16 %v2319
    %v2465 = vpack.c.b16 %v2394, %v2393
    %v2466 = vpack.c.b16 %v2396, %v2395
    %v2467 = vpack.c.b16 %v2398, %v2397
    %v2468 = vpack.c.b16 %v2400, %v2399
    %v2469 = vpack.c.b16 %v2402, %v2401
    %v2470 = vpack.c.b16 %v2404, %v2403
    %v2471 = vpack.c.b16 %v2406, %v2405
    %v2472 = vpack.c.b16 %v2408, %v2407
    %v2473 = vpack.c.b16 %v2410, %v2409
    %v2474 = vpack.c.b16 %v2412, %v2411
    %v2475 = vpack.c.b16 %v2414, %v2413
    %v2476 = vpack.c.b16 %v2416, %v2415
    %v2477 = vpack.c.b16 %v2418, %v2417
    %v2478 = vpack.c.b16 %v2420, %v2419
    %v2479 = vpack.c.b16 %v2422, %v2421
    %v2480 = vpack.c.b16 %v2424, %v2423
    %v2481 = vpack.c.b16 %v2426, %v2425
    %v2482 = vpack.c.b16 %v2428, %v2427
    %v2483 = vpack.c.b16 %v2430, %v2429
    %v2484 = vpack.c.b16 %v2432, %v2431
    %v2485 = vpack.c.b16 %v2434, %v2433
    %v2486 = vpack.c.b16 %v2436, %v2435
    %v2487 = vpack.c.b16 %v2438, %v2437
    %v2488 = vpack.c.b16 %v2440, %v2439
    %v2489 = vpack.c.b16 %v2442, %v2441
    %v2490 = vpack.c.b16 %v2444, %v2443
    %v2491 = vpack.c.b16 %v2446, %v2445
    %v2492 = vpack.c.b16 %v2448, %v2447
    %v2493 = vpack.c.b16 %v2450, %v2449
    %v2494 = vpack.c.b16 %v2452, %v2451
    %v2495 = vpack.c.b16 %v2454, %v2453
    %v2496 = vpack.c.b16 %v2456, %v2455
    %v2497 = vpack.c.b16 %v2458, %v2457
    %v2498 = vpack.c.b16 %v2460, %v2459
    %v2499 = vpack.c.b16 %v2462, %v2461
    %v2500 = vpack.c.b16 %v2464, %v2463
    %v2538 = vsel %vm540, %v2219, 0
    %2540 = vmatprep.subr.bf16.mxu0 0
    %2541 = vmatpush1.bf16.msra.mxu0 %v2465
    %2542 = vmatprep.subr.bf16.mxu0 0
    %2543 = vmatpush1.bf16.msra.mxu0 %v2466
    %2544 = vmatprep.subr.bf16.mxu0 0
    %2545 = vmatpush1.bf16.msra.mxu0 %v2467
    %2546 = vmatprep.subr.bf16.mxu0 0
    %2547 = vmatpush1.bf16.msra.mxu0 %v2468
    %2548 = vmatprep.subr.bf16.mxu0 0
    %2549 = vmatpush1.bf16.msra.mxu0 %v2469
    %2550 = vmatprep.subr.bf16.mxu0 0
    %2551 = vmatpush1.bf16.msra.mxu0 %v2470
    %2552 = vmatprep.subr.bf16.mxu0 0
    %2553 = vmatpush1.bf16.msra.mxu0 %v2471
    %2554 = vmatprep.subr.bf16.mxu0 0
    %2555 = vmatpush1.bf16.msra.mxu0 %v2472
    %2556 = vmatprep.subr.bf16.mxu0 0
    %2557 = vmatpush1.bf16.msra.mxu0 %v2473
    %2558 = vmatprep.subr.bf16.mxu0 0
    %2559 = vmatpush1.bf16.msra.mxu0 %v2474
    %2560 = vmatprep.subr.bf16.mxu0 0
    %2561 = vmatpush1.bf16.msra.mxu0 %v2475
    %2562 = vmatprep.subr.bf16.mxu0 0
    %2563 = vmatpush1.bf16.msra.mxu0 %v2476
    %2564 = vmatprep.subr.bf16.mxu0 0
    %2565 = vmatpush1.bf16.msra.mxu0 %v2477
    %2566 = vmatprep.subr.bf16.mxu0 0
    %2567 = vmatpush1.bf16.msra.mxu0 %v2478
    %2568 = vmatprep.subr.bf16.mxu0 0
    %2569 = vmatpush1.bf16.msra.mxu0 %v2479
    %2570 = vmatprep.subr.bf16.mxu0 0
    %2571 = vmatpush1.bf16.msra.mxu0 %v2480
    %2572 = vmatprep.mubr.bf16.mxu0 %v2238
    %2573 = vmatmul.mubr.bf16.gmra.mrb[0].mxu0 %v2234
    %v2574 = vpop.f32.mrb[0].mxu0
    %v2575 = vadd.f32 %v2320, %v2574
    %v2576 = vpop.f32.mrb[0].mxu0
    %v2577 = vpop.f32.mrb[0].mxu0
    %v2578 = vpop.f32.mrb[0].mxu0
    %2579 = vdwg.mxu0
    %2580 = vmatprep.subr.bf16.mxu0 0
    %2581 = vmatpush1.bf16.msra.mxu0 %v2481
    %2582 = vmatprep.subr.bf16.mxu0 0
    %2583 = vmatpush1.bf16.msra.mxu0 %v2482
    %2584 = vmatprep.subr.bf16.mxu0 0
    %2585 = vmatpush1.bf16.msra.mxu0 %v2483
    %2586 = vmatprep.subr.bf16.mxu0 0
    %2587 = vmatpush1.bf16.msra.mxu0 %v2484
    %2588 = vmatprep.subr.bf16.mxu0 0
    %2589 = vmatpush1.bf16.msra.mxu0 %v2485
    %2590 = vmatprep.subr.bf16.mxu0 0
    %2591 = vmatpush1.bf16.msra.mxu0 %v2486
    %2592 = vmatprep.subr.bf16.mxu0 0
    %2593 = vmatpush1.bf16.msra.mxu0 %v2487
    %2594 = vmatprep.subr.bf16.mxu0 0
    %2595 = vmatpush1.bf16.msra.mxu0 %v2488
    %2596 = vmatprep.subr.bf16.mxu0 0
    %2597 = vmatpush1.bf16.msra.mxu0 %v2489
    %2598 = vmatprep.subr.bf16.mxu0 0
    %2599 = vmatpush1.bf16.msra.mxu0 %v2490
    %2600 = vmatprep.subr.bf16.mxu0 0
    %2601 = vmatpush1.bf16.msra.mxu0 %v2491
    %2602 = vmatprep.subr.bf16.mxu0 0
    %2603 = vmatpush1.bf16.msra.mxu0 %v2492
    %2604 = vmatprep.subr.bf16.mxu0 0
    %2605 = vmatpush1.bf16.msra.mxu0 %v2493
    %2606 = vmatprep.subr.bf16.mxu0 0
    %2607 = vmatpush1.bf16.msra.mxu0 %v2494
    %2608 = vmatprep.subr.bf16.mxu0 0
    %2609 = vmatpush1.bf16.msra.mxu0 %v2495
    %2610 = vmatprep.subr.bf16.mxu0 0
    %2611 = vmatpush1.bf16.msra.mxu0 %v2496
    %2612 = vmatprep.mubr.bf16.mxu0 %v2246
    %2613 = vmatmul.mubr.bf16.gmra.mrb[0].mxu0 %v2242
    %v2614 = vpop.f32.mrb[0].mxu0
    %v2615 = vadd.f32 %v2575, %v2614
    %v2616 = vpop.f32.mrb[0].mxu0
    %v2617 = vpop.f32.mrb[0].mxu0
    %v2618 = vpop.f32.mrb[0].mxu0
    %2619 = vdwg.mxu0
    %2620 = vmatprep.subr.bf16.mxu0 0
    %2621 = vmatpush1.bf16.msra.mxu0 %v2497
    %2622 = vmatprep.subr.bf16.mxu0 0
    %2623 = vmatpush1.bf16.msra.mxu0 %v2498
    %2624 = vmatprep.subr.bf16.mxu0 0
    %2625 = vmatpush1.bf16.msra.mxu0 %v2499
    %2626 = vmatprep.subr.bf16.mxu0 0
    %2627 = vmatpush1.bf16.msra.mxu0 %v2500
    %2628 = vmatprep.subr.bf16.mxu0 0
    %2629 = vmatpush1.bf16.msra.mxu0 0
    %2630 = vmatprep.subr.bf16.mxu0 0
    %2631 = vmatpush1.bf16.msra.mxu0 0
    %2632 = vmatprep.subr.bf16.mxu0 0
    %2633 = vmatpush1.bf16.msra.mxu0 0
    %2634 = vmatprep.subr.bf16.mxu0 0
    %2635 = vmatpush1.bf16.msra.mxu0 0
    %2636 = vmatprep.subr.bf16.mxu0 0
    %2637 = vmatpush1.bf16.msra.mxu0 0
    %2638 = vmatprep.subr.bf16.mxu0 0
    %2639 = vmatpush1.bf16.msra.mxu0 0
    %2640 = vmatprep.subr.bf16.mxu0 0
    %2641 = vmatpush1.bf16.msra.mxu0 0
    %2642 = vmatprep.subr.bf16.mxu0 0
    %2643 = vmatpush1.bf16.msra.mxu0 0
    %2644 = vmatprep.subr.bf16.mxu0 0
    %2645 = vmatpush1.bf16.msra.mxu0 0
    %2646 = vmatprep.subr.bf16.mxu0 0
    %2647 = vmatpush1.bf16.msra.mxu0 0
    %2648 = vmatprep.subr.bf16.mxu0 0
    %2649 = vmatpush1.bf16.msra.mxu0 0
    %2650 = vmatprep.subr.bf16.mxu0 0
    %2651 = vmatpush1.bf16.msra.mxu0 0
    %2652 = vmatprep.mubr.bf16.mxu0 0
    %2653 = vmatmul.mubr.bf16.gmra.mrb[0].mxu0 %v2538
    %v2654 = vpop.f32.mrb[0].mxu0
    %v2655 = vadd.f32 %v2615, %v2654
    %v2656 = vpop.f32.mrb[0].mxu0
    %v2657 = vpop.f32.mrb[0].mxu0
    %v2658 = vpop.f32.mrb[0].mxu0
    %2659 = vdwg.mxu0
    %v2660 = vmax.f32 %v2655, 0.0
    %v2661 = vpack.c.bf16 %v2660, %v2660
    %2662 = vmatprep.subr.bf16.mxu0 0
    %2663 = vmatpush1.bf16.msra.mxu0 %v529
    %2664 = vmatprep.subr.bf16.mxu0 0
    %2665 = vmatpush1.bf16.msra.mxu0 %v530
    %2666 = vmatprep.subr.bf16.mxu0 0
    %2667 = vmatpush1.bf16.msra.mxu0 %v531
    %2668 = vmatprep.subr.bf16.mxu0 0
    %2669 = vmatpush1.bf16.msra.mxu0 %v532
    %2670 = vmatprep.subr.bf16.mxu0 0
    %2671 = vmatpush1.bf16.msra.mxu0 0
    %2672 = vmatprep.subr.bf16.mxu0 0
    %2673 = vmatpush1.bf16.msra.mxu0 0
    %2674 = vmatprep.subr.bf16.mxu0 0
    %2675 = vmatpush1.bf16.msra.mxu0 0
    %2676 = vmatprep.subr.bf16.mxu0 0
    %2677 = vmatpush1.bf16.msra.mxu0 0
    %2678 = vmatprep.subr.bf16.mxu0 0
    %2679 = vmatpush1.bf16.msra.mxu0 0
    %2680 = vmatprep.subr.bf16.mxu0 0
    %2681 = vmatpush1.bf16.msra.mxu0 0
    %2682 = vmatprep.subr.bf16.mxu0 0
    %2683 = vmatpush1.bf16.msra.mxu0 0
    %2684 = vmatprep.subr.bf16.mxu0 0
    %2685 = vmatpush1.bf16.msra.mxu0 0
    %2686 = vmatprep.subr.bf16.mxu0 0
    %2687 = vmatpush1.bf16.msra.mxu0 0
    %2688 = vmatprep.subr.bf16.mxu0 0
    %2689 = vmatpush1.bf16.msra.mxu0 0
    %2690 = vmatprep.subr.bf16.mxu0 0
    %2691 = vmatpush1.bf16.msra.mxu0 0
    %2692 = vmatprep.subr.bf16.mxu0 0
    %2693 = vmatpush1.bf16.msra.mxu0 0
    %2694 = vmatprep.mubr.bf16.mxu0 0
    %2695 = vmatmul.mubr.bf16.gmra.mrb[0].mxu0 %v542
    %v2696 = vpop.f32.mrb[0].mxu0
    %v2697 = vadd.f32 0.0, %v2696
    %v2698 = vpop.f32.mrb[0].mxu0
    %v2699 = vpop.f32.mrb[0].mxu0
    %v2700 = vadd.f32 0.0, %v2699
    %v2701 = vpop.f32.mrb[0].mxu0
    %2702 = vdwg.mxu0
    %v2703 = vpack.c.bf16 %v2700, %v2697
    %2704 = vmatprep.subr.bf16.mxu0 0
    %2705 = vmatpush1.bf16.msra.mxu0 %v529
    %2706 = vmatprep.subr.bf16.mxu0 0
    %2707 = vmatpush1.bf16.msra.mxu0 %v530
    %2708 = vmatprep.subr.bf16.mxu0 0
    %2709 = vmatpush1.bf16.msra.mxu0 %v531
    %2710 = vmatprep.subr.bf16.mxu0 0
    %2711 = vmatpush1.bf16.msra.mxu0 %v532
    %2712 = vmatprep.subr.bf16.mxu0 0
    %2713 = vmatpush1.bf16.msra.mxu0 0
    %2714 = vmatprep.subr.bf16.mxu0 0
    %2715 = vmatpush1.bf16.msra.mxu0 0
    %2716 = vmatprep.subr.bf16.mxu0 0
    %2717 = vmatpush1.bf16.msra.mxu0 0
    %2718 = vmatprep.subr.bf16.mxu0 0
    %2719 = vmatpush1.bf16.msra.mxu0 0
    %2720 = vmatprep.subr.bf16.mxu0 0
    %2721 = vmatpush1.bf16.msra.mxu0 0
    %2722 = vmatprep.subr.bf16.mxu0 0
    %2723 = vmatpush1.bf16.msra.mxu0 0
    %2724 = vmatprep.subr.bf16.mxu0 0
    %2725 = vmatpush1.bf16.msra.mxu0 0
    %2726 = vmatprep.subr.bf16.mxu0 0
    %2727 = vmatpush1.bf16.msra.mxu0 0
    %2728 = vmatprep.subr.bf16.mxu0 0
    %2729 = vmatpush1.bf16.msra.mxu0 0
    %2730 = vmatprep.subr.bf16.mxu0 0
    %2731 = vmatpush1.bf16.msra.mxu0 0
    %2732 = vmatprep.subr.bf16.mxu0 0
    %2733 = vmatpush1.bf16.msra.mxu0 0
    %2734 = vmatprep.subr.bf16.mxu0 0
    %2735 = vmatpush1.bf16.msra.mxu0 0
    %2736 = vmatprep.mubr.bf16.mxu0 0
    %2737 = vmatmul.mubr.bf16.gmra.mrb[0].mxu0 %v595
    %v2738 = vpop.f32.mrb[0].mxu0
    %v2739 = vadd.f32 0.0, %v2738
    %v2740 = vpop.f32.mrb[0].mxu0
    %v2741 = vpop.f32.mrb[0].mxu0
    %v2742 = vadd.f32 0.0, %v2741
    %v2743 = vpop.f32.mrb[0].mxu0
    %2744 = vdwg.mxu0
    %v2745 = vpack.c.bf16 %v2742, %v2739
    %2746 = vmatprep.subr.bf16.mxu0 0
    %2747 = vmatpush1.bf16.msra.mxu0 %v529
    %2748 = vmatprep.subr.bf16.mxu0 0
    %2749 = vmatpush1.bf16.msra.mxu0 %v530
    %2750 = vmatprep.subr.bf16.mxu0 0
    %2751 = vmatpush1.bf16.msra.mxu0 %v531
    %2752 = vmatprep.subr.bf16.mxu0 0
    %2753 = vmatpush1.bf16.msra.mxu0 %v532
    %2754 = vmatprep.subr.bf16.mxu0 0
    %2755 = vmatpush1.bf16.msra.mxu0 0
    %2756 = vmatprep.subr.bf16.mxu0 0
    %2757 = vmatpush1.bf16.msra.mxu0 0
    %2758 = vmatprep.subr.bf16.mxu0 0
    %2759 = vmatpush1.bf16.msra.mxu0 0
    %2760 = vmatprep.subr.bf16.mxu0 0
    %2761 = vmatpush1.bf16.msra.mxu0 0
    %2762 = vmatprep.subr.bf16.mxu0 0
    %2763 = vmatpush1.bf16.msra.mxu0 0
    %2764 = vmatprep.subr.bf16.mxu0 0
    %2765 = vmatpush1.bf16.msra.mxu0 0
    %2766 = vmatprep.subr.bf16.mxu0 0
    %2767 = vmatpush1.bf16.msra.mxu0 0
    %2768 = vmatprep.subr.bf16.mxu0 0
    %2769 = vmatpush1.bf16.msra.mxu0 0
    %2770 = vmatprep.subr.bf16.mxu0 0
    %2771 = vmatpush1.bf16.msra.mxu0 0
    %2772 = vmatprep.subr.bf16.mxu0 0
    %2773 = vmatpush1.bf16.msra.mxu0 0
    %2774 = vmatprep.subr.bf16.mxu0 0
    %2775 = vmatpush1.bf16.msra.mxu0 0
    %2776 = vmatprep.subr.bf16.mxu0 0
    %2777 = vmatpush1.bf16.msra.mxu0 0
    %2778 = vmatprep.mubr.bf16.mxu0 0
    %2779 = vmatmul.mubr.bf16.gmra.mrb[0].mxu0 %v648
    %v2780 = vpop.f32.mrb[0].mxu0
    %v2781 = vadd.f32 0.0, %v2780
    %v2782 = vpop.f32.mrb[0].mxu0
    %v2783 = vpop.f32.mrb[0].mxu0
    %v2784 = vadd.f32 0.0, %v2783
    %v2785 = vpop.f32.mrb[0].mxu0
    %2786 = vdwg.mxu0
    %v2787 = vpack.c.bf16 %v2784, %v2781
    %2788 = vmatprep.subr.bf16.mxu0 0
    %2789 = vmatpush1.bf16.msra.mxu0 %v529
    %2790 = vmatprep.subr.bf16.mxu0 0
    %2791 = vmatpush1.bf16.msra.mxu0 %v530
    %2792 = vmatprep.subr.bf16.mxu0 0
    %2793 = vmatpush1.bf16.msra.mxu0 %v531
    %2794 = vmatprep.subr.bf16.mxu0 0
    %2795 = vmatpush1.bf16.msra.mxu0 %v532
    %2796 = vmatprep.subr.bf16.mxu0 0
    %2797 = vmatpush1.bf16.msra.mxu0 0
    %2798 = vmatprep.subr.bf16.mxu0 0
    %2799 = vmatpush1.bf16.msra.mxu0 0
    %2800 = vmatprep.subr.bf16.mxu0 0
    %2801 = vmatpush1.bf16.msra.mxu0 0
    %2802 = vmatprep.subr.bf16.mxu0 0
    %2803 = vmatpush1.bf16.msra.mxu0 0
    %2804 = vmatprep.subr.bf16.mxu0 0
    %2805 = vmatpush1.bf16.msra.mxu0 0
    %2806 = vmatprep.subr.bf16.mxu0 0
    %2807 = vmatpush1.bf16.msra.mxu0 0
    %2808 = vmatprep.subr.bf16.mxu0 0
    %2809 = vmatpush1.bf16.msra.mxu0 0
    %2810 = vmatprep.subr.bf16.mxu0 0
    %2811 = vmatpush1.bf16.msra.mxu0 0
    %2812 = vmatprep.subr.bf16.mxu0 0
    %2813 = vmatpush1.bf16.msra.mxu0 0
    %2814 = vmatprep.subr.bf16.mxu0 0
    %2815 = vmatpush1.bf16.msra.mxu0 0
    %2816 = vmatprep.subr.bf16.mxu0 0
    %2817 = vmatpush1.bf16.msra.mxu0 0
    %2818 = vmatprep.subr.bf16.mxu0 0
    %2819 = vmatpush1.bf16.msra.mxu0 0
    %2820 = vmatprep.mubr.bf16.mxu0 0
    %2821 = vmatmul.mubr.bf16.gmra.mrb[0].mxu0 %v701
    %v2822 = vpop.f32.mrb[0].mxu0
    %v2823 = vadd.f32 0.0, %v2822
    %v2824 = vpop.f32.mrb[0].mxu0
    %v2825 = vpop.f32.mrb[0].mxu0
    %v2826 = vadd.f32 0.0, %v2825
    %v2827 = vpop.f32.mrb[0].mxu0
    %2828 = vdwg.mxu0
    %v2829 = vpack.c.bf16 %v2826, %v2823
    %2830 = vmatprep.subr.bf16.mxu0 0
    %2831 = vmatpush1.bf16.msra.mxu0 %v529
    %2832 = vmatprep.subr.bf16.mxu0 0
    %2833 = vmatpush1.bf16.msra.mxu0 %v530
    %2834 = vmatprep.subr.bf16.mxu0 0
    %2835 = vmatpush1.bf16.msra.mxu0 %v531
    %2836 = vmatprep.subr.bf16.mxu0 0
    %2837 = vmatpush1.bf16.msra.mxu0 %v532
    %2838 = vmatprep.subr.bf16.mxu0 0
    %2839 = vmatpush1.bf16.msra.mxu0 0
    %2840 = vmatprep.subr.bf16.mxu0 0
    %2841 = vmatpush1.bf16.msra.mxu0 0
    %2842 = vmatprep.subr.bf16.mxu0 0
    %2843 = vmatpush1.bf16.msra.mxu0 0
    %2844 = vmatprep.subr.bf16.mxu0 0
    %2845 = vmatpush1.bf16.msra.mxu0 0
    %2846 = vmatprep.subr.bf16.mxu0 0
    %2847 = vmatpush1.bf16.msra.mxu0 0
    %2848 = vmatprep.subr.bf16.mxu0 0
    %2849 = vmatpush1.bf16.msra.mxu0 0
    %2850 = vmatprep.subr.bf16.mxu0 0
    %2851 = vmatpush1.bf16.msra.mxu0 0
    %2852 = vmatprep.subr.bf16.mxu0 0
    %2853 = vmatpush1.bf16.msra.mxu0 0
    %2854 = vmatprep.subr.bf16.mxu0 0
    %2855 = vmatpush1.bf16.msra.mxu0 0
    %2856 = vmatprep.subr.bf16.mxu0 0
    %2857 = vmatpush1.bf16.msra.mxu0 0
    %2858 = vmatprep.subr.bf16.mxu0 0
    %2859 = vmatpush1.bf16.msra.mxu0 0
    %2860 = vmatprep.subr.bf16.mxu0 0
    %2861 = vmatpush1.bf16.msra.mxu0 0
    %2862 = vmatprep.mubr.bf16.mxu0 0
    %2863 = vmatmul.mubr.bf16.gmra.mrb[0].mxu0 %v754
    %v2864 = vpop.f32.mrb[0].mxu0
    %v2865 = vadd.f32 0.0, %v2864
    %v2866 = vpop.f32.mrb[0].mxu0
    %v2867 = vpop.f32.mrb[0].mxu0
    %v2868 = vadd.f32 0.0, %v2867
    %v2869 = vpop.f32.mrb[0].mxu0
    %2870 = vdwg.mxu0
    %v2871 = vpack.c.bf16 %v2868, %v2865
    %2872 = vmatprep.subr.bf16.mxu0 0
    %2873 = vmatpush1.bf16.msra.mxu0 %v529
    %2874 = vmatprep.subr.bf16.mxu0 0
    %2875 = vmatpush1.bf16.msra.mxu0 %v530
    %2876 = vmatprep.subr.bf16.mxu0 0
    %2877 = vmatpush1.bf16.msra.mxu0 %v531
    %2878 = vmatprep.subr.bf16.mxu0 0
    %2879 = vmatpush1.bf16.msra.mxu0 %v532
    %2880 = vmatprep.subr.bf16.mxu0 0
    %2881 = vmatpush1.bf16.msra.mxu0 0
    %2882 = vmatprep.subr.bf16.mxu0 0
    %2883 = vmatpush1.bf16.msra.mxu0 0
    %2884 = vmatprep.subr.bf16.mxu0 0
    %2885 = vmatpush1.bf16.msra.mxu0 0
    %2886 = vmatprep.subr.bf16.mxu0 0
    %2887 = vmatpush1.bf16.msra.mxu0 0
    %2888 = vmatprep.subr.bf16.mxu0 0
    %2889 = vmatpush1.bf16.msra.mxu0 0
    %2890 = vmatprep.subr.bf16.mxu0 0
    %2891 = vmatpush1.bf16.msra.mxu0 0
    %2892 = vmatprep.subr.bf16.mxu0 0
    %2893 = vmatpush1.bf16.msra.mxu0 0
    %2894 = vmatprep.subr.bf16.mxu0 0
    %2895 = vmatpush1.bf16.msra.mxu0 0
    %2896 = vmatprep.subr.bf16.mxu0 0
    %2897 = vmatpush1.bf16.msra.mxu0 0
    %2898 = vmatprep.subr.bf16.mxu0 0
    %2899 = vmatpush1.bf16.msra.mxu0 0
    %2900 = vmatprep.subr.bf16.mxu0 0
    %2901 = vmatpush1.bf16.msra.mxu0 0
    %2902 = vmatprep.subr.bf16.mxu0 0
    %2903 = vmatpush1.bf16.msra.mxu0 0
    %2904 = vmatprep.mubr.bf16.mxu0 0
    %2905 = vmatmul.mubr.bf16.gmra.mrb[0].mxu0 %v807
    %v2906 = vpop.f32.mrb[0].mxu0
    %v2907 = vadd.f32 0.0, %v2906
    %v2908 = vpop.f32.mrb[0].mxu0
    %v2909 = vpop.f32.mrb[0].mxu0
    %v2910 = vadd.f32 0.0, %v2909
    %v2911 = vpop.f32.mrb[0].mxu0
    %2912 = vdwg.mxu0
    %v2913 = vpack.c.bf16 %v2910, %v2907
    %2914 = vmatprep.subr.bf16.mxu0 0
    %2915 = vmatpush1.bf16.msra.mxu0 %v529
    %2916 = vmatprep.subr.bf16.mxu0 0
    %2917 = vmatpush1.bf16.msra.mxu0 %v530
    %2918 = vmatprep.subr.bf16.mxu0 0
    %2919 = vmatpush1.bf16.msra.mxu0 %v531
    %2920 = vmatprep.subr.bf16.mxu0 0
    %2921 = vmatpush1.bf16.msra.mxu0 %v532
    %2922 = vmatprep.subr.bf16.mxu0 0
    %2923 = vmatpush1.bf16.msra.mxu0 0
    %2924 = vmatprep.subr.bf16.mxu0 0
    %2925 = vmatpush1.bf16.msra.mxu0 0
    %2926 = vmatprep.subr.bf16.mxu0 0
    %2927 = vmatpush1.bf16.msra.mxu0 0
    %2928 = vmatprep.subr.bf16.mxu0 0
    %2929 = vmatpush1.bf16.msra.mxu0 0
    %2930 = vmatprep.subr.bf16.mxu0 0
    %2931 = vmatpush1.bf16.msra.mxu0 0
    %2932 = vmatprep.subr.bf16.mxu0 0
    %2933 = vmatpush1.bf16.msra.mxu0 0
    %2934 = vmatprep.subr.bf16.mxu0 0
    %2935 = vmatpush1.bf16.msra.mxu0 0
    %2936 = vmatprep.subr.bf16.mxu0 0
    %2937 = vmatpush1.bf16.msra.mxu0 0
    %2938 = vmatprep.subr.bf16.mxu0 0
    %2939 = vmatpush1.bf16.msra.mxu0 0
    %2940 = vmatprep.subr.bf16.mxu0 0
    %2941 = vmatpush1.bf16.msra.mxu0 0
    %2942 = vmatprep.subr.bf16.mxu0 0
    %2943 = vmatpush1.bf16.msra.mxu0 0
    %2944 = vmatprep.subr.bf16.mxu0 0
    %2945 = vmatpush1.bf16.msra.mxu0 0
    %2946 = vmatprep.mubr.bf16.mxu0 0
    %2947 = vmatmul.mubr.bf16.gmra.mrb[0].mxu0 %v860
    %v2948 = vpop.f32.mrb[0].mxu0
    %v2949 = vadd.f32 0.0, %v2948
    %v2950 = vpop.f32.mrb[0].mxu0
    %v2951 = vpop.f32.mrb[0].mxu0
    %v2952 = vadd.f32 0.0, %v2951
    %v2953 = vpop.f32.mrb[0].mxu0
    %2954 = vdwg.mxu0
    %v2955 = vpack.c.bf16 %v2952, %v2949
    %2956 = vmatprep.subr.bf16.mxu0 0
    %2957 = vmatpush1.bf16.msra.mxu0 %v529
    %2958 = vmatprep.subr.bf16.mxu0 0
    %2959 = vmatpush1.bf16.msra.mxu0 %v530
    %2960 = vmatprep.subr.bf16.mxu0 0
    %2961 = vmatpush1.bf16.msra.mxu0 %v531
    %2962 = vmatprep.subr.bf16.mxu0 0
    %2963 = vmatpush1.bf16.msra.mxu0 %v532
    %2964 = vmatprep.subr.bf16.mxu0 0
    %2965 = vmatpush1.bf16.msra.mxu0 0
    %2966 = vmatprep.subr.bf16.mxu0 0
    %2967 = vmatpush1.bf16.msra.mxu0 0
    %2968 = vmatprep.subr.bf16.mxu0 0
    %2969 = vmatpush1.bf16.msra.mxu0 0
    %2970 = vmatprep.subr.bf16.mxu0 0
    %2971 = vmatpush1.bf16.msra.mxu0 0
    %2972 = vmatprep.subr.bf16.mxu0 0
    %2973 = vmatpush1.bf16.msra.mxu0 0
    %2974 = vmatprep.subr.bf16.mxu0 0
    %2975 = vmatpush1.bf16.msra.mxu0 0
    %2976 = vmatprep.subr.bf16.mxu0 0
    %2977 = vmatpush1.bf16.msra.mxu0 0
    %2978 = vmatprep.subr.bf16.mxu0 0
    %2979 = vmatpush1.bf16.msra.mxu0 0
    %2980 = vmatprep.subr.bf16.mxu0 0
    %2981 = vmatpush1.bf16.msra.mxu0 0
    %2982 = vmatprep.subr.bf16.mxu0 0
    %2983 = vmatpush1.bf16.msra.mxu0 0
    %2984 = vmatprep.subr.bf16.mxu0 0
    %2985 = vmatpush1.bf16.msra.mxu0 0
    %2986 = vmatprep.subr.bf16.mxu0 0
    %2987 = vmatpush1.bf16.msra.mxu0 0
    %2988 = vmatprep.mubr.bf16.mxu0 0
    %2989 = vmatmul.mubr.bf16.gmra.mrb[0].mxu0 %v913
    %v2990 = vpop.f32.mrb[0].mxu0
    %v2991 = vadd.f32 0.0, %v2990
    %v2992 = vpop.f32.mrb[0].mxu0
    %v2993 = vpop.f32.mrb[0].mxu0
    %v2994 = vadd.f32 0.0, %v2993
    %v2995 = vpop.f32.mrb[0].mxu0
    %2996 = vdwg.mxu0
    %v2997 = vpack.c.bf16 %v2994, %v2991
    %2998 = vmatprep.subr.bf16.mxu0 0
    %2999 = vmatpush1.bf16.msra.mxu0 %v529
    %3000 = vmatprep.subr.bf16.mxu0 0
    %3001 = vmatpush1.bf16.msra.mxu0 %v530
    %3002 = vmatprep.subr.bf16.mxu0 0
    %3003 = vmatpush1.bf16.msra.mxu0 %v531
    %3004 = vmatprep.subr.bf16.mxu0 0
    %3005 = vmatpush1.bf16.msra.mxu0 %v532
    %3006 = vmatprep.subr.bf16.mxu0 0
    %3007 = vmatpush1.bf16.msra.mxu0 0
    %3008 = vmatprep.subr.bf16.mxu0 0
    %3009 = vmatpush1.bf16.msra.mxu0 0
    %3010 = vmatprep.subr.bf16.mxu0 0
    %3011 = vmatpush1.bf16.msra.mxu0 0
    %3012 = vmatprep.subr.bf16.mxu0 0
    %3013 = vmatpush1.bf16.msra.mxu0 0
    %3014 = vmatprep.subr.bf16.mxu0 0
    %3015 = vmatpush1.bf16.msra.mxu0 0
    %3016 = vmatprep.subr.bf16.mxu0 0
    %3017 = vmatpush1.bf16.msra.mxu0 0
    %3018 = vmatprep.subr.bf16.mxu0 0
    %3019 = vmatpush1.bf16.msra.mxu0 0
    %3020 = vmatprep.subr.bf16.mxu0 0
    %3021 = vmatpush1.bf16.msra.mxu0 0
    %3022 = vmatprep.subr.bf16.mxu0 0
    %3023 = vmatpush1.bf16.msra.mxu0 0
    %3024 = vmatprep.subr.bf16.mxu0 0
    %3025 = vmatpush1.bf16.msra.mxu0 0
    %3026 = vmatprep.subr.bf16.mxu0 0
    %3027 = vmatpush1.bf16.msra.mxu0 0
    %3028 = vmatprep.subr.bf16.mxu0 0
    %3029 = vmatpush1.bf16.msra.mxu0 0
    %3030 = vmatprep.mubr.bf16.mxu0 0
    %3031 = vmatmul.mubr.bf16.gmra.mrb[0].mxu0 %v966
    %v3032 = vpop.f32.mrb[0].mxu0
    %v3033 = vadd.f32 0.0, %v3032
    %v3034 = vpop.f32.mrb[0].mxu0
    %v3035 = vpop.f32.mrb[0].mxu0
    %v3036 = vadd.f32 0.0, %v3035
    %v3037 = vpop.f32.mrb[0].mxu0
    %3038 = vdwg.mxu0
    %v3039 = vpack.c.bf16 %v3036, %v3033
    %3040 = vmatprep.subr.bf16.mxu0 0
    %3041 = vmatpush1.bf16.msra.mxu0 %v529
    %3042 = vmatprep.subr.bf16.mxu0 0
    %3043 = vmatpush1.bf16.msra.mxu0 %v530
    %3044 = vmatprep.subr.bf16.mxu0 0
    %3045 = vmatpush1.bf16.msra.mxu0 %v531
    %3046 = vmatprep.subr.bf16.mxu0 0
    %3047 = vmatpush1.bf16.msra.mxu0 %v532
    %3048 = vmatprep.subr.bf16.mxu0 0
    %3049 = vmatpush1.bf16.msra.mxu0 0
    %3050 = vmatprep.subr.bf16.mxu0 0
    %3051 = vmatpush1.bf16.msra.mxu0 0
    %3052 = vmatprep.subr.bf16.mxu0 0
    %3053 = vmatpush1.bf16.msra.mxu0 0
    %3054 = vmatprep.subr.bf16.mxu0 0
    %3055 = vmatpush1.bf16.msra.mxu0 0
    %3056 = vmatprep.subr.bf16.mxu0 0
    %3057 = vmatpush1.bf16.msra.mxu0 0
    %3058 = vmatprep.subr.bf16.mxu0 0
    %3059 = vmatpush1.bf16.msra.mxu0 0
    %3060 = vmatprep.subr.bf16.mxu0 0
    %3061 = vmatpush1.bf16.msra.mxu0 0
    %3062 = vmatprep.subr.bf16.mxu0 0
    %3063 = vmatpush1.bf16.msra.mxu0 0
    %3064 = vmatprep.subr.bf16.mxu0 0
    %3065 = vmatpush1.bf16.msra.mxu0 0
    %3066 = vmatprep.subr.bf16.mxu0 0
    %3067 = vmatpush1.bf16.msra.mxu0 0
    %3068 = vmatprep.subr.bf16.mxu0 0
    %3069 = vmatpush1.bf16.msra.mxu0 0
    %3070 = vmatprep.subr.bf16.mxu0 0
    %3071 = vmatpush1.bf16.msra.mxu0 0
    %3072 = vmatprep.mubr.bf16.mxu0 0
    %3073 = vmatmul.mubr.bf16.gmra.mrb[0].mxu0 %v1019
    %v3074 = vpop.f32.mrb[0].mxu0
    %v3075 = vadd.f32 0.0, %v3074
    %v3076 = vpop.f32.mrb[0].mxu0
    %v3077 = vpop.f32.mrb[0].mxu0
    %v3078 = vadd.f32 0.0, %v3077
    %v3079 = vpop.f32.mrb[0].mxu0
    %3080 = vdwg.mxu0
    %v3081 = vpack.c.bf16 %v3078, %v3075
    %3082 = vmatprep.subr.bf16.mxu0 0
    %3083 = vmatpush1.bf16.msra.mxu0 %v529
    %3084 = vmatprep.subr.bf16.mxu0 0
    %3085 = vmatpush1.bf16.msra.mxu0 %v530
    %3086 = vmatprep.subr.bf16.mxu0 0
    %3087 = vmatpush1.bf16.msra.mxu0 %v531
    %3088 = vmatprep.subr.bf16.mxu0 0
    %3089 = vmatpush1.bf16.msra.mxu0 %v532
    %3090 = vmatprep.subr.bf16.mxu0 0
    %3091 = vmatpush1.bf16.msra.mxu0 0
    %3092 = vmatprep.subr.bf16.mxu0 0
    %3093 = vmatpush1.bf16.msra.mxu0 0
    %3094 = vmatprep.subr.bf16.mxu0 0
    %3095 = vmatpush1.bf16.msra.mxu0 0
    %3096 = vmatprep.subr.bf16.mxu0 0
    %3097 = vmatpush1.bf16.msra.mxu0 0
    %3098 = vmatprep.subr.bf16.mxu0 0
    %3099 = vmatpush1.bf16.msra.mxu0 0
    %3100 = vmatprep.subr.bf16.mxu0 0
    %3101 = vmatpush1.bf16.msra.mxu0 0
    %3102 = vmatprep.subr.bf16.mxu0 0
    %3103 = vmatpush1.bf16.msra.mxu0 0
    %3104 = vmatprep.subr.bf16.mxu0 0
    %3105 = vmatpush1.bf16.msra.mxu0 0
    %3106 = vmatprep.subr.bf16.mxu0 0
    %3107 = vmatpush1.bf16.msra.mxu0 0
    %3108 = vmatprep.subr.bf16.mxu0 0
    %3109 = vmatpush1.bf16.msra.mxu0 0
    %3110 = vmatprep.subr.bf16.mxu0 0
    %3111 = vmatpush1.bf16.msra.mxu0 0
    %3112 = vmatprep.subr.bf16.mxu0 0
    %3113 = vmatpush1.bf16.msra.mxu0 0
    %3114 = vmatprep.mubr.bf16.mxu0 0
    %3115 = vmatmul.mubr.bf16.gmra.mrb[0].mxu0 %v1072
    %v3116 = vpop.f32.mrb[0].mxu0
    %v3117 = vadd.f32 0.0, %v3116
    %v3118 = vpop.f32.mrb[0].mxu0
    %v3119 = vpop.f32.mrb[0].mxu0
    %v3120 = vadd.f32 0.0, %v3119
    %v3121 = vpop.f32.mrb[0].mxu0
    %3122 = vdwg.mxu0
    %v3123 = vpack.c.bf16 %v3120, %v3117
    %3124 = vmatprep.subr.bf16.mxu0 0
    %3125 = vmatpush1.bf16.msra.mxu0 %v529
    %3126 = vmatprep.subr.bf16.mxu0 0
    %3127 = vmatpush1.bf16.msra.mxu0 %v530
    %3128 = vmatprep.subr.bf16.mxu0 0
    %3129 = vmatpush1.bf16.msra.mxu0 %v531
    %3130 = vmatprep.subr.bf16.mxu0 0
    %3131 = vmatpush1.bf16.msra.mxu0 %v532
    %3132 = vmatprep.subr.bf16.mxu0 0
    %3133 = vmatpush1.bf16.msra.mxu0 0
    %3134 = vmatprep.subr.bf16.mxu0 0
    %3135 = vmatpush1.bf16.msra.mxu0 0
    %3136 = vmatprep.subr.bf16.mxu0 0
    %3137 = vmatpush1.bf16.msra.mxu0 0
    %3138 = vmatprep.subr.bf16.mxu0 0
    %3139 = vmatpush1.bf16.msra.mxu0 0
    %3140 = vmatprep.subr.bf16.mxu0 0
    %3141 = vmatpush1.bf16.msra.mxu0 0
    %3142 = vmatprep.subr.bf16.mxu0 0
    %3143 = vmatpush1.bf16.msra.mxu0 0
    %3144 = vmatprep.subr.bf16.mxu0 0
    %3145 = vmatpush1.bf16.msra.mxu0 0
    %3146 = vmatprep.subr.bf16.mxu0 0
    %3147 = vmatpush1.bf16.msra.mxu0 0
    %3148 = vmatprep.subr.bf16.mxu0 0
    %3149 = vmatpush1.bf16.msra.mxu0 0
    %3150 = vmatprep.subr.bf16.mxu0 0
    %3151 = vmatpush1.bf16.msra.mxu0 0
    %3152 = vmatprep.subr.bf16.mxu0 0
    %3153 = vmatpush1.bf16.msra.mxu0 0
    %3154 = vmatprep.subr.bf16.mxu0 0
    %3155 = vmatpush1.bf16.msra.mxu0 0
    %3156 = vmatprep.mubr.bf16.mxu0 0
    %3157 = vmatmul.mubr.bf16.gmra.mrb[0].mxu0 %v1125
    %v3158 = vpop.f32.mrb[0].mxu0
    %v3159 = vadd.f32 0.0, %v3158
    %v3160 = vpop.f32.mrb[0].mxu0
    %v3161 = vpop.f32.mrb[0].mxu0
    %v3162 = vadd.f32 0.0, %v3161
    %v3163 = vpop.f32.mrb[0].mxu0
    %3164 = vdwg.mxu0
    %v3165 = vpack.c.bf16 %v3162, %v3159
    %3166 = vmatprep.subr.bf16.mxu0 0
    %3167 = vmatpush1.bf16.msra.mxu0 %v529
    %3168 = vmatprep.subr.bf16.mxu0 0
    %3169 = vmatpush1.bf16.msra.mxu0 %v530
    %3170 = vmatprep.subr.bf16.mxu0 0
    %3171 = vmatpush1.bf16.msra.mxu0 %v531
    %3172 = vmatprep.subr.bf16.mxu0 0
    %3173 = vmatpush1.bf16.msra.mxu0 %v532
    %3174 = vmatprep.subr.bf16.mxu0 0
    %3175 = vmatpush1.bf16.msra.mxu0 0
    %3176 = vmatprep.subr.bf16.mxu0 0
    %3177 = vmatpush1.bf16.msra.mxu0 0
    %3178 = vmatprep.subr.bf16.mxu0 0
    %3179 = vmatpush1.bf16.msra.mxu0 0
    %3180 = vmatprep.subr.bf16.mxu0 0
    %3181 = vmatpush1.bf16.msra.mxu0 0
    %3182 = vmatprep.subr.bf16.mxu0 0
    %3183 = vmatpush1.bf16.msra.mxu0 0
    %3184 = vmatprep.subr.bf16.mxu0 0
    %3185 = vmatpush1.bf16.msra.mxu0 0
    %3186 = vmatprep.subr.bf16.mxu0 0
    %3187 = vmatpush1.bf16.msra.mxu0 0
    %3188 = vmatprep.subr.bf16.mxu0 0
    %3189 = vmatpush1.bf16.msra.mxu0 0
    %3190 = vmatprep.subr.bf16.mxu0 0
    %3191 = vmatpush1.bf16.msra.mxu0 0
    %3192 = vmatprep.subr.bf16.mxu0 0
    %3193 = vmatpush1.bf16.msra.mxu0 0
    %3194 = vmatprep.subr.bf16.mxu0 0
    %3195 = vmatpush1.bf16.msra.mxu0 0
    %3196 = vmatprep.subr.bf16.mxu0 0
    %3197 = vmatpush1.bf16.msra.mxu0 0
    %3198 = vmatprep.mubr.bf16.mxu0 0
    %3199 = vmatmul.mubr.bf16.gmra.mrb[0].mxu0 %v1178
    %v3200 = vpop.f32.mrb[0].mxu0
    %v3201 = vadd.f32 0.0, %v3200
    %v3202 = vpop.f32.mrb[0].mxu0
    %v3203 = vpop.f32.mrb[0].mxu0
    %v3204 = vadd.f32 0.0, %v3203
    %v3205 = vpop.f32.mrb[0].mxu0
    %3206 = vdwg.mxu0
    %v3207 = vpack.c.bf16 %v3204, %v3201
    %3208 = vmatprep.subr.bf16.mxu0 0
    %3209 = vmatpush1.bf16.msra.mxu0 %v529
    %3210 = vmatprep.subr.bf16.mxu0 0
    %3211 = vmatpush1.bf16.msra.mxu0 %v530
    %3212 = vmatprep.subr.bf16.mxu0 0
    %3213 = vmatpush1.bf16.msra.mxu0 %v531
    %3214 = vmatprep.subr.bf16.mxu0 0
    %3215 = vmatpush1.bf16.msra.mxu0 %v532
    %3216 = vmatprep.subr.bf16.mxu0 0
    %3217 = vmatpush1.bf16.msra.mxu0 0
    %3218 = vmatprep.subr.bf16.mxu0 0
    %3219 = vmatpush1.bf16.msra.mxu0 0
    %3220 = vmatprep.subr.bf16.mxu0 0
    %3221 = vmatpush1.bf16.msra.mxu0 0
    %3222 = vmatprep.subr.bf16.mxu0 0
    %3223 = vmatpush1.bf16.msra.mxu0 0
    %3224 = vmatprep.subr.bf16.mxu0 0
    %3225 = vmatpush1.bf16.msra.mxu0 0
    %3226 = vmatprep.subr.bf16.mxu0 0
    %3227 = vmatpush1.bf16.msra.mxu0 0
    %3228 = vmatprep.subr.bf16.mxu0 0
    %3229 = vmatpush1.bf16.msra.mxu0 0
    %3230 = vmatprep.subr.bf16.mxu0 0
    %3231 = vmatpush1.bf16.msra.mxu0 0
    %3232 = vmatprep.subr.bf16.mxu0 0
    %3233 = vmatpush1.bf16.msra.mxu0 0
    %3234 = vmatprep.subr.bf16.mxu0 0
    %3235 = vmatpush1.bf16.msra.mxu0 0
    %3236 = vmatprep.subr.bf16.mxu0 0
    %3237 = vmatpush1.bf16.msra.mxu0 0
    %3238 = vmatprep.subr.bf16.mxu0 0
    %3239 = vmatpush1.bf16.msra.mxu0 0
    %3240 = vmatprep.mubr.bf16.mxu0 0
    %3241 = vmatmul.mubr.bf16.gmra.mrb[0].mxu0 %v1231
    %v3242 = vpop.f32.mrb[0].mxu0
    %v3243 = vadd.f32 0.0, %v3242
    %v3244 = vpop.f32.mrb[0].mxu0
    %v3245 = vpop.f32.mrb[0].mxu0
    %v3246 = vadd.f32 0.0, %v3245
    %v3247 = vpop.f32.mrb[0].mxu0
    %3248 = vdwg.mxu0
    %v3249 = vpack.c.bf16 %v3246, %v3243
    %3250 = vmatprep.subr.bf16.mxu0 0
    %3251 = vmatpush1.bf16.msra.mxu0 %v529
    %3252 = vmatprep.subr.bf16.mxu0 0
    %3253 = vmatpush1.bf16.msra.mxu0 %v530
    %3254 = vmatprep.subr.bf16.mxu0 0
    %3255 = vmatpush1.bf16.msra.mxu0 %v531
    %3256 = vmatprep.subr.bf16.mxu0 0
    %3257 = vmatpush1.bf16.msra.mxu0 %v532
    %3258 = vmatprep.subr.bf16.mxu0 0
    %3259 = vmatpush1.bf16.msra.mxu0 0
    %3260 = vmatprep.subr.bf16.mxu0 0
    %3261 = vmatpush1.bf16.msra.mxu0 0
    %3262 = vmatprep.subr.bf16.mxu0 0
    %3263 = vmatpush1.bf16.msra.mxu0 0
    %3264 = vmatprep.subr.bf16.mxu0 0
    %3265 = vmatpush1.bf16.msra.mxu0 0
    %3266 = vmatprep.subr.bf16.mxu0 0
    %3267 = vmatpush1.bf16.msra.mxu0 0
    %3268 = vmatprep.subr.bf16.mxu0 0
    %3269 = vmatpush1.bf16.msra.mxu0 0
    %3270 = vmatprep.subr.bf16.mxu0 0
    %3271 = vmatpush1.bf16.msra.mxu0 0
    %3272 = vmatprep.subr.bf16.mxu0 0
    %3273 = vmatpush1.bf16.msra.mxu0 0
    %3274 = vmatprep.subr.bf16.mxu0 0
    %3275 = vmatpush1.bf16.msra.mxu0 0
    %3276 = vmatprep.subr.bf16.mxu0 0
    %3277 = vmatpush1.bf16.msra.mxu0 0
    %3278 = vmatprep.subr.bf16.mxu0 0
    %3279 = vmatpush1.bf16.msra.mxu0 0
    %3280 = vmatprep.subr.bf16.mxu0 0
    %3281 = vmatpush1.bf16.msra.mxu0 0
    %3282 = vmatprep.mubr.bf16.mxu0 0
    %3283 = vmatmul.mubr.bf16.gmra.mrb[0].mxu0 %v1284
    %v3284 = vpop.f32.mrb[0].mxu0
    %v3285 = vadd.f32 0.0, %v3284
    %v3286 = vpop.f32.mrb[0].mxu0
    %v3287 = vpop.f32.mrb[0].mxu0
    %v3288 = vadd.f32 0.0, %v3287
    %v3289 = vpop.f32.mrb[0].mxu0
    %3290 = vdwg.mxu0
    %v3291 = vpack.c.bf16 %v3288, %v3285
    %3292 = vmatprep.subr.bf16.mxu0 0
    %3293 = vmatpush1.bf16.msra.mxu0 %v529
    %3294 = vmatprep.subr.bf16.mxu0 0
    %3295 = vmatpush1.bf16.msra.mxu0 %v530
    %3296 = vmatprep.subr.bf16.mxu0 0
    %3297 = vmatpush1.bf16.msra.mxu0 %v531
    %3298 = vmatprep.subr.bf16.mxu0 0
    %3299 = vmatpush1.bf16.msra.mxu0 %v532
    %3300 = vmatprep.subr.bf16.mxu0 0
    %3301 = vmatpush1.bf16.msra.mxu0 0
    %3302 = vmatprep.subr.bf16.mxu0 0
    %3303 = vmatpush1.bf16.msra.mxu0 0
    %3304 = vmatprep.subr.bf16.mxu0 0
    %3305 = vmatpush1.bf16.msra.mxu0 0
    %3306 = vmatprep.subr.bf16.mxu0 0
    %3307 = vmatpush1.bf16.msra.mxu0 0
    %3308 = vmatprep.subr.bf16.mxu0 0
    %3309 = vmatpush1.bf16.msra.mxu0 0
    %3310 = vmatprep.subr.bf16.mxu0 0
    %3311 = vmatpush1.bf16.msra.mxu0 0
    %3312 = vmatprep.subr.bf16.mxu0 0
    %3313 = vmatpush1.bf16.msra.mxu0 0
    %3314 = vmatprep.subr.bf16.mxu0 0
    %3315 = vmatpush1.bf16.msra.mxu0 0
    %3316 = vmatprep.subr.bf16.mxu0 0
    %3317 = vmatpush1.bf16.msra.mxu0 0
    %3318 = vmatprep.subr.bf16.mxu0 0
    %3319 = vmatpush1.bf16.msra.mxu0 0
    %3320 = vmatprep.subr.bf16.mxu0 0
    %3321 = vmatpush1.bf16.msra.mxu0 0
    %3322 = vmatprep.subr.bf16.mxu0 0
    %3323 = vmatpush1.bf16.msra.mxu0 0
    %3324 = vmatprep.mubr.bf16.mxu0 0
    %3325 = vmatmul.mubr.bf16.gmra.mrb[0].mxu0 %v1337
    %v3326 = vpop.f32.mrb[0].mxu0
    %v3327 = vadd.f32 0.0, %v3326
    %v3328 = vpop.f32.mrb[0].mxu0
    %v3329 = vpop.f32.mrb[0].mxu0
    %v3330 = vadd.f32 0.0, %v3329
    %v3331 = vpop.f32.mrb[0].mxu0
    %3332 = vdwg.mxu0
    %v3333 = vpack.c.bf16 %v3330, %v3327
    %3335 = vrot.lane.b32.xlu0 %v2745, 32
    %v3336 = vpop.permute.xlu0 %3335
    %3338 = vrot.lane.b32.xlu0 %v2787, 64
    %v3339 = vpop.permute.xlu0 %3338
    %3341 = vrot.lane.b32.xlu0 %v2829, 96
    %v3342 = vpop.permute.xlu0 %3341
    %3344 = vrot.lane.b32.xlu0 %v2913, 32
    %v3345 = vpop.permute.xlu0 %3344
    %3347 = vrot.lane.b32.xlu0 %v2955, 64
    %v3348 = vpop.permute.xlu0 %3347
    %3350 = vrot.lane.b32.xlu0 %v2997, 96
    %v3351 = vpop.permute.xlu0 %3350
    %3353 = vrot.lane.b32.xlu0 %v3081, 32
    %v3354 = vpop.permute.xlu0 %3353
    %3356 = vrot.lane.b32.xlu0 %v3123, 64
    %v3357 = vpop.permute.xlu0 %3356
    %3359 = vrot.lane.b32.xlu0 %v3165, 96
    %v3360 = vpop.permute.xlu0 %3359
    %3362 = vrot.lane.b32.xlu0 %v3249, 32
    %v3363 = vpop.permute.xlu0 %3362
    %3365 = vrot.lane.b32.xlu0 %v3291, 64
    %v3366 = vpop.permute.xlu0 %3365
    %3368 = vrot.lane.b32.xlu0 %v3333, 96
    %v3369 = vpop.permute.xlu0 %3368
    %v3372 = vsel %vm1417, %v2703, %v3336
    %v3374 = vsel %vm540, %v3372, %v3339
    %v3376 = vsel %vm1423, %v3374, %v3342
    %v3380 = vsel %vm1417, %v2871, %v3345
    %v3382 = vsel %vm540, %v3380, %v3348
    %v3384 = vsel %vm1423, %v3382, %v3351
    %v3388 = vsel %vm1417, %v3039, %v3354
    %v3390 = vsel %vm540, %v3388, %v3357
    %v3392 = vsel %vm1423, %v3390, %v3360
    %v3396 = vsel %vm1417, %v3207, %v3363
    %v3398 = vsel %vm540, %v3396, %v3366
    %v3400 = vsel %vm1423, %v3398, %v3369
    %3402 = vmatprep.subr.bf16.mxu0 0
    %3403 = vmatpush1.bf16.msra.mxu0 %v1650
    %3404 = vmatprep.subr.bf16.mxu0 0
    %3405 = vmatpush1.bf16.msra.mxu0 %v1651
    %3406 = vmatprep.subr.bf16.mxu0 0
    %3407 = vmatpush1.bf16.msra.mxu0 %v1652
    %3408 = vmatprep.subr.bf16.mxu0 0
    %3409 = vmatpush1.bf16.msra.mxu0 %v1653
    %3410 = vmatprep.subr.bf16.mxu0 0
    %3411 = vmatpush1.bf16.msra.mxu0 %v1654
    %3412 = vmatprep.subr.bf16.mxu0 0
    %3413 = vmatpush1.bf16.msra.mxu0 %v1655
    %3414 = vmatprep.subr.bf16.mxu0 0
    %3415 = vmatpush1.bf16.msra.mxu0 %v1656
    %3416 = vmatprep.subr.bf16.mxu0 0
    %3417 = vmatpush1.bf16.msra.mxu0 %v1657
    %3418 = vmatprep.subr.bf16.mxu0 0
    %3419 = vmatpush1.bf16.msra.mxu0 %v1658
    %3420 = vmatprep.subr.bf16.mxu0 0
    %3421 = vmatpush1.bf16.msra.mxu0 %v1659
    %3422 = vmatprep.subr.bf16.mxu0 0
    %3423 = vmatpush1.bf16.msra.mxu0 %v1660
    %3424 = vmatprep.subr.bf16.mxu0 0
    %3425 = vmatpush1.bf16.msra.mxu0 %v1661
    %3426 = vmatprep.subr.bf16.mxu0 0
    %3427 = vmatpush1.bf16.msra.mxu0 %v1662
    %3428 = vmatprep.subr.bf16.mxu0 0
    %3429 = vmatpush1.bf16.msra.mxu0 %v1663
    %3430 = vmatprep.subr.bf16.mxu0 0
    %3431 = vmatpush1.bf16.msra.mxu0 %v1664
    %3432 = vmatprep.subr.bf16.mxu0 0
    %3433 = vmatpush1.bf16.msra.mxu0 %v1665
    %3434 = vmatprep.mubr.bf16.mxu0 %v3384
    %3435 = vmatmul.mubr.bf16.gmra.mrb[0].mxu0 %v3376
    %v3436 = vpop.f32.mrb[0].mxu0
    %v3437 = vadd.f32 %v1520, %v3436
    %v3438 = vpop.f32.mrb[0].mxu0
    %v3439 = vpop.f32.mrb[0].mxu0
    %v3440 = vadd.f32 %v1520, %v3439
    %v3441 = vpop.f32.mrb[0].mxu0
    %3442 = vdwg.mxu0
    %3443 = vmatprep.subr.bf16.mxu0 0
    %3444 = vmatpush1.bf16.msra.mxu0 %v1666
    %3445 = vmatprep.subr.bf16.mxu0 0
    %3446 = vmatpush1.bf16.msra.mxu0 %v1667
    %3447 = vmatprep.subr.bf16.mxu0 0
    %3448 = vmatpush1.bf16.msra.mxu0 %v1668
    %3449 = vmatprep.subr.bf16.mxu0 0
    %3450 = vmatpush1.bf16.msra.mxu0 %v1669
    %3451 = vmatprep.subr.bf16.mxu0 0
    %3452 = vmatpush1.bf16.msra.mxu0 %v1670
    %3453 = vmatprep.subr.bf16.mxu0 0
    %3454 = vmatpush1.bf16.msra.mxu0 %v1671
    %3455 = vmatprep.subr.bf16.mxu0 0
    %3456 = vmatpush1.bf16.msra.mxu0 %v1672
    %3457 = vmatprep.subr.bf16.mxu0 0
    %3458 = vmatpush1.bf16.msra.mxu0 %v1673
    %3459 = vmatprep.subr.bf16.mxu0 0
    %3460 = vmatpush1.bf16.msra.mxu0 %v1674
    %3461 = vmatprep.subr.bf16.mxu0 0
    %3462 = vmatpush1.bf16.msra.mxu0 %v1675
    %3463 = vmatprep.subr.bf16.mxu0 0
    %3464 = vmatpush1.bf16.msra.mxu0 %v1676
    %3465 = vmatprep.subr.bf16.mxu0 0
    %3466 = vmatpush1.bf16.msra.mxu0 %v1677
    %3467 = vmatprep.subr.bf16.mxu0 0
    %3468 = vmatpush1.bf16.msra.mxu0 %v1678
    %3469 = vmatprep.subr.bf16.mxu0 0
    %3470 = vmatpush1.bf16.msra.mxu0 %v1679
    %3471 = vmatprep.subr.bf16.mxu0 0
    %3472 = vmatpush1.bf16.msra.mxu0 %v1680
    %3473 = vmatprep.subr.bf16.mxu0 0
    %3474 = vmatpush1.bf16.msra.mxu0 %v1681
    %3475 = vmatprep.mubr.bf16.mxu0 %v3400
    %3476 = vmatmul.mubr.bf16.gmra.mrb[0].mxu0 %v3392
    %v3477 = vpop.f32.mrb[0].mxu0
    %v3478 = vadd.f32 %v3437, %v3477
    %v3479 = vpop.f32.mrb[0].mxu0
    %v3480 = vpop.f32.mrb[0].mxu0
    %v3481 = vadd.f32 %v3440, %v3480
    %v3482 = vpop.f32.mrb[0].mxu0
    %3483 = vdwg.mxu0
    %v3484 = vmax.f32 %v3478, 0.0
    %v3485 = vmax.f32 %v3481, 0.0
    %v3486 = vpack.c.bf16 %v3485, %v3484
    %v3488 = vand.u32 %v3486, %v1807
    %3490 = vmatprep.subr.bf16.mxu0 0
    %3491 = vmatpush1.bf16.msra.mxu0 %v3488
    %3492 = vmatprep.subr.bf16.mxu0 0
    %3493 = vmatpush1.bf16.msra.mxu0 0
    %3494 = vmatprep.subr.bf16.mxu0 0
    %3495 = vmatpush1.bf16.msra.mxu0 0
    %3496 = vmatprep.subr.bf16.mxu0 0
    %3497 = vmatpush1.bf16.msra.mxu0 0
    %3498 = vmatprep.subr.bf16.mxu0 0
    %3499 = vmatpush1.bf16.msra.mxu0 0
    %3500 = vmatprep.subr.bf16.mxu0 0
    %3501 = vmatpush1.bf16.msra.mxu0 0
    %3502 = vmatprep.subr.bf16.mxu0 0
    %3503 = vmatpush1.bf16.msra.mxu0 0
    %3504 = vmatprep.subr.bf16.mxu0 0
    %3505 = vmatpush1.bf16.msra.mxu0 0
    %3506 = vmatprep.subr.bf16.mxu0 0
    %3507 = vmatpush1.bf16.msra.mxu0 0
    %3508 = vmatprep.subr.bf16.mxu0 0
    %3509 = vmatpush1.bf16.msra.mxu0 0
    %3510 = vmatprep.subr.bf16.mxu0 0
    %3511 = vmatpush1.bf16.msra.mxu0 0
    %3512 = vmatprep.subr.bf16.mxu0 0
    %3513 = vmatpush1.bf16.msra.mxu0 0
    %3514 = vmatprep.subr.bf16.mxu0 0
    %3515 = vmatpush1.bf16.msra.mxu0 0
    %3516 = vmatprep.subr.bf16.mxu0 0
    %3517 = vmatpush1.bf16.msra.mxu0 0
    %3518 = vmatprep.subr.bf16.mxu0 0
    %3519 = vmatpush1.bf16.msra.mxu0 0
    %3520 = vmatprep.subr.bf16.mxu0 0
    %3521 = vmatpush1.bf16.msra.mxu0 0
    %3522 = vmatprep.mubr.bf16.mxu0 0
    %3523 = vmatmul.mubr.bf16.gmra.mrb[0].mxu0 %v1802
    %v3524 = vpop.f32.mrb[0].mxu0
    %v3525 = vadd.f32 0.0, %v3524
    %v3526 = vpop.f32.mrb[0].mxu0
    %v3527 = vpop.f32.mrb[0].mxu0
    %v3528 = vpop.f32.mrb[0].mxu0
    %3529 = vdwg.mxu0
    %v3530 = vpack.c.bf16 %v3525, %v3525
    %3531 = vmatprep.subr.bf16.mxu0 0
    %3532 = vmatpush1.bf16.msra.mxu0 %v3488
    %3533 = vmatprep.subr.bf16.mxu0 0
    %3534 = vmatpush1.bf16.msra.mxu0 0
    %3535 = vmatprep.subr.bf16.mxu0 0
    %3536 = vmatpush1.bf16.msra.mxu0 0
    %3537 = vmatprep.subr.bf16.mxu0 0
    %3538 = vmatpush1.bf16.msra.mxu0 0
    %3539 = vmatprep.subr.bf16.mxu0 0
    %3540 = vmatpush1.bf16.msra.mxu0 0
    %3541 = vmatprep.subr.bf16.mxu0 0
    %3542 = vmatpush1.bf16.msra.mxu0 0
    %3543 = vmatprep.subr.bf16.mxu0 0
    %3544 = vmatpush1.bf16.msra.mxu0 0
    %3545 = vmatprep.subr.bf16.mxu0 0
    %3546 = vmatpush1.bf16.msra.mxu0 0
    %3547 = vmatprep.subr.bf16.mxu0 0
    %3548 = vmatpush1.bf16.msra.mxu0 0
    %3549 = vmatprep.subr.bf16.mxu0 0
    %3550 = vmatpush1.bf16.msra.mxu0 0
    %3551 = vmatprep.subr.bf16.mxu0 0
    %3552 = vmatpush1.bf16.msra.mxu0 0
    %3553 = vmatprep.subr.bf16.mxu0 0
    %3554 = vmatpush1.bf16.msra.mxu0 0
    %3555 = vmatprep.subr.bf16.mxu0 0
    %3556 = vmatpush1.bf16.msra.mxu0 0
    %3557 = vmatprep.subr.bf16.mxu0 0
    %3558 = vmatpush1.bf16.msra.mxu0 0
    %3559 = vmatprep.subr.bf16.mxu0 0
    %3560 = vmatpush1.bf16.msra.mxu0 0
    %3561 = vmatprep.subr.bf16.mxu0 0
    %3562 = vmatpush1.bf16.msra.mxu0 0
    %3563 = vmatprep.mubr.bf16.mxu0 0
    %3564 = vmatmul.mubr.bf16.gmra.mrb[0].mxu0 %v1855
    %v3565 = vpop.f32.mrb[0].mxu0
    %v3566 = vadd.f32 0.0, %v3565
    %v3567 = vpop.f32.mrb[0].mxu0
    %v3568 = vpop.f32.mrb[0].mxu0
    %v3569 = vpop.f32.mrb[0].mxu0
    %3570 = vdwg.mxu0
    %v3571 = vpack.c.bf16 %v3566, %v3566
    %3572 = vmatprep.subr.bf16.mxu0 0
    %3573 = vmatpush1.bf16.msra.mxu0 %v3488
    %3574 = vmatprep.subr.bf16.mxu0 0
    %3575 = vmatpush1.bf16.msra.mxu0 0
    %3576 = vmatprep.subr.bf16.mxu0 0
    %3577 = vmatpush1.bf16.msra.mxu0 0
    %3578 = vmatprep.subr.bf16.mxu0 0
    %3579 = vmatpush1.bf16.msra.mxu0 0
    %3580 = vmatprep.subr.bf16.mxu0 0
    %3581 = vmatpush1.bf16.msra.mxu0 0
    %3582 = vmatprep.subr.bf16.mxu0 0
    %3583 = vmatpush1.bf16.msra.mxu0 0
    %3584 = vmatprep.subr.bf16.mxu0 0
    %3585 = vmatpush1.bf16.msra.mxu0 0
    %3586 = vmatprep.subr.bf16.mxu0 0
    %3587 = vmatpush1.bf16.msra.mxu0 0
    %3588 = vmatprep.subr.bf16.mxu0 0
    %3589 = vmatpush1.bf16.msra.mxu0 0
    %3590 = vmatprep.subr.bf16.mxu0 0
    %3591 = vmatpush1.bf16.msra.mxu0 0
    %3592 = vmatprep.subr.bf16.mxu0 0
    %3593 = vmatpush1.bf16.msra.mxu0 0
    %3594 = vmatprep.subr.bf16.mxu0 0
    %3595 = vmatpush1.bf16.msra.mxu0 0
    %3596 = vmatprep.subr.bf16.mxu0 0
    %3597 = vmatpush1.bf16.msra.mxu0 0
    %3598 = vmatprep.subr.bf16.mxu0 0
    %3599 = vmatpush1.bf16.msra.mxu0 0
    %3600 = vmatprep.subr.bf16.mxu0 0
    %3601 = vmatpush1.bf16.msra.mxu0 0
    %3602 = vmatprep.subr.bf16.mxu0 0
    %3603 = vmatpush1.bf16.msra.mxu0 0
    %3604 = vmatprep.mubr.bf16.mxu0 0
    %3605 = vmatmul.mubr.bf16.gmra.mrb[0].mxu0 %v1901
    %v3606 = vpop.f32.mrb[0].mxu0
    %v3607 = vadd.f32 0.0, %v3606
    %v3608 = vpop.f32.mrb[0].mxu0
    %v3609 = vpop.f32.mrb[0].mxu0
    %v3610 = vpop.f32.mrb[0].mxu0
    %3611 = vdwg.mxu0
    %v3612 = vpack.c.bf16 %v3607, %v3607
    %3613 = vmatprep.subr.bf16.mxu0 0
    %3614 = vmatpush1.bf16.msra.mxu0 %v3488
    %3615 = vmatprep.subr.bf16.mxu0 0
    %3616 = vmatpush1.bf16.msra.mxu0 0
    %3617 = vmatprep.subr.bf16.mxu0 0
    %3618 = vmatpush1.bf16.msra.mxu0 0
    %3619 = vmatprep.subr.bf16.mxu0 0
    %3620 = vmatpush1.bf16.msra.mxu0 0
    %3621 = vmatprep.subr.bf16.mxu0 0
    %3622 = vmatpush1.bf16.msra.mxu0 0
    %3623 = vmatprep.subr.bf16.mxu0 0
    %3624 = vmatpush1.bf16.msra.mxu0 0
    %3625 = vmatprep.subr.bf16.mxu0 0
    %3626 = vmatpush1.bf16.msra.mxu0 0
    %3627 = vmatprep.subr.bf16.mxu0 0
    %3628 = vmatpush1.bf16.msra.mxu0 0
    %3629 = vmatprep.subr.bf16.mxu0 0
    %3630 = vmatpush1.bf16.msra.mxu0 0
    %3631 = vmatprep.subr.bf16.mxu0 0
    %3632 = vmatpush1.bf16.msra.mxu0 0
    %3633 = vmatprep.subr.bf16.mxu0 0
    %3634 = vmatpush1.bf16.msra.mxu0 0
    %3635 = vmatprep.subr.bf16.mxu0 0
    %3636 = vmatpush1.bf16.msra.mxu0 0
    %3637 = vmatprep.subr.bf16.mxu0 0
    %3638 = vmatpush1.bf16.msra.mxu0 0
    %3639 = vmatprep.subr.bf16.mxu0 0
    %3640 = vmatpush1.bf16.msra.mxu0 0
    %3641 = vmatprep.subr.bf16.mxu0 0
    %3642 = vmatpush1.bf16.msra.mxu0 0
    %3643 = vmatprep.subr.bf16.mxu0 0
    %3644 = vmatpush1.bf16.msra.mxu0 0
    %3645 = vmatprep.mubr.bf16.mxu0 0
    %3646 = vmatmul.mubr.bf16.gmra.mrb[0].mxu0 %v1947
    %v3647 = vpop.f32.mrb[0].mxu0
    %v3648 = vadd.f32 0.0, %v3647
    %v3649 = vpop.f32.mrb[0].mxu0
    %v3650 = vpop.f32.mrb[0].mxu0
    %v3651 = vpop.f32.mrb[0].mxu0
    %3652 = vdwg.mxu0
    %v3653 = vpack.c.bf16 %v3648, %v3648
    %3654 = vmatprep.subr.bf16.mxu0 0
    %3655 = vmatpush1.bf16.msra.mxu0 %v3488
    %3656 = vmatprep.subr.bf16.mxu0 0
    %3657 = vmatpush1.bf16.msra.mxu0 0
    %3658 = vmatprep.subr.bf16.mxu0 0
    %3659 = vmatpush1.bf16.msra.mxu0 0
    %3660 = vmatprep.subr.bf16.mxu0 0
    %3661 = vmatpush1.bf16.msra.mxu0 0
    %3662 = vmatprep.subr.bf16.mxu0 0
    %3663 = vmatpush1.bf16.msra.mxu0 0
    %3664 = vmatprep.subr.bf16.mxu0 0
    %3665 = vmatpush1.bf16.msra.mxu0 0
    %3666 = vmatprep.subr.bf16.mxu0 0
    %3667 = vmatpush1.bf16.msra.mxu0 0
    %3668 = vmatprep.subr.bf16.mxu0 0
    %3669 = vmatpush1.bf16.msra.mxu0 0
    %3670 = vmatprep.subr.bf16.mxu0 0
    %3671 = vmatpush1.bf16.msra.mxu0 0
    %3672 = vmatprep.subr.bf16.mxu0 0
    %3673 = vmatpush1.bf16.msra.mxu0 0
    %3674 = vmatprep.subr.bf16.mxu0 0
    %3675 = vmatpush1.bf16.msra.mxu0 0
    %3676 = vmatprep.subr.bf16.mxu0 0
    %3677 = vmatpush1.bf16.msra.mxu0 0
    %3678 = vmatprep.subr.bf16.mxu0 0
    %3679 = vmatpush1.bf16.msra.mxu0 0
    %3680 = vmatprep.subr.bf16.mxu0 0
    %3681 = vmatpush1.bf16.msra.mxu0 0
    %3682 = vmatprep.subr.bf16.mxu0 0
    %3683 = vmatpush1.bf16.msra.mxu0 0
    %3684 = vmatprep.subr.bf16.mxu0 0
    %3685 = vmatpush1.bf16.msra.mxu0 0
    %3686 = vmatprep.mubr.bf16.mxu0 0
    %3687 = vmatmul.mubr.bf16.gmra.mrb[0].mxu0 %v1993
    %v3688 = vpop.f32.mrb[0].mxu0
    %v3689 = vadd.f32 0.0, %v3688
    %v3690 = vpop.f32.mrb[0].mxu0
    %v3691 = vpop.f32.mrb[0].mxu0
    %v3692 = vpop.f32.mrb[0].mxu0
    %3693 = vdwg.mxu0
    %v3694 = vpack.c.bf16 %v3689, %v3689
    %3695 = vmatprep.subr.bf16.mxu0 0
    %3696 = vmatpush1.bf16.msra.mxu0 %v3488
    %3697 = vmatprep.subr.bf16.mxu0 0
    %3698 = vmatpush1.bf16.msra.mxu0 0
    %3699 = vmatprep.subr.bf16.mxu0 0
    %3700 = vmatpush1.bf16.msra.mxu0 0
    %3701 = vmatprep.subr.bf16.mxu0 0
    %3702 = vmatpush1.bf16.msra.mxu0 0
    %3703 = vmatprep.subr.bf16.mxu0 0
    %3704 = vmatpush1.bf16.msra.mxu0 0
    %3705 = vmatprep.subr.bf16.mxu0 0
    %3706 = vmatpush1.bf16.msra.mxu0 0
    %3707 = vmatprep.subr.bf16.mxu0 0
    %3708 = vmatpush1.bf16.msra.mxu0 0
    %3709 = vmatprep.subr.bf16.mxu0 0
    %3710 = vmatpush1.bf16.msra.mxu0 0
    %3711 = vmatprep.subr.bf16.mxu0 0
    %3712 = vmatpush1.bf16.msra.mxu0 0
    %3713 = vmatprep.subr.bf16.mxu0 0
    %3714 = vmatpush1.bf16.msra.mxu0 0
    %3715 = vmatprep.subr.bf16.mxu0 0
    %3716 = vmatpush1.bf16.msra.mxu0 0
    %3717 = vmatprep.subr.bf16.mxu0 0
    %3718 = vmatpush1.bf16.msra.mxu0 0
    %3719 = vmatprep.subr.bf16.mxu0 0
    %3720 = vmatpush1.bf16.msra.mxu0 0
    %3721 = vmatprep.subr.bf16.mxu0 0
    %3722 = vmatpush1.bf16.msra.mxu0 0
    %3723 = vmatprep.subr.bf16.mxu0 0
    %3724 = vmatpush1.bf16.msra.mxu0 0
    %3725 = vmatprep.subr.bf16.mxu0 0
    %3726 = vmatpush1.bf16.msra.mxu0 0
    %3727 = vmatprep.mubr.bf16.mxu0 0
    %3728 = vmatmul.mubr.bf16.gmra.mrb[0].mxu0 %v2039
    %v3729 = vpop.f32.mrb[0].mxu0
    %v3730 = vadd.f32 0.0, %v3729
    %v3731 = vpop.f32.mrb[0].mxu0
    %v3732 = vpop.f32.mrb[0].mxu0
    %v3733 = vpop.f32.mrb[0].mxu0
    %3734 = vdwg.mxu0
    %v3735 = vpack.c.bf16 %v3730, %v3730
    %3736 = vmatprep.subr.bf16.mxu0 0
    %3737 = vmatpush1.bf16.msra.mxu0 %v3488
    %3738 = vmatprep.subr.bf16.mxu0 0
    %3739 = vmatpush1.bf16.msra.mxu0 0
    %3740 = vmatprep.subr.bf16.mxu0 0
    %3741 = vmatpush1.bf16.msra.mxu0 0
    %3742 = vmatprep.subr.bf16.mxu0 0
    %3743 = vmatpush1.bf16.msra.mxu0 0
    %3744 = vmatprep.subr.bf16.mxu0 0
    %3745 = vmatpush1.bf16.msra.mxu0 0
    %3746 = vmatprep.subr.bf16.mxu0 0
    %3747 = vmatpush1.bf16.msra.mxu0 0
    %3748 = vmatprep.subr.bf16.mxu0 0
    %3749 = vmatpush1.bf16.msra.mxu0 0
    %3750 = vmatprep.subr.bf16.mxu0 0
    %3751 = vmatpush1.bf16.msra.mxu0 0
    %3752 = vmatprep.subr.bf16.mxu0 0
    %3753 = vmatpush1.bf16.msra.mxu0 0
    %3754 = vmatprep.subr.bf16.mxu0 0
    %3755 = vmatpush1.bf16.msra.mxu0 0
    %3756 = vmatprep.subr.bf16.mxu0 0
    %3757 = vmatpush1.bf16.msra.mxu0 0
    %3758 = vmatprep.subr.bf16.mxu0 0
    %3759 = vmatpush1.bf16.msra.mxu0 0
    %3760 = vmatprep.subr.bf16.mxu0 0
    %3761 = vmatpush1.bf16.msra.mxu0 0
    %3762 = vmatprep.subr.bf16.mxu0 0
    %3763 = vmatpush1.bf16.msra.mxu0 0
    %3764 = vmatprep.subr.bf16.mxu0 0
    %3765 = vmatpush1.bf16.msra.mxu0 0
    %3766 = vmatprep.subr.bf16.mxu0 0
    %3767 = vmatpush1.bf16.msra.mxu0 0
    %3768 = vmatprep.mubr.bf16.mxu0 0
    %3769 = vmatmul.mubr.bf16.gmra.mrb[0].mxu0 %v2085
    %v3770 = vpop.f32.mrb[0].mxu0
    %v3771 = vadd.f32 0.0, %v3770
    %v3772 = vpop.f32.mrb[0].mxu0
    %v3773 = vpop.f32.mrb[0].mxu0
    %v3774 = vpop.f32.mrb[0].mxu0
    %3775 = vdwg.mxu0
    %v3776 = vpack.c.bf16 %v3771, %v3771
    %3777 = vmatprep.subr.bf16.mxu0 0
    %3778 = vmatpush1.bf16.msra.mxu0 %v3488
    %3779 = vmatprep.subr.bf16.mxu0 0
    %3780 = vmatpush1.bf16.msra.mxu0 0
    %3781 = vmatprep.subr.bf16.mxu0 0
    %3782 = vmatpush1.bf16.msra.mxu0 0
    %3783 = vmatprep.subr.bf16.mxu0 0
    %3784 = vmatpush1.bf16.msra.mxu0 0
    %3785 = vmatprep.subr.bf16.mxu0 0
    %3786 = vmatpush1.bf16.msra.mxu0 0
    %3787 = vmatprep.subr.bf16.mxu0 0
    %3788 = vmatpush1.bf16.msra.mxu0 0
    %3789 = vmatprep.subr.bf16.mxu0 0
    %3790 = vmatpush1.bf16.msra.mxu0 0
    %3791 = vmatprep.subr.bf16.mxu0 0
    %3792 = vmatpush1.bf16.msra.mxu0 0
    %3793 = vmatprep.subr.bf16.mxu0 0
    %3794 = vmatpush1.bf16.msra.mxu0 0
    %3795 = vmatprep.subr.bf16.mxu0 0
    %3796 = vmatpush1.bf16.msra.mxu0 0
    %3797 = vmatprep.subr.bf16.mxu0 0
    %3798 = vmatpush1.bf16.msra.mxu0 0
    %3799 = vmatprep.subr.bf16.mxu0 0
    %3800 = vmatpush1.bf16.msra.mxu0 0
    %3801 = vmatprep.subr.bf16.mxu0 0
    %3802 = vmatpush1.bf16.msra.mxu0 0
    %3803 = vmatprep.subr.bf16.mxu0 0
    %3804 = vmatpush1.bf16.msra.mxu0 0
    %3805 = vmatprep.subr.bf16.mxu0 0
    %3806 = vmatpush1.bf16.msra.mxu0 0
    %3807 = vmatprep.subr.bf16.mxu0 0
    %3808 = vmatpush1.bf16.msra.mxu0 0
    %3809 = vmatprep.mubr.bf16.mxu0 0
    %3810 = vmatmul.mubr.bf16.gmra.mrb[0].mxu0 %v2131
    %v3811 = vpop.f32.mrb[0].mxu0
    %v3812 = vadd.f32 0.0, %v3811
    %v3813 = vpop.f32.mrb[0].mxu0
    %v3814 = vpop.f32.mrb[0].mxu0
    %v3815 = vpop.f32.mrb[0].mxu0
    %3816 = vdwg.mxu0
    %v3817 = vpack.c.bf16 %v3812, %v3812
    %3818 = vmatprep.subr.bf16.mxu0 0
    %3819 = vmatpush1.bf16.msra.mxu0 %v3488
    %3820 = vmatprep.subr.bf16.mxu0 0
    %3821 = vmatpush1.bf16.msra.mxu0 0
    %3822 = vmatprep.subr.bf16.mxu0 0
    %3823 = vmatpush1.bf16.msra.mxu0 0
    %3824 = vmatprep.subr.bf16.mxu0 0
    %3825 = vmatpush1.bf16.msra.mxu0 0
    %3826 = vmatprep.subr.bf16.mxu0 0
    %3827 = vmatpush1.bf16.msra.mxu0 0
    %3828 = vmatprep.subr.bf16.mxu0 0
    %3829 = vmatpush1.bf16.msra.mxu0 0
    %3830 = vmatprep.subr.bf16.mxu0 0
    %3831 = vmatpush1.bf16.msra.mxu0 0
    %3832 = vmatprep.subr.bf16.mxu0 0
    %3833 = vmatpush1.bf16.msra.mxu0 0
    %3834 = vmatprep.subr.bf16.mxu0 0
    %3835 = vmatpush1.bf16.msra.mxu0 0
    %3836 = vmatprep.subr.bf16.mxu0 0
    %3837 = vmatpush1.bf16.msra.mxu0 0
    %3838 = vmatprep.subr.bf16.mxu0 0
    %3839 = vmatpush1.bf16.msra.mxu0 0
    %3840 = vmatprep.subr.bf16.mxu0 0
    %3841 = vmatpush1.bf16.msra.mxu0 0
    %3842 = vmatprep.subr.bf16.mxu0 0
    %3843 = vmatpush1.bf16.msra.mxu0 0
    %3844 = vmatprep.subr.bf16.mxu0 0
    %3845 = vmatpush1.bf16.msra.mxu0 0
    %3846 = vmatprep.subr.bf16.mxu0 0
    %3847 = vmatpush1.bf16.msra.mxu0 0
    %3848 = vmatprep.subr.bf16.mxu0 0
    %3849 = vmatpush1.bf16.msra.mxu0 0
    %3850 = vmatprep.mubr.bf16.mxu0 0
    %3851 = vmatmul.mubr.bf16.gmra.mrb[0].mxu0 %v2177
    %v3852 = vpop.f32.mrb[0].mxu0
    %v3853 = vadd.f32 0.0, %v3852
    %v3854 = vpop.f32.mrb[0].mxu0
    %v3855 = vpop.f32.mrb[0].mxu0
    %v3856 = vpop.f32.mrb[0].mxu0
    %3857 = vdwg.mxu0
    %v3858 = vpack.c.bf16 %v3853, %v3853
    %3860 = vrot.lane.b32.xlu0 %v3571, 64
    %v3861 = vpop.permute.xlu0 %3860
    %3863 = vrot.lane.b32.xlu0 %v3653, 64
    %v3864 = vpop.permute.xlu0 %3863
    %3866 = vrot.lane.b32.xlu0 %v3735, 64
    %v3867 = vpop.permute.xlu0 %3866
    %3869 = vrot.lane.b32.xlu0 %v3817, 64
    %v3870 = vpop.permute.xlu0 %3869
    %v3873 = vsel %vm540, %v3530, %v3861
    %v3877 = vsel %vm540, %v3612, %v3864
    %v3881 = vsel %vm540, %v3694, %v3867
    %v3885 = vsel %vm540, %v3776, %v3870
    %v3888 = vsel %vm540, %v3858, 0
    %3890 = vmatprep.subr.bf16.mxu0 0
    %3891 = vmatpush1.bf16.msra.mxu0 %v2465
    %3892 = vmatprep.subr.bf16.mxu0 0
    %3893 = vmatpush1.bf16.msra.mxu0 %v2466
    %3894 = vmatprep.subr.bf16.mxu0 0
    %3895 = vmatpush1.bf16.msra.mxu0 %v2467
    %3896 = vmatprep.subr.bf16.mxu0 0
    %3897 = vmatpush1.bf16.msra.mxu0 %v2468
    %3898 = vmatprep.subr.bf16.mxu0 0
    %3899 = vmatpush1.bf16.msra.mxu0 %v2469
    %3900 = vmatprep.subr.bf16.mxu0 0
    %3901 = vmatpush1.bf16.msra.mxu0 %v2470
    %3902 = vmatprep.subr.bf16.mxu0 0
    %3903 = vmatpush1.bf16.msra.mxu0 %v2471
    %3904 = vmatprep.subr.bf16.mxu0 0
    %3905 = vmatpush1.bf16.msra.mxu0 %v2472
    %3906 = vmatprep.subr.bf16.mxu0 0
    %3907 = vmatpush1.bf16.msra.mxu0 %v2473
    %3908 = vmatprep.subr.bf16.mxu0 0
    %3909 = vmatpush1.bf16.msra.mxu0 %v2474
    %3910 = vmatprep.subr.bf16.mxu0 0
    %3911 = vmatpush1.bf16.msra.mxu0 %v2475
    %3912 = vmatprep.subr.bf16.mxu0 0
    %3913 = vmatpush1.bf16.msra.mxu0 %v2476
    %3914 = vmatprep.subr.bf16.mxu0 0
    %3915 = vmatpush1.bf16.msra.mxu0 %v2477
    %3916 = vmatprep.subr.bf16.mxu0 0
    %3917 = vmatpush1.bf16.msra.mxu0 %v2478
    %3918 = vmatprep.subr.bf16.mxu0 0
    %3919 = vmatpush1.bf16.msra.mxu0 %v2479
    %3920 = vmatprep.subr.bf16.mxu0 0
    %3921 = vmatpush1.bf16.msra.mxu0 %v2480
    %3922 = vmatprep.mubr.bf16.mxu0 %v3877
    %3923 = vmatmul.mubr.bf16.gmra.mrb[0].mxu0 %v3873
    %v3924 = vpop.f32.mrb[0].mxu0
    %v3925 = vadd.f32 %v2320, %v3924
    %v3926 = vpop.f32.mrb[0].mxu0
    %v3927 = vpop.f32.mrb[0].mxu0
    %v3928 = vpop.f32.mrb[0].mxu0
    %3929 = vdwg.mxu0
    %3930 = vmatprep.subr.bf16.mxu0 0
    %3931 = vmatpush1.bf16.msra.mxu0 %v2481
    %3932 = vmatprep.subr.bf16.mxu0 0
    %3933 = vmatpush1.bf16.msra.mxu0 %v2482
    %3934 = vmatprep.subr.bf16.mxu0 0
    %3935 = vmatpush1.bf16.msra.mxu0 %v2483
    %3936 = vmatprep.subr.bf16.mxu0 0
    %3937 = vmatpush1.bf16.msra.mxu0 %v2484
    %3938 = vmatprep.subr.bf16.mxu0 0
    %3939 = vmatpush1.bf16.msra.mxu0 %v2485
    %3940 = vmatprep.subr.bf16.mxu0 0
    %3941 = vmatpush1.bf16.msra.mxu0 %v2486
    %3942 = vmatprep.subr.bf16.mxu0 0
    %3943 = vmatpush1.bf16.msra.mxu0 %v2487
    %3944 = vmatprep.subr.bf16.mxu0 0
    %3945 = vmatpush1.bf16.msra.mxu0 %v2488
    %3946 = vmatprep.subr.bf16.mxu0 0
    %3947 = vmatpush1.bf16.msra.mxu0 %v2489
    %3948 = vmatprep.subr.bf16.mxu0 0
    %3949 = vmatpush1.bf16.msra.mxu0 %v2490
    %3950 = vmatprep.subr.bf16.mxu0 0
    %3951 = vmatpush1.bf16.msra.mxu0 %v2491
    %3952 = vmatprep.subr.bf16.mxu0 0
    %3953 = vmatpush1.bf16.msra.mxu0 %v2492
    %3954 = vmatprep.subr.bf16.mxu0 0
    %3955 = vmatpush1.bf16.msra.mxu0 %v2493
    %3956 = vmatprep.subr.bf16.mxu0 0
    %3957 = vmatpush1.bf16.msra.mxu0 %v2494
    %3958 = vmatprep.subr.bf16.mxu0 0
    %3959 = vmatpush1.bf16.msra.mxu0 %v2495
    %3960 = vmatprep.subr.bf16.mxu0 0
    %3961 = vmatpush1.bf16.msra.mxu0 %v2496
    %3962 = vmatprep.mubr.bf16.mxu0 %v3885
    %3963 = vmatmul.mubr.bf16.gmra.mrb[0].mxu0 %v3881
    %v3964 = vpop.f32.mrb[0].mxu0
    %v3965 = vadd.f32 %v3925, %v3964
    %v3966 = vpop.f32.mrb[0].mxu0
    %v3967 = vpop.f32.mrb[0].mxu0
    %v3968 = vpop.f32.mrb[0].mxu0
    %3969 = vdwg.mxu0
    %3970 = vmatprep.subr.bf16.mxu0 0
    %3971 = vmatpush1.bf16.msra.mxu0 %v2497
    %3972 = vmatprep.subr.bf16.mxu0 0
    %3973 = vmatpush1.bf16.msra.mxu0 %v2498
    %3974 = vmatprep.subr.bf16.mxu0 0
    %3975 = vmatpush1.bf16.msra.mxu0 %v2499
    %3976 = vmatprep.subr.bf16.mxu0 0
    %3977 = vmatpush1.bf16.msra.mxu0 %v2500
    %3978 = vmatprep.subr.bf16.mxu0 0
    %3979 = vmatpush1.bf16.msra.mxu0 0
    %3980 = vmatprep.subr.bf16.mxu0 0
    %3981 = vmatpush1.bf16.msra.mxu0 0
    %3982 = vmatprep.subr.bf16.mxu0 0
    %3983 = vmatpush1.bf16.msra.mxu0 0
    %3984 = vmatprep.subr.bf16.mxu0 0
    %3985 = vmatpush1.bf16.msra.mxu0 0
    %3986 = vmatprep.subr.bf16.mxu0 0
    %3987 = vmatpush1.bf16.msra.mxu0 0
    %3988 = vmatprep.subr.bf16.mxu0 0
    %3989 = vmatpush1.bf16.msra.mxu0 0
    %3990 = vmatprep.subr.bf16.mxu0 0
    %3991 = vmatpush1.bf16.msra.mxu0 0
    %3992 = vmatprep.subr.bf16.mxu0 0
    %3993 = vmatpush1.bf16.msra.mxu0 0
    %3994 = vmatprep.subr.bf16.mxu0 0
    %3995 = vmatpush1.bf16.msra.mxu0 0
    %3996 = vmatprep.subr.bf16.mxu0 0
    %3997 = vmatpush1.bf16.msra.mxu0 0
    %3998 = vmatprep.subr.bf16.mxu0 0
    %3999 = vmatpush1.bf16.msra.mxu0 0
    %4000 = vmatprep.subr.bf16.mxu0 0
    %4001 = vmatpush1.bf16.msra.mxu0 0
    %4002 = vmatprep.mubr.bf16.mxu0 0
    %4003 = vmatmul.mubr.bf16.gmra.mrb[0].mxu0 %v3888
    %v4004 = vpop.f32.mrb[0].mxu0
    %v4005 = vadd.f32 %v3965, %v4004
    %v4006 = vpop.f32.mrb[0].mxu0
    %v4007 = vpop.f32.mrb[0].mxu0
    %v4008 = vpop.f32.mrb[0].mxu0
    %4009 = vdwg.mxu0
    %v4010 = vmax.f32 %v4005, 0.0
    %v4011 = vpack.c.bf16 %v4010, %v4010
    %v4013 = vshll.u32 %v4011, 16
    %vm4016 = vcmask 1040384
    %vm4017 = vsmask.f32 256
    %vm4018 = vmand %vm4016, %vm4017
    %v4019 = vsel %vm4018, %v2661, %v4013
    %v4020 = vld [vmem:[#allocation17] sm:$0xf]
    %v4021 = vld [vmem:[#allocation17 + $0x4] sm:$0xf]
    %v4022 = vld [vmem:[#allocation17 + $0x8] sm:$0xf]
    %v4023 = vld [vmem:[#allocation17 + $0xc] sm:$0xf]
    %v4024 = vld [vmem:[#allocation17 + $0x10] sm:$0xf]
    %v4025 = vld [vmem:[#allocation17 + $0x14] sm:$0xf]
    %v4026 = vld [vmem:[#allocation17 + $0x18] sm:$0xf]
    %v4027 = vld [vmem:[#allocation17 + $0x1c] sm:$0xf]
    %v4028 = vld [vmem:[#allocation19] sm:$0x1]
    %v4030 = vlaneseq
    %v4031 = vshrl.u32 %v4030, 7
    %v4032 = vsub.s32 0, %v4031
    %v4033 = vrot.slane %v4028, %v4032
    %v4043 = vunpack.c.l.b16 %v4020
    %v4044 = vunpack.c.l.b16 %v4021
    %v4045 = vunpack.c.l.b16 %v4022
    %v4046 = vunpack.c.l.b16 %v4023
    %v4047 = vunpack.c.l.b16 %v4024
    %v4048 = vunpack.c.l.b16 %v4025
    %v4049 = vunpack.c.l.b16 %v4026
    %v4050 = vunpack.c.l.b16 %v4027
    %v4051 = vpack.c.b16 %v4044, %v4043
    %v4052 = vpack.c.b16 %v4046, %v4045
    %v4053 = vpack.c.b16 %v4048, %v4047
    %v4054 = vpack.c.b16 %v4050, %v4049
    %v4060 = vsel %vm540, %v4019, 0
    %4062 = vmatprep.subr.bf16.mxu0 0
    %4063 = vmatpush1.bf16.msra.mxu0 %v4051
    %4064 = vmatprep.subr.bf16.mxu0 0
    %4065 = vmatpush1.bf16.msra.mxu0 %v4052
    %4066 = vmatprep.subr.bf16.mxu0 0
    %4067 = vmatpush1.bf16.msra.mxu0 %v4053
    %4068 = vmatprep.subr.bf16.mxu0 0
    %4069 = vmatpush1.bf16.msra.mxu0 %v4054
    %4070 = vmatprep.subr.bf16.mxu0 0
    %4071 = vmatpush1.bf16.msra.mxu0 0
    %4072 = vmatprep.subr.bf16.mxu0 0
    %4073 = vmatpush1.bf16.msra.mxu0 0
    %4074 = vmatprep.subr.bf16.mxu0 0
    %4075 = vmatpush1.bf16.msra.mxu0 0
    %4076 = vmatprep.subr.bf16.mxu0 0
    %4077 = vmatpush1.bf16.msra.mxu0 0
    %4078 = vmatprep.subr.bf16.mxu0 0
    %4079 = vmatpush1.bf16.msra.mxu0 0
    %4080 = vmatprep.subr.bf16.mxu0 0
    %4081 = vmatpush1.bf16.msra.mxu0 0
    %4082 = vmatprep.subr.bf16.mxu0 0
    %4083 = vmatpush1.bf16.msra.mxu0 0
    %4084 = vmatprep.subr.bf16.mxu0 0
    %4085 = vmatpush1.bf16.msra.mxu0 0
    %4086 = vmatprep.subr.bf16.mxu0 0
    %4087 = vmatpush1.bf16.msra.mxu0 0
    %4088 = vmatprep.subr.bf16.mxu0 0
    %4089 = vmatpush1.bf16.msra.mxu0 0
    %4090 = vmatprep.subr.bf16.mxu0 0
    %4091 = vmatpush1.bf16.msra.mxu0 0
    %4092 = vmatprep.subr.bf16.mxu0 0
    %4093 = vmatpush1.bf16.msra.mxu0 0
    %4094 = vmatprep.mubr.bf16.mxu0 0
    %4095 = vmatmul.mubr.bf16.gmra.mrb[0].mxu0 %v4060
    %v4096 = vpop.f32.mrb[0].mxu0
    %v4097 = vadd.f32 %v4033, %v4096
    %v4098 = vpop.f32.mrb[0].mxu0
    %v4099 = vpop.f32.mrb[0].mxu0
    %v4100 = vpop.f32.mrb[0].mxu0
    %4101 = vdwg.mxu0
    %v4102 = vmax.f32 %v4097, 0.0
    %4103 = vst [vmem:[#allocation20] sm:$0x3] %v4102
    // Predicated region
    $region90: #{tpu_custom_call.1} parent=1 // pred_check
      _
    $region91: #{tpu_custom_call.1} parent=1 // pred_check_branch
      %4105 = sbr.rel (0) target = $region93
    $region92: #{tpu_custom_call.1} parent=1 // pred_region
      %s4107 = ssub.s32 32, 32
      %4108 = vsyncadd [#allocation4], %s4107
      %s4110 = sshll.u32 [#allocation20], 4
      %s4111 = int_to_ptr.vmem [resolvable:$true] %s4110
      %4113 = dma.vmem_to_hbm [thread:$0]  %s4111, 32, %s11, [#allocation4]
    $region93: #{tpu_custom_call.1} parent=1 // pred_fallthru
      _
    // Predicated region
    $region94: #{tpu_custom_call.1} parent=1 // pred_check
      _
    $region95: #{tpu_custom_call.1} parent=1 // pred_check_branch
      %4115 = sbr.rel (0) target = $region97
    $region96: #{tpu_custom_call.1} parent=1 // pred_region
      %4116 = dma.done [#allocation4], 32
    $region97: #{tpu_custom_call.1} parent=1 // pred_fallthru
      _
    %4117 = vsyncpa [#allocation3], 1
    %4118 = vsyncpa [#allocation6], 1
    %4119 = vsyncpa [#allocation9], 1
    %4120 = vsyncpa [#allocation12], 1
    %4121 = vsyncpa [#allocation15], 1
    %4122 = vsyncpa [#allocation18], 1
    %4123 = vsyncpa [#allocation4], 1

</llo_original>
